<compile_context>
chip_gen: v7x
topology: tpu7x:2x2x1
jax: 0.10.0
libtpu: 0.0.40
codegen_flags: <defaults>
</compile_context>

<pallas_src>
import jax
import jax.numpy as jnp
from jax.experimental import pallas as pl
from jax.experimental.pallas import tpu as pltpu


# ----------------------------- static sizes --------------------------------
B = 2
T_IN = 61
C_IN = 12
K = 5
STRIDE = 2
T1, T2, T3 = 29, 13, 5          # time lengths after each conv layer
H = 256                         # LSTM hidden size
N_CLS = 5
FC_PAD = 128                    # lane-dense FC output width


# ----------------------------- fused kernel --------------------------------

def _conv_batch(in_ref, w_ref, b_ref, batch, t_in, t_out):
    """One batch row of a valid strided 1-D conv + bias + ReLU.

    in_ref rows are batch-major: row index = batch * t_in + t.
    w_ref: (K, C_in, C_out), b_ref: (1, C_out).  Returns (t_out, C_out) f32.
    """
    c_out = w_ref.shape[2]
    acc = jnp.zeros((t_out, c_out), jnp.float32)
    for k in range(K):                                       # K=5 matmuls, M=t_out
        xs = in_ref[pl.ds(batch * t_in + k, t_out, stride=STRIDE), :]
        acc = acc + jnp.dot(xs, w_ref[k], preferred_element_type=jnp.float32)
    return jnp.maximum(acc + b_ref[...], 0.0)


def _fused_kernel(x_ref,
                  cw1_ref, cb1_ref, cw2_ref, cb2_ref, cw3_ref, cb3_ref,
                  wih0_ref, whh0_ref, b0_ref,
                  w1_ref, b1_ref,
                  wfc_ref, bfc_ref,
                  o_ref,
                  a1_ref, a2_ref, xw0_ref):
    # ---- conv stack; activations live in VMEM scratch (batch-major rows) ----
    for b in range(B):
        a1_ref[b * T1:(b + 1) * T1, :] = _conv_batch(x_ref, cw1_ref, cb1_ref, b, T_IN, T1)
    for b in range(B):
        a2_ref[b * T2:(b + 1) * T2, :] = _conv_batch(a1_ref, cw2_ref, cb2_ref, b, T1, T2)

    # conv layer 3 fused with the hoisted LSTM layer-0 input projection:
    #   xw0[b, t, :] = act3[b, t, :] @ Wih0 + b0   (off the recurrent critical path)
    for b in range(B):
        act3 = _conv_batch(a2_ref, cw3_ref, cb3_ref, b, T2, T3)          # (T3, 128)
        xw0_ref[b] = (jnp.dot(act3, wih0_ref[...],
                              preferred_element_type=jnp.float32) + b0_ref[...])

    # ---- 2-layer LSTM recurrence over T3 steps -------------------------------
    whh0 = whh0_ref[...]                                   # (H, 4H)
    w1 = w1_ref[...]                                       # (2H, 4H) = [Wih1; Whh1]
    b1 = jnp.broadcast_to(b1_ref[...], (B, 4 * H))         # hoisted broadcast

    def split_gates(g):                                    # PyTorch gate order i,f,g,o
        i = jax.nn.sigmoid(g[:, 0 * H:1 * H])
        f = jax.nn.sigmoid(g[:, 1 * H:2 * H])
        c = jnp.tanh(g[:, 2 * H:3 * H])
        o = jax.nn.sigmoid(g[:, 3 * H:4 * H])
        return i, f, c, o

    h0 = jnp.zeros((B, H), jnp.float32)
    c0 = jnp.zeros((B, H), jnp.float32)
    h1 = jnp.zeros((B, H), jnp.float32)
    c1 = jnp.zeros((B, H), jnp.float32)
    for t in range(T3):                                    # tiny static trip count
        # layer 0: only the recurrent matmul sits on the serial critical path
        g0 = xw0_ref[:, t, :] + jnp.dot(h0, whh0, preferred_element_type=jnp.float32)
        i0, f0, gg0, o0 = split_gates(g0)
        c0 = f0 * c0 + i0 * gg0
        h0 = o0 * jnp.tanh(c0)
        # layer 1: fused input+recurrent matmul in a single MXU push
        g1 = jnp.dot(jnp.concatenate([h0, h1], axis=1), w1,
                     preferred_element_type=jnp.float32) + b1
        i1, f1, gg1, o1 = split_gates(g1)
        c1 = f1 * c1 + i1 * gg1
        h1 = o1 * jnp.tanh(c1)

    # nn.Dropout(0.5) is the identity at inference time.
    # TODO(synk): training-mode dropout mask not implemented (inference kernel).
    # FC into a lane-dense (B, 128) slab (wfc/bfc zero-padded); slice outside.
    o_ref[...] = (jnp.dot(h1, wfc_ref[...], preferred_element_type=jnp.float32)
                  + bfc_ref[...])


# ----------------------------- wrapper --------------------------------------

@jax.jit
def model_forward(x, p):
    """x: (B, T, C_in) channels-last float32."""
    x2d = x.reshape(B * T_IN, C_IN)                        # batch-major rows
    cb1 = p['cb1'].reshape(1, -1)
    cb2 = p['cb2'].reshape(1, -1)
    cb3 = p['cb3'].reshape(1, -1)
    b0 = p['b0'].reshape(1, -1)
    b1 = p['b1'].reshape(1, -1)
    w1 = jnp.concatenate([p['wih1'], p['whh1']], axis=0)   # (2H, 4H)
    wfc = jnp.pad(p['wfc'], ((0, 0), (0, FC_PAD - N_CLS)))  # lane-dense output
    bfc = jnp.pad(p['bfc'], (0, FC_PAD - N_CLS)).reshape(1, FC_PAD)

    vmem = pl.BlockSpec(memory_space=pltpu.MemorySpace.VMEM)
    out = pl.pallas_call(
        _fused_kernel,
        out_shape=jax.ShapeDtypeStruct((B, FC_PAD), jnp.float32),
        in_specs=[vmem] * 14,
        out_specs=vmem,
        scratch_shapes=[
            pltpu.VMEM((B * T1, 32), jnp.float32),         # conv1 activations
            pltpu.VMEM((B * T2, 64), jnp.float32),         # conv2 activations
            pltpu.VMEM((B, T3, 4 * H), jnp.float32),       # hoisted x @ Wih0 + b0
        ],
    )(x2d,
      p['cw1'], cb1, p['cw2'], cb2, p['cw3'], cb3,
      p['wih0'], p['whh0'], b0,
      w1, b1,
      wfc, bfc)
    return out[:, :N_CLS]


# --------------------------- parameters -------------------------------------

def init_params(key):
    ks = jax.random.split(key, 14)

    def u(k, shape, fan_in):
        bound = 1.0 / jnp.sqrt(jnp.float32(fan_in))
        return jax.random.uniform(k, shape, jnp.float32, -bound, bound)

    p = {
        # Conv2d(C_in, C_out, (5,1)) stored as (K, C_in, C_out)
        'cw1': u(ks[0], (5, 12, 32), 5 * 12),  'cb1': u(ks[1], (32,), 5 * 12),
        'cw2': u(ks[2], (5, 32, 64), 5 * 32),  'cb2': u(ks[3], (64,), 5 * 32),
        'cw3': u(ks[4], (5, 64, 128), 5 * 64), 'cb3': u(ks[5], (128,), 5 * 64),
        # LSTM layer 0 / layer 1, weights stored transposed: (in, 4H);
        # gate order i,f,g,o; b = bias_ih + bias_hh folded.
        'wih0': u(ks[6], (128, 4 * H), H), 'whh0': u(ks[7], (H, 4 * H), H),
        'b0':   u(ks[8], (4 * H,), H),
        'wih1': u(ks[9], (H, 4 * H), H),  'whh1': u(ks[10], (H, 4 * H), H),
        'b1':   u(ks[11], (4 * H,), H),
        # Linear(256, 5)
        'wfc': u(ks[12], (H, N_CLS), H), 'bfc': u(ks[13], (N_CLS,), H),
    }
    return p


# --------------------------- plain-JAX reference ----------------------------

def _ref_conv_relu(x, w, b, stride=2):
    Bb, T_in, _ = x.shape
    Kk, _, C_out = w.shape
    T_out = (T_in - Kk) // stride + 1
    ys = []
    for t in range(T_out):
        patch = x[:, t * stride:t * stride + Kk, :]
        ys.append(jnp.einsum('bkc,kco->bo', patch, w) + b)
    return jnp.maximum(jnp.stack(ys, axis=1), 0.0)


def _ref_lstm_fc(x, p):
    Bb, L, _ = x.shape

    def cell(xt, h, c, wih, whh, b):
        gates = xt @ wih + h @ whh + b
        i = jax.nn.sigmoid(gates[:, :H])
        f = jax.nn.sigmoid(gates[:, H:2 * H])
        g = jnp.tanh(gates[:, 2 * H:3 * H])
        o = jax.nn.sigmoid(gates[:, 3 * H:])
        c = f * c + i * g
        return o * jnp.tanh(c), c

    h0 = c0 = h1 = c1 = jnp.zeros((Bb, H), jnp.float32)
    for t in range(L):
        h0, c0 = cell(x[:, t, :], h0, c0, p['wih0'], p['whh0'], p['b0'])
        h1, c1 = cell(h0, h1, c1, p['wih1'], p['whh1'], p['b1'])
    return h1 @ p['wfc'] + p['bfc']


def _ref_forward(x, p):
    h = _ref_conv_relu(x, p['cw1'], p['cb1'])
    h = _ref_conv_relu(h, p['cw2'], p['cb2'])
    h = _ref_conv_relu(h, p['cw3'], p['cb3'])
    return _ref_lstm_fc(h, p)


# ----------------------------------- main -----------------------------------

if __name__ == "__main__":
    key = jax.random.PRNGKey(0)
    pkey, xkey = jax.random.split(key)
    params = init_params(pkey)

    # B=2, T=61, C=12 ; conv stack shrinks time: 61 -> 29 -> 13 -> 5 steps
    x = jax.random.normal(xkey, (B, T_IN, C_IN), jnp.float32)

    out = jax.block_until_ready(model_forward(x, params))
    assert out.shape == (B, N_CLS), out.shape

    ref = _ref_forward(x, params)
    assert jnp.allclose(out, ref, atol=1e-4, rtol=1e-4), (out, ref)

    print("KERNEL_OK")
</pallas_src>

<mosaic_0001>
module attributes {stable_mosaic.version = 11 : i64} {
  func.func @_fused_kernel(%arg0: memref<122x12xf32, #tpu.memory_space<vmem>>, %arg1: memref<5x12x32xf32, #tpu.memory_space<vmem>>, %arg2: memref<1x32xf32, #tpu.memory_space<vmem>>, %arg3: memref<5x32x64xf32, #tpu.memory_space<vmem>>, %arg4: memref<1x64xf32, #tpu.memory_space<vmem>>, %arg5: memref<5x64x128xf32, #tpu.memory_space<vmem>>, %arg6: memref<1x128xf32, #tpu.memory_space<vmem>>, %arg7: memref<128x1024xf32, #tpu.memory_space<vmem>>, %arg8: memref<256x1024xf32, #tpu.memory_space<vmem>>, %arg9: memref<1x1024xf32, #tpu.memory_space<vmem>>, %arg10: memref<512x1024xf32, #tpu.memory_space<vmem>>, %arg11: memref<1x1024xf32, #tpu.memory_space<vmem>>, %arg12: memref<256x128xf32, #tpu.memory_space<vmem>>, %arg13: memref<1x128xf32, #tpu.memory_space<vmem>>, %arg14: memref<2x128xf32, #tpu.memory_space<vmem>>, %arg15: memref<58x32xf32, #tpu.memory_space<vmem>>, %arg16: memref<26x64xf32, #tpu.memory_space<vmem>>, %arg17: memref<2x5x1024xf32, #tpu.memory_space<vmem>>) attributes {dimension_semantics = [], scalar_prefetch = 0 : i64, scratch_operands = 3 : i64, tpu.core_type = #tpu.core_type<tc>} {
    %cst = arith.constant 0.000000e+00 : f32
    %0 = vector.broadcast %cst : f32 to vector<29x32xf32>
    %c0 = arith.constant 0 : index
    %c0_0 = arith.constant 0 : index
    %1 = tpu.strided_load %arg0[%c0, %c0_0] {strides = array<i32: 2, 1>} : memref<122x12xf32, #tpu.memory_space<vmem>>, vector<29x12xf32>
    %c0_1 = arith.constant 0 : index
    %c0_2 = arith.constant 0 : index
    %c0_3 = arith.constant 0 : index
    %2 = vector.load %arg1[%c0_1, %c0_2, %c0_3] : memref<5x12x32xf32, #tpu.memory_space<vmem>>, vector<1x12x32xf32>
    %3 = vector.shape_cast %2 : vector<1x12x32xf32> to vector<12x32xf32>
    %cst_4 = arith.constant dense<0.000000e+00> : vector<29x32xf32>
    %4 = tpu.matmul %1, %3, %cst_4 {dimension_numbers = #tpu.dot_dimension_numbers<[1], [0], [0], [1], [0, 0, 1, 1], [], []>} : vector<29x12xf32>, vector<12x32xf32>, vector<29x32xf32> -> vector<29x32xf32>
    %5 = arith.addf %0, %4 : vector<29x32xf32>
    %c1 = arith.constant 1 : index
    %c0_5 = arith.constant 0 : index
    %6 = tpu.strided_load %arg0[%c1, %c0_5] {strides = array<i32: 2, 1>} : memref<122x12xf32, #tpu.memory_space<vmem>>, vector<29x12xf32>
    %c1_6 = arith.constant 1 : index
    %c0_7 = arith.constant 0 : index
    %c0_8 = arith.constant 0 : index
    %7 = vector.load %arg1[%c1_6, %c0_7, %c0_8] : memref<5x12x32xf32, #tpu.memory_space<vmem>>, vector<1x12x32xf32>
    %8 = vector.shape_cast %7 : vector<1x12x32xf32> to vector<12x32xf32>
    %cst_9 = arith.constant dense<0.000000e+00> : vector<29x32xf32>
    %9 = tpu.matmul %6, %8, %cst_9 {dimension_numbers = #tpu.dot_dimension_numbers<[1], [0], [0], [1], [0, 0, 1, 1], [], []>} : vector<29x12xf32>, vector<12x32xf32>, vector<29x32xf32> -> vector<29x32xf32>
    %10 = arith.addf %5, %9 : vector<29x32xf32>
    %c2 = arith.constant 2 : index
    %c0_10 = arith.constant 0 : index
    %11 = tpu.strided_load %arg0[%c2, %c0_10] {strides = array<i32: 2, 1>} : memref<122x12xf32, #tpu.memory_space<vmem>>, vector<29x12xf32>
    %c2_11 = arith.constant 2 : index
    %c0_12 = arith.constant 0 : index
    %c0_13 = arith.constant 0 : index
    %12 = vector.load %arg1[%c2_11, %c0_12, %c0_13] : memref<5x12x32xf32, #tpu.memory_space<vmem>>, vector<1x12x32xf32>
    %13 = vector.shape_cast %12 : vector<1x12x32xf32> to vector<12x32xf32>
    %cst_14 = arith.constant dense<0.000000e+00> : vector<29x32xf32>
    %14 = tpu.matmul %11, %13, %cst_14 {dimension_numbers = #tpu.dot_dimension_numbers<[1], [0], [0], [1], [0, 0, 1, 1], [], []>} : vector<29x12xf32>, vector<12x32xf32>, vector<29x32xf32> -> vector<29x32xf32>
    %15 = arith.addf %10, %14 : vector<29x32xf32>
    %c3 = arith.constant 3 : index
    %c0_15 = arith.constant 0 : index
    %16 = tpu.strided_load %arg0[%c3, %c0_15] {strides = array<i32: 2, 1>} : memref<122x12xf32, #tpu.memory_space<vmem>>, vector<29x12xf32>
    %c3_16 = arith.constant 3 : index
    %c0_17 = arith.constant 0 : index
    %c0_18 = arith.constant 0 : index
    %17 = vector.load %arg1[%c3_16, %c0_17, %c0_18] : memref<5x12x32xf32, #tpu.memory_space<vmem>>, vector<1x12x32xf32>
    %18 = vector.shape_cast %17 : vector<1x12x32xf32> to vector<12x32xf32>
    %cst_19 = arith.constant dense<0.000000e+00> : vector<29x32xf32>
    %19 = tpu.matmul %16, %18, %cst_19 {dimension_numbers = #tpu.dot_dimension_numbers<[1], [0], [0], [1], [0, 0, 1, 1], [], []>} : vector<29x12xf32>, vector<12x32xf32>, vector<29x32xf32> -> vector<29x32xf32>
    %20 = arith.addf %15, %19 : vector<29x32xf32>
    %c4 = arith.constant 4 : index
    %c0_20 = arith.constant 0 : index
    %21 = tpu.strided_load %arg0[%c4, %c0_20] {strides = array<i32: 2, 1>} : memref<122x12xf32, #tpu.memory_space<vmem>>, vector<29x12xf32>
    %c4_21 = arith.constant 4 : index
    %c0_22 = arith.constant 0 : index
    %c0_23 = arith.constant 0 : index
    %22 = vector.load %arg1[%c4_21, %c0_22, %c0_23] : memref<5x12x32xf32, #tpu.memory_space<vmem>>, vector<1x12x32xf32>
    %23 = vector.shape_cast %22 : vector<1x12x32xf32> to vector<12x32xf32>
    %cst_24 = arith.constant dense<0.000000e+00> : vector<29x32xf32>
    %24 = tpu.matmul %21, %23, %cst_24 {dimension_numbers = #tpu.dot_dimension_numbers<[1], [0], [0], [1], [0, 0, 1, 1], [], []>} : vector<29x12xf32>, vector<12x32xf32>, vector<29x32xf32> -> vector<29x32xf32>
    %25 = arith.addf %20, %24 : vector<29x32xf32>
    %c0_25 = arith.constant 0 : index
    %c0_26 = arith.constant 0 : index
    %26 = vector.load %arg2[%c0_25, %c0_26] : memref<1x32xf32, #tpu.memory_space<vmem>>, vector<1x32xf32>
    %27 = vector.broadcast %26 : vector<1x32xf32> to vector<29x32xf32>
    %28 = arith.addf %25, %27 : vector<29x32xf32>
    %cst_27 = arith.constant 0.000000e+00 : f32
    %29 = vector.broadcast %cst_27 : f32 to vector<29x32xf32>
    %30 = arith.maximumf %28, %29 : vector<29x32xf32>
    %c0_28 = arith.constant 0 : index
    %c0_29 = arith.constant 0 : index
    %31 = vector.load %arg15[%c0_28, %c0_29] : memref<58x32xf32, #tpu.memory_space<vmem>>, vector<29x32xf32>
    tpu.vector_store %arg15[%c0_28, %c0_29], %30 {strides = array<i32>} : memref<58x32xf32, #tpu.memory_space<vmem>>, vector<29x32xf32>,
    %cst_30 = arith.constant 0.000000e+00 : f32
    %32 = vector.broadcast %cst_30 : f32 to vector<29x32xf32>
    %c61 = arith.constant 61 : index
    %c0_31 = arith.constant 0 : index
    %33 = tpu.strided_load %arg0[%c61, %c0_31] {strides = array<i32: 2, 1>} : memref<122x12xf32, #tpu.memory_space<vmem>>, vector<29x12xf32>
    %c0_32 = arith.constant 0 : index
    %c0_33 = arith.constant 0 : index
    %c0_34 = arith.constant 0 : index
    %34 = vector.load %arg1[%c0_32, %c0_33, %c0_34] : memref<5x12x32xf32, #tpu.memory_space<vmem>>, vector<1x12x32xf32>
    %35 = vector.shape_cast %34 : vector<1x12x32xf32> to vector<12x32xf32>
    %cst_35 = arith.constant dense<0.000000e+00> : vector<29x32xf32>
    %36 = tpu.matmul %33, %35, %cst_35 {dimension_numbers = #tpu.dot_dimension_numbers<[1], [0], [0], [1], [0, 0, 1, 1], [], []>} : vector<29x12xf32>, vector<12x32xf32>, vector<29x32xf32> -> vector<29x32xf32>
    %37 = arith.addf %32, %36 : vector<29x32xf32>
    %c62 = arith.constant 62 : index
    %c0_36 = arith.constant 0 : index
    %38 = tpu.strided_load %arg0[%c62, %c0_36] {strides = array<i32: 2, 1>} : memref<122x12xf32, #tpu.memory_space<vmem>>, vector<29x12xf32>
    %c1_37 = arith.constant 1 : index
    %c0_38 = arith.constant 0 : index
    %c0_39 = arith.constant 0 : index
    %39 = vector.load %arg1[%c1_37, %c0_38, %c0_39] : memref<5x12x32xf32, #tpu.memory_space<vmem>>, vector<1x12x32xf32>
    %40 = vector.shape_cast %39 : vector<1x12x32xf32> to vector<12x32xf32>
    %cst_40 = arith.constant dense<0.000000e+00> : vector<29x32xf32>
    %41 = tpu.matmul %38, %40, %cst_40 {dimension_numbers = #tpu.dot_dimension_numbers<[1], [0], [0], [1], [0, 0, 1, 1], [], []>} : vector<29x12xf32>, vector<12x32xf32>, vector<29x32xf32> -> vector<29x32xf32>
    %42 = arith.addf %37, %41 : vector<29x32xf32>
    %c63 = arith.constant 63 : index
    %c0_41 = arith.constant 0 : index
    %43 = tpu.strided_load %arg0[%c63, %c0_41] {strides = array<i32: 2, 1>} : memref<122x12xf32, #tpu.memory_space<vmem>>, vector<29x12xf32>
    %c2_42 = arith.constant 2 : index
    %c0_43 = arith.constant 0 : index
    %c0_44 = arith.constant 0 : index
    %44 = vector.load %arg1[%c2_42, %c0_43, %c0_44] : memref<5x12x32xf32, #tpu.memory_space<vmem>>, vector<1x12x32xf32>
    %45 = vector.shape_cast %44 : vector<1x12x32xf32> to vector<12x32xf32>
    %cst_45 = arith.constant dense<0.000000e+00> : vector<29x32xf32>
    %46 = tpu.matmul %43, %45, %cst_45 {dimension_numbers = #tpu.dot_dimension_numbers<[1], [0], [0], [1], [0, 0, 1, 1], [], []>} : vector<29x12xf32>, vector<12x32xf32>, vector<29x32xf32> -> vector<29x32xf32>
    %47 = arith.addf %42, %46 : vector<29x32xf32>
    %c64 = arith.constant 64 : index
    %c0_46 = arith.constant 0 : index
    %48 = tpu.strided_load %arg0[%c64, %c0_46] {strides = array<i32: 2, 1>} : memref<122x12xf32, #tpu.memory_space<vmem>>, vector<29x12xf32>
    %c3_47 = arith.constant 3 : index
    %c0_48 = arith.constant 0 : index
    %c0_49 = arith.constant 0 : index
    %49 = vector.load %arg1[%c3_47, %c0_48, %c0_49] : memref<5x12x32xf32, #tpu.memory_space<vmem>>, vector<1x12x32xf32>
    %50 = vector.shape_cast %49 : vector<1x12x32xf32> to vector<12x32xf32>
    %cst_50 = arith.constant dense<0.000000e+00> : vector<29x32xf32>
    %51 = tpu.matmul %48, %50, %cst_50 {dimension_numbers = #tpu.dot_dimension_numbers<[1], [0], [0], [1], [0, 0, 1, 1], [], []>} : vector<29x12xf32>, vector<12x32xf32>, vector<29x32xf32> -> vector<29x32xf32>
    %52 = arith.addf %47, %51 : vector<29x32xf32>
    %c65 = arith.constant 65 : index
    %c0_51 = arith.constant 0 : index
    %53 = tpu.strided_load %arg0[%c65, %c0_51] {strides = array<i32: 2, 1>} : memref<122x12xf32, #tpu.memory_space<vmem>>, vector<29x12xf32>
    %c4_52 = arith.constant 4 : index
    %c0_53 = arith.constant 0 : index
    %c0_54 = arith.constant 0 : index
    %54 = vector.load %arg1[%c4_52, %c0_53, %c0_54] : memref<5x12x32xf32, #tpu.memory_space<vmem>>, vector<1x12x32xf32>
    %55 = vector.shape_cast %54 : vector<1x12x32xf32> to vector<12x32xf32>
    %cst_55 = arith.constant dense<0.000000e+00> : vector<29x32xf32>
    %56 = tpu.matmul %53, %55, %cst_55 {dimension_numbers = #tpu.dot_dimension_numbers<[1], [0], [0], [1], [0, 0, 1, 1], [], []>} : vector<29x12xf32>, vector<12x32xf32>, vector<29x32xf32> -> vector<29x32xf32>
    %57 = arith.addf %52, %56 : vector<29x32xf32>
    %c0_56 = arith.constant 0 : index
    %c0_57 = arith.constant 0 : index
    %58 = vector.load %arg2[%c0_56, %c0_57] : memref<1x32xf32, #tpu.memory_space<vmem>>, vector<1x32xf32>
    %59 = vector.broadcast %58 : vector<1x32xf32> to vector<29x32xf32>
    %60 = arith.addf %57, %59 : vector<29x32xf32>
    %cst_58 = arith.constant 0.000000e+00 : f32
    %61 = vector.broadcast %cst_58 : f32 to vector<29x32xf32>
    %62 = arith.maximumf %60, %61 : vector<29x32xf32>
    %c29 = arith.constant 29 : index
    %c0_59 = arith.constant 0 : index
    %63 = vector.load %arg15[%c29, %c0_59] : memref<58x32xf32, #tpu.memory_space<vmem>>, vector<29x32xf32>
    tpu.vector_store %arg15[%c29, %c0_59], %62 {strides = array<i32>} : memref<58x32xf32, #tpu.memory_space<vmem>>, vector<29x32xf32>,
    %cst_60 = arith.constant 0.000000e+00 : f32
    %64 = vector.broadcast %cst_60 : f32 to vector<13x64xf32>
    %c0_61 = arith.constant 0 : index
    %c0_62 = arith.constant 0 : index
    %65 = tpu.strided_load %arg15[%c0_61, %c0_62] {strides = array<i32: 2, 1>} : memref<58x32xf32, #tpu.memory_space<vmem>>, vector<13x32xf32>
    %c0_63 = arith.constant 0 : index
    %c0_64 = arith.constant 0 : index
    %c0_65 = arith.constant 0 : index
    %66 = vector.load %arg3[%c0_63, %c0_64, %c0_65] : memref<5x32x64xf32, #tpu.memory_space<vmem>>, vector<1x32x64xf32>
    %67 = vector.shape_cast %66 : vector<1x32x64xf32> to vector<32x64xf32>
    %cst_66 = arith.constant dense<0.000000e+00> : vector<13x64xf32>
    %68 = tpu.matmul %65, %67, %cst_66 {dimension_numbers = #tpu.dot_dimension_numbers<[1], [0], [0], [1], [0, 0, 1, 1], [], []>} : vector<13x32xf32>, vector<32x64xf32>, vector<13x64xf32> -> vector<13x64xf32>
    %69 = arith.addf %64, %68 : vector<13x64xf32>
    %c1_67 = arith.constant 1 : index
    %c0_68 = arith.constant 0 : index
    %70 = tpu.strided_load %arg15[%c1_67, %c0_68] {strides = array<i32: 2, 1>} : memref<58x32xf32, #tpu.memory_space<vmem>>, vector<13x32xf32>
    %c1_69 = arith.constant 1 : index
    %c0_70 = arith.constant 0 : index
    %c0_71 = arith.constant 0 : index
    %71 = vector.load %arg3[%c1_69, %c0_70, %c0_71] : memref<5x32x64xf32, #tpu.memory_space<vmem>>, vector<1x32x64xf32>
    %72 = vector.shape_cast %71 : vector<1x32x64xf32> to vector<32x64xf32>
    %cst_72 = arith.constant dense<0.000000e+00> : vector<13x64xf32>
    %73 = tpu.matmul %70, %72, %cst_72 {dimension_numbers = #tpu.dot_dimension_numbers<[1], [0], [0], [1], [0, 0, 1, 1], [], []>} : vector<13x32xf32>, vector<32x64xf32>, vector<13x64xf32> -> vector<13x64xf32>
    %74 = arith.addf %69, %73 : vector<13x64xf32>
    %c2_73 = arith.constant 2 : index
    %c0_74 = arith.constant 0 : index
    %75 = tpu.strided_load %arg15[%c2_73, %c0_74] {strides = array<i32: 2, 1>} : memref<58x32xf32, #tpu.memory_space<vmem>>, vector<13x32xf32>
    %c2_75 = arith.constant 2 : index
    %c0_76 = arith.constant 0 : index
    %c0_77 = arith.constant 0 : index
    %76 = vector.load %arg3[%c2_75, %c0_76, %c0_77] : memref<5x32x64xf32, #tpu.memory_space<vmem>>, vector<1x32x64xf32>
    %77 = vector.shape_cast %76 : vector<1x32x64xf32> to vector<32x64xf32>
    %cst_78 = arith.constant dense<0.000000e+00> : vector<13x64xf32>
    %78 = tpu.matmul %75, %77, %cst_78 {dimension_numbers = #tpu.dot_dimension_numbers<[1], [0], [0], [1], [0, 0, 1, 1], [], []>} : vector<13x32xf32>, vector<32x64xf32>, vector<13x64xf32> -> vector<13x64xf32>
    %79 = arith.addf %74, %78 : vector<13x64xf32>
    %c3_79 = arith.constant 3 : index
    %c0_80 = arith.constant 0 : index
    %80 = tpu.strided_load %arg15[%c3_79, %c0_80] {strides = array<i32: 2, 1>} : memref<58x32xf32, #tpu.memory_space<vmem>>, vector<13x32xf32>
    %c3_81 = arith.constant 3 : index
    %c0_82 = arith.constant 0 : index
    %c0_83 = arith.constant 0 : index
    %81 = vector.load %arg3[%c3_81, %c0_82, %c0_83] : memref<5x32x64xf32, #tpu.memory_space<vmem>>, vector<1x32x64xf32>
    %82 = vector.shape_cast %81 : vector<1x32x64xf32> to vector<32x64xf32>
    %cst_84 = arith.constant dense<0.000000e+00> : vector<13x64xf32>
    %83 = tpu.matmul %80, %82, %cst_84 {dimension_numbers = #tpu.dot_dimension_numbers<[1], [0], [0], [1], [0, 0, 1, 1], [], []>} : vector<13x32xf32>, vector<32x64xf32>, vector<13x64xf32> -> vector<13x64xf32>
    %84 = arith.addf %79, %83 : vector<13x64xf32>
    %c4_85 = arith.constant 4 : index
    %c0_86 = arith.constant 0 : index
    %85 = tpu.strided_load %arg15[%c4_85, %c0_86] {strides = array<i32: 2, 1>} : memref<58x32xf32, #tpu.memory_space<vmem>>, vector<13x32xf32>
    %c4_87 = arith.constant 4 : index
    %c0_88 = arith.constant 0 : index
    %c0_89 = arith.constant 0 : index
    %86 = vector.load %arg3[%c4_87, %c0_88, %c0_89] : memref<5x32x64xf32, #tpu.memory_space<vmem>>, vector<1x32x64xf32>
    %87 = vector.shape_cast %86 : vector<1x32x64xf32> to vector<32x64xf32>
    %cst_90 = arith.constant dense<0.000000e+00> : vector<13x64xf32>
    %88 = tpu.matmul %85, %87, %cst_90 {dimension_numbers = #tpu.dot_dimension_numbers<[1], [0], [0], [1], [0, 0, 1, 1], [], []>} : vector<13x32xf32>, vector<32x64xf32>, vector<13x64xf32> -> vector<13x64xf32>
    %89 = arith.addf %84, %88 : vector<13x64xf32>
    %c0_91 = arith.constant 0 : index
    %c0_92 = arith.constant 0 : index
    %90 = vector.load %arg4[%c0_91, %c0_92] : memref<1x64xf32, #tpu.memory_space<vmem>>, vector<1x64xf32>
    %91 = vector.broadcast %90 : vector<1x64xf32> to vector<13x64xf32>
    %92 = arith.addf %89, %91 : vector<13x64xf32>
    %cst_93 = arith.constant 0.000000e+00 : f32
    %93 = vector.broadcast %cst_93 : f32 to vector<13x64xf32>
    %94 = arith.maximumf %92, %93 : vector<13x64xf32>
    %c0_94 = arith.constant 0 : index
    %c0_95 = arith.constant 0 : index
    %95 = vector.load %arg16[%c0_94, %c0_95] : memref<26x64xf32, #tpu.memory_space<vmem>>, vector<13x64xf32>
    tpu.vector_store %arg16[%c0_94, %c0_95], %94 {strides = array<i32>} : memref<26x64xf32, #tpu.memory_space<vmem>>, vector<13x64xf32>,
    %cst_96 = arith.constant 0.000000e+00 : f32
    %96 = vector.broadcast %cst_96 : f32 to vector<13x64xf32>
    %c29_97 = arith.constant 29 : index
    %c0_98 = arith.constant 0 : index
    %97 = tpu.strided_load %arg15[%c29_97, %c0_98] {strides = array<i32: 2, 1>} : memref<58x32xf32, #tpu.memory_space<vmem>>, vector<13x32xf32>
    %c0_99 = arith.constant 0 : index
    %c0_100 = arith.constant 0 : index
    %c0_101 = arith.constant 0 : index
    %98 = vector.load %arg3[%c0_99, %c0_100, %c0_101] : memref<5x32x64xf32, #tpu.memory_space<vmem>>, vector<1x32x64xf32>
    %99 = vector.shape_cast %98 : vector<1x32x64xf32> to vector<32x64xf32>
    %cst_102 = arith.constant dense<0.000000e+00> : vector<13x64xf32>
    %100 = tpu.matmul %97, %99, %cst_102 {dimension_numbers = #tpu.dot_dimension_numbers<[1], [0], [0], [1], [0, 0, 1, 1], [], []>} : vector<13x32xf32>, vector<32x64xf32>, vector<13x64xf32> -> vector<13x64xf32>
    %101 = arith.addf %96, %100 : vector<13x64xf32>
    %c30 = arith.constant 30 : index
    %c0_103 = arith.constant 0 : index
    %102 = tpu.strided_load %arg15[%c30, %c0_103] {strides = array<i32: 2, 1>} : memref<58x32xf32, #tpu.memory_space<vmem>>, vector<13x32xf32>
    %c1_104 = arith.constant 1 : index
    %c0_105 = arith.constant 0 : index
    %c0_106 = arith.constant 0 : index
    %103 = vector.load %arg3[%c1_104, %c0_105, %c0_106] : memref<5x32x64xf32, #tpu.memory_space<vmem>>, vector<1x32x64xf32>
    %104 = vector.shape_cast %103 : vector<1x32x64xf32> to vector<32x64xf32>
    %cst_107 = arith.constant dense<0.000000e+00> : vector<13x64xf32>
    %105 = tpu.matmul %102, %104, %cst_107 {dimension_numbers = #tpu.dot_dimension_numbers<[1], [0], [0], [1], [0, 0, 1, 1], [], []>} : vector<13x32xf32>, vector<32x64xf32>, vector<13x64xf32> -> vector<13x64xf32>
    %106 = arith.addf %101, %105 : vector<13x64xf32>
    %c31 = arith.constant 31 : index
    %c0_108 = arith.constant 0 : index
    %107 = tpu.strided_load %arg15[%c31, %c0_108] {strides = array<i32: 2, 1>} : memref<58x32xf32, #tpu.memory_space<vmem>>, vector<13x32xf32>
    %c2_109 = arith.constant 2 : index
    %c0_110 = arith.constant 0 : index
    %c0_111 = arith.constant 0 : index
    %108 = vector.load %arg3[%c2_109, %c0_110, %c0_111] : memref<5x32x64xf32, #tpu.memory_space<vmem>>, vector<1x32x64xf32>
    %109 = vector.shape_cast %108 : vector<1x32x64xf32> to vector<32x64xf32>
    %cst_112 = arith.constant dense<0.000000e+00> : vector<13x64xf32>
    %110 = tpu.matmul %107, %109, %cst_112 {dimension_numbers = #tpu.dot_dimension_numbers<[1], [0], [0], [1], [0, 0, 1, 1], [], []>} : vector<13x32xf32>, vector<32x64xf32>, vector<13x64xf32> -> vector<13x64xf32>
    %111 = arith.addf %106, %110 : vector<13x64xf32>
    %c32 = arith.constant 32 : index
    %c0_113 = arith.constant 0 : index
    %112 = tpu.strided_load %arg15[%c32, %c0_113] {strides = array<i32: 2, 1>} : memref<58x32xf32, #tpu.memory_space<vmem>>, vector<13x32xf32>
    %c3_114 = arith.constant 3 : index
    %c0_115 = arith.constant 0 : index
    %c0_116 = arith.constant 0 : index
    %113 = vector.load %arg3[%c3_114, %c0_115, %c0_116] : memref<5x32x64xf32, #tpu.memory_space<vmem>>, vector<1x32x64xf32>
    %114 = vector.shape_cast %113 : vector<1x32x64xf32> to vector<32x64xf32>
    %cst_117 = arith.constant dense<0.000000e+00> : vector<13x64xf32>
    %115 = tpu.matmul %112, %114, %cst_117 {dimension_numbers = #tpu.dot_dimension_numbers<[1], [0], [0], [1], [0, 0, 1, 1], [], []>} : vector<13x32xf32>, vector<32x64xf32>, vector<13x64xf32> -> vector<13x64xf32>
    %116 = arith.addf %111, %115 : vector<13x64xf32>
    %c33 = arith.constant 33 : index
    %c0_118 = arith.constant 0 : index
    %117 = tpu.strided_load %arg15[%c33, %c0_118] {strides = array<i32: 2, 1>} : memref<58x32xf32, #tpu.memory_space<vmem>>, vector<13x32xf32>
    %c4_119 = arith.constant 4 : index
    %c0_120 = arith.constant 0 : index
    %c0_121 = arith.constant 0 : index
    %118 = vector.load %arg3[%c4_119, %c0_120, %c0_121] : memref<5x32x64xf32, #tpu.memory_space<vmem>>, vector<1x32x64xf32>
    %119 = vector.shape_cast %118 : vector<1x32x64xf32> to vector<32x64xf32>
    %cst_122 = arith.constant dense<0.000000e+00> : vector<13x64xf32>
    %120 = tpu.matmul %117, %119, %cst_122 {dimension_numbers = #tpu.dot_dimension_numbers<[1], [0], [0], [1], [0, 0, 1, 1], [], []>} : vector<13x32xf32>, vector<32x64xf32>, vector<13x64xf32> -> vector<13x64xf32>
    %121 = arith.addf %116, %120 : vector<13x64xf32>
    %c0_123 = arith.constant 0 : index
    %c0_124 = arith.constant 0 : index
    %122 = vector.load %arg4[%c0_123, %c0_124] : memref<1x64xf32, #tpu.memory_space<vmem>>, vector<1x64xf32>
    %123 = vector.broadcast %122 : vector<1x64xf32> to vector<13x64xf32>
    %124 = arith.addf %121, %123 : vector<13x64xf32>
    %cst_125 = arith.constant 0.000000e+00 : f32
    %125 = vector.broadcast %cst_125 : f32 to vector<13x64xf32>
    %126 = arith.maximumf %124, %125 : vector<13x64xf32>
    %c13 = arith.constant 13 : index
    %c0_126 = arith.constant 0 : index
    %127 = vector.load %arg16[%c13, %c0_126] : memref<26x64xf32, #tpu.memory_space<vmem>>, vector<13x64xf32>
    tpu.vector_store %arg16[%c13, %c0_126], %126 {strides = array<i32>} : memref<26x64xf32, #tpu.memory_space<vmem>>, vector<13x64xf32>,
    %cst_127 = arith.constant 0.000000e+00 : f32
    %128 = vector.broadcast %cst_127 : f32 to vector<5x128xf32>
    %c0_128 = arith.constant 0 : index
    %c0_129 = arith.constant 0 : index
    %129 = tpu.strided_load %arg16[%c0_128, %c0_129] {strides = array<i32: 2, 1>} : memref<26x64xf32, #tpu.memory_space<vmem>>, vector<5x64xf32>
    %c0_130 = arith.constant 0 : index
    %c0_131 = arith.constant 0 : index
    %c0_132 = arith.constant 0 : index
    %130 = vector.load %arg5[%c0_130, %c0_131, %c0_132] : memref<5x64x128xf32, #tpu.memory_space<vmem>>, vector<1x64x128xf32>
    %131 = vector.shape_cast %130 : vector<1x64x128xf32> to vector<64x128xf32>
    %cst_133 = arith.constant dense<0.000000e+00> : vector<5x128xf32>
    %132 = tpu.matmul %129, %131, %cst_133 {dimension_numbers = #tpu.dot_dimension_numbers<[1], [0], [0], [1], [0, 0, 1, 1], [], []>} : vector<5x64xf32>, vector<64x128xf32>, vector<5x128xf32> -> vector<5x128xf32>
    %133 = arith.addf %128, %132 : vector<5x128xf32>
    %c1_134 = arith.constant 1 : index
    %c0_135 = arith.constant 0 : index
    %134 = tpu.strided_load %arg16[%c1_134, %c0_135] {strides = array<i32: 2, 1>} : memref<26x64xf32, #tpu.memory_space<vmem>>, vector<5x64xf32>
    %c1_136 = arith.constant 1 : index
    %c0_137 = arith.constant 0 : index
    %c0_138 = arith.constant 0 : index
    %135 = vector.load %arg5[%c1_136, %c0_137, %c0_138] : memref<5x64x128xf32, #tpu.memory_space<vmem>>, vector<1x64x128xf32>
    %136 = vector.shape_cast %135 : vector<1x64x128xf32> to vector<64x128xf32>
    %cst_139 = arith.constant dense<0.000000e+00> : vector<5x128xf32>
    %137 = tpu.matmul %134, %136, %cst_139 {dimension_numbers = #tpu.dot_dimension_numbers<[1], [0], [0], [1], [0, 0, 1, 1], [], []>} : vector<5x64xf32>, vector<64x128xf32>, vector<5x128xf32> -> vector<5x128xf32>
    %138 = arith.addf %133, %137 : vector<5x128xf32>
    %c2_140 = arith.constant 2 : index
    %c0_141 = arith.constant 0 : index
    %139 = tpu.strided_load %arg16[%c2_140, %c0_141] {strides = array<i32: 2, 1>} : memref<26x64xf32, #tpu.memory_space<vmem>>, vector<5x64xf32>
    %c2_142 = arith.constant 2 : index
    %c0_143 = arith.constant 0 : index
    %c0_144 = arith.constant 0 : index
    %140 = vector.load %arg5[%c2_142, %c0_143, %c0_144] : memref<5x64x128xf32, #tpu.memory_space<vmem>>, vector<1x64x128xf32>
    %141 = vector.shape_cast %140 : vector<1x64x128xf32> to vector<64x128xf32>
    %cst_145 = arith.constant dense<0.000000e+00> : vector<5x128xf32>
    %142 = tpu.matmul %139, %141, %cst_145 {dimension_numbers = #tpu.dot_dimension_numbers<[1], [0], [0], [1], [0, 0, 1, 1], [], []>} : vector<5x64xf32>, vector<64x128xf32>, vector<5x128xf32> -> vector<5x128xf32>
    %143 = arith.addf %138, %142 : vector<5x128xf32>
    %c3_146 = arith.constant 3 : index
    %c0_147 = arith.constant 0 : index
    %144 = tpu.strided_load %arg16[%c3_146, %c0_147] {strides = array<i32: 2, 1>} : memref<26x64xf32, #tpu.memory_space<vmem>>, vector<5x64xf32>
    %c3_148 = arith.constant 3 : index
    %c0_149 = arith.constant 0 : index
    %c0_150 = arith.constant 0 : index
    %145 = vector.load %arg5[%c3_148, %c0_149, %c0_150] : memref<5x64x128xf32, #tpu.memory_space<vmem>>, vector<1x64x128xf32>
    %146 = vector.shape_cast %145 : vector<1x64x128xf32> to vector<64x128xf32>
    %cst_151 = arith.constant dense<0.000000e+00> : vector<5x128xf32>
    %147 = tpu.matmul %144, %146, %cst_151 {dimension_numbers = #tpu.dot_dimension_numbers<[1], [0], [0], [1], [0, 0, 1, 1], [], []>} : vector<5x64xf32>, vector<64x128xf32>, vector<5x128xf32> -> vector<5x128xf32>
    %148 = arith.addf %143, %147 : vector<5x128xf32>
    %c4_152 = arith.constant 4 : index
    %c0_153 = arith.constant 0 : index
    %149 = tpu.strided_load %arg16[%c4_152, %c0_153] {strides = array<i32: 2, 1>} : memref<26x64xf32, #tpu.memory_space<vmem>>, vector<5x64xf32>
    %c4_154 = arith.constant 4 : index
    %c0_155 = arith.constant 0 : index
    %c0_156 = arith.constant 0 : index
    %150 = vector.load %arg5[%c4_154, %c0_155, %c0_156] : memref<5x64x128xf32, #tpu.memory_space<vmem>>, vector<1x64x128xf32>
    %151 = vector.shape_cast %150 : vector<1x64x128xf32> to vector<64x128xf32>
    %cst_157 = arith.constant dense<0.000000e+00> : vector<5x128xf32>
    %152 = tpu.matmul %149, %151, %cst_157 {dimension_numbers = #tpu.dot_dimension_numbers<[1], [0], [0], [1], [0, 0, 1, 1], [], []>} : vector<5x64xf32>, vector<64x128xf32>, vector<5x128xf32> -> vector<5x128xf32>
    %153 = arith.addf %148, %152 : vector<5x128xf32>
    %c0_158 = arith.constant 0 : index
    %c0_159 = arith.constant 0 : index
    %154 = vector.load %arg6[%c0_158, %c0_159] : memref<1x128xf32, #tpu.memory_space<vmem>>, vector<1x128xf32>
    %155 = vector.broadcast %154 : vector<1x128xf32> to vector<5x128xf32>
    %156 = arith.addf %153, %155 : vector<5x128xf32>
    %cst_160 = arith.constant 0.000000e+00 : f32
    %157 = vector.broadcast %cst_160 : f32 to vector<5x128xf32>
    %158 = arith.maximumf %156, %157 : vector<5x128xf32>
    %c0_161 = arith.constant 0 : index
    %c0_162 = arith.constant 0 : index
    %159 = vector.load %arg7[%c0_161, %c0_162] : memref<128x1024xf32, #tpu.memory_space<vmem>>, vector<128x1024xf32>
    %cst_163 = arith.constant dense<0.000000e+00> : vector<5x1024xf32>
    %160 = tpu.matmul %158, %159, %cst_163 {dimension_numbers = #tpu.dot_dimension_numbers<[1], [0], [0], [1], [0, 0, 1, 1], [], []>} : vector<5x128xf32>, vector<128x1024xf32>, vector<5x1024xf32> -> vector<5x1024xf32>
    %c0_164 = arith.constant 0 : index
    %c0_165 = arith.constant 0 : index
    %161 = vector.load %arg9[%c0_164, %c0_165] : memref<1x1024xf32, #tpu.memory_space<vmem>>, vector<1x1024xf32>
    %162 = vector.broadcast %161 : vector<1x1024xf32> to vector<5x1024xf32>
    %163 = arith.addf %160, %162 : vector<5x1024xf32>
    %c0_166 = arith.constant 0 : index
    %c0_167 = arith.constant 0 : index
    %c0_168 = arith.constant 0 : index
    %164 = vector.load %arg17[%c0_166, %c0_167, %c0_168] : memref<2x5x1024xf32, #tpu.memory_space<vmem>>, vector<1x5x1024xf32>
    %165 = vector.shape_cast %164 : vector<1x5x1024xf32> to vector<5x1024xf32>
    %166 = vector.shape_cast %163 : vector<5x1024xf32> to vector<1x5x1024xf32>
    tpu.vector_store %arg17[%c0_166, %c0_167, %c0_168], %166 {strides = array<i32>} : memref<2x5x1024xf32, #tpu.memory_space<vmem>>, vector<1x5x1024xf32>,
    %cst_169 = arith.constant 0.000000e+00 : f32
    %167 = vector.broadcast %cst_169 : f32 to vector<5x128xf32>
    %c13_170 = arith.constant 13 : index
    %c0_171 = arith.constant 0 : index
    %168 = tpu.strided_load %arg16[%c13_170, %c0_171] {strides = array<i32: 2, 1>} : memref<26x64xf32, #tpu.memory_space<vmem>>, vector<5x64xf32>
    %c0_172 = arith.constant 0 : index
    %c0_173 = arith.constant 0 : index
    %c0_174 = arith.constant 0 : index
    %169 = vector.load %arg5[%c0_172, %c0_173, %c0_174] : memref<5x64x128xf32, #tpu.memory_space<vmem>>, vector<1x64x128xf32>
    %170 = vector.shape_cast %169 : vector<1x64x128xf32> to vector<64x128xf32>
    %cst_175 = arith.constant dense<0.000000e+00> : vector<5x128xf32>
    %171 = tpu.matmul %168, %170, %cst_175 {dimension_numbers = #tpu.dot_dimension_numbers<[1], [0], [0], [1], [0, 0, 1, 1], [], []>} : vector<5x64xf32>, vector<64x128xf32>, vector<5x128xf32> -> vector<5x128xf32>
    %172 = arith.addf %167, %171 : vector<5x128xf32>
    %c14 = arith.constant 14 : index
    %c0_176 = arith.constant 0 : index
    %173 = tpu.strided_load %arg16[%c14, %c0_176] {strides = array<i32: 2, 1>} : memref<26x64xf32, #tpu.memory_space<vmem>>, vector<5x64xf32>
    %c1_177 = arith.constant 1 : index
    %c0_178 = arith.constant 0 : index
    %c0_179 = arith.constant 0 : index
    %174 = vector.load %arg5[%c1_177, %c0_178, %c0_179] : memref<5x64x128xf32, #tpu.memory_space<vmem>>, vector<1x64x128xf32>
    %175 = vector.shape_cast %174 : vector<1x64x128xf32> to vector<64x128xf32>
    %cst_180 = arith.constant dense<0.000000e+00> : vector<5x128xf32>
    %176 = tpu.matmul %173, %175, %cst_180 {dimension_numbers = #tpu.dot_dimension_numbers<[1], [0], [0], [1], [0, 0, 1, 1], [], []>} : vector<5x64xf32>, vector<64x128xf32>, vector<5x128xf32> -> vector<5x128xf32>
    %177 = arith.addf %172, %176 : vector<5x128xf32>
    %c15 = arith.constant 15 : index
    %c0_181 = arith.constant 0 : index
    %178 = tpu.strided_load %arg16[%c15, %c0_181] {strides = array<i32: 2, 1>} : memref<26x64xf32, #tpu.memory_space<vmem>>, vector<5x64xf32>
    %c2_182 = arith.constant 2 : index
    %c0_183 = arith.constant 0 : index
    %c0_184 = arith.constant 0 : index
    %179 = vector.load %arg5[%c2_182, %c0_183, %c0_184] : memref<5x64x128xf32, #tpu.memory_space<vmem>>, vector<1x64x128xf32>
    %180 = vector.shape_cast %179 : vector<1x64x128xf32> to vector<64x128xf32>
    %cst_185 = arith.constant dense<0.000000e+00> : vector<5x128xf32>
    %181 = tpu.matmul %178, %180, %cst_185 {dimension_numbers = #tpu.dot_dimension_numbers<[1], [0], [0], [1], [0, 0, 1, 1], [], []>} : vector<5x64xf32>, vector<64x128xf32>, vector<5x128xf32> -> vector<5x128xf32>
    %182 = arith.addf %177, %181 : vector<5x128xf32>
    %c16 = arith.constant 16 : index
    %c0_186 = arith.constant 0 : index
    %183 = tpu.strided_load %arg16[%c16, %c0_186] {strides = array<i32: 2, 1>} : memref<26x64xf32, #tpu.memory_space<vmem>>, vector<5x64xf32>
    %c3_187 = arith.constant 3 : index
    %c0_188 = arith.constant 0 : index
    %c0_189 = arith.constant 0 : index
    %184 = vector.load %arg5[%c3_187, %c0_188, %c0_189] : memref<5x64x128xf32, #tpu.memory_space<vmem>>, vector<1x64x128xf32>
    %185 = vector.shape_cast %184 : vector<1x64x128xf32> to vector<64x128xf32>
    %cst_190 = arith.constant dense<0.000000e+00> : vector<5x128xf32>
    %186 = tpu.matmul %183, %185, %cst_190 {dimension_numbers = #tpu.dot_dimension_numbers<[1], [0], [0], [1], [0, 0, 1, 1], [], []>} : vector<5x64xf32>, vector<64x128xf32>, vector<5x128xf32> -> vector<5x128xf32>
    %187 = arith.addf %182, %186 : vector<5x128xf32>
    %c17 = arith.constant 17 : index
    %c0_191 = arith.constant 0 : index
    %188 = tpu.strided_load %arg16[%c17, %c0_191] {strides = array<i32: 2, 1>} : memref<26x64xf32, #tpu.memory_space<vmem>>, vector<5x64xf32>
    %c4_192 = arith.constant 4 : index
    %c0_193 = arith.constant 0 : index
    %c0_194 = arith.constant 0 : index
    %189 = vector.load %arg5[%c4_192, %c0_193, %c0_194] : memref<5x64x128xf32, #tpu.memory_space<vmem>>, vector<1x64x128xf32>
    %190 = vector.shape_cast %189 : vector<1x64x128xf32> to vector<64x128xf32>
    %cst_195 = arith.constant dense<0.000000e+00> : vector<5x128xf32>
    %191 = tpu.matmul %188, %190, %cst_195 {dimension_numbers = #tpu.dot_dimension_numbers<[1], [0], [0], [1], [0, 0, 1, 1], [], []>} : vector<5x64xf32>, vector<64x128xf32>, vector<5x128xf32> -> vector<5x128xf32>
    %192 = arith.addf %187, %191 : vector<5x128xf32>
    %c0_196 = arith.constant 0 : index
    %c0_197 = arith.constant 0 : index
    %193 = vector.load %arg6[%c0_196, %c0_197] : memref<1x128xf32, #tpu.memory_space<vmem>>, vector<1x128xf32>
    %194 = vector.broadcast %193 : vector<1x128xf32> to vector<5x128xf32>
    %195 = arith.addf %192, %194 : vector<5x128xf32>
    %cst_198 = arith.constant 0.000000e+00 : f32
    %196 = vector.broadcast %cst_198 : f32 to vector<5x128xf32>
    %197 = arith.maximumf %195, %196 : vector<5x128xf32>
    %c0_199 = arith.constant 0 : index
    %c0_200 = arith.constant 0 : index
    %198 = vector.load %arg7[%c0_199, %c0_200] : memref<128x1024xf32, #tpu.memory_space<vmem>>, vector<128x1024xf32>
    %cst_201 = arith.constant dense<0.000000e+00> : vector<5x1024xf32>
    %199 = tpu.matmul %197, %198, %cst_201 {dimension_numbers = #tpu.dot_dimension_numbers<[1], [0], [0], [1], [0, 0, 1, 1], [], []>} : vector<5x128xf32>, vector<128x1024xf32>, vector<5x1024xf32> -> vector<5x1024xf32>
    %c0_202 = arith.constant 0 : index
    %c0_203 = arith.constant 0 : index
    %200 = vector.load %arg9[%c0_202, %c0_203] : memref<1x1024xf32, #tpu.memory_space<vmem>>, vector<1x1024xf32>
    %201 = vector.broadcast %200 : vector<1x1024xf32> to vector<5x1024xf32>
    %202 = arith.addf %199, %201 : vector<5x1024xf32>
    %c1_204 = arith.constant 1 : index
    %c0_205 = arith.constant 0 : index
    %c0_206 = arith.constant 0 : index
    %203 = vector.load %arg17[%c1_204, %c0_205, %c0_206] : memref<2x5x1024xf32, #tpu.memory_space<vmem>>, vector<1x5x1024xf32>
    %204 = vector.shape_cast %203 : vector<1x5x1024xf32> to vector<5x1024xf32>
    %205 = vector.shape_cast %202 : vector<5x1024xf32> to vector<1x5x1024xf32>
    tpu.vector_store %arg17[%c1_204, %c0_205, %c0_206], %205 {strides = array<i32>} : memref<2x5x1024xf32, #tpu.memory_space<vmem>>, vector<1x5x1024xf32>,
    %c0_207 = arith.constant 0 : index
    %c0_208 = arith.constant 0 : index
    %206 = vector.load %arg8[%c0_207, %c0_208] : memref<256x1024xf32, #tpu.memory_space<vmem>>, vector<256x1024xf32>
    %c0_209 = arith.constant 0 : index
    %c0_210 = arith.constant 0 : index
    %207 = vector.load %arg10[%c0_209, %c0_210] : memref<512x1024xf32, #tpu.memory_space<vmem>>, vector<512x1024xf32>
    %c0_211 = arith.constant 0 : index
    %c0_212 = arith.constant 0 : index
    %208 = vector.load %arg11[%c0_211, %c0_212] : memref<1x1024xf32, #tpu.memory_space<vmem>>, vector<1x1024xf32>
    %209 = vector.shape_cast %208 : vector<1x1024xf32> to vector<1x1024xf32>
    %210 = vector.broadcast %209 : vector<1x1024xf32> to vector<2x1024xf32>
    %cst_213 = arith.constant 0.000000e+00 : f32
    %211 = vector.broadcast %cst_213 : f32 to vector<2x256xf32>
    %cst_214 = arith.constant 0.000000e+00 : f32
    %212 = vector.broadcast %cst_214 : f32 to vector<2x256xf32>
    %cst_215 = arith.constant 0.000000e+00 : f32
    %213 = vector.broadcast %cst_215 : f32 to vector<2x256xf32>
    %cst_216 = arith.constant 0.000000e+00 : f32
    %214 = vector.broadcast %cst_216 : f32 to vector<2x256xf32>
    %c0_217 = arith.constant 0 : index
    %c0_218 = arith.constant 0 : index
    %c0_219 = arith.constant 0 : index
    %215 = vector.load %arg17[%c0_217, %c0_218, %c0_219] : memref<2x5x1024xf32, #tpu.memory_space<vmem>>, vector<2x1x1024xf32>
    %216 = vector.shape_cast %215 : vector<2x1x1024xf32> to vector<2x1024xf32>
    %cst_220 = arith.constant dense<0.000000e+00> : vector<2x1024xf32>
    %217 = tpu.matmul %211, %206, %cst_220 {dimension_numbers = #tpu.dot_dimension_numbers<[1], [0], [0], [1], [0, 0, 1, 1], [], []>} : vector<2x256xf32>, vector<256x1024xf32>, vector<2x1024xf32> -> vector<2x1024xf32>
    %218 = arith.addf %216, %217 : vector<2x1024xf32>
    %219 = vector.extract_strided_slice %218 {offsets = [0, 0], sizes = [2, 256], strides = [1, 1]} : vector<2x1024xf32> to vector<2x256xf32>
    %220 = arith.negf %219 : vector<2x256xf32>
    %221 = math.exp %220 : vector<2x256xf32>
    %cst_221 = arith.constant 1.000000e+00 : f32
    %222 = vector.broadcast %cst_221 : f32 to vector<2x256xf32>
    %223 = arith.addf %222, %221 : vector<2x256xf32>
    %224 = arith.divf %222, %223 : vector<2x256xf32>
    %225 = vector.extract_strided_slice %218 {offsets = [0, 256], sizes = [2, 256], strides = [1, 1]} : vector<2x1024xf32> to vector<2x256xf32>
    %226 = arith.negf %225 : vector<2x256xf32>
    %227 = math.exp %226 : vector<2x256xf32>
    %cst_222 = arith.constant 1.000000e+00 : f32
    %228 = vector.broadcast %cst_222 : f32 to vector<2x256xf32>
    %229 = arith.addf %228, %227 : vector<2x256xf32>
    %230 = arith.divf %228, %229 : vector<2x256xf32>
    %231 = vector.extract_strided_slice %218 {offsets = [0, 512], sizes = [2, 256], strides = [1, 1]} : vector<2x1024xf32> to vector<2x256xf32>
    %232 = math.tanh %231 : vector<2x256xf32>
    %233 = vector.extract_strided_slice %218 {offsets = [0, 768], sizes = [2, 256], strides = [1, 1]} : vector<2x1024xf32> to vector<2x256xf32>
    %234 = arith.negf %233 : vector<2x256xf32>
    %235 = math.exp %234 : vector<2x256xf32>
    %cst_223 = arith.constant 1.000000e+00 : f32
    %236 = vector.broadcast %cst_223 : f32 to vector<2x256xf32>
    %237 = arith.addf %236, %235 : vector<2x256xf32>
    %238 = arith.divf %236, %237 : vector<2x256xf32>
    %239 = arith.mulf %230, %212 : vector<2x256xf32>
    %240 = arith.mulf %224, %232 : vector<2x256xf32>
    %241 = arith.addf %239, %240 : vector<2x256xf32>
    %242 = math.tanh %241 : vector<2x256xf32>
    %243 = arith.mulf %238, %242 : vector<2x256xf32>
    %244 = tpu.concatenate %243, %213 in 1 : vector<2x256xf32>, vector<2x256xf32> -> vector<2x512xf32>
    %cst_224 = arith.constant dense<0.000000e+00> : vector<2x1024xf32>
    %245 = tpu.matmul %244, %207, %cst_224 {dimension_numbers = #tpu.dot_dimension_numbers<[1], [0], [0], [1], [0, 0, 1, 1], [], []>} : vector<2x512xf32>, vector<512x1024xf32>, vector<2x1024xf32> -> vector<2x1024xf32>
    %246 = arith.addf %245, %210 : vector<2x1024xf32>
    %247 = vector.extract_strided_slice %246 {offsets = [0, 0], sizes = [2, 256], strides = [1, 1]} : vector<2x1024xf32> to vector<2x256xf32>
    %248 = arith.negf %247 : vector<2x256xf32>
    %249 = math.exp %248 : vector<2x256xf32>
    %cst_225 = arith.constant 1.000000e+00 : f32
    %250 = vector.broadcast %cst_225 : f32 to vector<2x256xf32>
    %251 = arith.addf %250, %249 : vector<2x256xf32>
    %252 = arith.divf %250, %251 : vector<2x256xf32>
    %253 = vector.extract_strided_slice %246 {offsets = [0, 256], sizes = [2, 256], strides = [1, 1]} : vector<2x1024xf32> to vector<2x256xf32>
    %254 = arith.negf %253 : vector<2x256xf32>
    %255 = math.exp %254 : vector<2x256xf32>
    %cst_226 = arith.constant 1.000000e+00 : f32
    %256 = vector.broadcast %cst_226 : f32 to vector<2x256xf32>
    %257 = arith.addf %256, %255 : vector<2x256xf32>
    %258 = arith.divf %256, %257 : vector<2x256xf32>
    %259 = vector.extract_strided_slice %246 {offsets = [0, 512], sizes = [2, 256], strides = [1, 1]} : vector<2x1024xf32> to vector<2x256xf32>
    %260 = math.tanh %259 : vector<2x256xf32>
    %261 = vector.extract_strided_slice %246 {offsets = [0, 768], sizes = [2, 256], strides = [1, 1]} : vector<2x1024xf32> to vector<2x256xf32>
    %262 = arith.negf %261 : vector<2x256xf32>
    %263 = math.exp %262 : vector<2x256xf32>
    %cst_227 = arith.constant 1.000000e+00 : f32
    %264 = vector.broadcast %cst_227 : f32 to vector<2x256xf32>
    %265 = arith.addf %264, %263 : vector<2x256xf32>
    %266 = arith.divf %264, %265 : vector<2x256xf32>
    %267 = arith.mulf %258, %214 : vector<2x256xf32>
    %268 = arith.mulf %252, %260 : vector<2x256xf32>
    %269 = arith.addf %267, %268 : vector<2x256xf32>
    %270 = math.tanh %269 : vector<2x256xf32>
    %271 = arith.mulf %266, %270 : vector<2x256xf32>
    %c0_228 = arith.constant 0 : index
    %c1_229 = arith.constant 1 : index
    %c0_230 = arith.constant 0 : index
    %272 = vector.load %arg17[%c0_228, %c1_229, %c0_230] : memref<2x5x1024xf32, #tpu.memory_space<vmem>>, vector<2x1x1024xf32>
    %273 = vector.shape_cast %272 : vector<2x1x1024xf32> to vector<2x1024xf32>
    %cst_231 = arith.constant dense<0.000000e+00> : vector<2x1024xf32>
    %274 = tpu.matmul %243, %206, %cst_231 {dimension_numbers = #tpu.dot_dimension_numbers<[1], [0], [0], [1], [0, 0, 1, 1], [], []>} : vector<2x256xf32>, vector<256x1024xf32>, vector<2x1024xf32> -> vector<2x1024xf32>
    %275 = arith.addf %273, %274 : vector<2x1024xf32>
    %276 = vector.extract_strided_slice %275 {offsets = [0, 0], sizes = [2, 256], strides = [1, 1]} : vector<2x1024xf32> to vector<2x256xf32>
    %277 = arith.negf %276 : vector<2x256xf32>
    %278 = math.exp %277 : vector<2x256xf32>
    %cst_232 = arith.constant 1.000000e+00 : f32
    %279 = vector.broadcast %cst_232 : f32 to vector<2x256xf32>
    %280 = arith.addf %279, %278 : vector<2x256xf32>
    %281 = arith.divf %279, %280 : vector<2x256xf32>
    %282 = vector.extract_strided_slice %275 {offsets = [0, 256], sizes = [2, 256], strides = [1, 1]} : vector<2x1024xf32> to vector<2x256xf32>
    %283 = arith.negf %282 : vector<2x256xf32>
    %284 = math.exp %283 : vector<2x256xf32>
    %cst_233 = arith.constant 1.000000e+00 : f32
    %285 = vector.broadcast %cst_233 : f32 to vector<2x256xf32>
    %286 = arith.addf %285, %284 : vector<2x256xf32>
    %287 = arith.divf %285, %286 : vector<2x256xf32>
    %288 = vector.extract_strided_slice %275 {offsets = [0, 512], sizes = [2, 256], strides = [1, 1]} : vector<2x1024xf32> to vector<2x256xf32>
    %289 = math.tanh %288 : vector<2x256xf32>
    %290 = vector.extract_strided_slice %275 {offsets = [0, 768], sizes = [2, 256], strides = [1, 1]} : vector<2x1024xf32> to vector<2x256xf32>
    %291 = arith.negf %290 : vector<2x256xf32>
    %292 = math.exp %291 : vector<2x256xf32>
    %cst_234 = arith.constant 1.000000e+00 : f32
    %293 = vector.broadcast %cst_234 : f32 to vector<2x256xf32>
    %294 = arith.addf %293, %292 : vector<2x256xf32>
    %295 = arith.divf %293, %294 : vector<2x256xf32>
    %296 = arith.mulf %287, %241 : vector<2x256xf32>
    %297 = arith.mulf %281, %289 : vector<2x256xf32>
    %298 = arith.addf %296, %297 : vector<2x256xf32>
    %299 = math.tanh %298 : vector<2x256xf32>
    %300 = arith.mulf %295, %299 : vector<2x256xf32>
    %301 = tpu.concatenate %300, %271 in 1 : vector<2x256xf32>, vector<2x256xf32> -> vector<2x512xf32>
    %cst_235 = arith.constant dense<0.000000e+00> : vector<2x1024xf32>
    %302 = tpu.matmul %301, %207, %cst_235 {dimension_numbers = #tpu.dot_dimension_numbers<[1], [0], [0], [1], [0, 0, 1, 1], [], []>} : vector<2x512xf32>, vector<512x1024xf32>, vector<2x1024xf32> -> vector<2x1024xf32>
    %303 = arith.addf %302, %210 : vector<2x1024xf32>
    %304 = vector.extract_strided_slice %303 {offsets = [0, 0], sizes = [2, 256], strides = [1, 1]} : vector<2x1024xf32> to vector<2x256xf32>
    %305 = arith.negf %304 : vector<2x256xf32>
    %306 = math.exp %305 : vector<2x256xf32>
    %cst_236 = arith.constant 1.000000e+00 : f32
    %307 = vector.broadcast %cst_236 : f32 to vector<2x256xf32>
    %308 = arith.addf %307, %306 : vector<2x256xf32>
    %309 = arith.divf %307, %308 : vector<2x256xf32>
    %310 = vector.extract_strided_slice %303 {offsets = [0, 256], sizes = [2, 256], strides = [1, 1]} : vector<2x1024xf32> to vector<2x256xf32>
    %311 = arith.negf %310 : vector<2x256xf32>
    %312 = math.exp %311 : vector<2x256xf32>
    %cst_237 = arith.constant 1.000000e+00 : f32
    %313 = vector.broadcast %cst_237 : f32 to vector<2x256xf32>
    %314 = arith.addf %313, %312 : vector<2x256xf32>
    %315 = arith.divf %313, %314 : vector<2x256xf32>
    %316 = vector.extract_strided_slice %303 {offsets = [0, 512], sizes = [2, 256], strides = [1, 1]} : vector<2x1024xf32> to vector<2x256xf32>
    %317 = math.tanh %316 : vector<2x256xf32>
    %318 = vector.extract_strided_slice %303 {offsets = [0, 768], sizes = [2, 256], strides = [1, 1]} : vector<2x1024xf32> to vector<2x256xf32>
    %319 = arith.negf %318 : vector<2x256xf32>
    %320 = math.exp %319 : vector<2x256xf32>
    %cst_238 = arith.constant 1.000000e+00 : f32
    %321 = vector.broadcast %cst_238 : f32 to vector<2x256xf32>
    %322 = arith.addf %321, %320 : vector<2x256xf32>
    %323 = arith.divf %321, %322 : vector<2x256xf32>
    %324 = arith.mulf %315, %269 : vector<2x256xf32>
    %325 = arith.mulf %309, %317 : vector<2x256xf32>
    %326 = arith.addf %324, %325 : vector<2x256xf32>
    %327 = math.tanh %326 : vector<2x256xf32>
    %328 = arith.mulf %323, %327 : vector<2x256xf32>
    %c0_239 = arith.constant 0 : index
    %c2_240 = arith.constant 2 : index
    %c0_241 = arith.constant 0 : index
    %329 = vector.load %arg17[%c0_239, %c2_240, %c0_241] : memref<2x5x1024xf32, #tpu.memory_space<vmem>>, vector<2x1x1024xf32>
    %330 = vector.shape_cast %329 : vector<2x1x1024xf32> to vector<2x1024xf32>
    %cst_242 = arith.constant dense<0.000000e+00> : vector<2x1024xf32>
    %331 = tpu.matmul %300, %206, %cst_242 {dimension_numbers = #tpu.dot_dimension_numbers<[1], [0], [0], [1], [0, 0, 1, 1], [], []>} : vector<2x256xf32>, vector<256x1024xf32>, vector<2x1024xf32> -> vector<2x1024xf32>
    %332 = arith.addf %330, %331 : vector<2x1024xf32>
    %333 = vector.extract_strided_slice %332 {offsets = [0, 0], sizes = [2, 256], strides = [1, 1]} : vector<2x1024xf32> to vector<2x256xf32>
    %334 = arith.negf %333 : vector<2x256xf32>
    %335 = math.exp %334 : vector<2x256xf32>
    %cst_243 = arith.constant 1.000000e+00 : f32
    %336 = vector.broadcast %cst_243 : f32 to vector<2x256xf32>
    %337 = arith.addf %336, %335 : vector<2x256xf32>
    %338 = arith.divf %336, %337 : vector<2x256xf32>
    %339 = vector.extract_strided_slice %332 {offsets = [0, 256], sizes = [2, 256], strides = [1, 1]} : vector<2x1024xf32> to vector<2x256xf32>
    %340 = arith.negf %339 : vector<2x256xf32>
    %341 = math.exp %340 : vector<2x256xf32>
    %cst_244 = arith.constant 1.000000e+00 : f32
    %342 = vector.broadcast %cst_244 : f32 to vector<2x256xf32>
    %343 = arith.addf %342, %341 : vector<2x256xf32>
    %344 = arith.divf %342, %343 : vector<2x256xf32>
    %345 = vector.extract_strided_slice %332 {offsets = [0, 512], sizes = [2, 256], strides = [1, 1]} : vector<2x1024xf32> to vector<2x256xf32>
    %346 = math.tanh %345 : vector<2x256xf32>
    %347 = vector.extract_strided_slice %332 {offsets = [0, 768], sizes = [2, 256], strides = [1, 1]} : vector<2x1024xf32> to vector<2x256xf32>
    %348 = arith.negf %347 : vector<2x256xf32>
    %349 = math.exp %348 : vector<2x256xf32>
    %cst_245 = arith.constant 1.000000e+00 : f32
    %350 = vector.broadcast %cst_245 : f32 to vector<2x256xf32>
    %351 = arith.addf %350, %349 : vector<2x256xf32>
    %352 = arith.divf %350, %351 : vector<2x256xf32>
    %353 = arith.mulf %344, %298 : vector<2x256xf32>
    %354 = arith.mulf %338, %346 : vector<2x256xf32>
    %355 = arith.addf %353, %354 : vector<2x256xf32>
    %356 = math.tanh %355 : vector<2x256xf32>
    %357 = arith.mulf %352, %356 : vector<2x256xf32>
    %358 = tpu.concatenate %357, %328 in 1 : vector<2x256xf32>, vector<2x256xf32> -> vector<2x512xf32>
    %cst_246 = arith.constant dense<0.000000e+00> : vector<2x1024xf32>
    %359 = tpu.matmul %358, %207, %cst_246 {dimension_numbers = #tpu.dot_dimension_numbers<[1], [0], [0], [1], [0, 0, 1, 1], [], []>} : vector<2x512xf32>, vector<512x1024xf32>, vector<2x1024xf32> -> vector<2x1024xf32>
    %360 = arith.addf %359, %210 : vector<2x1024xf32>
    %361 = vector.extract_strided_slice %360 {offsets = [0, 0], sizes = [2, 256], strides = [1, 1]} : vector<2x1024xf32> to vector<2x256xf32>
    %362 = arith.negf %361 : vector<2x256xf32>
    %363 = math.exp %362 : vector<2x256xf32>
    %cst_247 = arith.constant 1.000000e+00 : f32
    %364 = vector.broadcast %cst_247 : f32 to vector<2x256xf32>
    %365 = arith.addf %364, %363 : vector<2x256xf32>
    %366 = arith.divf %364, %365 : vector<2x256xf32>
    %367 = vector.extract_strided_slice %360 {offsets = [0, 256], sizes = [2, 256], strides = [1, 1]} : vector<2x1024xf32> to vector<2x256xf32>
    %368 = arith.negf %367 : vector<2x256xf32>
    %369 = math.exp %368 : vector<2x256xf32>
    %cst_248 = arith.constant 1.000000e+00 : f32
    %370 = vector.broadcast %cst_248 : f32 to vector<2x256xf32>
    %371 = arith.addf %370, %369 : vector<2x256xf32>
    %372 = arith.divf %370, %371 : vector<2x256xf32>
    %373 = vector.extract_strided_slice %360 {offsets = [0, 512], sizes = [2, 256], strides = [1, 1]} : vector<2x1024xf32> to vector<2x256xf32>
    %374 = math.tanh %373 : vector<2x256xf32>
    %375 = vector.extract_strided_slice %360 {offsets = [0, 768], sizes = [2, 256], strides = [1, 1]} : vector<2x1024xf32> to vector<2x256xf32>
    %376 = arith.negf %375 : vector<2x256xf32>
    %377 = math.exp %376 : vector<2x256xf32>
    %cst_249 = arith.constant 1.000000e+00 : f32
    %378 = vector.broadcast %cst_249 : f32 to vector<2x256xf32>
    %379 = arith.addf %378, %377 : vector<2x256xf32>
    %380 = arith.divf %378, %379 : vector<2x256xf32>
    %381 = arith.mulf %372, %326 : vector<2x256xf32>
    %382 = arith.mulf %366, %374 : vector<2x256xf32>
    %383 = arith.addf %381, %382 : vector<2x256xf32>
    %384 = math.tanh %383 : vector<2x256xf32>
    %385 = arith.mulf %380, %384 : vector<2x256xf32>
    %c0_250 = arith.constant 0 : index
    %c3_251 = arith.constant 3 : index
    %c0_252 = arith.constant 0 : index
    %386 = vector.load %arg17[%c0_250, %c3_251, %c0_252] : memref<2x5x1024xf32, #tpu.memory_space<vmem>>, vector<2x1x1024xf32>
    %387 = vector.shape_cast %386 : vector<2x1x1024xf32> to vector<2x1024xf32>
    %cst_253 = arith.constant dense<0.000000e+00> : vector<2x1024xf32>
    %388 = tpu.matmul %357, %206, %cst_253 {dimension_numbers = #tpu.dot_dimension_numbers<[1], [0], [0], [1], [0, 0, 1, 1], [], []>} : vector<2x256xf32>, vector<256x1024xf32>, vector<2x1024xf32> -> vector<2x1024xf32>
    %389 = arith.addf %387, %388 : vector<2x1024xf32>
    %390 = vector.extract_strided_slice %389 {offsets = [0, 0], sizes = [2, 256], strides = [1, 1]} : vector<2x1024xf32> to vector<2x256xf32>
    %391 = arith.negf %390 : vector<2x256xf32>
    %392 = math.exp %391 : vector<2x256xf32>
    %cst_254 = arith.constant 1.000000e+00 : f32
    %393 = vector.broadcast %cst_254 : f32 to vector<2x256xf32>
    %394 = arith.addf %393, %392 : vector<2x256xf32>
    %395 = arith.divf %393, %394 : vector<2x256xf32>
    %396 = vector.extract_strided_slice %389 {offsets = [0, 256], sizes = [2, 256], strides = [1, 1]} : vector<2x1024xf32> to vector<2x256xf32>
    %397 = arith.negf %396 : vector<2x256xf32>
    %398 = math.exp %397 : vector<2x256xf32>
    %cst_255 = arith.constant 1.000000e+00 : f32
    %399 = vector.broadcast %cst_255 : f32 to vector<2x256xf32>
    %400 = arith.addf %399, %398 : vector<2x256xf32>
    %401 = arith.divf %399, %400 : vector<2x256xf32>
    %402 = vector.extract_strided_slice %389 {offsets = [0, 512], sizes = [2, 256], strides = [1, 1]} : vector<2x1024xf32> to vector<2x256xf32>
    %403 = math.tanh %402 : vector<2x256xf32>
    %404 = vector.extract_strided_slice %389 {offsets = [0, 768], sizes = [2, 256], strides = [1, 1]} : vector<2x1024xf32> to vector<2x256xf32>
    %405 = arith.negf %404 : vector<2x256xf32>
    %406 = math.exp %405 : vector<2x256xf32>
    %cst_256 = arith.constant 1.000000e+00 : f32
    %407 = vector.broadcast %cst_256 : f32 to vector<2x256xf32>
    %408 = arith.addf %407, %406 : vector<2x256xf32>
    %409 = arith.divf %407, %408 : vector<2x256xf32>
    %410 = arith.mulf %401, %355 : vector<2x256xf32>
    %411 = arith.mulf %395, %403 : vector<2x256xf32>
    %412 = arith.addf %410, %411 : vector<2x256xf32>
    %413 = math.tanh %412 : vector<2x256xf32>
    %414 = arith.mulf %409, %413 : vector<2x256xf32>
    %415 = tpu.concatenate %414, %385 in 1 : vector<2x256xf32>, vector<2x256xf32> -> vector<2x512xf32>
    %cst_257 = arith.constant dense<0.000000e+00> : vector<2x1024xf32>
    %416 = tpu.matmul %415, %207, %cst_257 {dimension_numbers = #tpu.dot_dimension_numbers<[1], [0], [0], [1], [0, 0, 1, 1], [], []>} : vector<2x512xf32>, vector<512x1024xf32>, vector<2x1024xf32> -> vector<2x1024xf32>
    %417 = arith.addf %416, %210 : vector<2x1024xf32>
    %418 = vector.extract_strided_slice %417 {offsets = [0, 0], sizes = [2, 256], strides = [1, 1]} : vector<2x1024xf32> to vector<2x256xf32>
    %419 = arith.negf %418 : vector<2x256xf32>
    %420 = math.exp %419 : vector<2x256xf32>
    %cst_258 = arith.constant 1.000000e+00 : f32
    %421 = vector.broadcast %cst_258 : f32 to vector<2x256xf32>
    %422 = arith.addf %421, %420 : vector<2x256xf32>
    %423 = arith.divf %421, %422 : vector<2x256xf32>
    %424 = vector.extract_strided_slice %417 {offsets = [0, 256], sizes = [2, 256], strides = [1, 1]} : vector<2x1024xf32> to vector<2x256xf32>
    %425 = arith.negf %424 : vector<2x256xf32>
    %426 = math.exp %425 : vector<2x256xf32>
    %cst_259 = arith.constant 1.000000e+00 : f32
    %427 = vector.broadcast %cst_259 : f32 to vector<2x256xf32>
    %428 = arith.addf %427, %426 : vector<2x256xf32>
    %429 = arith.divf %427, %428 : vector<2x256xf32>
    %430 = vector.extract_strided_slice %417 {offsets = [0, 512], sizes = [2, 256], strides = [1, 1]} : vector<2x1024xf32> to vector<2x256xf32>
    %431 = math.tanh %430 : vector<2x256xf32>
    %432 = vector.extract_strided_slice %417 {offsets = [0, 768], sizes = [2, 256], strides = [1, 1]} : vector<2x1024xf32> to vector<2x256xf32>
    %433 = arith.negf %432 : vector<2x256xf32>
    %434 = math.exp %433 : vector<2x256xf32>
    %cst_260 = arith.constant 1.000000e+00 : f32
    %435 = vector.broadcast %cst_260 : f32 to vector<2x256xf32>
    %436 = arith.addf %435, %434 : vector<2x256xf32>
    %437 = arith.divf %435, %436 : vector<2x256xf32>
    %438 = arith.mulf %429, %383 : vector<2x256xf32>
    %439 = arith.mulf %423, %431 : vector<2x256xf32>
    %440 = arith.addf %438, %439 : vector<2x256xf32>
    %441 = math.tanh %440 : vector<2x256xf32>
    %442 = arith.mulf %437, %441 : vector<2x256xf32>
    %c0_261 = arith.constant 0 : index
    %c4_262 = arith.constant 4 : index
    %c0_263 = arith.constant 0 : index
    %443 = vector.load %arg17[%c0_261, %c4_262, %c0_263] : memref<2x5x1024xf32, #tpu.memory_space<vmem>>, vector<2x1x1024xf32>
    %444 = vector.shape_cast %443 : vector<2x1x1024xf32> to vector<2x1024xf32>
    %cst_264 = arith.constant dense<0.000000e+00> : vector<2x1024xf32>
    %445 = tpu.matmul %414, %206, %cst_264 {dimension_numbers = #tpu.dot_dimension_numbers<[1], [0], [0], [1], [0, 0, 1, 1], [], []>} : vector<2x256xf32>, vector<256x1024xf32>, vector<2x1024xf32> -> vector<2x1024xf32>
    %446 = arith.addf %444, %445 : vector<2x1024xf32>
    %447 = vector.extract_strided_slice %446 {offsets = [0, 0], sizes = [2, 256], strides = [1, 1]} : vector<2x1024xf32> to vector<2x256xf32>
    %448 = arith.negf %447 : vector<2x256xf32>
    %449 = math.exp %448 : vector<2x256xf32>
    %cst_265 = arith.constant 1.000000e+00 : f32
    %450 = vector.broadcast %cst_265 : f32 to vector<2x256xf32>
    %451 = arith.addf %450, %449 : vector<2x256xf32>
    %452 = arith.divf %450, %451 : vector<2x256xf32>
    %453 = vector.extract_strided_slice %446 {offsets = [0, 256], sizes = [2, 256], strides = [1, 1]} : vector<2x1024xf32> to vector<2x256xf32>
    %454 = arith.negf %453 : vector<2x256xf32>
    %455 = math.exp %454 : vector<2x256xf32>
    %cst_266 = arith.constant 1.000000e+00 : f32
    %456 = vector.broadcast %cst_266 : f32 to vector<2x256xf32>
    %457 = arith.addf %456, %455 : vector<2x256xf32>
    %458 = arith.divf %456, %457 : vector<2x256xf32>
    %459 = vector.extract_strided_slice %446 {offsets = [0, 512], sizes = [2, 256], strides = [1, 1]} : vector<2x1024xf32> to vector<2x256xf32>
    %460 = math.tanh %459 : vector<2x256xf32>
    %461 = vector.extract_strided_slice %446 {offsets = [0, 768], sizes = [2, 256], strides = [1, 1]} : vector<2x1024xf32> to vector<2x256xf32>
    %462 = arith.negf %461 : vector<2x256xf32>
    %463 = math.exp %462 : vector<2x256xf32>
    %cst_267 = arith.constant 1.000000e+00 : f32
    %464 = vector.broadcast %cst_267 : f32 to vector<2x256xf32>
    %465 = arith.addf %464, %463 : vector<2x256xf32>
    %466 = arith.divf %464, %465 : vector<2x256xf32>
    %467 = arith.mulf %458, %412 : vector<2x256xf32>
    %468 = arith.mulf %452, %460 : vector<2x256xf32>
    %469 = arith.addf %467, %468 : vector<2x256xf32>
    %470 = math.tanh %469 : vector<2x256xf32>
    %471 = arith.mulf %466, %470 : vector<2x256xf32>
    %472 = tpu.concatenate %471, %442 in 1 : vector<2x256xf32>, vector<2x256xf32> -> vector<2x512xf32>
    %cst_268 = arith.constant dense<0.000000e+00> : vector<2x1024xf32>
    %473 = tpu.matmul %472, %207, %cst_268 {dimension_numbers = #tpu.dot_dimension_numbers<[1], [0], [0], [1], [0, 0, 1, 1], [], []>} : vector<2x512xf32>, vector<512x1024xf32>, vector<2x1024xf32> -> vector<2x1024xf32>
    %474 = arith.addf %473, %210 : vector<2x1024xf32>
    %475 = vector.extract_strided_slice %474 {offsets = [0, 0], sizes = [2, 256], strides = [1, 1]} : vector<2x1024xf32> to vector<2x256xf32>
    %476 = arith.negf %475 : vector<2x256xf32>
    %477 = math.exp %476 : vector<2x256xf32>
    %cst_269 = arith.constant 1.000000e+00 : f32
    %478 = vector.broadcast %cst_269 : f32 to vector<2x256xf32>
    %479 = arith.addf %478, %477 : vector<2x256xf32>
    %480 = arith.divf %478, %479 : vector<2x256xf32>
    %481 = vector.extract_strided_slice %474 {offsets = [0, 256], sizes = [2, 256], strides = [1, 1]} : vector<2x1024xf32> to vector<2x256xf32>
    %482 = arith.negf %481 : vector<2x256xf32>
    %483 = math.exp %482 : vector<2x256xf32>
    %cst_270 = arith.constant 1.000000e+00 : f32
    %484 = vector.broadcast %cst_270 : f32 to vector<2x256xf32>
    %485 = arith.addf %484, %483 : vector<2x256xf32>
    %486 = arith.divf %484, %485 : vector<2x256xf32>
    %487 = vector.extract_strided_slice %474 {offsets = [0, 512], sizes = [2, 256], strides = [1, 1]} : vector<2x1024xf32> to vector<2x256xf32>
    %488 = math.tanh %487 : vector<2x256xf32>
    %489 = vector.extract_strided_slice %474 {offsets = [0, 768], sizes = [2, 256], strides = [1, 1]} : vector<2x1024xf32> to vector<2x256xf32>
    %490 = arith.negf %489 : vector<2x256xf32>
    %491 = math.exp %490 : vector<2x256xf32>
    %cst_271 = arith.constant 1.000000e+00 : f32
    %492 = vector.broadcast %cst_271 : f32 to vector<2x256xf32>
    %493 = arith.addf %492, %491 : vector<2x256xf32>
    %494 = arith.divf %492, %493 : vector<2x256xf32>
    %495 = arith.mulf %486, %440 : vector<2x256xf32>
    %496 = arith.mulf %480, %488 : vector<2x256xf32>
    %497 = arith.addf %495, %496 : vector<2x256xf32>
    %498 = math.tanh %497 : vector<2x256xf32>
    %499 = arith.mulf %494, %498 : vector<2x256xf32>
    %c0_272 = arith.constant 0 : index
    %c0_273 = arith.constant 0 : index
    %500 = vector.load %arg12[%c0_272, %c0_273] : memref<256x128xf32, #tpu.memory_space<vmem>>, vector<256x128xf32>
    %cst_274 = arith.constant dense<0.000000e+00> : vector<2x128xf32>
    %501 = tpu.matmul %499, %500, %cst_274 {dimension_numbers = #tpu.dot_dimension_numbers<[1], [0], [0], [1], [0, 0, 1, 1], [], []>} : vector<2x256xf32>, vector<256x128xf32>, vector<2x128xf32> -> vector<2x128xf32>
    %c0_275 = arith.constant 0 : index
    %c0_276 = arith.constant 0 : index
    %502 = vector.load %arg13[%c0_275, %c0_276] : memref<1x128xf32, #tpu.memory_space<vmem>>, vector<1x128xf32>
    %503 = vector.broadcast %502 : vector<1x128xf32> to vector<2x128xf32>
    %504 = arith.addf %501, %503 : vector<2x128xf32>
    %c0_277 = arith.constant 0 : index
    %c0_278 = arith.constant 0 : index
    %505 = vector.load %arg14[%c0_277, %c0_278] : memref<2x128xf32, #tpu.memory_space<vmem>>, vector<2x128xf32>
    tpu.vector_store %arg14[%c0_277, %c0_278], %504 {strides = array<i32>} : memref<2x128xf32, #tpu.memory_space<vmem>>, vector<2x128xf32>,
    return
  }
}

</mosaic_0001>

<llo_original>
// kernel: model_forward.1
$region0: #{model_forward.1}
  #allocation0 [shape = 'u32[]', space=smem, size = 0x4, offset = 0x4, fixed_abs, tag = 'smem constant byte address 0x4 - core index']
  #allocation1 [shape = 'u32[144,128]{1,0:T(1,128)}', space=vmem, size = 0x12000, scoped, tag = 'internal scratch']
  #allocation2 [shape = 'f32[58,32]{1,0:T(8,128)}', space=vmem, size = 0x8000, scoped, tag = 'scratch operand']
  #allocation3 [shape = 'f32[26,64]{1,0:T(8,128)}', space=vmem, size = 0x4000, scoped, tag = 'scratch operand']
  #allocation4 [shape = 'f32[2,5,1024]{2,1,0:T(8,128)}', space=vmem, size = 0x10000, scoped, tag = 'scratch operand']
  %s0 = inlined_call_operand.vmem [shape: f32[122,12], index: 0, kind: input, shape index: {}]
  %s1 = inlined_call_operand.vmem [shape: f32[5,12,32], index: 1, kind: input, shape index: {}]
  %s2 = inlined_call_operand.vmem [shape: f32[1,32], index: 2, kind: input, shape index: {}]
  %s3 = inlined_call_operand.vmem [shape: f32[5,32,64], index: 3, kind: input, shape index: {}]
  %s4 = inlined_call_operand.vmem [shape: f32[1,64], index: 4, kind: input, shape index: {}]
  %s5 = inlined_call_operand.vmem [shape: f32[5,64,128], index: 5, kind: input, shape index: {}]
  %s6 = inlined_call_operand.vmem [shape: f32[1,128], index: 6, kind: input, shape index: {}]
  %s7 = inlined_call_operand.vmem [shape: f32[128,1024], index: 7, kind: input, shape index: {}]
  %s8 = inlined_call_operand.vmem [shape: f32[256,1024], index: 8, kind: input, shape index: {}]
  %s9 = inlined_call_operand.vmem [shape: f32[1,1024], index: 9, kind: input, shape index: {}]
  %s10 = inlined_call_operand.vmem [shape: f32[512,1024], index: 10, kind: input, shape index: {}]
  %s11 = inlined_call_operand.vmem [shape: f32[1,1024], index: 11, kind: input, shape index: {}]
  %s12 = inlined_call_operand.vmem [shape: f32[256,128], index: 12, kind: input, shape index: {}]
  %s13 = inlined_call_operand.vmem [shape: f32[1,128], index: 13, kind: input, shape index: {}]
  %s14 = inlined_call_operand.hbm [shape: f32[2,128], index: 14, kind: output, shape index: {}]
  %s15 = sld [smem:[#allocation0]]
  $region66: #{model_forward.1} parent=0
    _
  %s17 = ssub.s32 1, %s15
  %s18 = scalar_select 0, %s17, %s15
  $region1: #{model_forward.1} parent=0
    #allocation5 [shape = 'u8[1024]{0}', space=vmem, size = 0x400, scoped, tag = 'output window, operand 0, single buffered']
    #allocation6 [shape = 's32[1]{0}', space=sflag, size = 0x4, scoped, tag = 'scoped memory for model_forward.1']
    %19 = vsyncpa [#allocation6], 0
    // Predicated region
    $region2: #{model_forward.1} parent=1 // pred_check
      _
    $region3: #{model_forward.1} parent=1 // pred_check_branch
      %21 = sbr.rel (0) target = $region5
    $region4: #{model_forward.1} parent=1 // pred_region
      _
    $region5: #{model_forward.1} parent=1 // pred_fallthru
      _
    // Predicated region
    $region6: #{model_forward.1} parent=1 // pred_check
      _
    $region7: #{model_forward.1} parent=1 // pred_check_branch
      %23 = sbr.rel (0) target = $region9
    $region8: #{model_forward.1} parent=1 // pred_region
      _
    $region9: #{model_forward.1} parent=1 // pred_fallthru
      _
    // Predicated region
    $region10: #{model_forward.1} parent=1 // pred_check
      _
    $region11: #{model_forward.1} parent=1 // pred_check_branch
      %25 = sbr.rel (0) target = $region13
    $region12: #{model_forward.1} parent=1 // pred_region
      _
    $region13: #{model_forward.1} parent=1 // pred_fallthru
      _
    // Predicated region
    $region14: #{model_forward.1} parent=1 // pred_check
      _
    $region15: #{model_forward.1} parent=1 // pred_check_branch
      %27 = sbr.rel (0) target = $region17
    $region16: #{model_forward.1} parent=1 // pred_region
      _
    $region17: #{model_forward.1} parent=1 // pred_fallthru
      _
    // Predicated region
    $region18: #{model_forward.1} parent=1 // pred_check
      _
    $region19: #{model_forward.1} parent=1 // pred_check_branch
      %29 = sbr.rel (0) target = $region21
    $region20: #{model_forward.1} parent=1 // pred_region
      _
    $region21: #{model_forward.1} parent=1 // pred_fallthru
      _
    // Predicated region
    $region22: #{model_forward.1} parent=1 // pred_check
      _
    $region23: #{model_forward.1} parent=1 // pred_check_branch
      %31 = sbr.rel (0) target = $region25
    $region24: #{model_forward.1} parent=1 // pred_region
      _
    $region25: #{model_forward.1} parent=1 // pred_fallthru
      _
    // Predicated region
    $region26: #{model_forward.1} parent=1 // pred_check
      _
    $region27: #{model_forward.1} parent=1 // pred_check_branch
      %33 = sbr.rel (0) target = $region29
    $region28: #{model_forward.1} parent=1 // pred_region
      _
    $region29: #{model_forward.1} parent=1 // pred_fallthru
      _
    // Predicated region
    $region30: #{model_forward.1} parent=1 // pred_check
      _
    $region31: #{model_forward.1} parent=1 // pred_check_branch
      %35 = sbr.rel (0) target = $region33
    $region32: #{model_forward.1} parent=1 // pred_region
      _
    $region33: #{model_forward.1} parent=1 // pred_fallthru
      _
    // Predicated region
    $region34: #{model_forward.1} parent=1 // pred_check
      _
    $region35: #{model_forward.1} parent=1 // pred_check_branch
      %37 = sbr.rel (0) target = $region37
    $region36: #{model_forward.1} parent=1 // pred_region
      _
    $region37: #{model_forward.1} parent=1 // pred_fallthru
      _
    // Predicated region
    $region38: #{model_forward.1} parent=1 // pred_check
      _
    $region39: #{model_forward.1} parent=1 // pred_check_branch
      %39 = sbr.rel (0) target = $region41
    $region40: #{model_forward.1} parent=1 // pred_region
      _
    $region41: #{model_forward.1} parent=1 // pred_fallthru
      _
    // Predicated region
    $region42: #{model_forward.1} parent=1 // pred_check
      _
    $region43: #{model_forward.1} parent=1 // pred_check_branch
      %41 = sbr.rel (0) target = $region45
    $region44: #{model_forward.1} parent=1 // pred_region
      _
    $region45: #{model_forward.1} parent=1 // pred_fallthru
      _
    // Predicated region
    $region46: #{model_forward.1} parent=1 // pred_check
      _
    $region47: #{model_forward.1} parent=1 // pred_check_branch
      %43 = sbr.rel (0) target = $region49
    $region48: #{model_forward.1} parent=1 // pred_region
      _
    $region49: #{model_forward.1} parent=1 // pred_fallthru
      _
    // Predicated region
    $region50: #{model_forward.1} parent=1 // pred_check
      _
    $region51: #{model_forward.1} parent=1 // pred_check_branch
      %45 = sbr.rel (0) target = $region53
    $region52: #{model_forward.1} parent=1 // pred_region
      _
    $region53: #{model_forward.1} parent=1 // pred_fallthru
      _
    // Predicated region
    $region54: #{model_forward.1} parent=1 // pred_check
      _
    $region55: #{model_forward.1} parent=1 // pred_check_branch
      %47 = sbr.rel (0) target = $region57
    $region56: #{model_forward.1} parent=1 // pred_region
      _
    $region57: #{model_forward.1} parent=1 // pred_fallthru
      _
    %v48 = vld [vmem:[%s0] ss:$2 sm:$0xff]
    %s49 = scalar_lea.vmem %s0, 16
    %v50 = vld [vmem:[%s49] ss:$2 sm:$0xff]
    %s51 = scalar_lea.vmem %s0, 32
    %v52 = vld [vmem:[%s51] ss:$2 sm:$0xff]
    %s53 = scalar_lea.vmem %s0, 48
    %v54 = vld [vmem:[%s53] ss:$2 sm:$0x1f]
    %v55 = vld [vmem:[%s1] sm:$0xff]
    %v56 = vld [vmem:[%s1 + $0x8] sm:$0xf]
    %s57 = scalar_lea.vmem %s0, 1
    %v58 = vld [vmem:[%s57] ss:$2 sm:$0xff]
    %s59 = scalar_lea.vmem %s0, 17
    %v60 = vld [vmem:[%s59] ss:$2 sm:$0xff]
    %s61 = scalar_lea.vmem %s0, 33
    %v62 = vld [vmem:[%s61] ss:$2 sm:$0xff]
    %s63 = scalar_lea.vmem %s0, 49
    %v64 = vld [vmem:[%s63] ss:$2 sm:$0x1f]
    %s65 = scalar_lea.vmem %s1, 16
    %v66 = vld [vmem:[%s65] sm:$0xff]
    %v67 = vld [vmem:[%s65 + $0x8] sm:$0xf]
    %vm68 = vcmask 97280
    %v70 = vsel %vm68, %v58, 0
    %v73 = vsel %vm68, %v60, 0
    %v76 = vsel %vm68, %v62, 0
    %v79 = vsel %vm68, %v64, 0
    %vm81 = vcmask 1043456
    %v83 = vsel %vm81, %v67, 0
    %85 = vmatprep.subr.mxu0 0.0
    %86 = vmatpush1.msra.mxu0 %v66
    %87 = vmatprep.subr.mxu0 0.0
    %88 = vmatpush1.msra.mxu0 %v83
    %89 = vmatprep.subr.mxu0 0.0
    %90 = vmatpush1.msra.mxu0 0.0
    %91 = vmatprep.subr.mxu0 0.0
    %92 = vmatpush1.msra.mxu0 0.0
    %93 = vmatprep.subr.mxu0 0.0
    %94 = vmatpush1.msra.mxu0 0.0
    %95 = vmatprep.subr.mxu0 0.0
    %96 = vmatpush1.msra.mxu0 0.0
    %97 = vmatprep.subr.mxu0 0.0
    %98 = vmatpush1.msra.mxu0 0.0
    %99 = vmatprep.subr.mxu0 0.0
    %100 = vmatpush1.msra.mxu0 0.0
    %101 = vmatprep.subr.mxu0 0.0
    %102 = vmatpush1.msra.mxu0 0.0
    %103 = vmatprep.subr.mxu0 0.0
    %104 = vmatpush1.msra.mxu0 0.0
    %105 = vmatprep.subr.mxu0 0.0
    %106 = vmatpush1.msra.mxu0 0.0
    %107 = vmatprep.subr.mxu0 0.0
    %108 = vmatpush1.msra.mxu0 0.0
    %109 = vmatprep.subr.mxu0 0.0
    %110 = vmatpush1.msra.mxu0 0.0
    %111 = vmatprep.subr.mxu0 0.0
    %112 = vmatpush1.msra.mxu0 0.0
    %113 = vmatprep.subr.mxu0 0.0
    %114 = vmatpush1.msra.mxu0 0.0
    %115 = vmatprep.subr.mxu0 0.0
    %116 = vmatpush1.msra.mxu0 0.0
    %117 = vmatprep.subr.mxu0 0.0
    %118 = vmatpush1.msra.mxu0 0.0
    %119 = vmatprep.subr.mxu0 0.0
    %120 = vmatpush1.msra.mxu0 0.0
    %121 = vmatprep.subr.mxu0 0.0
    %122 = vmatpush1.msra.mxu0 0.0
    %123 = vmatprep.subr.mxu0 0.0
    %124 = vmatpush1.msra.mxu0 0.0
    %125 = vmatprep.subr.mxu0 0.0
    %126 = vmatpush1.msra.mxu0 0.0
    %127 = vmatprep.subr.mxu0 0.0
    %128 = vmatpush1.msra.mxu0 0.0
    %129 = vmatprep.subr.mxu0 0.0
    %130 = vmatpush1.msra.mxu0 0.0
    %131 = vmatprep.subr.mxu0 0.0
    %132 = vmatpush1.msra.mxu0 0.0
    %133 = vmatprep.subr.mxu0 0.0
    %134 = vmatpush1.msra.mxu0 0.0
    %135 = vmatprep.subr.mxu0 0.0
    %136 = vmatpush1.msra.mxu0 0.0
    %137 = vmatprep.subr.mxu0 0.0
    %138 = vmatpush1.msra.mxu0 0.0
    %139 = vmatprep.subr.mxu0 0.0
    %140 = vmatpush1.msra.mxu0 0.0
    %141 = vmatprep.subr.mxu0 0.0
    %142 = vmatpush1.msra.mxu0 0.0
    %143 = vmatprep.subr.mxu0 0.0
    %144 = vmatpush1.msra.mxu0 0.0
    %145 = vmatprep.subr.mxu0 0.0
    %146 = vmatpush1.msra.mxu0 0.0
    %147 = vmatprep.subr.mxu0 0.0
    %148 = vmatpush1.msra.mxu0 0.0
    %149 = vmatprep.mubr.f32.mxu0 0.0
    %150 = vmatmul.mubr.f32.gmra.mrb[0].mxu0 %v70
    %v151 = vpop.f32.mrb[0].mxu0
    %v152 = vadd.f32 0.0, %v151
    %v153 = vpop.f32.mrb[0].mxu0
    %154 = vmatprep.mubr.f32.mxu0 0.0
    %155 = vmatmul.mubr.f32.gmra.mrb[0].mxu0 %v73
    %v156 = vpop.f32.mrb[0].mxu0
    %v157 = vadd.f32 0.0, %v156
    %v158 = vpop.f32.mrb[0].mxu0
    %159 = vmatprep.mubr.f32.mxu0 0.0
    %160 = vmatmul.mubr.f32.gmra.mrb[0].mxu0 %v76
    %v161 = vpop.f32.mrb[0].mxu0
    %v162 = vadd.f32 0.0, %v161
    %v163 = vpop.f32.mrb[0].mxu0
    %164 = vmatprep.mubr.f32.mxu0 0.0
    %165 = vmatmul.mubr.f32.gmra.mrb[0].mxu0 %v79
    %v166 = vpop.f32.mrb[0].mxu0
    %v167 = vadd.f32 0.0, %v166
    %v168 = vpop.f32.mrb[0].mxu0
    %169 = vdwg.mxu0
    %v171 = vsel %vm68, %v48, 0
    %v174 = vsel %vm68, %v50, 0
    %v177 = vsel %vm68, %v52, 0
    %v180 = vsel %vm68, %v54, 0
    %v183 = vsel %vm81, %v56, 0
    %185 = vmatprep.subr.mxu0 0.0
    %186 = vmatpush1.msra.mxu0 %v55
    %187 = vmatprep.subr.mxu0 0.0
    %188 = vmatpush1.msra.mxu0 %v183
    %189 = vmatprep.subr.mxu0 0.0
    %190 = vmatpush1.msra.mxu0 0.0
    %191 = vmatprep.subr.mxu0 0.0
    %192 = vmatpush1.msra.mxu0 0.0
    %193 = vmatprep.subr.mxu0 0.0
    %194 = vmatpush1.msra.mxu0 0.0
    %195 = vmatprep.subr.mxu0 0.0
    %196 = vmatpush1.msra.mxu0 0.0
    %197 = vmatprep.subr.mxu0 0.0
    %198 = vmatpush1.msra.mxu0 0.0
    %199 = vmatprep.subr.mxu0 0.0
    %200 = vmatpush1.msra.mxu0 0.0
    %201 = vmatprep.subr.mxu0 0.0
    %202 = vmatpush1.msra.mxu0 0.0
    %203 = vmatprep.subr.mxu0 0.0
    %204 = vmatpush1.msra.mxu0 0.0
    %205 = vmatprep.subr.mxu0 0.0
    %206 = vmatpush1.msra.mxu0 0.0
    %207 = vmatprep.subr.mxu0 0.0
    %208 = vmatpush1.msra.mxu0 0.0
    %209 = vmatprep.subr.mxu0 0.0
    %210 = vmatpush1.msra.mxu0 0.0
    %211 = vmatprep.subr.mxu0 0.0
    %212 = vmatpush1.msra.mxu0 0.0
    %213 = vmatprep.subr.mxu0 0.0
    %214 = vmatpush1.msra.mxu0 0.0
    %215 = vmatprep.subr.mxu0 0.0
    %216 = vmatpush1.msra.mxu0 0.0
    %217 = vmatprep.subr.mxu0 0.0
    %218 = vmatpush1.msra.mxu0 0.0
    %219 = vmatprep.subr.mxu0 0.0
    %220 = vmatpush1.msra.mxu0 0.0
    %221 = vmatprep.subr.mxu0 0.0
    %222 = vmatpush1.msra.mxu0 0.0
    %223 = vmatprep.subr.mxu0 0.0
    %224 = vmatpush1.msra.mxu0 0.0
    %225 = vmatprep.subr.mxu0 0.0
    %226 = vmatpush1.msra.mxu0 0.0
    %227 = vmatprep.subr.mxu0 0.0
    %228 = vmatpush1.msra.mxu0 0.0
    %229 = vmatprep.subr.mxu0 0.0
    %230 = vmatpush1.msra.mxu0 0.0
    %231 = vmatprep.subr.mxu0 0.0
    %232 = vmatpush1.msra.mxu0 0.0
    %233 = vmatprep.subr.mxu0 0.0
    %234 = vmatpush1.msra.mxu0 0.0
    %235 = vmatprep.subr.mxu0 0.0
    %236 = vmatpush1.msra.mxu0 0.0
    %237 = vmatprep.subr.mxu0 0.0
    %238 = vmatpush1.msra.mxu0 0.0
    %239 = vmatprep.subr.mxu0 0.0
    %240 = vmatpush1.msra.mxu0 0.0
    %241 = vmatprep.subr.mxu0 0.0
    %242 = vmatpush1.msra.mxu0 0.0
    %243 = vmatprep.subr.mxu0 0.0
    %244 = vmatpush1.msra.mxu0 0.0
    %245 = vmatprep.subr.mxu0 0.0
    %246 = vmatpush1.msra.mxu0 0.0
    %247 = vmatprep.subr.mxu0 0.0
    %248 = vmatpush1.msra.mxu0 0.0
    %249 = vmatprep.mubr.f32.mxu0 0.0
    %250 = vmatmul.mubr.f32.gmra.mrb[0].mxu0 %v171
    %v251 = vpop.f32.mrb[0].mxu0
    %v252 = vadd.f32 %v152, %v251
    %v253 = vpop.f32.mrb[0].mxu0
    %254 = vmatprep.mubr.f32.mxu0 0.0
    %255 = vmatmul.mubr.f32.gmra.mrb[0].mxu0 %v174
    %v256 = vpop.f32.mrb[0].mxu0
    %v257 = vadd.f32 %v157, %v256
    %v258 = vpop.f32.mrb[0].mxu0
    %259 = vmatprep.mubr.f32.mxu0 0.0
    %260 = vmatmul.mubr.f32.gmra.mrb[0].mxu0 %v177
    %v261 = vpop.f32.mrb[0].mxu0
    %v262 = vadd.f32 %v162, %v261
    %v263 = vpop.f32.mrb[0].mxu0
    %264 = vmatprep.mubr.f32.mxu0 0.0
    %265 = vmatmul.mubr.f32.gmra.mrb[0].mxu0 %v180
    %v266 = vpop.f32.mrb[0].mxu0
    %v267 = vadd.f32 %v167, %v266
    %v268 = vpop.f32.mrb[0].mxu0
    %269 = vdwg.mxu0
    %s270 = scalar_lea.vmem %s0, 2
    %v271 = vld [vmem:[%s270] ss:$2 sm:$0xff]
    %s272 = scalar_lea.vmem %s0, 18
    %v273 = vld [vmem:[%s272] ss:$2 sm:$0xff]
    %s274 = scalar_lea.vmem %s0, 34
    %v275 = vld [vmem:[%s274] ss:$2 sm:$0xff]
    %s276 = scalar_lea.vmem %s0, 50
    %v277 = vld [vmem:[%s276] ss:$2 sm:$0x1f]
    %s278 = scalar_lea.vmem %s1, 32
    %v279 = vld [vmem:[%s278] sm:$0xff]
    %v280 = vld [vmem:[%s278 + $0x8] sm:$0xf]
    %v282 = vsel %vm68, %v271, 0
    %v285 = vsel %vm68, %v273, 0
    %v288 = vsel %vm68, %v275, 0
    %v291 = vsel %vm68, %v277, 0
    %v294 = vsel %vm81, %v280, 0
    %296 = vmatprep.subr.mxu0 0.0
    %297 = vmatpush1.msra.mxu0 %v279
    %298 = vmatprep.subr.mxu0 0.0
    %299 = vmatpush1.msra.mxu0 %v294
    %300 = vmatprep.subr.mxu0 0.0
    %301 = vmatpush1.msra.mxu0 0.0
    %302 = vmatprep.subr.mxu0 0.0
    %303 = vmatpush1.msra.mxu0 0.0
    %304 = vmatprep.subr.mxu0 0.0
    %305 = vmatpush1.msra.mxu0 0.0
    %306 = vmatprep.subr.mxu0 0.0
    %307 = vmatpush1.msra.mxu0 0.0
    %308 = vmatprep.subr.mxu0 0.0
    %309 = vmatpush1.msra.mxu0 0.0
    %310 = vmatprep.subr.mxu0 0.0
    %311 = vmatpush1.msra.mxu0 0.0
    %312 = vmatprep.subr.mxu0 0.0
    %313 = vmatpush1.msra.mxu0 0.0
    %314 = vmatprep.subr.mxu0 0.0
    %315 = vmatpush1.msra.mxu0 0.0
    %316 = vmatprep.subr.mxu0 0.0
    %317 = vmatpush1.msra.mxu0 0.0
    %318 = vmatprep.subr.mxu0 0.0
    %319 = vmatpush1.msra.mxu0 0.0
    %320 = vmatprep.subr.mxu0 0.0
    %321 = vmatpush1.msra.mxu0 0.0
    %322 = vmatprep.subr.mxu0 0.0
    %323 = vmatpush1.msra.mxu0 0.0
    %324 = vmatprep.subr.mxu0 0.0
    %325 = vmatpush1.msra.mxu0 0.0
    %326 = vmatprep.subr.mxu0 0.0
    %327 = vmatpush1.msra.mxu0 0.0
    %328 = vmatprep.subr.mxu0 0.0
    %329 = vmatpush1.msra.mxu0 0.0
    %330 = vmatprep.subr.mxu0 0.0
    %331 = vmatpush1.msra.mxu0 0.0
    %332 = vmatprep.subr.mxu0 0.0
    %333 = vmatpush1.msra.mxu0 0.0
    %334 = vmatprep.subr.mxu0 0.0
    %335 = vmatpush1.msra.mxu0 0.0
    %336 = vmatprep.subr.mxu0 0.0
    %337 = vmatpush1.msra.mxu0 0.0
    %338 = vmatprep.subr.mxu0 0.0
    %339 = vmatpush1.msra.mxu0 0.0
    %340 = vmatprep.subr.mxu0 0.0
    %341 = vmatpush1.msra.mxu0 0.0
    %342 = vmatprep.subr.mxu0 0.0
    %343 = vmatpush1.msra.mxu0 0.0
    %344 = vmatprep.subr.mxu0 0.0
    %345 = vmatpush1.msra.mxu0 0.0
    %346 = vmatprep.subr.mxu0 0.0
    %347 = vmatpush1.msra.mxu0 0.0
    %348 = vmatprep.subr.mxu0 0.0
    %349 = vmatpush1.msra.mxu0 0.0
    %350 = vmatprep.subr.mxu0 0.0
    %351 = vmatpush1.msra.mxu0 0.0
    %352 = vmatprep.subr.mxu0 0.0
    %353 = vmatpush1.msra.mxu0 0.0
    %354 = vmatprep.subr.mxu0 0.0
    %355 = vmatpush1.msra.mxu0 0.0
    %356 = vmatprep.subr.mxu0 0.0
    %357 = vmatpush1.msra.mxu0 0.0
    %358 = vmatprep.subr.mxu0 0.0
    %359 = vmatpush1.msra.mxu0 0.0
    %360 = vmatprep.mubr.f32.mxu0 0.0
    %361 = vmatmul.mubr.f32.gmra.mrb[0].mxu0 %v282
    %v362 = vpop.f32.mrb[0].mxu0
    %v363 = vadd.f32 0.0, %v362
    %v364 = vpop.f32.mrb[0].mxu0
    %365 = vmatprep.mubr.f32.mxu0 0.0
    %366 = vmatmul.mubr.f32.gmra.mrb[0].mxu0 %v285
    %v367 = vpop.f32.mrb[0].mxu0
    %v368 = vadd.f32 0.0, %v367
    %v369 = vpop.f32.mrb[0].mxu0
    %370 = vmatprep.mubr.f32.mxu0 0.0
    %371 = vmatmul.mubr.f32.gmra.mrb[0].mxu0 %v288
    %v372 = vpop.f32.mrb[0].mxu0
    %v373 = vadd.f32 0.0, %v372
    %v374 = vpop.f32.mrb[0].mxu0
    %375 = vmatprep.mubr.f32.mxu0 0.0
    %376 = vmatmul.mubr.f32.gmra.mrb[0].mxu0 %v291
    %v377 = vpop.f32.mrb[0].mxu0
    %v378 = vadd.f32 0.0, %v377
    %v379 = vpop.f32.mrb[0].mxu0
    %380 = vdwg.mxu0
    %v381 = vadd.f32 %v252, %v363
    %v382 = vadd.f32 %v257, %v368
    %v383 = vadd.f32 %v262, %v373
    %v384 = vadd.f32 %v267, %v378
    %s385 = scalar_lea.vmem %s0, 3
    %v386 = vld [vmem:[%s385] ss:$2 sm:$0xff]
    %s387 = scalar_lea.vmem %s0, 19
    %v388 = vld [vmem:[%s387] ss:$2 sm:$0xff]
    %s389 = scalar_lea.vmem %s0, 35
    %v390 = vld [vmem:[%s389] ss:$2 sm:$0xff]
    %s391 = scalar_lea.vmem %s0, 51
    %v392 = vld [vmem:[%s391] ss:$2 sm:$0x1f]
    %s393 = scalar_lea.vmem %s1, 48
    %v394 = vld [vmem:[%s393] sm:$0xff]
    %v395 = vld [vmem:[%s393 + $0x8] sm:$0xf]
    %v397 = vsel %vm68, %v386, 0
    %v400 = vsel %vm68, %v388, 0
    %v403 = vsel %vm68, %v390, 0
    %v406 = vsel %vm68, %v392, 0
    %v409 = vsel %vm81, %v395, 0
    %411 = vmatprep.subr.mxu0 0.0
    %412 = vmatpush1.msra.mxu0 %v394
    %413 = vmatprep.subr.mxu0 0.0
    %414 = vmatpush1.msra.mxu0 %v409
    %415 = vmatprep.subr.mxu0 0.0
    %416 = vmatpush1.msra.mxu0 0.0
    %417 = vmatprep.subr.mxu0 0.0
    %418 = vmatpush1.msra.mxu0 0.0
    %419 = vmatprep.subr.mxu0 0.0
    %420 = vmatpush1.msra.mxu0 0.0
    %421 = vmatprep.subr.mxu0 0.0
    %422 = vmatpush1.msra.mxu0 0.0
    %423 = vmatprep.subr.mxu0 0.0
    %424 = vmatpush1.msra.mxu0 0.0
    %425 = vmatprep.subr.mxu0 0.0
    %426 = vmatpush1.msra.mxu0 0.0
    %427 = vmatprep.subr.mxu0 0.0
    %428 = vmatpush1.msra.mxu0 0.0
    %429 = vmatprep.subr.mxu0 0.0
    %430 = vmatpush1.msra.mxu0 0.0
    %431 = vmatprep.subr.mxu0 0.0
    %432 = vmatpush1.msra.mxu0 0.0
    %433 = vmatprep.subr.mxu0 0.0
    %434 = vmatpush1.msra.mxu0 0.0
    %435 = vmatprep.subr.mxu0 0.0
    %436 = vmatpush1.msra.mxu0 0.0
    %437 = vmatprep.subr.mxu0 0.0
    %438 = vmatpush1.msra.mxu0 0.0
    %439 = vmatprep.subr.mxu0 0.0
    %440 = vmatpush1.msra.mxu0 0.0
    %441 = vmatprep.subr.mxu0 0.0
    %442 = vmatpush1.msra.mxu0 0.0
    %443 = vmatprep.subr.mxu0 0.0
    %444 = vmatpush1.msra.mxu0 0.0
    %445 = vmatprep.subr.mxu0 0.0
    %446 = vmatpush1.msra.mxu0 0.0
    %447 = vmatprep.subr.mxu0 0.0
    %448 = vmatpush1.msra.mxu0 0.0
    %449 = vmatprep.subr.mxu0 0.0
    %450 = vmatpush1.msra.mxu0 0.0
    %451 = vmatprep.subr.mxu0 0.0
    %452 = vmatpush1.msra.mxu0 0.0
    %453 = vmatprep.subr.mxu0 0.0
    %454 = vmatpush1.msra.mxu0 0.0
    %455 = vmatprep.subr.mxu0 0.0
    %456 = vmatpush1.msra.mxu0 0.0
    %457 = vmatprep.subr.mxu0 0.0
    %458 = vmatpush1.msra.mxu0 0.0
    %459 = vmatprep.subr.mxu0 0.0
    %460 = vmatpush1.msra.mxu0 0.0
    %461 = vmatprep.subr.mxu0 0.0
    %462 = vmatpush1.msra.mxu0 0.0
    %463 = vmatprep.subr.mxu0 0.0
    %464 = vmatpush1.msra.mxu0 0.0
    %465 = vmatprep.subr.mxu0 0.0
    %466 = vmatpush1.msra.mxu0 0.0
    %467 = vmatprep.subr.mxu0 0.0
    %468 = vmatpush1.msra.mxu0 0.0
    %469 = vmatprep.subr.mxu0 0.0
    %470 = vmatpush1.msra.mxu0 0.0
    %471 = vmatprep.subr.mxu0 0.0
    %472 = vmatpush1.msra.mxu0 0.0
    %473 = vmatprep.subr.mxu0 0.0
    %474 = vmatpush1.msra.mxu0 0.0
    %475 = vmatprep.mubr.f32.mxu0 0.0
    %476 = vmatmul.mubr.f32.gmra.mrb[0].mxu0 %v397
    %v477 = vpop.f32.mrb[0].mxu0
    %v478 = vadd.f32 0.0, %v477
    %v479 = vpop.f32.mrb[0].mxu0
    %480 = vmatprep.mubr.f32.mxu0 0.0
    %481 = vmatmul.mubr.f32.gmra.mrb[0].mxu0 %v400
    %v482 = vpop.f32.mrb[0].mxu0
    %v483 = vadd.f32 0.0, %v482
    %v484 = vpop.f32.mrb[0].mxu0
    %485 = vmatprep.mubr.f32.mxu0 0.0
    %486 = vmatmul.mubr.f32.gmra.mrb[0].mxu0 %v403
    %v487 = vpop.f32.mrb[0].mxu0
    %v488 = vadd.f32 0.0, %v487
    %v489 = vpop.f32.mrb[0].mxu0
    %490 = vmatprep.mubr.f32.mxu0 0.0
    %491 = vmatmul.mubr.f32.gmra.mrb[0].mxu0 %v406
    %v492 = vpop.f32.mrb[0].mxu0
    %v493 = vadd.f32 0.0, %v492
    %v494 = vpop.f32.mrb[0].mxu0
    %495 = vdwg.mxu0
    %v496 = vadd.f32 %v381, %v478
    %v497 = vadd.f32 %v382, %v483
    %v498 = vadd.f32 %v383, %v488
    %v499 = vadd.f32 %v384, %v493
    %s500 = scalar_lea.vmem %s0, 4
    %v501 = vld [vmem:[%s500] ss:$2 sm:$0xff]
    %s502 = scalar_lea.vmem %s0, 20
    %v503 = vld [vmem:[%s502] ss:$2 sm:$0xff]
    %s504 = scalar_lea.vmem %s0, 36
    %v505 = vld [vmem:[%s504] ss:$2 sm:$0xff]
    %s506 = scalar_lea.vmem %s0, 52
    %v507 = vld [vmem:[%s506] ss:$2 sm:$0x1f]
    %s508 = scalar_lea.vmem %s1, 64
    %v509 = vld [vmem:[%s508] sm:$0xff]
    %v510 = vld [vmem:[%s508 + $0x8] sm:$0xf]
    %v512 = vsel %vm68, %v501, 0
    %v515 = vsel %vm68, %v503, 0
    %v518 = vsel %vm68, %v505, 0
    %v521 = vsel %vm68, %v507, 0
    %v524 = vsel %vm81, %v510, 0
    %526 = vmatprep.subr.mxu0 0.0
    %527 = vmatpush1.msra.mxu0 %v509
    %528 = vmatprep.subr.mxu0 0.0
    %529 = vmatpush1.msra.mxu0 %v524
    %530 = vmatprep.subr.mxu0 0.0
    %531 = vmatpush1.msra.mxu0 0.0
    %532 = vmatprep.subr.mxu0 0.0
    %533 = vmatpush1.msra.mxu0 0.0
    %534 = vmatprep.subr.mxu0 0.0
    %535 = vmatpush1.msra.mxu0 0.0
    %536 = vmatprep.subr.mxu0 0.0
    %537 = vmatpush1.msra.mxu0 0.0
    %538 = vmatprep.subr.mxu0 0.0
    %539 = vmatpush1.msra.mxu0 0.0
    %540 = vmatprep.subr.mxu0 0.0
    %541 = vmatpush1.msra.mxu0 0.0
    %542 = vmatprep.subr.mxu0 0.0
    %543 = vmatpush1.msra.mxu0 0.0
    %544 = vmatprep.subr.mxu0 0.0
    %545 = vmatpush1.msra.mxu0 0.0
    %546 = vmatprep.subr.mxu0 0.0
    %547 = vmatpush1.msra.mxu0 0.0
    %548 = vmatprep.subr.mxu0 0.0
    %549 = vmatpush1.msra.mxu0 0.0
    %550 = vmatprep.subr.mxu0 0.0
    %551 = vmatpush1.msra.mxu0 0.0
    %552 = vmatprep.subr.mxu0 0.0
    %553 = vmatpush1.msra.mxu0 0.0
    %554 = vmatprep.subr.mxu0 0.0
    %555 = vmatpush1.msra.mxu0 0.0
    %556 = vmatprep.subr.mxu0 0.0
    %557 = vmatpush1.msra.mxu0 0.0
    %558 = vmatprep.subr.mxu0 0.0
    %559 = vmatpush1.msra.mxu0 0.0
    %560 = vmatprep.subr.mxu0 0.0
    %561 = vmatpush1.msra.mxu0 0.0
    %562 = vmatprep.subr.mxu0 0.0
    %563 = vmatpush1.msra.mxu0 0.0
    %564 = vmatprep.subr.mxu0 0.0
    %565 = vmatpush1.msra.mxu0 0.0
    %566 = vmatprep.subr.mxu0 0.0
    %567 = vmatpush1.msra.mxu0 0.0
    %568 = vmatprep.subr.mxu0 0.0
    %569 = vmatpush1.msra.mxu0 0.0
    %570 = vmatprep.subr.mxu0 0.0
    %571 = vmatpush1.msra.mxu0 0.0
    %572 = vmatprep.subr.mxu0 0.0
    %573 = vmatpush1.msra.mxu0 0.0
    %574 = vmatprep.subr.mxu0 0.0
    %575 = vmatpush1.msra.mxu0 0.0
    %576 = vmatprep.subr.mxu0 0.0
    %577 = vmatpush1.msra.mxu0 0.0
    %578 = vmatprep.subr.mxu0 0.0
    %579 = vmatpush1.msra.mxu0 0.0
    %580 = vmatprep.subr.mxu0 0.0
    %581 = vmatpush1.msra.mxu0 0.0
    %582 = vmatprep.subr.mxu0 0.0
    %583 = vmatpush1.msra.mxu0 0.0
    %584 = vmatprep.subr.mxu0 0.0
    %585 = vmatpush1.msra.mxu0 0.0
    %586 = vmatprep.subr.mxu0 0.0
    %587 = vmatpush1.msra.mxu0 0.0
    %588 = vmatprep.subr.mxu0 0.0
    %589 = vmatpush1.msra.mxu0 0.0
    %590 = vmatprep.mubr.f32.mxu0 0.0
    %591 = vmatmul.mubr.f32.gmra.mrb[0].mxu0 %v512
    %v592 = vpop.f32.mrb[0].mxu0
    %v593 = vadd.f32 0.0, %v592
    %v594 = vpop.f32.mrb[0].mxu0
    %595 = vmatprep.mubr.f32.mxu0 0.0
    %596 = vmatmul.mubr.f32.gmra.mrb[0].mxu0 %v515
    %v597 = vpop.f32.mrb[0].mxu0
    %v598 = vadd.f32 0.0, %v597
    %v599 = vpop.f32.mrb[0].mxu0
    %600 = vmatprep.mubr.f32.mxu0 0.0
    %601 = vmatmul.mubr.f32.gmra.mrb[0].mxu0 %v518
    %v602 = vpop.f32.mrb[0].mxu0
    %v603 = vadd.f32 0.0, %v602
    %v604 = vpop.f32.mrb[0].mxu0
    %605 = vmatprep.mubr.f32.mxu0 0.0
    %606 = vmatmul.mubr.f32.gmra.mrb[0].mxu0 %v521
    %v607 = vpop.f32.mrb[0].mxu0
    %v608 = vadd.f32 0.0, %v607
    %v609 = vpop.f32.mrb[0].mxu0
    %610 = vdwg.mxu0
    %v611 = vadd.f32 %v496, %v593
    %v612 = vadd.f32 %v497, %v598
    %v613 = vadd.f32 %v498, %v603
    %v614 = vadd.f32 %v499, %v608
    %v615 = vld [vmem:[%s2] sm:$0x1]
    %v617 = vlaneseq
    %v618 = vshrl.u32 %v617, 7
    %v619 = vsub.s32 0, %v618
    %v620 = vrot.slane %v615, %v619
    %v622 = vadd.f32 %v611, %v620
    %v623 = vadd.f32 %v612, %v620
    %v624 = vadd.f32 %v613, %v620
    %v625 = vadd.f32 %v614, %v620
    %v626 = vmax.f32 %v622, 0.0
    %v627 = vmax.f32 %v623, 0.0
    %v628 = vmax.f32 %v624, 0.0
    %v629 = vmax.f32 %v625, 0.0
    %vm630 = vcmask 261120
    %631 = vst.msk [vmem:[#allocation2] sm:$0xff] %vm630, %v626
    %632 = vst.msk [vmem:[#allocation2 + $0x8] sm:$0xff] %vm630, %v627
    %633 = vst.msk [vmem:[#allocation2 + $0x10] sm:$0xff] %vm630, %v628
    %vm634 = vcmask 258048
    %635 = vst.msk [vmem:[#allocation2 + $0x18] sm:$0x1f] %vm634, %v629
    %s636 = scalar_lea.vmem %s0, 61
    %v637 = vld [vmem:[%s636] ss:$2 sm:$0xff]
    %s638 = scalar_lea.vmem %s0, 77
    %v639 = vld [vmem:[%s638] ss:$2 sm:$0xff]
    %s640 = scalar_lea.vmem %s0, 93
    %v641 = vld [vmem:[%s640] ss:$2 sm:$0xff]
    %s642 = scalar_lea.vmem %s0, 109
    %v643 = vld [vmem:[%s642] ss:$2 sm:$0x1f]
    %v644 = vld [vmem:[%s1] sm:$0xff]
    %v645 = vld [vmem:[%s1 + $0x8] sm:$0xf]
    %s646 = scalar_lea.vmem %s0, 62
    %v647 = vld [vmem:[%s646] ss:$2 sm:$0xff]
    %s648 = scalar_lea.vmem %s0, 78
    %v649 = vld [vmem:[%s648] ss:$2 sm:$0xff]
    %s650 = scalar_lea.vmem %s0, 94
    %v651 = vld [vmem:[%s650] ss:$2 sm:$0xff]
    %s652 = scalar_lea.vmem %s0, 110
    %v653 = vld [vmem:[%s652] ss:$2 sm:$0x1f]
    %v654 = vld [vmem:[%s65] sm:$0xff]
    %v655 = vld [vmem:[%s65 + $0x8] sm:$0xf]
    %v657 = vsel %vm68, %v647, 0
    %v660 = vsel %vm68, %v649, 0
    %v663 = vsel %vm68, %v651, 0
    %v666 = vsel %vm68, %v653, 0
    %v669 = vsel %vm81, %v655, 0
    %671 = vmatprep.subr.mxu0 0.0
    %672 = vmatpush1.msra.mxu0 %v654
    %673 = vmatprep.subr.mxu0 0.0
    %674 = vmatpush1.msra.mxu0 %v669
    %675 = vmatprep.subr.mxu0 0.0
    %676 = vmatpush1.msra.mxu0 0.0
    %677 = vmatprep.subr.mxu0 0.0
    %678 = vmatpush1.msra.mxu0 0.0
    %679 = vmatprep.subr.mxu0 0.0
    %680 = vmatpush1.msra.mxu0 0.0
    %681 = vmatprep.subr.mxu0 0.0
    %682 = vmatpush1.msra.mxu0 0.0
    %683 = vmatprep.subr.mxu0 0.0
    %684 = vmatpush1.msra.mxu0 0.0
    %685 = vmatprep.subr.mxu0 0.0
    %686 = vmatpush1.msra.mxu0 0.0
    %687 = vmatprep.subr.mxu0 0.0
    %688 = vmatpush1.msra.mxu0 0.0
    %689 = vmatprep.subr.mxu0 0.0
    %690 = vmatpush1.msra.mxu0 0.0
    %691 = vmatprep.subr.mxu0 0.0
    %692 = vmatpush1.msra.mxu0 0.0
    %693 = vmatprep.subr.mxu0 0.0
    %694 = vmatpush1.msra.mxu0 0.0
    %695 = vmatprep.subr.mxu0 0.0
    %696 = vmatpush1.msra.mxu0 0.0
    %697 = vmatprep.subr.mxu0 0.0
    %698 = vmatpush1.msra.mxu0 0.0
    %699 = vmatprep.subr.mxu0 0.0
    %700 = vmatpush1.msra.mxu0 0.0
    %701 = vmatprep.subr.mxu0 0.0
    %702 = vmatpush1.msra.mxu0 0.0
    %703 = vmatprep.subr.mxu0 0.0
    %704 = vmatpush1.msra.mxu0 0.0
    %705 = vmatprep.subr.mxu0 0.0
    %706 = vmatpush1.msra.mxu0 0.0
    %707 = vmatprep.subr.mxu0 0.0
    %708 = vmatpush1.msra.mxu0 0.0
    %709 = vmatprep.subr.mxu0 0.0
    %710 = vmatpush1.msra.mxu0 0.0
    %711 = vmatprep.subr.mxu0 0.0
    %712 = vmatpush1.msra.mxu0 0.0
    %713 = vmatprep.subr.mxu0 0.0
    %714 = vmatpush1.msra.mxu0 0.0
    %715 = vmatprep.subr.mxu0 0.0
    %716 = vmatpush1.msra.mxu0 0.0
    %717 = vmatprep.subr.mxu0 0.0
    %718 = vmatpush1.msra.mxu0 0.0
    %719 = vmatprep.subr.mxu0 0.0
    %720 = vmatpush1.msra.mxu0 0.0
    %721 = vmatprep.subr.mxu0 0.0
    %722 = vmatpush1.msra.mxu0 0.0
    %723 = vmatprep.subr.mxu0 0.0
    %724 = vmatpush1.msra.mxu0 0.0
    %725 = vmatprep.subr.mxu0 0.0
    %726 = vmatpush1.msra.mxu0 0.0
    %727 = vmatprep.subr.mxu0 0.0
    %728 = vmatpush1.msra.mxu0 0.0
    %729 = vmatprep.subr.mxu0 0.0
    %730 = vmatpush1.msra.mxu0 0.0
    %731 = vmatprep.subr.mxu0 0.0
    %732 = vmatpush1.msra.mxu0 0.0
    %733 = vmatprep.subr.mxu0 0.0
    %734 = vmatpush1.msra.mxu0 0.0
    %735 = vmatprep.mubr.f32.mxu0 0.0
    %736 = vmatmul.mubr.f32.gmra.mrb[0].mxu0 %v657
    %v737 = vpop.f32.mrb[0].mxu0
    %v738 = vadd.f32 0.0, %v737
    %v739 = vpop.f32.mrb[0].mxu0
    %740 = vmatprep.mubr.f32.mxu0 0.0
    %741 = vmatmul.mubr.f32.gmra.mrb[0].mxu0 %v660
    %v742 = vpop.f32.mrb[0].mxu0
    %v743 = vadd.f32 0.0, %v742
    %v744 = vpop.f32.mrb[0].mxu0
    %745 = vmatprep.mubr.f32.mxu0 0.0
    %746 = vmatmul.mubr.f32.gmra.mrb[0].mxu0 %v663
    %v747 = vpop.f32.mrb[0].mxu0
    %v748 = vadd.f32 0.0, %v747
    %v749 = vpop.f32.mrb[0].mxu0
    %750 = vmatprep.mubr.f32.mxu0 0.0
    %751 = vmatmul.mubr.f32.gmra.mrb[0].mxu0 %v666
    %v752 = vpop.f32.mrb[0].mxu0
    %v753 = vadd.f32 0.0, %v752
    %v754 = vpop.f32.mrb[0].mxu0
    %755 = vdwg.mxu0
    %v757 = vsel %vm68, %v637, 0
    %v760 = vsel %vm68, %v639, 0
    %v763 = vsel %vm68, %v641, 0
    %v766 = vsel %vm68, %v643, 0
    %v769 = vsel %vm81, %v645, 0
    %771 = vmatprep.subr.mxu0 0.0
    %772 = vmatpush1.msra.mxu0 %v644
    %773 = vmatprep.subr.mxu0 0.0
    %774 = vmatpush1.msra.mxu0 %v769
    %775 = vmatprep.subr.mxu0 0.0
    %776 = vmatpush1.msra.mxu0 0.0
    %777 = vmatprep.subr.mxu0 0.0
    %778 = vmatpush1.msra.mxu0 0.0
    %779 = vmatprep.subr.mxu0 0.0
    %780 = vmatpush1.msra.mxu0 0.0
    %781 = vmatprep.subr.mxu0 0.0
    %782 = vmatpush1.msra.mxu0 0.0
    %783 = vmatprep.subr.mxu0 0.0
    %784 = vmatpush1.msra.mxu0 0.0
    %785 = vmatprep.subr.mxu0 0.0
    %786 = vmatpush1.msra.mxu0 0.0
    %787 = vmatprep.subr.mxu0 0.0
    %788 = vmatpush1.msra.mxu0 0.0
    %789 = vmatprep.subr.mxu0 0.0
    %790 = vmatpush1.msra.mxu0 0.0
    %791 = vmatprep.subr.mxu0 0.0
    %792 = vmatpush1.msra.mxu0 0.0
    %793 = vmatprep.subr.mxu0 0.0
    %794 = vmatpush1.msra.mxu0 0.0
    %795 = vmatprep.subr.mxu0 0.0
    %796 = vmatpush1.msra.mxu0 0.0
    %797 = vmatprep.subr.mxu0 0.0
    %798 = vmatpush1.msra.mxu0 0.0
    %799 = vmatprep.subr.mxu0 0.0
    %800 = vmatpush1.msra.mxu0 0.0
    %801 = vmatprep.subr.mxu0 0.0
    %802 = vmatpush1.msra.mxu0 0.0
    %803 = vmatprep.subr.mxu0 0.0
    %804 = vmatpush1.msra.mxu0 0.0
    %805 = vmatprep.subr.mxu0 0.0
    %806 = vmatpush1.msra.mxu0 0.0
    %807 = vmatprep.subr.mxu0 0.0
    %808 = vmatpush1.msra.mxu0 0.0
    %809 = vmatprep.subr.mxu0 0.0
    %810 = vmatpush1.msra.mxu0 0.0
    %811 = vmatprep.subr.mxu0 0.0
    %812 = vmatpush1.msra.mxu0 0.0
    %813 = vmatprep.subr.mxu0 0.0
    %814 = vmatpush1.msra.mxu0 0.0
    %815 = vmatprep.subr.mxu0 0.0
    %816 = vmatpush1.msra.mxu0 0.0
    %817 = vmatprep.subr.mxu0 0.0
    %818 = vmatpush1.msra.mxu0 0.0
    %819 = vmatprep.subr.mxu0 0.0
    %820 = vmatpush1.msra.mxu0 0.0
    %821 = vmatprep.subr.mxu0 0.0
    %822 = vmatpush1.msra.mxu0 0.0
    %823 = vmatprep.subr.mxu0 0.0
    %824 = vmatpush1.msra.mxu0 0.0
    %825 = vmatprep.subr.mxu0 0.0
    %826 = vmatpush1.msra.mxu0 0.0
    %827 = vmatprep.subr.mxu0 0.0
    %828 = vmatpush1.msra.mxu0 0.0
    %829 = vmatprep.subr.mxu0 0.0
    %830 = vmatpush1.msra.mxu0 0.0
    %831 = vmatprep.subr.mxu0 0.0
    %832 = vmatpush1.msra.mxu0 0.0
    %833 = vmatprep.subr.mxu0 0.0
    %834 = vmatpush1.msra.mxu0 0.0
    %835 = vmatprep.mubr.f32.mxu0 0.0
    %836 = vmatmul.mubr.f32.gmra.mrb[0].mxu0 %v757
    %v837 = vpop.f32.mrb[0].mxu0
    %v838 = vadd.f32 %v738, %v837
    %v839 = vpop.f32.mrb[0].mxu0
    %840 = vmatprep.mubr.f32.mxu0 0.0
    %841 = vmatmul.mubr.f32.gmra.mrb[0].mxu0 %v760
    %v842 = vpop.f32.mrb[0].mxu0
    %v843 = vadd.f32 %v743, %v842
    %v844 = vpop.f32.mrb[0].mxu0
    %845 = vmatprep.mubr.f32.mxu0 0.0
    %846 = vmatmul.mubr.f32.gmra.mrb[0].mxu0 %v763
    %v847 = vpop.f32.mrb[0].mxu0
    %v848 = vadd.f32 %v748, %v847
    %v849 = vpop.f32.mrb[0].mxu0
    %850 = vmatprep.mubr.f32.mxu0 0.0
    %851 = vmatmul.mubr.f32.gmra.mrb[0].mxu0 %v766
    %v852 = vpop.f32.mrb[0].mxu0
    %v853 = vadd.f32 %v753, %v852
    %v854 = vpop.f32.mrb[0].mxu0
    %855 = vdwg.mxu0
    %s856 = scalar_lea.vmem %s0, 63
    %v857 = vld [vmem:[%s856] ss:$2 sm:$0xff]
    %s858 = scalar_lea.vmem %s0, 79
    %v859 = vld [vmem:[%s858] ss:$2 sm:$0xff]
    %s860 = scalar_lea.vmem %s0, 95
    %v861 = vld [vmem:[%s860] ss:$2 sm:$0xff]
    %s862 = scalar_lea.vmem %s0, 111
    %v863 = vld [vmem:[%s862] ss:$2 sm:$0x1f]
    %v864 = vld [vmem:[%s278] sm:$0xff]
    %v865 = vld [vmem:[%s278 + $0x8] sm:$0xf]
    %v867 = vsel %vm68, %v857, 0
    %v870 = vsel %vm68, %v859, 0
    %v873 = vsel %vm68, %v861, 0
    %v876 = vsel %vm68, %v863, 0
    %v879 = vsel %vm81, %v865, 0
    %881 = vmatprep.subr.mxu0 0.0
    %882 = vmatpush1.msra.mxu0 %v864
    %883 = vmatprep.subr.mxu0 0.0
    %884 = vmatpush1.msra.mxu0 %v879
    %885 = vmatprep.subr.mxu0 0.0
    %886 = vmatpush1.msra.mxu0 0.0
    %887 = vmatprep.subr.mxu0 0.0
    %888 = vmatpush1.msra.mxu0 0.0
    %889 = vmatprep.subr.mxu0 0.0
    %890 = vmatpush1.msra.mxu0 0.0
    %891 = vmatprep.subr.mxu0 0.0
    %892 = vmatpush1.msra.mxu0 0.0
    %893 = vmatprep.subr.mxu0 0.0
    %894 = vmatpush1.msra.mxu0 0.0
    %895 = vmatprep.subr.mxu0 0.0
    %896 = vmatpush1.msra.mxu0 0.0
    %897 = vmatprep.subr.mxu0 0.0
    %898 = vmatpush1.msra.mxu0 0.0
    %899 = vmatprep.subr.mxu0 0.0
    %900 = vmatpush1.msra.mxu0 0.0
    %901 = vmatprep.subr.mxu0 0.0
    %902 = vmatpush1.msra.mxu0 0.0
    %903 = vmatprep.subr.mxu0 0.0
    %904 = vmatpush1.msra.mxu0 0.0
    %905 = vmatprep.subr.mxu0 0.0
    %906 = vmatpush1.msra.mxu0 0.0
    %907 = vmatprep.subr.mxu0 0.0
    %908 = vmatpush1.msra.mxu0 0.0
    %909 = vmatprep.subr.mxu0 0.0
    %910 = vmatpush1.msra.mxu0 0.0
    %911 = vmatprep.subr.mxu0 0.0
    %912 = vmatpush1.msra.mxu0 0.0
    %913 = vmatprep.subr.mxu0 0.0
    %914 = vmatpush1.msra.mxu0 0.0
    %915 = vmatprep.subr.mxu0 0.0
    %916 = vmatpush1.msra.mxu0 0.0
    %917 = vmatprep.subr.mxu0 0.0
    %918 = vmatpush1.msra.mxu0 0.0
    %919 = vmatprep.subr.mxu0 0.0
    %920 = vmatpush1.msra.mxu0 0.0
    %921 = vmatprep.subr.mxu0 0.0
    %922 = vmatpush1.msra.mxu0 0.0
    %923 = vmatprep.subr.mxu0 0.0
    %924 = vmatpush1.msra.mxu0 0.0
    %925 = vmatprep.subr.mxu0 0.0
    %926 = vmatpush1.msra.mxu0 0.0
    %927 = vmatprep.subr.mxu0 0.0
    %928 = vmatpush1.msra.mxu0 0.0
    %929 = vmatprep.subr.mxu0 0.0
    %930 = vmatpush1.msra.mxu0 0.0
    %931 = vmatprep.subr.mxu0 0.0
    %932 = vmatpush1.msra.mxu0 0.0
    %933 = vmatprep.subr.mxu0 0.0
    %934 = vmatpush1.msra.mxu0 0.0
    %935 = vmatprep.subr.mxu0 0.0
    %936 = vmatpush1.msra.mxu0 0.0
    %937 = vmatprep.subr.mxu0 0.0
    %938 = vmatpush1.msra.mxu0 0.0
    %939 = vmatprep.subr.mxu0 0.0
    %940 = vmatpush1.msra.mxu0 0.0
    %941 = vmatprep.subr.mxu0 0.0
    %942 = vmatpush1.msra.mxu0 0.0
    %943 = vmatprep.subr.mxu0 0.0
    %944 = vmatpush1.msra.mxu0 0.0
    %945 = vmatprep.mubr.f32.mxu0 0.0
    %946 = vmatmul.mubr.f32.gmra.mrb[0].mxu0 %v867
    %v947 = vpop.f32.mrb[0].mxu0
    %v948 = vadd.f32 0.0, %v947
    %v949 = vpop.f32.mrb[0].mxu0
    %950 = vmatprep.mubr.f32.mxu0 0.0
    %951 = vmatmul.mubr.f32.gmra.mrb[0].mxu0 %v870
    %v952 = vpop.f32.mrb[0].mxu0
    %v953 = vadd.f32 0.0, %v952
    %v954 = vpop.f32.mrb[0].mxu0
    %955 = vmatprep.mubr.f32.mxu0 0.0
    %956 = vmatmul.mubr.f32.gmra.mrb[0].mxu0 %v873
    %v957 = vpop.f32.mrb[0].mxu0
    %v958 = vadd.f32 0.0, %v957
    %v959 = vpop.f32.mrb[0].mxu0
    %960 = vmatprep.mubr.f32.mxu0 0.0
    %961 = vmatmul.mubr.f32.gmra.mrb[0].mxu0 %v876
    %v962 = vpop.f32.mrb[0].mxu0
    %v963 = vadd.f32 0.0, %v962
    %v964 = vpop.f32.mrb[0].mxu0
    %965 = vdwg.mxu0
    %v966 = vadd.f32 %v838, %v948
    %v967 = vadd.f32 %v843, %v953
    %v968 = vadd.f32 %v848, %v958
    %v969 = vadd.f32 %v853, %v963
    %s970 = scalar_lea.vmem %s0, 64
    %v971 = vld [vmem:[%s970] ss:$2 sm:$0xff]
    %s972 = scalar_lea.vmem %s0, 80
    %v973 = vld [vmem:[%s972] ss:$2 sm:$0xff]
    %s974 = scalar_lea.vmem %s0, 96
    %v975 = vld [vmem:[%s974] ss:$2 sm:$0xff]
    %s976 = scalar_lea.vmem %s0, 112
    %v977 = vld [vmem:[%s976] ss:$2 sm:$0x1f]
    %v978 = vld [vmem:[%s393] sm:$0xff]
    %v979 = vld [vmem:[%s393 + $0x8] sm:$0xf]
    %v981 = vsel %vm68, %v971, 0
    %v984 = vsel %vm68, %v973, 0
    %v987 = vsel %vm68, %v975, 0
    %v990 = vsel %vm68, %v977, 0
    %v993 = vsel %vm81, %v979, 0
    %995 = vmatprep.subr.mxu0 0.0
    %996 = vmatpush1.msra.mxu0 %v978
    %997 = vmatprep.subr.mxu0 0.0
    %998 = vmatpush1.msra.mxu0 %v993
    %999 = vmatprep.subr.mxu0 0.0
    %1000 = vmatpush1.msra.mxu0 0.0
    %1001 = vmatprep.subr.mxu0 0.0
    %1002 = vmatpush1.msra.mxu0 0.0
    %1003 = vmatprep.subr.mxu0 0.0
    %1004 = vmatpush1.msra.mxu0 0.0
    %1005 = vmatprep.subr.mxu0 0.0
    %1006 = vmatpush1.msra.mxu0 0.0
    %1007 = vmatprep.subr.mxu0 0.0
    %1008 = vmatpush1.msra.mxu0 0.0
    %1009 = vmatprep.subr.mxu0 0.0
    %1010 = vmatpush1.msra.mxu0 0.0
    %1011 = vmatprep.subr.mxu0 0.0
    %1012 = vmatpush1.msra.mxu0 0.0
    %1013 = vmatprep.subr.mxu0 0.0
    %1014 = vmatpush1.msra.mxu0 0.0
    %1015 = vmatprep.subr.mxu0 0.0
    %1016 = vmatpush1.msra.mxu0 0.0
    %1017 = vmatprep.subr.mxu0 0.0
    %1018 = vmatpush1.msra.mxu0 0.0
    %1019 = vmatprep.subr.mxu0 0.0
    %1020 = vmatpush1.msra.mxu0 0.0
    %1021 = vmatprep.subr.mxu0 0.0
    %1022 = vmatpush1.msra.mxu0 0.0
    %1023 = vmatprep.subr.mxu0 0.0
    %1024 = vmatpush1.msra.mxu0 0.0
    %1025 = vmatprep.subr.mxu0 0.0
    %1026 = vmatpush1.msra.mxu0 0.0
    %1027 = vmatprep.subr.mxu0 0.0
    %1028 = vmatpush1.msra.mxu0 0.0
    %1029 = vmatprep.subr.mxu0 0.0
    %1030 = vmatpush1.msra.mxu0 0.0
    %1031 = vmatprep.subr.mxu0 0.0
    %1032 = vmatpush1.msra.mxu0 0.0
    %1033 = vmatprep.subr.mxu0 0.0
    %1034 = vmatpush1.msra.mxu0 0.0
    %1035 = vmatprep.subr.mxu0 0.0
    %1036 = vmatpush1.msra.mxu0 0.0
    %1037 = vmatprep.subr.mxu0 0.0
    %1038 = vmatpush1.msra.mxu0 0.0
    %1039 = vmatprep.subr.mxu0 0.0
    %1040 = vmatpush1.msra.mxu0 0.0
    %1041 = vmatprep.subr.mxu0 0.0
    %1042 = vmatpush1.msra.mxu0 0.0
    %1043 = vmatprep.subr.mxu0 0.0
    %1044 = vmatpush1.msra.mxu0 0.0
    %1045 = vmatprep.subr.mxu0 0.0
    %1046 = vmatpush1.msra.mxu0 0.0
    %1047 = vmatprep.subr.mxu0 0.0
    %1048 = vmatpush1.msra.mxu0 0.0
    %1049 = vmatprep.subr.mxu0 0.0
    %1050 = vmatpush1.msra.mxu0 0.0
    %1051 = vmatprep.subr.mxu0 0.0
    %1052 = vmatpush1.msra.mxu0 0.0
    %1053 = vmatprep.subr.mxu0 0.0
    %1054 = vmatpush1.msra.mxu0 0.0
    %1055 = vmatprep.subr.mxu0 0.0
    %1056 = vmatpush1.msra.mxu0 0.0
    %1057 = vmatprep.subr.mxu0 0.0
    %1058 = vmatpush1.msra.mxu0 0.0
    %1059 = vmatprep.mubr.f32.mxu0 0.0
    %1060 = vmatmul.mubr.f32.gmra.mrb[0].mxu0 %v981
    %v1061 = vpop.f32.mrb[0].mxu0
    %v1062 = vadd.f32 0.0, %v1061
    %v1063 = vpop.f32.mrb[0].mxu0
    %1064 = vmatprep.mubr.f32.mxu0 0.0
    %1065 = vmatmul.mubr.f32.gmra.mrb[0].mxu0 %v984
    %v1066 = vpop.f32.mrb[0].mxu0
    %v1067 = vadd.f32 0.0, %v1066
    %v1068 = vpop.f32.mrb[0].mxu0
    %1069 = vmatprep.mubr.f32.mxu0 0.0
    %1070 = vmatmul.mubr.f32.gmra.mrb[0].mxu0 %v987
    %v1071 = vpop.f32.mrb[0].mxu0
    %v1072 = vadd.f32 0.0, %v1071
    %v1073 = vpop.f32.mrb[0].mxu0
    %1074 = vmatprep.mubr.f32.mxu0 0.0
    %1075 = vmatmul.mubr.f32.gmra.mrb[0].mxu0 %v990
    %v1076 = vpop.f32.mrb[0].mxu0
    %v1077 = vadd.f32 0.0, %v1076
    %v1078 = vpop.f32.mrb[0].mxu0
    %1079 = vdwg.mxu0
    %v1080 = vadd.f32 %v966, %v1062
    %v1081 = vadd.f32 %v967, %v1067
    %v1082 = vadd.f32 %v968, %v1072
    %v1083 = vadd.f32 %v969, %v1077
    %s1084 = scalar_lea.vmem %s0, 65
    %v1085 = vld [vmem:[%s1084] ss:$2 sm:$0xff]
    %s1086 = scalar_lea.vmem %s0, 81
    %v1087 = vld [vmem:[%s1086] ss:$2 sm:$0xff]
    %s1088 = scalar_lea.vmem %s0, 97
    %v1089 = vld [vmem:[%s1088] ss:$2 sm:$0xff]
    %s1090 = scalar_lea.vmem %s0, 113
    %v1091 = vld [vmem:[%s1090] ss:$2 sm:$0x1f]
    %v1092 = vld [vmem:[%s508] sm:$0xff]
    %v1093 = vld [vmem:[%s508 + $0x8] sm:$0xf]
    %v1095 = vsel %vm68, %v1085, 0
    %v1098 = vsel %vm68, %v1087, 0
    %v1101 = vsel %vm68, %v1089, 0
    %v1104 = vsel %vm68, %v1091, 0
    %v1107 = vsel %vm81, %v1093, 0
    %1109 = vmatprep.subr.mxu0 0.0
    %1110 = vmatpush1.msra.mxu0 %v1092
    %1111 = vmatprep.subr.mxu0 0.0
    %1112 = vmatpush1.msra.mxu0 %v1107
    %1113 = vmatprep.subr.mxu0 0.0
    %1114 = vmatpush1.msra.mxu0 0.0
    %1115 = vmatprep.subr.mxu0 0.0
    %1116 = vmatpush1.msra.mxu0 0.0
    %1117 = vmatprep.subr.mxu0 0.0
    %1118 = vmatpush1.msra.mxu0 0.0
    %1119 = vmatprep.subr.mxu0 0.0
    %1120 = vmatpush1.msra.mxu0 0.0
    %1121 = vmatprep.subr.mxu0 0.0
    %1122 = vmatpush1.msra.mxu0 0.0
    %1123 = vmatprep.subr.mxu0 0.0
    %1124 = vmatpush1.msra.mxu0 0.0
    %1125 = vmatprep.subr.mxu0 0.0
    %1126 = vmatpush1.msra.mxu0 0.0
    %1127 = vmatprep.subr.mxu0 0.0
    %1128 = vmatpush1.msra.mxu0 0.0
    %1129 = vmatprep.subr.mxu0 0.0
    %1130 = vmatpush1.msra.mxu0 0.0
    %1131 = vmatprep.subr.mxu0 0.0
    %1132 = vmatpush1.msra.mxu0 0.0
    %1133 = vmatprep.subr.mxu0 0.0
    %1134 = vmatpush1.msra.mxu0 0.0
    %1135 = vmatprep.subr.mxu0 0.0
    %1136 = vmatpush1.msra.mxu0 0.0
    %1137 = vmatprep.subr.mxu0 0.0
    %1138 = vmatpush1.msra.mxu0 0.0
    %1139 = vmatprep.subr.mxu0 0.0
    %1140 = vmatpush1.msra.mxu0 0.0
    %1141 = vmatprep.subr.mxu0 0.0
    %1142 = vmatpush1.msra.mxu0 0.0
    %1143 = vmatprep.subr.mxu0 0.0
    %1144 = vmatpush1.msra.mxu0 0.0
    %1145 = vmatprep.subr.mxu0 0.0
    %1146 = vmatpush1.msra.mxu0 0.0
    %1147 = vmatprep.subr.mxu0 0.0
    %1148 = vmatpush1.msra.mxu0 0.0
    %1149 = vmatprep.subr.mxu0 0.0
    %1150 = vmatpush1.msra.mxu0 0.0
    %1151 = vmatprep.subr.mxu0 0.0
    %1152 = vmatpush1.msra.mxu0 0.0
    %1153 = vmatprep.subr.mxu0 0.0
    %1154 = vmatpush1.msra.mxu0 0.0
    %1155 = vmatprep.subr.mxu0 0.0
    %1156 = vmatpush1.msra.mxu0 0.0
    %1157 = vmatprep.subr.mxu0 0.0
    %1158 = vmatpush1.msra.mxu0 0.0
    %1159 = vmatprep.subr.mxu0 0.0
    %1160 = vmatpush1.msra.mxu0 0.0
    %1161 = vmatprep.subr.mxu0 0.0
    %1162 = vmatpush1.msra.mxu0 0.0
    %1163 = vmatprep.subr.mxu0 0.0
    %1164 = vmatpush1.msra.mxu0 0.0
    %1165 = vmatprep.subr.mxu0 0.0
    %1166 = vmatpush1.msra.mxu0 0.0
    %1167 = vmatprep.subr.mxu0 0.0
    %1168 = vmatpush1.msra.mxu0 0.0
    %1169 = vmatprep.subr.mxu0 0.0
    %1170 = vmatpush1.msra.mxu0 0.0
    %1171 = vmatprep.subr.mxu0 0.0
    %1172 = vmatpush1.msra.mxu0 0.0
    %1173 = vmatprep.mubr.f32.mxu0 0.0
    %1174 = vmatmul.mubr.f32.gmra.mrb[0].mxu0 %v1095
    %v1175 = vpop.f32.mrb[0].mxu0
    %v1176 = vadd.f32 0.0, %v1175
    %v1177 = vpop.f32.mrb[0].mxu0
    %1178 = vmatprep.mubr.f32.mxu0 0.0
    %1179 = vmatmul.mubr.f32.gmra.mrb[0].mxu0 %v1098
    %v1180 = vpop.f32.mrb[0].mxu0
    %v1181 = vadd.f32 0.0, %v1180
    %v1182 = vpop.f32.mrb[0].mxu0
    %1183 = vmatprep.mubr.f32.mxu0 0.0
    %1184 = vmatmul.mubr.f32.gmra.mrb[0].mxu0 %v1101
    %v1185 = vpop.f32.mrb[0].mxu0
    %v1186 = vadd.f32 0.0, %v1185
    %v1187 = vpop.f32.mrb[0].mxu0
    %1188 = vmatprep.mubr.f32.mxu0 0.0
    %1189 = vmatmul.mubr.f32.gmra.mrb[0].mxu0 %v1104
    %v1190 = vpop.f32.mrb[0].mxu0
    %v1191 = vadd.f32 0.0, %v1190
    %v1192 = vpop.f32.mrb[0].mxu0
    %1193 = vdwg.mxu0
    %v1194 = vadd.f32 %v1080, %v1176
    %v1195 = vadd.f32 %v1081, %v1181
    %v1196 = vadd.f32 %v1082, %v1186
    %v1197 = vadd.f32 %v1083, %v1191
    %v1198 = vld [vmem:[%s2] sm:$0x1]
    %v1200 = vlaneseq
    %v1201 = vshrl.u32 %v1200, 7
    %v1202 = vsub.s32 0, %v1201
    %v1203 = vrot.slane %v1198, %v1202
    %v1205 = vadd.f32 %v1194, %v1203
    %v1206 = vadd.f32 %v1195, %v1203
    %v1207 = vadd.f32 %v1196, %v1203
    %v1208 = vadd.f32 %v1197, %v1203
    %v1209 = vmax.f32 %v1205, 0.0
    %v1210 = vmax.f32 %v1206, 0.0
    %v1211 = vmax.f32 %v1207, 0.0
    %v1212 = vmax.f32 %v1208, 0.0
    %1213 = vst.msk [vmem:[#allocation2 + $0x1d] sm:$0xff] %vm630, %v1209
    %1214 = vst.msk [vmem:[#allocation2 + $0x25] sm:$0xff] %vm630, %v1210
    %1215 = vst.msk [vmem:[#allocation2 + $0x2d] sm:$0xff] %vm630, %v1211
    %1216 = vst.msk [vmem:[#allocation2 + $0x35] sm:$0x1f] %vm634, %v1212
    %v1217 = vld [vmem:[#allocation2] ss:$2 sm:$0xff]
    %s1218 = scalar_lea.vmem [#allocation2], 16
    %v1219 = vld [vmem:[%s1218] ss:$2 sm:$0x1f]
    %v1220 = vld [vmem:[%s3] sm:$0xff]
    %v1221 = vld [vmem:[%s3 + $0x8] sm:$0xff]
    %v1222 = vld [vmem:[%s3 + $0x10] sm:$0xff]
    %v1223 = vld [vmem:[%s3 + $0x18] sm:$0xff]
    %s1224 = scalar_lea.vmem [#allocation2], 1
    %v1225 = vld [vmem:[%s1224] ss:$2 sm:$0xff]
    %s1226 = scalar_lea.vmem [#allocation2], 17
    %v1227 = vld [vmem:[%s1226] ss:$2 sm:$0x1f]
    %s1228 = scalar_lea.vmem %s3, 32
    %v1229 = vld [vmem:[%s1228] sm:$0xff]
    %v1230 = vld [vmem:[%s1228 + $0x8] sm:$0xff]
    %v1231 = vld [vmem:[%s1228 + $0x10] sm:$0xff]
    %v1232 = vld [vmem:[%s1228 + $0x18] sm:$0xff]
    %v1234 = vsel %vm630, %v1225, 0
    %v1237 = vsel %vm630, %v1227, 0
    %1239 = vmatprep.subr.mxu0 0.0
    %1240 = vmatpush1.msra.mxu0 %v1229
    %1241 = vmatprep.subr.mxu0 0.0
    %1242 = vmatpush1.msra.mxu0 %v1230
    %1243 = vmatprep.subr.mxu0 0.0
    %1244 = vmatpush1.msra.mxu0 %v1231
    %1245 = vmatprep.subr.mxu0 0.0
    %1246 = vmatpush1.msra.mxu0 %v1232
    %1247 = vmatprep.subr.mxu0 0.0
    %1248 = vmatpush1.msra.mxu0 0.0
    %1249 = vmatprep.subr.mxu0 0.0
    %1250 = vmatpush1.msra.mxu0 0.0
    %1251 = vmatprep.subr.mxu0 0.0
    %1252 = vmatpush1.msra.mxu0 0.0
    %1253 = vmatprep.subr.mxu0 0.0
    %1254 = vmatpush1.msra.mxu0 0.0
    %1255 = vmatprep.subr.mxu0 0.0
    %1256 = vmatpush1.msra.mxu0 0.0
    %1257 = vmatprep.subr.mxu0 0.0
    %1258 = vmatpush1.msra.mxu0 0.0
    %1259 = vmatprep.subr.mxu0 0.0
    %1260 = vmatpush1.msra.mxu0 0.0
    %1261 = vmatprep.subr.mxu0 0.0
    %1262 = vmatpush1.msra.mxu0 0.0
    %1263 = vmatprep.subr.mxu0 0.0
    %1264 = vmatpush1.msra.mxu0 0.0
    %1265 = vmatprep.subr.mxu0 0.0
    %1266 = vmatpush1.msra.mxu0 0.0
    %1267 = vmatprep.subr.mxu0 0.0
    %1268 = vmatpush1.msra.mxu0 0.0
    %1269 = vmatprep.subr.mxu0 0.0
    %1270 = vmatpush1.msra.mxu0 0.0
    %1271 = vmatprep.subr.mxu0 0.0
    %1272 = vmatpush1.msra.mxu0 0.0
    %1273 = vmatprep.subr.mxu0 0.0
    %1274 = vmatpush1.msra.mxu0 0.0
    %1275 = vmatprep.subr.mxu0 0.0
    %1276 = vmatpush1.msra.mxu0 0.0
    %1277 = vmatprep.subr.mxu0 0.0
    %1278 = vmatpush1.msra.mxu0 0.0
    %1279 = vmatprep.subr.mxu0 0.0
    %1280 = vmatpush1.msra.mxu0 0.0
    %1281 = vmatprep.subr.mxu0 0.0
    %1282 = vmatpush1.msra.mxu0 0.0
    %1283 = vmatprep.subr.mxu0 0.0
    %1284 = vmatpush1.msra.mxu0 0.0
    %1285 = vmatprep.subr.mxu0 0.0
    %1286 = vmatpush1.msra.mxu0 0.0
    %1287 = vmatprep.subr.mxu0 0.0
    %1288 = vmatpush1.msra.mxu0 0.0
    %1289 = vmatprep.subr.mxu0 0.0
    %1290 = vmatpush1.msra.mxu0 0.0
    %1291 = vmatprep.subr.mxu0 0.0
    %1292 = vmatpush1.msra.mxu0 0.0
    %1293 = vmatprep.subr.mxu0 0.0
    %1294 = vmatpush1.msra.mxu0 0.0
    %1295 = vmatprep.subr.mxu0 0.0
    %1296 = vmatpush1.msra.mxu0 0.0
    %1297 = vmatprep.subr.mxu0 0.0
    %1298 = vmatpush1.msra.mxu0 0.0
    %1299 = vmatprep.subr.mxu0 0.0
    %1300 = vmatpush1.msra.mxu0 0.0
    %1301 = vmatprep.subr.mxu0 0.0
    %1302 = vmatpush1.msra.mxu0 0.0
    %1303 = vmatprep.mubr.f32.mxu0 0.0
    %1304 = vmatmul.mubr.f32.gmra.mrb[0].mxu0 %v1234
    %v1305 = vpop.f32.mrb[0].mxu0
    %v1306 = vadd.f32 0.0, %v1305
    %v1307 = vpop.f32.mrb[0].mxu0
    %1308 = vmatprep.mubr.f32.mxu0 0.0
    %1309 = vmatmul.mubr.f32.gmra.mrb[0].mxu0 %v1237
    %v1310 = vpop.f32.mrb[0].mxu0
    %v1311 = vadd.f32 0.0, %v1310
    %v1312 = vpop.f32.mrb[0].mxu0
    %1313 = vdwg.mxu0
    %v1315 = vsel %vm630, %v1217, 0
    %v1318 = vsel %vm630, %v1219, 0
    %1320 = vmatprep.subr.mxu0 0.0
    %1321 = vmatpush1.msra.mxu0 %v1220
    %1322 = vmatprep.subr.mxu0 0.0
    %1323 = vmatpush1.msra.mxu0 %v1221
    %1324 = vmatprep.subr.mxu0 0.0
    %1325 = vmatpush1.msra.mxu0 %v1222
    %1326 = vmatprep.subr.mxu0 0.0
    %1327 = vmatpush1.msra.mxu0 %v1223
    %1328 = vmatprep.subr.mxu0 0.0
    %1329 = vmatpush1.msra.mxu0 0.0
    %1330 = vmatprep.subr.mxu0 0.0
    %1331 = vmatpush1.msra.mxu0 0.0
    %1332 = vmatprep.subr.mxu0 0.0
    %1333 = vmatpush1.msra.mxu0 0.0
    %1334 = vmatprep.subr.mxu0 0.0
    %1335 = vmatpush1.msra.mxu0 0.0
    %1336 = vmatprep.subr.mxu0 0.0
    %1337 = vmatpush1.msra.mxu0 0.0
    %1338 = vmatprep.subr.mxu0 0.0
    %1339 = vmatpush1.msra.mxu0 0.0
    %1340 = vmatprep.subr.mxu0 0.0
    %1341 = vmatpush1.msra.mxu0 0.0
    %1342 = vmatprep.subr.mxu0 0.0
    %1343 = vmatpush1.msra.mxu0 0.0
    %1344 = vmatprep.subr.mxu0 0.0
    %1345 = vmatpush1.msra.mxu0 0.0
    %1346 = vmatprep.subr.mxu0 0.0
    %1347 = vmatpush1.msra.mxu0 0.0
    %1348 = vmatprep.subr.mxu0 0.0
    %1349 = vmatpush1.msra.mxu0 0.0
    %1350 = vmatprep.subr.mxu0 0.0
    %1351 = vmatpush1.msra.mxu0 0.0
    %1352 = vmatprep.subr.mxu0 0.0
    %1353 = vmatpush1.msra.mxu0 0.0
    %1354 = vmatprep.subr.mxu0 0.0
    %1355 = vmatpush1.msra.mxu0 0.0
    %1356 = vmatprep.subr.mxu0 0.0
    %1357 = vmatpush1.msra.mxu0 0.0
    %1358 = vmatprep.subr.mxu0 0.0
    %1359 = vmatpush1.msra.mxu0 0.0
    %1360 = vmatprep.subr.mxu0 0.0
    %1361 = vmatpush1.msra.mxu0 0.0
    %1362 = vmatprep.subr.mxu0 0.0
    %1363 = vmatpush1.msra.mxu0 0.0
    %1364 = vmatprep.subr.mxu0 0.0
    %1365 = vmatpush1.msra.mxu0 0.0
    %1366 = vmatprep.subr.mxu0 0.0
    %1367 = vmatpush1.msra.mxu0 0.0
    %1368 = vmatprep.subr.mxu0 0.0
    %1369 = vmatpush1.msra.mxu0 0.0
    %1370 = vmatprep.subr.mxu0 0.0
    %1371 = vmatpush1.msra.mxu0 0.0
    %1372 = vmatprep.subr.mxu0 0.0
    %1373 = vmatpush1.msra.mxu0 0.0
    %1374 = vmatprep.subr.mxu0 0.0
    %1375 = vmatpush1.msra.mxu0 0.0
    %1376 = vmatprep.subr.mxu0 0.0
    %1377 = vmatpush1.msra.mxu0 0.0
    %1378 = vmatprep.subr.mxu0 0.0
    %1379 = vmatpush1.msra.mxu0 0.0
    %1380 = vmatprep.subr.mxu0 0.0
    %1381 = vmatpush1.msra.mxu0 0.0
    %1382 = vmatprep.subr.mxu0 0.0
    %1383 = vmatpush1.msra.mxu0 0.0
    %1384 = vmatprep.mubr.f32.mxu0 0.0
    %1385 = vmatmul.mubr.f32.gmra.mrb[0].mxu0 %v1315
    %v1386 = vpop.f32.mrb[0].mxu0
    %v1387 = vadd.f32 %v1306, %v1386
    %v1388 = vpop.f32.mrb[0].mxu0
    %1389 = vmatprep.mubr.f32.mxu0 0.0
    %1390 = vmatmul.mubr.f32.gmra.mrb[0].mxu0 %v1318
    %v1391 = vpop.f32.mrb[0].mxu0
    %v1392 = vadd.f32 %v1311, %v1391
    %v1393 = vpop.f32.mrb[0].mxu0
    %1394 = vdwg.mxu0
    %s1395 = scalar_lea.vmem [#allocation2], 2
    %v1396 = vld [vmem:[%s1395] ss:$2 sm:$0xff]
    %s1397 = scalar_lea.vmem [#allocation2], 18
    %v1398 = vld [vmem:[%s1397] ss:$2 sm:$0x1f]
    %s1399 = scalar_lea.vmem %s3, 64
    %v1400 = vld [vmem:[%s1399] sm:$0xff]
    %v1401 = vld [vmem:[%s1399 + $0x8] sm:$0xff]
    %v1402 = vld [vmem:[%s1399 + $0x10] sm:$0xff]
    %v1403 = vld [vmem:[%s1399 + $0x18] sm:$0xff]
    %v1405 = vsel %vm630, %v1396, 0
    %v1408 = vsel %vm630, %v1398, 0
    %1410 = vmatprep.subr.mxu0 0.0
    %1411 = vmatpush1.msra.mxu0 %v1400
    %1412 = vmatprep.subr.mxu0 0.0
    %1413 = vmatpush1.msra.mxu0 %v1401
    %1414 = vmatprep.subr.mxu0 0.0
    %1415 = vmatpush1.msra.mxu0 %v1402
    %1416 = vmatprep.subr.mxu0 0.0
    %1417 = vmatpush1.msra.mxu0 %v1403
    %1418 = vmatprep.subr.mxu0 0.0
    %1419 = vmatpush1.msra.mxu0 0.0
    %1420 = vmatprep.subr.mxu0 0.0
    %1421 = vmatpush1.msra.mxu0 0.0
    %1422 = vmatprep.subr.mxu0 0.0
    %1423 = vmatpush1.msra.mxu0 0.0
    %1424 = vmatprep.subr.mxu0 0.0
    %1425 = vmatpush1.msra.mxu0 0.0
    %1426 = vmatprep.subr.mxu0 0.0
    %1427 = vmatpush1.msra.mxu0 0.0
    %1428 = vmatprep.subr.mxu0 0.0
    %1429 = vmatpush1.msra.mxu0 0.0
    %1430 = vmatprep.subr.mxu0 0.0
    %1431 = vmatpush1.msra.mxu0 0.0
    %1432 = vmatprep.subr.mxu0 0.0
    %1433 = vmatpush1.msra.mxu0 0.0
    %1434 = vmatprep.subr.mxu0 0.0
    %1435 = vmatpush1.msra.mxu0 0.0
    %1436 = vmatprep.subr.mxu0 0.0
    %1437 = vmatpush1.msra.mxu0 0.0
    %1438 = vmatprep.subr.mxu0 0.0
    %1439 = vmatpush1.msra.mxu0 0.0
    %1440 = vmatprep.subr.mxu0 0.0
    %1441 = vmatpush1.msra.mxu0 0.0
    %1442 = vmatprep.subr.mxu0 0.0
    %1443 = vmatpush1.msra.mxu0 0.0
    %1444 = vmatprep.subr.mxu0 0.0
    %1445 = vmatpush1.msra.mxu0 0.0
    %1446 = vmatprep.subr.mxu0 0.0
    %1447 = vmatpush1.msra.mxu0 0.0
    %1448 = vmatprep.subr.mxu0 0.0
    %1449 = vmatpush1.msra.mxu0 0.0
    %1450 = vmatprep.subr.mxu0 0.0
    %1451 = vmatpush1.msra.mxu0 0.0
    %1452 = vmatprep.subr.mxu0 0.0
    %1453 = vmatpush1.msra.mxu0 0.0
    %1454 = vmatprep.subr.mxu0 0.0
    %1455 = vmatpush1.msra.mxu0 0.0
    %1456 = vmatprep.subr.mxu0 0.0
    %1457 = vmatpush1.msra.mxu0 0.0
    %1458 = vmatprep.subr.mxu0 0.0
    %1459 = vmatpush1.msra.mxu0 0.0
    %1460 = vmatprep.subr.mxu0 0.0
    %1461 = vmatpush1.msra.mxu0 0.0
    %1462 = vmatprep.subr.mxu0 0.0
    %1463 = vmatpush1.msra.mxu0 0.0
    %1464 = vmatprep.subr.mxu0 0.0
    %1465 = vmatpush1.msra.mxu0 0.0
    %1466 = vmatprep.subr.mxu0 0.0
    %1467 = vmatpush1.msra.mxu0 0.0
    %1468 = vmatprep.subr.mxu0 0.0
    %1469 = vmatpush1.msra.mxu0 0.0
    %1470 = vmatprep.subr.mxu0 0.0
    %1471 = vmatpush1.msra.mxu0 0.0
    %1472 = vmatprep.subr.mxu0 0.0
    %1473 = vmatpush1.msra.mxu0 0.0
    %1474 = vmatprep.mubr.f32.mxu0 0.0
    %1475 = vmatmul.mubr.f32.gmra.mrb[0].mxu0 %v1405
    %v1476 = vpop.f32.mrb[0].mxu0
    %v1477 = vadd.f32 0.0, %v1476
    %v1478 = vpop.f32.mrb[0].mxu0
    %1479 = vmatprep.mubr.f32.mxu0 0.0
    %1480 = vmatmul.mubr.f32.gmra.mrb[0].mxu0 %v1408
    %v1481 = vpop.f32.mrb[0].mxu0
    %v1482 = vadd.f32 0.0, %v1481
    %v1483 = vpop.f32.mrb[0].mxu0
    %1484 = vdwg.mxu0
    %v1485 = vadd.f32 %v1387, %v1477
    %v1486 = vadd.f32 %v1392, %v1482
    %s1487 = scalar_lea.vmem [#allocation2], 3
    %v1488 = vld [vmem:[%s1487] ss:$2 sm:$0xff]
    %s1489 = scalar_lea.vmem [#allocation2], 19
    %v1490 = vld [vmem:[%s1489] ss:$2 sm:$0x1f]
    %s1491 = scalar_lea.vmem %s3, 96
    %v1492 = vld [vmem:[%s1491] sm:$0xff]
    %v1493 = vld [vmem:[%s1491 + $0x8] sm:$0xff]
    %v1494 = vld [vmem:[%s1491 + $0x10] sm:$0xff]
    %v1495 = vld [vmem:[%s1491 + $0x18] sm:$0xff]
    %v1497 = vsel %vm630, %v1488, 0
    %v1500 = vsel %vm630, %v1490, 0
    %1502 = vmatprep.subr.mxu0 0.0
    %1503 = vmatpush1.msra.mxu0 %v1492
    %1504 = vmatprep.subr.mxu0 0.0
    %1505 = vmatpush1.msra.mxu0 %v1493
    %1506 = vmatprep.subr.mxu0 0.0
    %1507 = vmatpush1.msra.mxu0 %v1494
    %1508 = vmatprep.subr.mxu0 0.0
    %1509 = vmatpush1.msra.mxu0 %v1495
    %1510 = vmatprep.subr.mxu0 0.0
    %1511 = vmatpush1.msra.mxu0 0.0
    %1512 = vmatprep.subr.mxu0 0.0
    %1513 = vmatpush1.msra.mxu0 0.0
    %1514 = vmatprep.subr.mxu0 0.0
    %1515 = vmatpush1.msra.mxu0 0.0
    %1516 = vmatprep.subr.mxu0 0.0
    %1517 = vmatpush1.msra.mxu0 0.0
    %1518 = vmatprep.subr.mxu0 0.0
    %1519 = vmatpush1.msra.mxu0 0.0
    %1520 = vmatprep.subr.mxu0 0.0
    %1521 = vmatpush1.msra.mxu0 0.0
    %1522 = vmatprep.subr.mxu0 0.0
    %1523 = vmatpush1.msra.mxu0 0.0
    %1524 = vmatprep.subr.mxu0 0.0
    %1525 = vmatpush1.msra.mxu0 0.0
    %1526 = vmatprep.subr.mxu0 0.0
    %1527 = vmatpush1.msra.mxu0 0.0
    %1528 = vmatprep.subr.mxu0 0.0
    %1529 = vmatpush1.msra.mxu0 0.0
    %1530 = vmatprep.subr.mxu0 0.0
    %1531 = vmatpush1.msra.mxu0 0.0
    %1532 = vmatprep.subr.mxu0 0.0
    %1533 = vmatpush1.msra.mxu0 0.0
    %1534 = vmatprep.subr.mxu0 0.0
    %1535 = vmatpush1.msra.mxu0 0.0
    %1536 = vmatprep.subr.mxu0 0.0
    %1537 = vmatpush1.msra.mxu0 0.0
    %1538 = vmatprep.subr.mxu0 0.0
    %1539 = vmatpush1.msra.mxu0 0.0
    %1540 = vmatprep.subr.mxu0 0.0
    %1541 = vmatpush1.msra.mxu0 0.0
    %1542 = vmatprep.subr.mxu0 0.0
    %1543 = vmatpush1.msra.mxu0 0.0
    %1544 = vmatprep.subr.mxu0 0.0
    %1545 = vmatpush1.msra.mxu0 0.0
    %1546 = vmatprep.subr.mxu0 0.0
    %1547 = vmatpush1.msra.mxu0 0.0
    %1548 = vmatprep.subr.mxu0 0.0
    %1549 = vmatpush1.msra.mxu0 0.0
    %1550 = vmatprep.subr.mxu0 0.0
    %1551 = vmatpush1.msra.mxu0 0.0
    %1552 = vmatprep.subr.mxu0 0.0
    %1553 = vmatpush1.msra.mxu0 0.0
    %1554 = vmatprep.subr.mxu0 0.0
    %1555 = vmatpush1.msra.mxu0 0.0
    %1556 = vmatprep.subr.mxu0 0.0
    %1557 = vmatpush1.msra.mxu0 0.0
    %1558 = vmatprep.subr.mxu0 0.0
    %1559 = vmatpush1.msra.mxu0 0.0
    %1560 = vmatprep.subr.mxu0 0.0
    %1561 = vmatpush1.msra.mxu0 0.0
    %1562 = vmatprep.subr.mxu0 0.0
    %1563 = vmatpush1.msra.mxu0 0.0
    %1564 = vmatprep.subr.mxu0 0.0
    %1565 = vmatpush1.msra.mxu0 0.0
    %1566 = vmatprep.mubr.f32.mxu0 0.0
    %1567 = vmatmul.mubr.f32.gmra.mrb[0].mxu0 %v1497
    %v1568 = vpop.f32.mrb[0].mxu0
    %v1569 = vadd.f32 0.0, %v1568
    %v1570 = vpop.f32.mrb[0].mxu0
    %1571 = vmatprep.mubr.f32.mxu0 0.0
    %1572 = vmatmul.mubr.f32.gmra.mrb[0].mxu0 %v1500
    %v1573 = vpop.f32.mrb[0].mxu0
    %v1574 = vadd.f32 0.0, %v1573
    %v1575 = vpop.f32.mrb[0].mxu0
    %1576 = vdwg.mxu0
    %v1577 = vadd.f32 %v1485, %v1569
    %v1578 = vadd.f32 %v1486, %v1574
    %s1579 = scalar_lea.vmem [#allocation2], 4
    %v1580 = vld [vmem:[%s1579] ss:$2 sm:$0xff]
    %s1581 = scalar_lea.vmem [#allocation2], 20
    %v1582 = vld [vmem:[%s1581] ss:$2 sm:$0x1f]
    %s1583 = scalar_lea.vmem %s3, 128
    %v1584 = vld [vmem:[%s1583] sm:$0xff]
    %v1585 = vld [vmem:[%s1583 + $0x8] sm:$0xff]
    %v1586 = vld [vmem:[%s1583 + $0x10] sm:$0xff]
    %v1587 = vld [vmem:[%s1583 + $0x18] sm:$0xff]
    %v1589 = vsel %vm630, %v1580, 0
    %v1592 = vsel %vm630, %v1582, 0
    %1594 = vmatprep.subr.mxu0 0.0
    %1595 = vmatpush1.msra.mxu0 %v1584
    %1596 = vmatprep.subr.mxu0 0.0
    %1597 = vmatpush1.msra.mxu0 %v1585
    %1598 = vmatprep.subr.mxu0 0.0
    %1599 = vmatpush1.msra.mxu0 %v1586
    %1600 = vmatprep.subr.mxu0 0.0
    %1601 = vmatpush1.msra.mxu0 %v1587
    %1602 = vmatprep.subr.mxu0 0.0
    %1603 = vmatpush1.msra.mxu0 0.0
    %1604 = vmatprep.subr.mxu0 0.0
    %1605 = vmatpush1.msra.mxu0 0.0
    %1606 = vmatprep.subr.mxu0 0.0
    %1607 = vmatpush1.msra.mxu0 0.0
    %1608 = vmatprep.subr.mxu0 0.0
    %1609 = vmatpush1.msra.mxu0 0.0
    %1610 = vmatprep.subr.mxu0 0.0
    %1611 = vmatpush1.msra.mxu0 0.0
    %1612 = vmatprep.subr.mxu0 0.0
    %1613 = vmatpush1.msra.mxu0 0.0
    %1614 = vmatprep.subr.mxu0 0.0
    %1615 = vmatpush1.msra.mxu0 0.0
    %1616 = vmatprep.subr.mxu0 0.0
    %1617 = vmatpush1.msra.mxu0 0.0
    %1618 = vmatprep.subr.mxu0 0.0
    %1619 = vmatpush1.msra.mxu0 0.0
    %1620 = vmatprep.subr.mxu0 0.0
    %1621 = vmatpush1.msra.mxu0 0.0
    %1622 = vmatprep.subr.mxu0 0.0
    %1623 = vmatpush1.msra.mxu0 0.0
    %1624 = vmatprep.subr.mxu0 0.0
    %1625 = vmatpush1.msra.mxu0 0.0
    %1626 = vmatprep.subr.mxu0 0.0
    %1627 = vmatpush1.msra.mxu0 0.0
    %1628 = vmatprep.subr.mxu0 0.0
    %1629 = vmatpush1.msra.mxu0 0.0
    %1630 = vmatprep.subr.mxu0 0.0
    %1631 = vmatpush1.msra.mxu0 0.0
    %1632 = vmatprep.subr.mxu0 0.0
    %1633 = vmatpush1.msra.mxu0 0.0
    %1634 = vmatprep.subr.mxu0 0.0
    %1635 = vmatpush1.msra.mxu0 0.0
    %1636 = vmatprep.subr.mxu0 0.0
    %1637 = vmatpush1.msra.mxu0 0.0
    %1638 = vmatprep.subr.mxu0 0.0
    %1639 = vmatpush1.msra.mxu0 0.0
    %1640 = vmatprep.subr.mxu0 0.0
    %1641 = vmatpush1.msra.mxu0 0.0
    %1642 = vmatprep.subr.mxu0 0.0
    %1643 = vmatpush1.msra.mxu0 0.0
    %1644 = vmatprep.subr.mxu0 0.0
    %1645 = vmatpush1.msra.mxu0 0.0
    %1646 = vmatprep.subr.mxu0 0.0
    %1647 = vmatpush1.msra.mxu0 0.0
    %1648 = vmatprep.subr.mxu0 0.0
    %1649 = vmatpush1.msra.mxu0 0.0
    %1650 = vmatprep.subr.mxu0 0.0
    %1651 = vmatpush1.msra.mxu0 0.0
    %1652 = vmatprep.subr.mxu0 0.0
    %1653 = vmatpush1.msra.mxu0 0.0
    %1654 = vmatprep.subr.mxu0 0.0
    %1655 = vmatpush1.msra.mxu0 0.0
    %1656 = vmatprep.subr.mxu0 0.0
    %1657 = vmatpush1.msra.mxu0 0.0
    %1658 = vmatprep.mubr.f32.mxu0 0.0
    %1659 = vmatmul.mubr.f32.gmra.mrb[0].mxu0 %v1589
    %v1660 = vpop.f32.mrb[0].mxu0
    %v1661 = vadd.f32 0.0, %v1660
    %v1662 = vpop.f32.mrb[0].mxu0
    %1663 = vmatprep.mubr.f32.mxu0 0.0
    %1664 = vmatmul.mubr.f32.gmra.mrb[0].mxu0 %v1592
    %v1665 = vpop.f32.mrb[0].mxu0
    %v1666 = vadd.f32 0.0, %v1665
    %v1667 = vpop.f32.mrb[0].mxu0
    %1668 = vdwg.mxu0
    %v1669 = vadd.f32 %v1577, %v1661
    %v1670 = vadd.f32 %v1578, %v1666
    %v1671 = vld [vmem:[%s4] sm:$0x1]
    %v1673 = vlaneseq
    %v1674 = vshrl.u32 %v1673, 7
    %v1675 = vsub.s32 0, %v1674
    %v1676 = vrot.slane %v1671, %v1675
    %v1678 = vadd.f32 %v1669, %v1676
    %v1679 = vadd.f32 %v1670, %v1676
    %v1680 = vmax.f32 %v1678, 0.0
    %v1681 = vmax.f32 %v1679, 0.0
    %vm1682 = vcmask 523264
    %1683 = vst.msk [vmem:[#allocation3] sm:$0xff] %vm1682, %v1680
    %vm1684 = vcmask 520192
    %1685 = vst.msk [vmem:[#allocation3 + $0x8] sm:$0x1f] %vm1684, %v1681
    %s1686 = scalar_lea.vmem [#allocation2], 29
    %v1687 = vld [vmem:[%s1686] ss:$2 sm:$0xff]
    %s1688 = scalar_lea.vmem [#allocation2], 45
    %v1689 = vld [vmem:[%s1688] ss:$2 sm:$0x1f]
    %v1690 = vld [vmem:[%s3] sm:$0xff]
    %v1691 = vld [vmem:[%s3 + $0x8] sm:$0xff]
    %v1692 = vld [vmem:[%s3 + $0x10] sm:$0xff]
    %v1693 = vld [vmem:[%s3 + $0x18] sm:$0xff]
    %s1694 = scalar_lea.vmem [#allocation2], 30
    %v1695 = vld [vmem:[%s1694] ss:$2 sm:$0xff]
    %s1696 = scalar_lea.vmem [#allocation2], 46
    %v1697 = vld [vmem:[%s1696] ss:$2 sm:$0x1f]
    %v1698 = vld [vmem:[%s1228] sm:$0xff]
    %v1699 = vld [vmem:[%s1228 + $0x8] sm:$0xff]
    %v1700 = vld [vmem:[%s1228 + $0x10] sm:$0xff]
    %v1701 = vld [vmem:[%s1228 + $0x18] sm:$0xff]
    %v1703 = vsel %vm630, %v1695, 0
    %v1706 = vsel %vm630, %v1697, 0
    %1708 = vmatprep.subr.mxu0 0.0
    %1709 = vmatpush1.msra.mxu0 %v1698
    %1710 = vmatprep.subr.mxu0 0.0
    %1711 = vmatpush1.msra.mxu0 %v1699
    %1712 = vmatprep.subr.mxu0 0.0
    %1713 = vmatpush1.msra.mxu0 %v1700
    %1714 = vmatprep.subr.mxu0 0.0
    %1715 = vmatpush1.msra.mxu0 %v1701
    %1716 = vmatprep.subr.mxu0 0.0
    %1717 = vmatpush1.msra.mxu0 0.0
    %1718 = vmatprep.subr.mxu0 0.0
    %1719 = vmatpush1.msra.mxu0 0.0
    %1720 = vmatprep.subr.mxu0 0.0
    %1721 = vmatpush1.msra.mxu0 0.0
    %1722 = vmatprep.subr.mxu0 0.0
    %1723 = vmatpush1.msra.mxu0 0.0
    %1724 = vmatprep.subr.mxu0 0.0
    %1725 = vmatpush1.msra.mxu0 0.0
    %1726 = vmatprep.subr.mxu0 0.0
    %1727 = vmatpush1.msra.mxu0 0.0
    %1728 = vmatprep.subr.mxu0 0.0
    %1729 = vmatpush1.msra.mxu0 0.0
    %1730 = vmatprep.subr.mxu0 0.0
    %1731 = vmatpush1.msra.mxu0 0.0
    %1732 = vmatprep.subr.mxu0 0.0
    %1733 = vmatpush1.msra.mxu0 0.0
    %1734 = vmatprep.subr.mxu0 0.0
    %1735 = vmatpush1.msra.mxu0 0.0
    %1736 = vmatprep.subr.mxu0 0.0
    %1737 = vmatpush1.msra.mxu0 0.0
    %1738 = vmatprep.subr.mxu0 0.0
    %1739 = vmatpush1.msra.mxu0 0.0
    %1740 = vmatprep.subr.mxu0 0.0
    %1741 = vmatpush1.msra.mxu0 0.0
    %1742 = vmatprep.subr.mxu0 0.0
    %1743 = vmatpush1.msra.mxu0 0.0
    %1744 = vmatprep.subr.mxu0 0.0
    %1745 = vmatpush1.msra.mxu0 0.0
    %1746 = vmatprep.subr.mxu0 0.0
    %1747 = vmatpush1.msra.mxu0 0.0
    %1748 = vmatprep.subr.mxu0 0.0
    %1749 = vmatpush1.msra.mxu0 0.0
    %1750 = vmatprep.subr.mxu0 0.0
    %1751 = vmatpush1.msra.mxu0 0.0
    %1752 = vmatprep.subr.mxu0 0.0
    %1753 = vmatpush1.msra.mxu0 0.0
    %1754 = vmatprep.subr.mxu0 0.0
    %1755 = vmatpush1.msra.mxu0 0.0
    %1756 = vmatprep.subr.mxu0 0.0
    %1757 = vmatpush1.msra.mxu0 0.0
    %1758 = vmatprep.subr.mxu0 0.0
    %1759 = vmatpush1.msra.mxu0 0.0
    %1760 = vmatprep.subr.mxu0 0.0
    %1761 = vmatpush1.msra.mxu0 0.0
    %1762 = vmatprep.subr.mxu0 0.0
    %1763 = vmatpush1.msra.mxu0 0.0
    %1764 = vmatprep.subr.mxu0 0.0
    %1765 = vmatpush1.msra.mxu0 0.0
    %1766 = vmatprep.subr.mxu0 0.0
    %1767 = vmatpush1.msra.mxu0 0.0
    %1768 = vmatprep.subr.mxu0 0.0
    %1769 = vmatpush1.msra.mxu0 0.0
    %1770 = vmatprep.subr.mxu0 0.0
    %1771 = vmatpush1.msra.mxu0 0.0
    %1772 = vmatprep.mubr.f32.mxu0 0.0
    %1773 = vmatmul.mubr.f32.gmra.mrb[0].mxu0 %v1703
    %v1774 = vpop.f32.mrb[0].mxu0
    %v1775 = vadd.f32 0.0, %v1774
    %v1776 = vpop.f32.mrb[0].mxu0
    %1777 = vmatprep.mubr.f32.mxu0 0.0
    %1778 = vmatmul.mubr.f32.gmra.mrb[0].mxu0 %v1706
    %v1779 = vpop.f32.mrb[0].mxu0
    %v1780 = vadd.f32 0.0, %v1779
    %v1781 = vpop.f32.mrb[0].mxu0
    %1782 = vdwg.mxu0
    %v1784 = vsel %vm630, %v1687, 0
    %v1787 = vsel %vm630, %v1689, 0
    %1789 = vmatprep.subr.mxu0 0.0
    %1790 = vmatpush1.msra.mxu0 %v1690
    %1791 = vmatprep.subr.mxu0 0.0
    %1792 = vmatpush1.msra.mxu0 %v1691
    %1793 = vmatprep.subr.mxu0 0.0
    %1794 = vmatpush1.msra.mxu0 %v1692
    %1795 = vmatprep.subr.mxu0 0.0
    %1796 = vmatpush1.msra.mxu0 %v1693
    %1797 = vmatprep.subr.mxu0 0.0
    %1798 = vmatpush1.msra.mxu0 0.0
    %1799 = vmatprep.subr.mxu0 0.0
    %1800 = vmatpush1.msra.mxu0 0.0
    %1801 = vmatprep.subr.mxu0 0.0
    %1802 = vmatpush1.msra.mxu0 0.0
    %1803 = vmatprep.subr.mxu0 0.0
    %1804 = vmatpush1.msra.mxu0 0.0
    %1805 = vmatprep.subr.mxu0 0.0
    %1806 = vmatpush1.msra.mxu0 0.0
    %1807 = vmatprep.subr.mxu0 0.0
    %1808 = vmatpush1.msra.mxu0 0.0
    %1809 = vmatprep.subr.mxu0 0.0
    %1810 = vmatpush1.msra.mxu0 0.0
    %1811 = vmatprep.subr.mxu0 0.0
    %1812 = vmatpush1.msra.mxu0 0.0
    %1813 = vmatprep.subr.mxu0 0.0
    %1814 = vmatpush1.msra.mxu0 0.0
    %1815 = vmatprep.subr.mxu0 0.0
    %1816 = vmatpush1.msra.mxu0 0.0
    %1817 = vmatprep.subr.mxu0 0.0
    %1818 = vmatpush1.msra.mxu0 0.0
    %1819 = vmatprep.subr.mxu0 0.0
    %1820 = vmatpush1.msra.mxu0 0.0
    %1821 = vmatprep.subr.mxu0 0.0
    %1822 = vmatpush1.msra.mxu0 0.0
    %1823 = vmatprep.subr.mxu0 0.0
    %1824 = vmatpush1.msra.mxu0 0.0
    %1825 = vmatprep.subr.mxu0 0.0
    %1826 = vmatpush1.msra.mxu0 0.0
    %1827 = vmatprep.subr.mxu0 0.0
    %1828 = vmatpush1.msra.mxu0 0.0
    %1829 = vmatprep.subr.mxu0 0.0
    %1830 = vmatpush1.msra.mxu0 0.0
    %1831 = vmatprep.subr.mxu0 0.0
    %1832 = vmatpush1.msra.mxu0 0.0
    %1833 = vmatprep.subr.mxu0 0.0
    %1834 = vmatpush1.msra.mxu0 0.0
    %1835 = vmatprep.subr.mxu0 0.0
    %1836 = vmatpush1.msra.mxu0 0.0
    %1837 = vmatprep.subr.mxu0 0.0
    %1838 = vmatpush1.msra.mxu0 0.0
    %1839 = vmatprep.subr.mxu0 0.0
    %1840 = vmatpush1.msra.mxu0 0.0
    %1841 = vmatprep.subr.mxu0 0.0
    %1842 = vmatpush1.msra.mxu0 0.0
    %1843 = vmatprep.subr.mxu0 0.0
    %1844 = vmatpush1.msra.mxu0 0.0
    %1845 = vmatprep.subr.mxu0 0.0
    %1846 = vmatpush1.msra.mxu0 0.0
    %1847 = vmatprep.subr.mxu0 0.0
    %1848 = vmatpush1.msra.mxu0 0.0
    %1849 = vmatprep.subr.mxu0 0.0
    %1850 = vmatpush1.msra.mxu0 0.0
    %1851 = vmatprep.subr.mxu0 0.0
    %1852 = vmatpush1.msra.mxu0 0.0
    %1853 = vmatprep.mubr.f32.mxu0 0.0
    %1854 = vmatmul.mubr.f32.gmra.mrb[0].mxu0 %v1784
    %v1855 = vpop.f32.mrb[0].mxu0
    %v1856 = vadd.f32 %v1775, %v1855
    %v1857 = vpop.f32.mrb[0].mxu0
    %1858 = vmatprep.mubr.f32.mxu0 0.0
    %1859 = vmatmul.mubr.f32.gmra.mrb[0].mxu0 %v1787
    %v1860 = vpop.f32.mrb[0].mxu0
    %v1861 = vadd.f32 %v1780, %v1860
    %v1862 = vpop.f32.mrb[0].mxu0
    %1863 = vdwg.mxu0
    %s1864 = scalar_lea.vmem [#allocation2], 31
    %v1865 = vld [vmem:[%s1864] ss:$2 sm:$0xff]
    %s1866 = scalar_lea.vmem [#allocation2], 47
    %v1867 = vld [vmem:[%s1866] ss:$2 sm:$0x1f]
    %v1868 = vld [vmem:[%s1399] sm:$0xff]
    %v1869 = vld [vmem:[%s1399 + $0x8] sm:$0xff]
    %v1870 = vld [vmem:[%s1399 + $0x10] sm:$0xff]
    %v1871 = vld [vmem:[%s1399 + $0x18] sm:$0xff]
    %v1873 = vsel %vm630, %v1865, 0
    %v1876 = vsel %vm630, %v1867, 0
    %1878 = vmatprep.subr.mxu0 0.0
    %1879 = vmatpush1.msra.mxu0 %v1868
    %1880 = vmatprep.subr.mxu0 0.0
    %1881 = vmatpush1.msra.mxu0 %v1869
    %1882 = vmatprep.subr.mxu0 0.0
    %1883 = vmatpush1.msra.mxu0 %v1870
    %1884 = vmatprep.subr.mxu0 0.0
    %1885 = vmatpush1.msra.mxu0 %v1871
    %1886 = vmatprep.subr.mxu0 0.0
    %1887 = vmatpush1.msra.mxu0 0.0
    %1888 = vmatprep.subr.mxu0 0.0
    %1889 = vmatpush1.msra.mxu0 0.0
    %1890 = vmatprep.subr.mxu0 0.0
    %1891 = vmatpush1.msra.mxu0 0.0
    %1892 = vmatprep.subr.mxu0 0.0
    %1893 = vmatpush1.msra.mxu0 0.0
    %1894 = vmatprep.subr.mxu0 0.0
    %1895 = vmatpush1.msra.mxu0 0.0
    %1896 = vmatprep.subr.mxu0 0.0
    %1897 = vmatpush1.msra.mxu0 0.0
    %1898 = vmatprep.subr.mxu0 0.0
    %1899 = vmatpush1.msra.mxu0 0.0
    %1900 = vmatprep.subr.mxu0 0.0
    %1901 = vmatpush1.msra.mxu0 0.0
    %1902 = vmatprep.subr.mxu0 0.0
    %1903 = vmatpush1.msra.mxu0 0.0
    %1904 = vmatprep.subr.mxu0 0.0
    %1905 = vmatpush1.msra.mxu0 0.0
    %1906 = vmatprep.subr.mxu0 0.0
    %1907 = vmatpush1.msra.mxu0 0.0
    %1908 = vmatprep.subr.mxu0 0.0
    %1909 = vmatpush1.msra.mxu0 0.0
    %1910 = vmatprep.subr.mxu0 0.0
    %1911 = vmatpush1.msra.mxu0 0.0
    %1912 = vmatprep.subr.mxu0 0.0
    %1913 = vmatpush1.msra.mxu0 0.0
    %1914 = vmatprep.subr.mxu0 0.0
    %1915 = vmatpush1.msra.mxu0 0.0
    %1916 = vmatprep.subr.mxu0 0.0
    %1917 = vmatpush1.msra.mxu0 0.0
    %1918 = vmatprep.subr.mxu0 0.0
    %1919 = vmatpush1.msra.mxu0 0.0
    %1920 = vmatprep.subr.mxu0 0.0
    %1921 = vmatpush1.msra.mxu0 0.0
    %1922 = vmatprep.subr.mxu0 0.0
    %1923 = vmatpush1.msra.mxu0 0.0
    %1924 = vmatprep.subr.mxu0 0.0
    %1925 = vmatpush1.msra.mxu0 0.0
    %1926 = vmatprep.subr.mxu0 0.0
    %1927 = vmatpush1.msra.mxu0 0.0
    %1928 = vmatprep.subr.mxu0 0.0
    %1929 = vmatpush1.msra.mxu0 0.0
    %1930 = vmatprep.subr.mxu0 0.0
    %1931 = vmatpush1.msra.mxu0 0.0
    %1932 = vmatprep.subr.mxu0 0.0
    %1933 = vmatpush1.msra.mxu0 0.0
    %1934 = vmatprep.subr.mxu0 0.0
    %1935 = vmatpush1.msra.mxu0 0.0
    %1936 = vmatprep.subr.mxu0 0.0
    %1937 = vmatpush1.msra.mxu0 0.0
    %1938 = vmatprep.subr.mxu0 0.0
    %1939 = vmatpush1.msra.mxu0 0.0
    %1940 = vmatprep.subr.mxu0 0.0
    %1941 = vmatpush1.msra.mxu0 0.0
    %1942 = vmatprep.mubr.f32.mxu0 0.0
    %1943 = vmatmul.mubr.f32.gmra.mrb[0].mxu0 %v1873
    %v1944 = vpop.f32.mrb[0].mxu0
    %v1945 = vadd.f32 0.0, %v1944
    %v1946 = vpop.f32.mrb[0].mxu0
    %1947 = vmatprep.mubr.f32.mxu0 0.0
    %1948 = vmatmul.mubr.f32.gmra.mrb[0].mxu0 %v1876
    %v1949 = vpop.f32.mrb[0].mxu0
    %v1950 = vadd.f32 0.0, %v1949
    %v1951 = vpop.f32.mrb[0].mxu0
    %1952 = vdwg.mxu0
    %v1953 = vadd.f32 %v1856, %v1945
    %v1954 = vadd.f32 %v1861, %v1950
    %s1955 = scalar_lea.vmem [#allocation2], 32
    %v1956 = vld [vmem:[%s1955] ss:$2 sm:$0xff]
    %s1957 = scalar_lea.vmem [#allocation2], 48
    %v1958 = vld [vmem:[%s1957] ss:$2 sm:$0x1f]
    %v1959 = vld [vmem:[%s1491] sm:$0xff]
    %v1960 = vld [vmem:[%s1491 + $0x8] sm:$0xff]
    %v1961 = vld [vmem:[%s1491 + $0x10] sm:$0xff]
    %v1962 = vld [vmem:[%s1491 + $0x18] sm:$0xff]
    %v1964 = vsel %vm630, %v1956, 0
    %v1967 = vsel %vm630, %v1958, 0
    %1969 = vmatprep.subr.mxu0 0.0
    %1970 = vmatpush1.msra.mxu0 %v1959
    %1971 = vmatprep.subr.mxu0 0.0
    %1972 = vmatpush1.msra.mxu0 %v1960
    %1973 = vmatprep.subr.mxu0 0.0
    %1974 = vmatpush1.msra.mxu0 %v1961
    %1975 = vmatprep.subr.mxu0 0.0
    %1976 = vmatpush1.msra.mxu0 %v1962
    %1977 = vmatprep.subr.mxu0 0.0
    %1978 = vmatpush1.msra.mxu0 0.0
    %1979 = vmatprep.subr.mxu0 0.0
    %1980 = vmatpush1.msra.mxu0 0.0
    %1981 = vmatprep.subr.mxu0 0.0
    %1982 = vmatpush1.msra.mxu0 0.0
    %1983 = vmatprep.subr.mxu0 0.0
    %1984 = vmatpush1.msra.mxu0 0.0
    %1985 = vmatprep.subr.mxu0 0.0
    %1986 = vmatpush1.msra.mxu0 0.0
    %1987 = vmatprep.subr.mxu0 0.0
    %1988 = vmatpush1.msra.mxu0 0.0
    %1989 = vmatprep.subr.mxu0 0.0
    %1990 = vmatpush1.msra.mxu0 0.0
    %1991 = vmatprep.subr.mxu0 0.0
    %1992 = vmatpush1.msra.mxu0 0.0
    %1993 = vmatprep.subr.mxu0 0.0
    %1994 = vmatpush1.msra.mxu0 0.0
    %1995 = vmatprep.subr.mxu0 0.0
    %1996 = vmatpush1.msra.mxu0 0.0
    %1997 = vmatprep.subr.mxu0 0.0
    %1998 = vmatpush1.msra.mxu0 0.0
    %1999 = vmatprep.subr.mxu0 0.0
    %2000 = vmatpush1.msra.mxu0 0.0
    %2001 = vmatprep.subr.mxu0 0.0
    %2002 = vmatpush1.msra.mxu0 0.0
    %2003 = vmatprep.subr.mxu0 0.0
    %2004 = vmatpush1.msra.mxu0 0.0
    %2005 = vmatprep.subr.mxu0 0.0
    %2006 = vmatpush1.msra.mxu0 0.0
    %2007 = vmatprep.subr.mxu0 0.0
    %2008 = vmatpush1.msra.mxu0 0.0
    %2009 = vmatprep.subr.mxu0 0.0
    %2010 = vmatpush1.msra.mxu0 0.0
    %2011 = vmatprep.subr.mxu0 0.0
    %2012 = vmatpush1.msra.mxu0 0.0
    %2013 = vmatprep.subr.mxu0 0.0
    %2014 = vmatpush1.msra.mxu0 0.0
    %2015 = vmatprep.subr.mxu0 0.0
    %2016 = vmatpush1.msra.mxu0 0.0
    %2017 = vmatprep.subr.mxu0 0.0
    %2018 = vmatpush1.msra.mxu0 0.0
    %2019 = vmatprep.subr.mxu0 0.0
    %2020 = vmatpush1.msra.mxu0 0.0
    %2021 = vmatprep.subr.mxu0 0.0
    %2022 = vmatpush1.msra.mxu0 0.0
    %2023 = vmatprep.subr.mxu0 0.0
    %2024 = vmatpush1.msra.mxu0 0.0
    %2025 = vmatprep.subr.mxu0 0.0
    %2026 = vmatpush1.msra.mxu0 0.0
    %2027 = vmatprep.subr.mxu0 0.0
    %2028 = vmatpush1.msra.mxu0 0.0
    %2029 = vmatprep.subr.mxu0 0.0
    %2030 = vmatpush1.msra.mxu0 0.0
    %2031 = vmatprep.subr.mxu0 0.0
    %2032 = vmatpush1.msra.mxu0 0.0
    %2033 = vmatprep.mubr.f32.mxu0 0.0
    %2034 = vmatmul.mubr.f32.gmra.mrb[0].mxu0 %v1964
    %v2035 = vpop.f32.mrb[0].mxu0
    %v2036 = vadd.f32 0.0, %v2035
    %v2037 = vpop.f32.mrb[0].mxu0
    %2038 = vmatprep.mubr.f32.mxu0 0.0
    %2039 = vmatmul.mubr.f32.gmra.mrb[0].mxu0 %v1967
    %v2040 = vpop.f32.mrb[0].mxu0
    %v2041 = vadd.f32 0.0, %v2040
    %v2042 = vpop.f32.mrb[0].mxu0
    %2043 = vdwg.mxu0
    %v2044 = vadd.f32 %v1953, %v2036
    %v2045 = vadd.f32 %v1954, %v2041
    %s2046 = scalar_lea.vmem [#allocation2], 33
    %v2047 = vld [vmem:[%s2046] ss:$2 sm:$0xff]
    %s2048 = scalar_lea.vmem [#allocation2], 49
    %v2049 = vld [vmem:[%s2048] ss:$2 sm:$0x1f]
    %v2050 = vld [vmem:[%s1583] sm:$0xff]
    %v2051 = vld [vmem:[%s1583 + $0x8] sm:$0xff]
    %v2052 = vld [vmem:[%s1583 + $0x10] sm:$0xff]
    %v2053 = vld [vmem:[%s1583 + $0x18] sm:$0xff]
    %v2055 = vsel %vm630, %v2047, 0
    %v2058 = vsel %vm630, %v2049, 0
    %2060 = vmatprep.subr.mxu0 0.0
    %2061 = vmatpush1.msra.mxu0 %v2050
    %2062 = vmatprep.subr.mxu0 0.0
    %2063 = vmatpush1.msra.mxu0 %v2051
    %2064 = vmatprep.subr.mxu0 0.0
    %2065 = vmatpush1.msra.mxu0 %v2052
    %2066 = vmatprep.subr.mxu0 0.0
    %2067 = vmatpush1.msra.mxu0 %v2053
    %2068 = vmatprep.subr.mxu0 0.0
    %2069 = vmatpush1.msra.mxu0 0.0
    %2070 = vmatprep.subr.mxu0 0.0
    %2071 = vmatpush1.msra.mxu0 0.0
    %2072 = vmatprep.subr.mxu0 0.0
    %2073 = vmatpush1.msra.mxu0 0.0
    %2074 = vmatprep.subr.mxu0 0.0
    %2075 = vmatpush1.msra.mxu0 0.0
    %2076 = vmatprep.subr.mxu0 0.0
    %2077 = vmatpush1.msra.mxu0 0.0
    %2078 = vmatprep.subr.mxu0 0.0
    %2079 = vmatpush1.msra.mxu0 0.0
    %2080 = vmatprep.subr.mxu0 0.0
    %2081 = vmatpush1.msra.mxu0 0.0
    %2082 = vmatprep.subr.mxu0 0.0
    %2083 = vmatpush1.msra.mxu0 0.0
    %2084 = vmatprep.subr.mxu0 0.0
    %2085 = vmatpush1.msra.mxu0 0.0
    %2086 = vmatprep.subr.mxu0 0.0
    %2087 = vmatpush1.msra.mxu0 0.0
    %2088 = vmatprep.subr.mxu0 0.0
    %2089 = vmatpush1.msra.mxu0 0.0
    %2090 = vmatprep.subr.mxu0 0.0
    %2091 = vmatpush1.msra.mxu0 0.0
    %2092 = vmatprep.subr.mxu0 0.0
    %2093 = vmatpush1.msra.mxu0 0.0
    %2094 = vmatprep.subr.mxu0 0.0
    %2095 = vmatpush1.msra.mxu0 0.0
    %2096 = vmatprep.subr.mxu0 0.0
    %2097 = vmatpush1.msra.mxu0 0.0
    %2098 = vmatprep.subr.mxu0 0.0
    %2099 = vmatpush1.msra.mxu0 0.0
    %2100 = vmatprep.subr.mxu0 0.0
    %2101 = vmatpush1.msra.mxu0 0.0
    %2102 = vmatprep.subr.mxu0 0.0
    %2103 = vmatpush1.msra.mxu0 0.0
    %2104 = vmatprep.subr.mxu0 0.0
    %2105 = vmatpush1.msra.mxu0 0.0
    %2106 = vmatprep.subr.mxu0 0.0
    %2107 = vmatpush1.msra.mxu0 0.0
    %2108 = vmatprep.subr.mxu0 0.0
    %2109 = vmatpush1.msra.mxu0 0.0
    %2110 = vmatprep.subr.mxu0 0.0
    %2111 = vmatpush1.msra.mxu0 0.0
    %2112 = vmatprep.subr.mxu0 0.0
    %2113 = vmatpush1.msra.mxu0 0.0
    %2114 = vmatprep.subr.mxu0 0.0
    %2115 = vmatpush1.msra.mxu0 0.0
    %2116 = vmatprep.subr.mxu0 0.0
    %2117 = vmatpush1.msra.mxu0 0.0
    %2118 = vmatprep.subr.mxu0 0.0
    %2119 = vmatpush1.msra.mxu0 0.0
    %2120 = vmatprep.subr.mxu0 0.0
    %2121 = vmatpush1.msra.mxu0 0.0
    %2122 = vmatprep.subr.mxu0 0.0
    %2123 = vmatpush1.msra.mxu0 0.0
    %2124 = vmatprep.mubr.f32.mxu0 0.0
    %2125 = vmatmul.mubr.f32.gmra.mrb[0].mxu0 %v2055
    %v2126 = vpop.f32.mrb[0].mxu0
    %v2127 = vadd.f32 0.0, %v2126
    %v2128 = vpop.f32.mrb[0].mxu0
    %2129 = vmatprep.mubr.f32.mxu0 0.0
    %2130 = vmatmul.mubr.f32.gmra.mrb[0].mxu0 %v2058
    %v2131 = vpop.f32.mrb[0].mxu0
    %v2132 = vadd.f32 0.0, %v2131
    %v2133 = vpop.f32.mrb[0].mxu0
    %2134 = vdwg.mxu0
    %v2135 = vadd.f32 %v2044, %v2127
    %v2136 = vadd.f32 %v2045, %v2132
    %v2137 = vld [vmem:[%s4] sm:$0x1]
    %v2139 = vlaneseq
    %v2140 = vshrl.u32 %v2139, 7
    %v2141 = vsub.s32 0, %v2140
    %v2142 = vrot.slane %v2137, %v2141
    %v2144 = vadd.f32 %v2135, %v2142
    %v2145 = vadd.f32 %v2136, %v2142
    %v2146 = vmax.f32 %v2144, 0.0
    %v2147 = vmax.f32 %v2145, 0.0
    %2148 = vst.msk [vmem:[#allocation3 + $0xd] sm:$0xff] %vm1682, %v2146
    %2149 = vst.msk [vmem:[#allocation3 + $0x15] sm:$0x1f] %vm1684, %v2147
    %v2150 = vld [vmem:[#allocation3] ss:$2 sm:$0x1f]
    %v2151 = vld [vmem:[%s5] sm:$0xff]
    %v2152 = vld [vmem:[%s5 + $0x8] sm:$0xff]
    %v2153 = vld [vmem:[%s5 + $0x10] sm:$0xff]
    %v2154 = vld [vmem:[%s5 + $0x18] sm:$0xff]
    %v2155 = vld [vmem:[%s5 + $0x20] sm:$0xff]
    %v2156 = vld [vmem:[%s5 + $0x28] sm:$0xff]
    %v2157 = vld [vmem:[%s5 + $0x30] sm:$0xff]
    %v2158 = vld [vmem:[%s5 + $0x38] sm:$0xff]
    %s2159 = scalar_lea.vmem [#allocation3], 1
    %v2160 = vld [vmem:[%s2159] ss:$2 sm:$0x1f]
    %s2161 = scalar_lea.vmem %s5, 64
    %v2162 = vld [vmem:[%s2161] sm:$0xff]
    %v2163 = vld [vmem:[%s2161 + $0x8] sm:$0xff]
    %v2164 = vld [vmem:[%s2161 + $0x10] sm:$0xff]
    %v2165 = vld [vmem:[%s2161 + $0x18] sm:$0xff]
    %v2166 = vld [vmem:[%s2161 + $0x20] sm:$0xff]
    %v2167 = vld [vmem:[%s2161 + $0x28] sm:$0xff]
    %v2168 = vld [vmem:[%s2161 + $0x30] sm:$0xff]
    %v2169 = vld [vmem:[%s2161 + $0x38] sm:$0xff]
    %v2171 = vsel %vm1682, %v2160, 0
    %2173 = vmatprep.subr.mxu0 0.0
    %2174 = vmatpush1.msra.mxu0 %v2162
    %2175 = vmatprep.subr.mxu0 0.0
    %2176 = vmatpush1.msra.mxu0 %v2163
    %2177 = vmatprep.subr.mxu0 0.0
    %2178 = vmatpush1.msra.mxu0 %v2164
    %2179 = vmatprep.subr.mxu0 0.0
    %2180 = vmatpush1.msra.mxu0 %v2165
    %2181 = vmatprep.subr.mxu0 0.0
    %2182 = vmatpush1.msra.mxu0 %v2166
    %2183 = vmatprep.subr.mxu0 0.0
    %2184 = vmatpush1.msra.mxu0 %v2167
    %2185 = vmatprep.subr.mxu0 0.0
    %2186 = vmatpush1.msra.mxu0 %v2168
    %2187 = vmatprep.subr.mxu0 0.0
    %2188 = vmatpush1.msra.mxu0 %v2169
    %2189 = vmatprep.subr.mxu0 0.0
    %2190 = vmatpush1.msra.mxu0 0.0
    %2191 = vmatprep.subr.mxu0 0.0
    %2192 = vmatpush1.msra.mxu0 0.0
    %2193 = vmatprep.subr.mxu0 0.0
    %2194 = vmatpush1.msra.mxu0 0.0
    %2195 = vmatprep.subr.mxu0 0.0
    %2196 = vmatpush1.msra.mxu0 0.0
    %2197 = vmatprep.subr.mxu0 0.0
    %2198 = vmatpush1.msra.mxu0 0.0
    %2199 = vmatprep.subr.mxu0 0.0
    %2200 = vmatpush1.msra.mxu0 0.0
    %2201 = vmatprep.subr.mxu0 0.0
    %2202 = vmatpush1.msra.mxu0 0.0
    %2203 = vmatprep.subr.mxu0 0.0
    %2204 = vmatpush1.msra.mxu0 0.0
    %2205 = vmatprep.subr.mxu0 0.0
    %2206 = vmatpush1.msra.mxu0 0.0
    %2207 = vmatprep.subr.mxu0 0.0
    %2208 = vmatpush1.msra.mxu0 0.0
    %2209 = vmatprep.subr.mxu0 0.0
    %2210 = vmatpush1.msra.mxu0 0.0
    %2211 = vmatprep.subr.mxu0 0.0
    %2212 = vmatpush1.msra.mxu0 0.0
    %2213 = vmatprep.subr.mxu0 0.0
    %2214 = vmatpush1.msra.mxu0 0.0
    %2215 = vmatprep.subr.mxu0 0.0
    %2216 = vmatpush1.msra.mxu0 0.0
    %2217 = vmatprep.subr.mxu0 0.0
    %2218 = vmatpush1.msra.mxu0 0.0
    %2219 = vmatprep.subr.mxu0 0.0
    %2220 = vmatpush1.msra.mxu0 0.0
    %2221 = vmatprep.subr.mxu0 0.0
    %2222 = vmatpush1.msra.mxu0 0.0
    %2223 = vmatprep.subr.mxu0 0.0
    %2224 = vmatpush1.msra.mxu0 0.0
    %2225 = vmatprep.subr.mxu0 0.0
    %2226 = vmatpush1.msra.mxu0 0.0
    %2227 = vmatprep.subr.mxu0 0.0
    %2228 = vmatpush1.msra.mxu0 0.0
    %2229 = vmatprep.subr.mxu0 0.0
    %2230 = vmatpush1.msra.mxu0 0.0
    %2231 = vmatprep.subr.mxu0 0.0
    %2232 = vmatpush1.msra.mxu0 0.0
    %2233 = vmatprep.subr.mxu0 0.0
    %2234 = vmatpush1.msra.mxu0 0.0
    %2235 = vmatprep.subr.mxu0 0.0
    %2236 = vmatpush1.msra.mxu0 0.0
    %2237 = vmatprep.mubr.f32.mxu0 0.0
    %2238 = vmatmul.mubr.f32.gmra.mrb[0].mxu0 %v2171
    %v2239 = vpop.f32.mrb[0].mxu0
    %v2240 = vadd.f32 0.0, %v2239
    %v2241 = vpop.f32.mrb[0].mxu0
    %2242 = vdwg.mxu0
    %v2244 = vsel %vm1682, %v2150, 0
    %2246 = vmatprep.subr.mxu0 0.0
    %2247 = vmatpush1.msra.mxu0 %v2151
    %2248 = vmatprep.subr.mxu0 0.0
    %2249 = vmatpush1.msra.mxu0 %v2152
    %2250 = vmatprep.subr.mxu0 0.0
    %2251 = vmatpush1.msra.mxu0 %v2153
    %2252 = vmatprep.subr.mxu0 0.0
    %2253 = vmatpush1.msra.mxu0 %v2154
    %2254 = vmatprep.subr.mxu0 0.0
    %2255 = vmatpush1.msra.mxu0 %v2155
    %2256 = vmatprep.subr.mxu0 0.0
    %2257 = vmatpush1.msra.mxu0 %v2156
    %2258 = vmatprep.subr.mxu0 0.0
    %2259 = vmatpush1.msra.mxu0 %v2157
    %2260 = vmatprep.subr.mxu0 0.0
    %2261 = vmatpush1.msra.mxu0 %v2158
    %2262 = vmatprep.subr.mxu0 0.0
    %2263 = vmatpush1.msra.mxu0 0.0
    %2264 = vmatprep.subr.mxu0 0.0
    %2265 = vmatpush1.msra.mxu0 0.0
    %2266 = vmatprep.subr.mxu0 0.0
    %2267 = vmatpush1.msra.mxu0 0.0
    %2268 = vmatprep.subr.mxu0 0.0
    %2269 = vmatpush1.msra.mxu0 0.0
    %2270 = vmatprep.subr.mxu0 0.0
    %2271 = vmatpush1.msra.mxu0 0.0
    %2272 = vmatprep.subr.mxu0 0.0
    %2273 = vmatpush1.msra.mxu0 0.0
    %2274 = vmatprep.subr.mxu0 0.0
    %2275 = vmatpush1.msra.mxu0 0.0
    %2276 = vmatprep.subr.mxu0 0.0
    %2277 = vmatpush1.msra.mxu0 0.0
    %2278 = vmatprep.subr.mxu0 0.0
    %2279 = vmatpush1.msra.mxu0 0.0
    %2280 = vmatprep.subr.mxu0 0.0
    %2281 = vmatpush1.msra.mxu0 0.0
    %2282 = vmatprep.subr.mxu0 0.0
    %2283 = vmatpush1.msra.mxu0 0.0
    %2284 = vmatprep.subr.mxu0 0.0
    %2285 = vmatpush1.msra.mxu0 0.0
    %2286 = vmatprep.subr.mxu0 0.0
    %2287 = vmatpush1.msra.mxu0 0.0
    %2288 = vmatprep.subr.mxu0 0.0
    %2289 = vmatpush1.msra.mxu0 0.0
    %2290 = vmatprep.subr.mxu0 0.0
    %2291 = vmatpush1.msra.mxu0 0.0
    %2292 = vmatprep.subr.mxu0 0.0
    %2293 = vmatpush1.msra.mxu0 0.0
    %2294 = vmatprep.subr.mxu0 0.0
    %2295 = vmatpush1.msra.mxu0 0.0
    %2296 = vmatprep.subr.mxu0 0.0
    %2297 = vmatpush1.msra.mxu0 0.0
    %2298 = vmatprep.subr.mxu0 0.0
    %2299 = vmatpush1.msra.mxu0 0.0
    %2300 = vmatprep.subr.mxu0 0.0
    %2301 = vmatpush1.msra.mxu0 0.0
    %2302 = vmatprep.subr.mxu0 0.0
    %2303 = vmatpush1.msra.mxu0 0.0
    %2304 = vmatprep.subr.mxu0 0.0
    %2305 = vmatpush1.msra.mxu0 0.0
    %2306 = vmatprep.subr.mxu0 0.0
    %2307 = vmatpush1.msra.mxu0 0.0
    %2308 = vmatprep.subr.mxu0 0.0
    %2309 = vmatpush1.msra.mxu0 0.0
    %2310 = vmatprep.mubr.f32.mxu0 0.0
    %2311 = vmatmul.mubr.f32.gmra.mrb[0].mxu0 %v2244
    %v2312 = vpop.f32.mrb[0].mxu0
    %v2313 = vadd.f32 %v2240, %v2312
    %v2314 = vpop.f32.mrb[0].mxu0
    %2315 = vdwg.mxu0
    %s2316 = scalar_lea.vmem [#allocation3], 2
    %v2317 = vld [vmem:[%s2316] ss:$2 sm:$0x1f]
    %s2318 = scalar_lea.vmem %s5, 128
    %v2319 = vld [vmem:[%s2318] sm:$0xff]
    %v2320 = vld [vmem:[%s2318 + $0x8] sm:$0xff]
    %v2321 = vld [vmem:[%s2318 + $0x10] sm:$0xff]
    %v2322 = vld [vmem:[%s2318 + $0x18] sm:$0xff]
    %v2323 = vld [vmem:[%s2318 + $0x20] sm:$0xff]
    %v2324 = vld [vmem:[%s2318 + $0x28] sm:$0xff]
    %v2325 = vld [vmem:[%s2318 + $0x30] sm:$0xff]
    %v2326 = vld [vmem:[%s2318 + $0x38] sm:$0xff]
    %v2328 = vsel %vm1682, %v2317, 0
    %2330 = vmatprep.subr.mxu0 0.0
    %2331 = vmatpush1.msra.mxu0 %v2319
    %2332 = vmatprep.subr.mxu0 0.0
    %2333 = vmatpush1.msra.mxu0 %v2320
    %2334 = vmatprep.subr.mxu0 0.0
    %2335 = vmatpush1.msra.mxu0 %v2321
    %2336 = vmatprep.subr.mxu0 0.0
    %2337 = vmatpush1.msra.mxu0 %v2322
    %2338 = vmatprep.subr.mxu0 0.0
    %2339 = vmatpush1.msra.mxu0 %v2323
    %2340 = vmatprep.subr.mxu0 0.0
    %2341 = vmatpush1.msra.mxu0 %v2324
    %2342 = vmatprep.subr.mxu0 0.0
    %2343 = vmatpush1.msra.mxu0 %v2325
    %2344 = vmatprep.subr.mxu0 0.0
    %2345 = vmatpush1.msra.mxu0 %v2326
    %2346 = vmatprep.subr.mxu0 0.0
    %2347 = vmatpush1.msra.mxu0 0.0
    %2348 = vmatprep.subr.mxu0 0.0
    %2349 = vmatpush1.msra.mxu0 0.0
    %2350 = vmatprep.subr.mxu0 0.0
    %2351 = vmatpush1.msra.mxu0 0.0
    %2352 = vmatprep.subr.mxu0 0.0
    %2353 = vmatpush1.msra.mxu0 0.0
    %2354 = vmatprep.subr.mxu0 0.0
    %2355 = vmatpush1.msra.mxu0 0.0
    %2356 = vmatprep.subr.mxu0 0.0
    %2357 = vmatpush1.msra.mxu0 0.0
    %2358 = vmatprep.subr.mxu0 0.0
    %2359 = vmatpush1.msra.mxu0 0.0
    %2360 = vmatprep.subr.mxu0 0.0
    %2361 = vmatpush1.msra.mxu0 0.0
    %2362 = vmatprep.subr.mxu0 0.0
    %2363 = vmatpush1.msra.mxu0 0.0
    %2364 = vmatprep.subr.mxu0 0.0
    %2365 = vmatpush1.msra.mxu0 0.0
    %2366 = vmatprep.subr.mxu0 0.0
    %2367 = vmatpush1.msra.mxu0 0.0
    %2368 = vmatprep.subr.mxu0 0.0
    %2369 = vmatpush1.msra.mxu0 0.0
    %2370 = vmatprep.subr.mxu0 0.0
    %2371 = vmatpush1.msra.mxu0 0.0
    %2372 = vmatprep.subr.mxu0 0.0
    %2373 = vmatpush1.msra.mxu0 0.0
    %2374 = vmatprep.subr.mxu0 0.0
    %2375 = vmatpush1.msra.mxu0 0.0
    %2376 = vmatprep.subr.mxu0 0.0
    %2377 = vmatpush1.msra.mxu0 0.0
    %2378 = vmatprep.subr.mxu0 0.0
    %2379 = vmatpush1.msra.mxu0 0.0
    %2380 = vmatprep.subr.mxu0 0.0
    %2381 = vmatpush1.msra.mxu0 0.0
    %2382 = vmatprep.subr.mxu0 0.0
    %2383 = vmatpush1.msra.mxu0 0.0
    %2384 = vmatprep.subr.mxu0 0.0
    %2385 = vmatpush1.msra.mxu0 0.0
    %2386 = vmatprep.subr.mxu0 0.0
    %2387 = vmatpush1.msra.mxu0 0.0
    %2388 = vmatprep.subr.mxu0 0.0
    %2389 = vmatpush1.msra.mxu0 0.0
    %2390 = vmatprep.subr.mxu0 0.0
    %2391 = vmatpush1.msra.mxu0 0.0
    %2392 = vmatprep.subr.mxu0 0.0
    %2393 = vmatpush1.msra.mxu0 0.0
    %2394 = vmatprep.mubr.f32.mxu0 0.0
    %2395 = vmatmul.mubr.f32.gmra.mrb[0].mxu0 %v2328
    %v2396 = vpop.f32.mrb[0].mxu0
    %v2397 = vadd.f32 0.0, %v2396
    %v2398 = vpop.f32.mrb[0].mxu0
    %2399 = vdwg.mxu0
    %v2400 = vadd.f32 %v2313, %v2397
    %s2401 = scalar_lea.vmem [#allocation3], 3
    %v2402 = vld [vmem:[%s2401] ss:$2 sm:$0x1f]
    %s2403 = scalar_lea.vmem %s5, 192
    %v2404 = vld [vmem:[%s2403] sm:$0xff]
    %v2405 = vld [vmem:[%s2403 + $0x8] sm:$0xff]
    %v2406 = vld [vmem:[%s2403 + $0x10] sm:$0xff]
    %v2407 = vld [vmem:[%s2403 + $0x18] sm:$0xff]
    %v2408 = vld [vmem:[%s2403 + $0x20] sm:$0xff]
    %v2409 = vld [vmem:[%s2403 + $0x28] sm:$0xff]
    %v2410 = vld [vmem:[%s2403 + $0x30] sm:$0xff]
    %v2411 = vld [vmem:[%s2403 + $0x38] sm:$0xff]
    %v2413 = vsel %vm1682, %v2402, 0
    %2415 = vmatprep.subr.mxu0 0.0
    %2416 = vmatpush1.msra.mxu0 %v2404
    %2417 = vmatprep.subr.mxu0 0.0
    %2418 = vmatpush1.msra.mxu0 %v2405
    %2419 = vmatprep.subr.mxu0 0.0
    %2420 = vmatpush1.msra.mxu0 %v2406
    %2421 = vmatprep.subr.mxu0 0.0
    %2422 = vmatpush1.msra.mxu0 %v2407
    %2423 = vmatprep.subr.mxu0 0.0
    %2424 = vmatpush1.msra.mxu0 %v2408
    %2425 = vmatprep.subr.mxu0 0.0
    %2426 = vmatpush1.msra.mxu0 %v2409
    %2427 = vmatprep.subr.mxu0 0.0
    %2428 = vmatpush1.msra.mxu0 %v2410
    %2429 = vmatprep.subr.mxu0 0.0
    %2430 = vmatpush1.msra.mxu0 %v2411
    %2431 = vmatprep.subr.mxu0 0.0
    %2432 = vmatpush1.msra.mxu0 0.0
    %2433 = vmatprep.subr.mxu0 0.0
    %2434 = vmatpush1.msra.mxu0 0.0
    %2435 = vmatprep.subr.mxu0 0.0
    %2436 = vmatpush1.msra.mxu0 0.0
    %2437 = vmatprep.subr.mxu0 0.0
    %2438 = vmatpush1.msra.mxu0 0.0
    %2439 = vmatprep.subr.mxu0 0.0
    %2440 = vmatpush1.msra.mxu0 0.0
    %2441 = vmatprep.subr.mxu0 0.0
    %2442 = vmatpush1.msra.mxu0 0.0
    %2443 = vmatprep.subr.mxu0 0.0
    %2444 = vmatpush1.msra.mxu0 0.0
    %2445 = vmatprep.subr.mxu0 0.0
    %2446 = vmatpush1.msra.mxu0 0.0
    %2447 = vmatprep.subr.mxu0 0.0
    %2448 = vmatpush1.msra.mxu0 0.0
    %2449 = vmatprep.subr.mxu0 0.0
    %2450 = vmatpush1.msra.mxu0 0.0
    %2451 = vmatprep.subr.mxu0 0.0
    %2452 = vmatpush1.msra.mxu0 0.0
    %2453 = vmatprep.subr.mxu0 0.0
    %2454 = vmatpush1.msra.mxu0 0.0
    %2455 = vmatprep.subr.mxu0 0.0
    %2456 = vmatpush1.msra.mxu0 0.0
    %2457 = vmatprep.subr.mxu0 0.0
    %2458 = vmatpush1.msra.mxu0 0.0
    %2459 = vmatprep.subr.mxu0 0.0
    %2460 = vmatpush1.msra.mxu0 0.0
    %2461 = vmatprep.subr.mxu0 0.0
    %2462 = vmatpush1.msra.mxu0 0.0
    %2463 = vmatprep.subr.mxu0 0.0
    %2464 = vmatpush1.msra.mxu0 0.0
    %2465 = vmatprep.subr.mxu0 0.0
    %2466 = vmatpush1.msra.mxu0 0.0
    %2467 = vmatprep.subr.mxu0 0.0
    %2468 = vmatpush1.msra.mxu0 0.0
    %2469 = vmatprep.subr.mxu0 0.0
    %2470 = vmatpush1.msra.mxu0 0.0
    %2471 = vmatprep.subr.mxu0 0.0
    %2472 = vmatpush1.msra.mxu0 0.0
    %2473 = vmatprep.subr.mxu0 0.0
    %2474 = vmatpush1.msra.mxu0 0.0
    %2475 = vmatprep.subr.mxu0 0.0
    %2476 = vmatpush1.msra.mxu0 0.0
    %2477 = vmatprep.subr.mxu0 0.0
    %2478 = vmatpush1.msra.mxu0 0.0
    %2479 = vmatprep.mubr.f32.mxu0 0.0
    %2480 = vmatmul.mubr.f32.gmra.mrb[0].mxu0 %v2413
    %v2481 = vpop.f32.mrb[0].mxu0
    %v2482 = vadd.f32 0.0, %v2481
    %v2483 = vpop.f32.mrb[0].mxu0
    %2484 = vdwg.mxu0
    %v2485 = vadd.f32 %v2400, %v2482
    %s2486 = scalar_lea.vmem [#allocation3], 4
    %v2487 = vld [vmem:[%s2486] ss:$2 sm:$0x1f]
    %s2488 = scalar_lea.vmem %s5, 256
    %v2489 = vld [vmem:[%s2488] sm:$0xff]
    %v2490 = vld [vmem:[%s2488 + $0x8] sm:$0xff]
    %v2491 = vld [vmem:[%s2488 + $0x10] sm:$0xff]
    %v2492 = vld [vmem:[%s2488 + $0x18] sm:$0xff]
    %v2493 = vld [vmem:[%s2488 + $0x20] sm:$0xff]
    %v2494 = vld [vmem:[%s2488 + $0x28] sm:$0xff]
    %v2495 = vld [vmem:[%s2488 + $0x30] sm:$0xff]
    %v2496 = vld [vmem:[%s2488 + $0x38] sm:$0xff]
    %v2498 = vsel %vm1682, %v2487, 0
    %2500 = vmatprep.subr.mxu0 0.0
    %2501 = vmatpush1.msra.mxu0 %v2489
    %2502 = vmatprep.subr.mxu0 0.0
    %2503 = vmatpush1.msra.mxu0 %v2490
    %2504 = vmatprep.subr.mxu0 0.0
    %2505 = vmatpush1.msra.mxu0 %v2491
    %2506 = vmatprep.subr.mxu0 0.0
    %2507 = vmatpush1.msra.mxu0 %v2492
    %2508 = vmatprep.subr.mxu0 0.0
    %2509 = vmatpush1.msra.mxu0 %v2493
    %2510 = vmatprep.subr.mxu0 0.0
    %2511 = vmatpush1.msra.mxu0 %v2494
    %2512 = vmatprep.subr.mxu0 0.0
    %2513 = vmatpush1.msra.mxu0 %v2495
    %2514 = vmatprep.subr.mxu0 0.0
    %2515 = vmatpush1.msra.mxu0 %v2496
    %2516 = vmatprep.subr.mxu0 0.0
    %2517 = vmatpush1.msra.mxu0 0.0
    %2518 = vmatprep.subr.mxu0 0.0
    %2519 = vmatpush1.msra.mxu0 0.0
    %2520 = vmatprep.subr.mxu0 0.0
    %2521 = vmatpush1.msra.mxu0 0.0
    %2522 = vmatprep.subr.mxu0 0.0
    %2523 = vmatpush1.msra.mxu0 0.0
    %2524 = vmatprep.subr.mxu0 0.0
    %2525 = vmatpush1.msra.mxu0 0.0
    %2526 = vmatprep.subr.mxu0 0.0
    %2527 = vmatpush1.msra.mxu0 0.0
    %2528 = vmatprep.subr.mxu0 0.0
    %2529 = vmatpush1.msra.mxu0 0.0
    %2530 = vmatprep.subr.mxu0 0.0
    %2531 = vmatpush1.msra.mxu0 0.0
    %2532 = vmatprep.subr.mxu0 0.0
    %2533 = vmatpush1.msra.mxu0 0.0
    %2534 = vmatprep.subr.mxu0 0.0
    %2535 = vmatpush1.msra.mxu0 0.0
    %2536 = vmatprep.subr.mxu0 0.0
    %2537 = vmatpush1.msra.mxu0 0.0
    %2538 = vmatprep.subr.mxu0 0.0
    %2539 = vmatpush1.msra.mxu0 0.0
    %2540 = vmatprep.subr.mxu0 0.0
    %2541 = vmatpush1.msra.mxu0 0.0
    %2542 = vmatprep.subr.mxu0 0.0
    %2543 = vmatpush1.msra.mxu0 0.0
    %2544 = vmatprep.subr.mxu0 0.0
    %2545 = vmatpush1.msra.mxu0 0.0
    %2546 = vmatprep.subr.mxu0 0.0
    %2547 = vmatpush1.msra.mxu0 0.0
    %2548 = vmatprep.subr.mxu0 0.0
    %2549 = vmatpush1.msra.mxu0 0.0
    %2550 = vmatprep.subr.mxu0 0.0
    %2551 = vmatpush1.msra.mxu0 0.0
    %2552 = vmatprep.subr.mxu0 0.0
    %2553 = vmatpush1.msra.mxu0 0.0
    %2554 = vmatprep.subr.mxu0 0.0
    %2555 = vmatpush1.msra.mxu0 0.0
    %2556 = vmatprep.subr.mxu0 0.0
    %2557 = vmatpush1.msra.mxu0 0.0
    %2558 = vmatprep.subr.mxu0 0.0
    %2559 = vmatpush1.msra.mxu0 0.0
    %2560 = vmatprep.subr.mxu0 0.0
    %2561 = vmatpush1.msra.mxu0 0.0
    %2562 = vmatprep.subr.mxu0 0.0
    %2563 = vmatpush1.msra.mxu0 0.0
    %2564 = vmatprep.mubr.f32.mxu0 0.0
    %2565 = vmatmul.mubr.f32.gmra.mrb[0].mxu0 %v2498
    %v2566 = vpop.f32.mrb[0].mxu0
    %v2567 = vadd.f32 0.0, %v2566
    %v2568 = vpop.f32.mrb[0].mxu0
    %2569 = vdwg.mxu0
    %v2570 = vadd.f32 %v2485, %v2567
    %v2571 = vld [vmem:[%s6] sm:$0x1]
    %v2573 = vlaneseq
    %v2574 = vshrl.u32 %v2573, 7
    %v2575 = vsub.s32 0, %v2574
    %v2576 = vrot.slane %v2571, %v2575
    %v2578 = vadd.f32 %v2570, %v2576
    %v2579 = vmax.f32 %v2578, 0.0
    %v2580 = vld [vmem:[%s7] sm:$0xff]
    %v2581 = vld [vmem:[%s7 + $0x8] sm:$0xff]
    %v2582 = vld [vmem:[%s7 + $0x10] sm:$0xff]
    %v2583 = vld [vmem:[%s7 + $0x18] sm:$0xff]
    %v2584 = vld [vmem:[%s7 + $0x20] sm:$0xff]
    %v2585 = vld [vmem:[%s7 + $0x28] sm:$0xff]
    %v2586 = vld [vmem:[%s7 + $0x30] sm:$0xff]
    %v2587 = vld [vmem:[%s7 + $0x38] sm:$0xff]
    %v2588 = vld [vmem:[%s7 + $0x40] sm:$0xff]
    %v2589 = vld [vmem:[%s7 + $0x48] sm:$0xff]
    %v2590 = vld [vmem:[%s7 + $0x50] sm:$0xff]
    %v2591 = vld [vmem:[%s7 + $0x58] sm:$0xff]
    %v2592 = vld [vmem:[%s7 + $0x60] sm:$0xff]
    %v2593 = vld [vmem:[%s7 + $0x68] sm:$0xff]
    %v2594 = vld [vmem:[%s7 + $0x70] sm:$0xff]
    %v2595 = vld [vmem:[%s7 + $0x78] sm:$0xff]
    %v2596 = vld [vmem:[%s7 + $0x80] sm:$0xff]
    %v2597 = vld [vmem:[%s7 + $0x88] sm:$0xff]
    %v2598 = vld [vmem:[%s7 + $0x90] sm:$0xff]
    %v2599 = vld [vmem:[%s7 + $0x98] sm:$0xff]
    %v2600 = vld [vmem:[%s7 + $0xa0] sm:$0xff]
    %v2601 = vld [vmem:[%s7 + $0xa8] sm:$0xff]
    %v2602 = vld [vmem:[%s7 + $0xb0] sm:$0xff]
    %v2603 = vld [vmem:[%s7 + $0xb8] sm:$0xff]
    %v2604 = vld [vmem:[%s7 + $0xc0] sm:$0xff]
    %v2605 = vld [vmem:[%s7 + $0xc8] sm:$0xff]
    %v2606 = vld [vmem:[%s7 + $0xd0] sm:$0xff]
    %v2607 = vld [vmem:[%s7 + $0xd8] sm:$0xff]
    %v2608 = vld [vmem:[%s7 + $0xe0] sm:$0xff]
    %v2609 = vld [vmem:[%s7 + $0xe8] sm:$0xff]
    %v2610 = vld [vmem:[%s7 + $0xf0] sm:$0xff]
    %v2611 = vld [vmem:[%s7 + $0xf8] sm:$0xff]
    %v2612 = vld [vmem:[%s7 + $0x100] sm:$0xff]
    %v2613 = vld [vmem:[%s7 + $0x108] sm:$0xff]
    %v2614 = vld [vmem:[%s7 + $0x110] sm:$0xff]
    %v2615 = vld [vmem:[%s7 + $0x118] sm:$0xff]
    %v2616 = vld [vmem:[%s7 + $0x120] sm:$0xff]
    %v2617 = vld [vmem:[%s7 + $0x128] sm:$0xff]
    %v2618 = vld [vmem:[%s7 + $0x130] sm:$0xff]
    %v2619 = vld [vmem:[%s7 + $0x138] sm:$0xff]
    %v2620 = vld [vmem:[%s7 + $0x140] sm:$0xff]
    %v2621 = vld [vmem:[%s7 + $0x148] sm:$0xff]
    %v2622 = vld [vmem:[%s7 + $0x150] sm:$0xff]
    %v2623 = vld [vmem:[%s7 + $0x158] sm:$0xff]
    %v2624 = vld [vmem:[%s7 + $0x160] sm:$0xff]
    %v2625 = vld [vmem:[%s7 + $0x168] sm:$0xff]
    %v2626 = vld [vmem:[%s7 + $0x170] sm:$0xff]
    %v2627 = vld [vmem:[%s7 + $0x178] sm:$0xff]
    %v2628 = vld [vmem:[%s7 + $0x180] sm:$0xff]
    %v2629 = vld [vmem:[%s7 + $0x188] sm:$0xff]
    %v2630 = vld [vmem:[%s7 + $0x190] sm:$0xff]
    %v2631 = vld [vmem:[%s7 + $0x198] sm:$0xff]
    %v2632 = vld [vmem:[%s7 + $0x1a0] sm:$0xff]
    %v2633 = vld [vmem:[%s7 + $0x1a8] sm:$0xff]
    %v2634 = vld [vmem:[%s7 + $0x1b0] sm:$0xff]
    %v2635 = vld [vmem:[%s7 + $0x1b8] sm:$0xff]
    %v2636 = vld [vmem:[%s7 + $0x1c0] sm:$0xff]
    %v2637 = vld [vmem:[%s7 + $0x1c8] sm:$0xff]
    %v2638 = vld [vmem:[%s7 + $0x1d0] sm:$0xff]
    %v2639 = vld [vmem:[%s7 + $0x1d8] sm:$0xff]
    %v2640 = vld [vmem:[%s7 + $0x1e0] sm:$0xff]
    %v2641 = vld [vmem:[%s7 + $0x1e8] sm:$0xff]
    %v2642 = vld [vmem:[%s7 + $0x1f0] sm:$0xff]
    %v2643 = vld [vmem:[%s7 + $0x1f8] sm:$0xff]
    %v2644 = vld [vmem:[%s7 + $0x200] sm:$0xff]
    %v2645 = vld [vmem:[%s7 + $0x208] sm:$0xff]
    %v2646 = vld [vmem:[%s7 + $0x210] sm:$0xff]
    %v2647 = vld [vmem:[%s7 + $0x218] sm:$0xff]
    %v2648 = vld [vmem:[%s7 + $0x220] sm:$0xff]
    %v2649 = vld [vmem:[%s7 + $0x228] sm:$0xff]
    %v2650 = vld [vmem:[%s7 + $0x230] sm:$0xff]
    %v2651 = vld [vmem:[%s7 + $0x238] sm:$0xff]
    %v2652 = vld [vmem:[%s7 + $0x240] sm:$0xff]
    %v2653 = vld [vmem:[%s7 + $0x248] sm:$0xff]
    %v2654 = vld [vmem:[%s7 + $0x250] sm:$0xff]
    %v2655 = vld [vmem:[%s7 + $0x258] sm:$0xff]
    %v2656 = vld [vmem:[%s7 + $0x260] sm:$0xff]
    %v2657 = vld [vmem:[%s7 + $0x268] sm:$0xff]
    %v2658 = vld [vmem:[%s7 + $0x270] sm:$0xff]
    %v2659 = vld [vmem:[%s7 + $0x278] sm:$0xff]
    %v2660 = vld [vmem:[%s7 + $0x280] sm:$0xff]
    %v2661 = vld [vmem:[%s7 + $0x288] sm:$0xff]
    %v2662 = vld [vmem:[%s7 + $0x290] sm:$0xff]
    %v2663 = vld [vmem:[%s7 + $0x298] sm:$0xff]
    %v2664 = vld [vmem:[%s7 + $0x2a0] sm:$0xff]
    %v2665 = vld [vmem:[%s7 + $0x2a8] sm:$0xff]
    %v2666 = vld [vmem:[%s7 + $0x2b0] sm:$0xff]
    %v2667 = vld [vmem:[%s7 + $0x2b8] sm:$0xff]
    %v2668 = vld [vmem:[%s7 + $0x2c0] sm:$0xff]
    %v2669 = vld [vmem:[%s7 + $0x2c8] sm:$0xff]
    %v2670 = vld [vmem:[%s7 + $0x2d0] sm:$0xff]
    %v2671 = vld [vmem:[%s7 + $0x2d8] sm:$0xff]
    %v2672 = vld [vmem:[%s7 + $0x2e0] sm:$0xff]
    %v2673 = vld [vmem:[%s7 + $0x2e8] sm:$0xff]
    %v2674 = vld [vmem:[%s7 + $0x2f0] sm:$0xff]
    %v2675 = vld [vmem:[%s7 + $0x2f8] sm:$0xff]
    %v2676 = vld [vmem:[%s7 + $0x300] sm:$0xff]
    %v2677 = vld [vmem:[%s7 + $0x308] sm:$0xff]
    %v2678 = vld [vmem:[%s7 + $0x310] sm:$0xff]
    %v2679 = vld [vmem:[%s7 + $0x318] sm:$0xff]
    %v2680 = vld [vmem:[%s7 + $0x320] sm:$0xff]
    %v2681 = vld [vmem:[%s7 + $0x328] sm:$0xff]
    %v2682 = vld [vmem:[%s7 + $0x330] sm:$0xff]
    %v2683 = vld [vmem:[%s7 + $0x338] sm:$0xff]
    %v2684 = vld [vmem:[%s7 + $0x340] sm:$0xff]
    %v2685 = vld [vmem:[%s7 + $0x348] sm:$0xff]
    %v2686 = vld [vmem:[%s7 + $0x350] sm:$0xff]
    %v2687 = vld [vmem:[%s7 + $0x358] sm:$0xff]
    %v2688 = vld [vmem:[%s7 + $0x360] sm:$0xff]
    %v2689 = vld [vmem:[%s7 + $0x368] sm:$0xff]
    %v2690 = vld [vmem:[%s7 + $0x370] sm:$0xff]
    %v2691 = vld [vmem:[%s7 + $0x378] sm:$0xff]
    %v2692 = vld [vmem:[%s7 + $0x380] sm:$0xff]
    %v2693 = vld [vmem:[%s7 + $0x388] sm:$0xff]
    %v2694 = vld [vmem:[%s7 + $0x390] sm:$0xff]
    %v2695 = vld [vmem:[%s7 + $0x398] sm:$0xff]
    %v2696 = vld [vmem:[%s7 + $0x3a0] sm:$0xff]
    %v2697 = vld [vmem:[%s7 + $0x3a8] sm:$0xff]
    %v2698 = vld [vmem:[%s7 + $0x3b0] sm:$0xff]
    %v2699 = vld [vmem:[%s7 + $0x3b8] sm:$0xff]
    %v2700 = vld [vmem:[%s7 + $0x3c0] sm:$0xff]
    %v2701 = vld [vmem:[%s7 + $0x3c8] sm:$0xff]
    %v2702 = vld [vmem:[%s7 + $0x3d0] sm:$0xff]
    %v2703 = vld [vmem:[%s7 + $0x3d8] sm:$0xff]
    %v2704 = vld [vmem:[%s7 + $0x3e0] sm:$0xff]
    %v2705 = vld [vmem:[%s7 + $0x3e8] sm:$0xff]
    %v2706 = vld [vmem:[%s7 + $0x3f0] sm:$0xff]
    %v2707 = vld [vmem:[%s7 + $0x3f8] sm:$0xff]
    %v2708 = vld [vmem:[%s9] sm:$0xff]
    %v2710 = vlaneseq
    %v2711 = vshrl.u32 %v2710, 7
    %v2712 = vsub.s32 0, %v2711
    %v2713 = vrot.slane %v2708, %v2712
    %v2714 = vlaneseq
    %v2715 = vshrl.u32 %v2714, 7
    %v2716 = vsub.s32 1, %v2715
    %v2717 = vrot.slane %v2708, %v2716
    %v2718 = vlaneseq
    %v2719 = vshrl.u32 %v2718, 7
    %v2720 = vsub.s32 2, %v2719
    %v2721 = vrot.slane %v2708, %v2720
    %v2722 = vlaneseq
    %v2723 = vshrl.u32 %v2722, 7
    %v2724 = vsub.s32 3, %v2723
    %v2725 = vrot.slane %v2708, %v2724
    %v2726 = vlaneseq
    %v2727 = vshrl.u32 %v2726, 7
    %v2728 = vsub.s32 4, %v2727
    %v2729 = vrot.slane %v2708, %v2728
    %v2730 = vlaneseq
    %v2731 = vshrl.u32 %v2730, 7
    %v2732 = vsub.s32 5, %v2731
    %v2733 = vrot.slane %v2708, %v2732
    %v2734 = vlaneseq
    %v2735 = vshrl.u32 %v2734, 7
    %v2736 = vsub.s32 6, %v2735
    %v2737 = vrot.slane %v2708, %v2736
    %v2738 = vlaneseq
    %v2739 = vshrl.u32 %v2738, 7
    %v2740 = vsub.s32 7, %v2739
    %v2741 = vrot.slane %v2708, %v2740
    %2750 = vmatprep.subr.mxu0 %v2581
    %2751 = vmatpush1.msra.mxu0 %v2580
    %2752 = vmatprep.subr.mxu0 %v2589
    %2753 = vmatpush1.msra.mxu0 %v2588
    %2754 = vmatprep.subr.mxu0 %v2597
    %2755 = vmatpush1.msra.mxu0 %v2596
    %2756 = vmatprep.subr.mxu0 %v2605
    %2757 = vmatpush1.msra.mxu0 %v2604
    %2758 = vmatprep.subr.mxu0 %v2613
    %2759 = vmatpush1.msra.mxu0 %v2612
    %2760 = vmatprep.subr.mxu0 %v2621
    %2761 = vmatpush1.msra.mxu0 %v2620
    %2762 = vmatprep.subr.mxu0 %v2629
    %2763 = vmatpush1.msra.mxu0 %v2628
    %2764 = vmatprep.subr.mxu0 %v2637
    %2765 = vmatpush1.msra.mxu0 %v2636
    %2766 = vmatprep.subr.mxu0 %v2645
    %2767 = vmatpush1.msra.mxu0 %v2644
    %2768 = vmatprep.subr.mxu0 %v2653
    %2769 = vmatpush1.msra.mxu0 %v2652
    %2770 = vmatprep.subr.mxu0 %v2661
    %2771 = vmatpush1.msra.mxu0 %v2660
    %2772 = vmatprep.subr.mxu0 %v2669
    %2773 = vmatpush1.msra.mxu0 %v2668
    %2774 = vmatprep.subr.mxu0 %v2677
    %2775 = vmatpush1.msra.mxu0 %v2676
    %2776 = vmatprep.subr.mxu0 %v2685
    %2777 = vmatpush1.msra.mxu0 %v2684
    %2778 = vmatprep.subr.mxu0 %v2693
    %2779 = vmatpush1.msra.mxu0 %v2692
    %2780 = vmatprep.subr.mxu0 %v2701
    %2781 = vmatpush1.msra.mxu0 %v2700
    %2782 = vmatprep.subr.mxu0 0.0
    %2783 = vmatpush1.msra.mxu0 0.0
    %2784 = vmatprep.subr.mxu0 0.0
    %2785 = vmatpush1.msra.mxu0 0.0
    %2786 = vmatprep.subr.mxu0 0.0
    %2787 = vmatpush1.msra.mxu0 0.0
    %2788 = vmatprep.subr.mxu0 0.0
    %2789 = vmatpush1.msra.mxu0 0.0
    %2790 = vmatprep.subr.mxu0 0.0
    %2791 = vmatpush1.msra.mxu0 0.0
    %2792 = vmatprep.subr.mxu0 0.0
    %2793 = vmatpush1.msra.mxu0 0.0
    %2794 = vmatprep.subr.mxu0 0.0
    %2795 = vmatpush1.msra.mxu0 0.0
    %2796 = vmatprep.subr.mxu0 0.0
    %2797 = vmatpush1.msra.mxu0 0.0
    %2798 = vmatprep.subr.mxu0 0.0
    %2799 = vmatpush1.msra.mxu0 0.0
    %2800 = vmatprep.subr.mxu0 0.0
    %2801 = vmatpush1.msra.mxu0 0.0
    %2802 = vmatprep.subr.mxu0 0.0
    %2803 = vmatpush1.msra.mxu0 0.0
    %2804 = vmatprep.subr.mxu0 0.0
    %2805 = vmatpush1.msra.mxu0 0.0
    %2806 = vmatprep.subr.mxu0 0.0
    %2807 = vmatpush1.msra.mxu0 0.0
    %2808 = vmatprep.subr.mxu0 0.0
    %2809 = vmatpush1.msra.mxu0 0.0
    %2810 = vmatprep.subr.mxu0 0.0
    %2811 = vmatpush1.msra.mxu0 0.0
    %2812 = vmatprep.subr.mxu0 0.0
    %2813 = vmatpush1.msra.mxu0 0.0
    %2814 = vmatprep.mubr.f32.mxu0 0.0
    %2815 = vmatmul.mubr.f32.gmra.mrb[0].mxu0 %v2579
    %v2816 = vpop.f32.mrb[0].mxu0
    %v2817 = vadd.f32 %v2713, %v2816
    %v2818 = vpop.f32.mrb[0].mxu0
    %v2819 = vadd.f32 %v2717, %v2818
    %2820 = vdwg.mxu0
    %2821 = vmatprep.subr.mxu0 %v2583
    %2822 = vmatpush1.msra.mxu0 %v2582
    %2823 = vmatprep.subr.mxu0 %v2591
    %2824 = vmatpush1.msra.mxu0 %v2590
    %2825 = vmatprep.subr.mxu0 %v2599
    %2826 = vmatpush1.msra.mxu0 %v2598
    %2827 = vmatprep.subr.mxu0 %v2607
    %2828 = vmatpush1.msra.mxu0 %v2606
    %2829 = vmatprep.subr.mxu0 %v2615
    %2830 = vmatpush1.msra.mxu0 %v2614
    %2831 = vmatprep.subr.mxu0 %v2623
    %2832 = vmatpush1.msra.mxu0 %v2622
    %2833 = vmatprep.subr.mxu0 %v2631
    %2834 = vmatpush1.msra.mxu0 %v2630
    %2835 = vmatprep.subr.mxu0 %v2639
    %2836 = vmatpush1.msra.mxu0 %v2638
    %2837 = vmatprep.subr.mxu0 %v2647
    %2838 = vmatpush1.msra.mxu0 %v2646
    %2839 = vmatprep.subr.mxu0 %v2655
    %2840 = vmatpush1.msra.mxu0 %v2654
    %2841 = vmatprep.subr.mxu0 %v2663
    %2842 = vmatpush1.msra.mxu0 %v2662
    %2843 = vmatprep.subr.mxu0 %v2671
    %2844 = vmatpush1.msra.mxu0 %v2670
    %2845 = vmatprep.subr.mxu0 %v2679
    %2846 = vmatpush1.msra.mxu0 %v2678
    %2847 = vmatprep.subr.mxu0 %v2687
    %2848 = vmatpush1.msra.mxu0 %v2686
    %2849 = vmatprep.subr.mxu0 %v2695
    %2850 = vmatpush1.msra.mxu0 %v2694
    %2851 = vmatprep.subr.mxu0 %v2703
    %2852 = vmatpush1.msra.mxu0 %v2702
    %2853 = vmatprep.subr.mxu0 0.0
    %2854 = vmatpush1.msra.mxu0 0.0
    %2855 = vmatprep.subr.mxu0 0.0
    %2856 = vmatpush1.msra.mxu0 0.0
    %2857 = vmatprep.subr.mxu0 0.0
    %2858 = vmatpush1.msra.mxu0 0.0
    %2859 = vmatprep.subr.mxu0 0.0
    %2860 = vmatpush1.msra.mxu0 0.0
    %2861 = vmatprep.subr.mxu0 0.0
    %2862 = vmatpush1.msra.mxu0 0.0
    %2863 = vmatprep.subr.mxu0 0.0
    %2864 = vmatpush1.msra.mxu0 0.0
    %2865 = vmatprep.subr.mxu0 0.0
    %2866 = vmatpush1.msra.mxu0 0.0
    %2867 = vmatprep.subr.mxu0 0.0
    %2868 = vmatpush1.msra.mxu0 0.0
    %2869 = vmatprep.subr.mxu0 0.0
    %2870 = vmatpush1.msra.mxu0 0.0
    %2871 = vmatprep.subr.mxu0 0.0
    %2872 = vmatpush1.msra.mxu0 0.0
    %2873 = vmatprep.subr.mxu0 0.0
    %2874 = vmatpush1.msra.mxu0 0.0
    %2875 = vmatprep.subr.mxu0 0.0
    %2876 = vmatpush1.msra.mxu0 0.0
    %2877 = vmatprep.subr.mxu0 0.0
    %2878 = vmatpush1.msra.mxu0 0.0
    %2879 = vmatprep.subr.mxu0 0.0
    %2880 = vmatpush1.msra.mxu0 0.0
    %2881 = vmatprep.subr.mxu0 0.0
    %2882 = vmatpush1.msra.mxu0 0.0
    %2883 = vmatprep.subr.mxu0 0.0
    %2884 = vmatpush1.msra.mxu0 0.0
    %2885 = vmatprep.mubr.f32.mxu0 0.0
    %2886 = vmatmul.mubr.f32.gmra.mrb[0].mxu0 %v2579
    %v2887 = vpop.f32.mrb[0].mxu0
    %v2888 = vadd.f32 %v2721, %v2887
    %v2889 = vpop.f32.mrb[0].mxu0
    %v2890 = vadd.f32 %v2725, %v2889
    %2891 = vdwg.mxu0
    %2892 = vmatprep.subr.mxu0 %v2585
    %2893 = vmatpush1.msra.mxu0 %v2584
    %2894 = vmatprep.subr.mxu0 %v2593
    %2895 = vmatpush1.msra.mxu0 %v2592
    %2896 = vmatprep.subr.mxu0 %v2601
    %2897 = vmatpush1.msra.mxu0 %v2600
    %2898 = vmatprep.subr.mxu0 %v2609
    %2899 = vmatpush1.msra.mxu0 %v2608
    %2900 = vmatprep.subr.mxu0 %v2617
    %2901 = vmatpush1.msra.mxu0 %v2616
    %2902 = vmatprep.subr.mxu0 %v2625
    %2903 = vmatpush1.msra.mxu0 %v2624
    %2904 = vmatprep.subr.mxu0 %v2633
    %2905 = vmatpush1.msra.mxu0 %v2632
    %2906 = vmatprep.subr.mxu0 %v2641
    %2907 = vmatpush1.msra.mxu0 %v2640
    %2908 = vmatprep.subr.mxu0 %v2649
    %2909 = vmatpush1.msra.mxu0 %v2648
    %2910 = vmatprep.subr.mxu0 %v2657
    %2911 = vmatpush1.msra.mxu0 %v2656
    %2912 = vmatprep.subr.mxu0 %v2665
    %2913 = vmatpush1.msra.mxu0 %v2664
    %2914 = vmatprep.subr.mxu0 %v2673
    %2915 = vmatpush1.msra.mxu0 %v2672
    %2916 = vmatprep.subr.mxu0 %v2681
    %2917 = vmatpush1.msra.mxu0 %v2680
    %2918 = vmatprep.subr.mxu0 %v2689
    %2919 = vmatpush1.msra.mxu0 %v2688
    %2920 = vmatprep.subr.mxu0 %v2697
    %2921 = vmatpush1.msra.mxu0 %v2696
    %2922 = vmatprep.subr.mxu0 %v2705
    %2923 = vmatpush1.msra.mxu0 %v2704
    %2924 = vmatprep.subr.mxu0 0.0
    %2925 = vmatpush1.msra.mxu0 0.0
    %2926 = vmatprep.subr.mxu0 0.0
    %2927 = vmatpush1.msra.mxu0 0.0
    %2928 = vmatprep.subr.mxu0 0.0
    %2929 = vmatpush1.msra.mxu0 0.0
    %2930 = vmatprep.subr.mxu0 0.0
    %2931 = vmatpush1.msra.mxu0 0.0
    %2932 = vmatprep.subr.mxu0 0.0
    %2933 = vmatpush1.msra.mxu0 0.0
    %2934 = vmatprep.subr.mxu0 0.0
    %2935 = vmatpush1.msra.mxu0 0.0
    %2936 = vmatprep.subr.mxu0 0.0
    %2937 = vmatpush1.msra.mxu0 0.0
    %2938 = vmatprep.subr.mxu0 0.0
    %2939 = vmatpush1.msra.mxu0 0.0
    %2940 = vmatprep.subr.mxu0 0.0
    %2941 = vmatpush1.msra.mxu0 0.0
    %2942 = vmatprep.subr.mxu0 0.0
    %2943 = vmatpush1.msra.mxu0 0.0
    %2944 = vmatprep.subr.mxu0 0.0
    %2945 = vmatpush1.msra.mxu0 0.0
    %2946 = vmatprep.subr.mxu0 0.0
    %2947 = vmatpush1.msra.mxu0 0.0
    %2948 = vmatprep.subr.mxu0 0.0
    %2949 = vmatpush1.msra.mxu0 0.0
    %2950 = vmatprep.subr.mxu0 0.0
    %2951 = vmatpush1.msra.mxu0 0.0
    %2952 = vmatprep.subr.mxu0 0.0
    %2953 = vmatpush1.msra.mxu0 0.0
    %2954 = vmatprep.subr.mxu0 0.0
    %2955 = vmatpush1.msra.mxu0 0.0
    %2956 = vmatprep.mubr.f32.mxu0 0.0
    %2957 = vmatmul.mubr.f32.gmra.mrb[0].mxu0 %v2579
    %v2958 = vpop.f32.mrb[0].mxu0
    %v2959 = vadd.f32 %v2729, %v2958
    %v2960 = vpop.f32.mrb[0].mxu0
    %v2961 = vadd.f32 %v2733, %v2960
    %2962 = vdwg.mxu0
    %2963 = vmatprep.subr.mxu0 %v2587
    %2964 = vmatpush1.msra.mxu0 %v2586
    %2965 = vmatprep.subr.mxu0 %v2595
    %2966 = vmatpush1.msra.mxu0 %v2594
    %2967 = vmatprep.subr.mxu0 %v2603
    %2968 = vmatpush1.msra.mxu0 %v2602
    %2969 = vmatprep.subr.mxu0 %v2611
    %2970 = vmatpush1.msra.mxu0 %v2610
    %2971 = vmatprep.subr.mxu0 %v2619
    %2972 = vmatpush1.msra.mxu0 %v2618
    %2973 = vmatprep.subr.mxu0 %v2627
    %2974 = vmatpush1.msra.mxu0 %v2626
    %2975 = vmatprep.subr.mxu0 %v2635
    %2976 = vmatpush1.msra.mxu0 %v2634
    %2977 = vmatprep.subr.mxu0 %v2643
    %2978 = vmatpush1.msra.mxu0 %v2642
    %2979 = vmatprep.subr.mxu0 %v2651
    %2980 = vmatpush1.msra.mxu0 %v2650
    %2981 = vmatprep.subr.mxu0 %v2659
    %2982 = vmatpush1.msra.mxu0 %v2658
    %2983 = vmatprep.subr.mxu0 %v2667
    %2984 = vmatpush1.msra.mxu0 %v2666
    %2985 = vmatprep.subr.mxu0 %v2675
    %2986 = vmatpush1.msra.mxu0 %v2674
    %2987 = vmatprep.subr.mxu0 %v2683
    %2988 = vmatpush1.msra.mxu0 %v2682
    %2989 = vmatprep.subr.mxu0 %v2691
    %2990 = vmatpush1.msra.mxu0 %v2690
    %2991 = vmatprep.subr.mxu0 %v2699
    %2992 = vmatpush1.msra.mxu0 %v2698
    %2993 = vmatprep.subr.mxu0 %v2707
    %2994 = vmatpush1.msra.mxu0 %v2706
    %2995 = vmatprep.subr.mxu0 0.0
    %2996 = vmatpush1.msra.mxu0 0.0
    %2997 = vmatprep.subr.mxu0 0.0
    %2998 = vmatpush1.msra.mxu0 0.0
    %2999 = vmatprep.subr.mxu0 0.0
    %3000 = vmatpush1.msra.mxu0 0.0
    %3001 = vmatprep.subr.mxu0 0.0
    %3002 = vmatpush1.msra.mxu0 0.0
    %3003 = vmatprep.subr.mxu0 0.0
    %3004 = vmatpush1.msra.mxu0 0.0
    %3005 = vmatprep.subr.mxu0 0.0
    %3006 = vmatpush1.msra.mxu0 0.0
    %3007 = vmatprep.subr.mxu0 0.0
    %3008 = vmatpush1.msra.mxu0 0.0
    %3009 = vmatprep.subr.mxu0 0.0
    %3010 = vmatpush1.msra.mxu0 0.0
    %3011 = vmatprep.subr.mxu0 0.0
    %3012 = vmatpush1.msra.mxu0 0.0
    %3013 = vmatprep.subr.mxu0 0.0
    %3014 = vmatpush1.msra.mxu0 0.0
    %3015 = vmatprep.subr.mxu0 0.0
    %3016 = vmatpush1.msra.mxu0 0.0
    %3017 = vmatprep.subr.mxu0 0.0
    %3018 = vmatpush1.msra.mxu0 0.0
    %3019 = vmatprep.subr.mxu0 0.0
    %3020 = vmatpush1.msra.mxu0 0.0
    %3021 = vmatprep.subr.mxu0 0.0
    %3022 = vmatpush1.msra.mxu0 0.0
    %3023 = vmatprep.subr.mxu0 0.0
    %3024 = vmatpush1.msra.mxu0 0.0
    %3025 = vmatprep.subr.mxu0 0.0
    %3026 = vmatpush1.msra.mxu0 0.0
    %3027 = vmatprep.mubr.f32.mxu0 0.0
    %3028 = vmatmul.mubr.f32.gmra.mrb[0].mxu0 %v2579
    %v3029 = vpop.f32.mrb[0].mxu0
    %v3030 = vadd.f32 %v2737, %v3029
    %v3031 = vpop.f32.mrb[0].mxu0
    %v3032 = vadd.f32 %v2741, %v3031
    %3033 = vdwg.mxu0
    %3034 = vst [vmem:[#allocation4] sm:$0x1f] %v2817
    %3035 = vst [vmem:[#allocation4 + $0x8] sm:$0x1f] %v2819
    %3036 = vst [vmem:[#allocation4 + $0x10] sm:$0x1f] %v2888
    %3037 = vst [vmem:[#allocation4 + $0x18] sm:$0x1f] %v2890
    %3038 = vst [vmem:[#allocation4 + $0x20] sm:$0x1f] %v2959
    %3039 = vst [vmem:[#allocation4 + $0x28] sm:$0x1f] %v2961
    %3040 = vst [vmem:[#allocation4 + $0x30] sm:$0x1f] %v3030
    %3041 = vst [vmem:[#allocation4 + $0x38] sm:$0x1f] %v3032
    %s3042 = scalar_lea.vmem [#allocation3], 13
    %v3043 = vld [vmem:[%s3042] ss:$2 sm:$0x1f]
    %v3044 = vld [vmem:[%s5] sm:$0xff]
    %v3045 = vld [vmem:[%s5 + $0x8] sm:$0xff]
    %v3046 = vld [vmem:[%s5 + $0x10] sm:$0xff]
    %v3047 = vld [vmem:[%s5 + $0x18] sm:$0xff]
    %v3048 = vld [vmem:[%s5 + $0x20] sm:$0xff]
    %v3049 = vld [vmem:[%s5 + $0x28] sm:$0xff]
    %v3050 = vld [vmem:[%s5 + $0x30] sm:$0xff]
    %v3051 = vld [vmem:[%s5 + $0x38] sm:$0xff]
    %s3052 = scalar_lea.vmem [#allocation3], 14
    %v3053 = vld [vmem:[%s3052] ss:$2 sm:$0x1f]
    %v3054 = vld [vmem:[%s2161] sm:$0xff]
    %v3055 = vld [vmem:[%s2161 + $0x8] sm:$0xff]
    %v3056 = vld [vmem:[%s2161 + $0x10] sm:$0xff]
    %v3057 = vld [vmem:[%s2161 + $0x18] sm:$0xff]
    %v3058 = vld [vmem:[%s2161 + $0x20] sm:$0xff]
    %v3059 = vld [vmem:[%s2161 + $0x28] sm:$0xff]
    %v3060 = vld [vmem:[%s2161 + $0x30] sm:$0xff]
    %v3061 = vld [vmem:[%s2161 + $0x38] sm:$0xff]
    %v3063 = vsel %vm1682, %v3053, 0
    %3065 = vmatprep.subr.mxu0 0.0
    %3066 = vmatpush1.msra.mxu0 %v3054
    %3067 = vmatprep.subr.mxu0 0.0
    %3068 = vmatpush1.msra.mxu0 %v3055
    %3069 = vmatprep.subr.mxu0 0.0
    %3070 = vmatpush1.msra.mxu0 %v3056
    %3071 = vmatprep.subr.mxu0 0.0
    %3072 = vmatpush1.msra.mxu0 %v3057
    %3073 = vmatprep.subr.mxu0 0.0
    %3074 = vmatpush1.msra.mxu0 %v3058
    %3075 = vmatprep.subr.mxu0 0.0
    %3076 = vmatpush1.msra.mxu0 %v3059
    %3077 = vmatprep.subr.mxu0 0.0
    %3078 = vmatpush1.msra.mxu0 %v3060
    %3079 = vmatprep.subr.mxu0 0.0
    %3080 = vmatpush1.msra.mxu0 %v3061
    %3081 = vmatprep.subr.mxu0 0.0
    %3082 = vmatpush1.msra.mxu0 0.0
    %3083 = vmatprep.subr.mxu0 0.0
    %3084 = vmatpush1.msra.mxu0 0.0
    %3085 = vmatprep.subr.mxu0 0.0
    %3086 = vmatpush1.msra.mxu0 0.0
    %3087 = vmatprep.subr.mxu0 0.0
    %3088 = vmatpush1.msra.mxu0 0.0
    %3089 = vmatprep.subr.mxu0 0.0
    %3090 = vmatpush1.msra.mxu0 0.0
    %3091 = vmatprep.subr.mxu0 0.0
    %3092 = vmatpush1.msra.mxu0 0.0
    %3093 = vmatprep.subr.mxu0 0.0
    %3094 = vmatpush1.msra.mxu0 0.0
    %3095 = vmatprep.subr.mxu0 0.0
    %3096 = vmatpush1.msra.mxu0 0.0
    %3097 = vmatprep.subr.mxu0 0.0
    %3098 = vmatpush1.msra.mxu0 0.0
    %3099 = vmatprep.subr.mxu0 0.0
    %3100 = vmatpush1.msra.mxu0 0.0
    %3101 = vmatprep.subr.mxu0 0.0
    %3102 = vmatpush1.msra.mxu0 0.0
    %3103 = vmatprep.subr.mxu0 0.0
    %3104 = vmatpush1.msra.mxu0 0.0
    %3105 = vmatprep.subr.mxu0 0.0
    %3106 = vmatpush1.msra.mxu0 0.0
    %3107 = vmatprep.subr.mxu0 0.0
    %3108 = vmatpush1.msra.mxu0 0.0
    %3109 = vmatprep.subr.mxu0 0.0
    %3110 = vmatpush1.msra.mxu0 0.0
    %3111 = vmatprep.subr.mxu0 0.0
    %3112 = vmatpush1.msra.mxu0 0.0
    %3113 = vmatprep.subr.mxu0 0.0
    %3114 = vmatpush1.msra.mxu0 0.0
    %3115 = vmatprep.subr.mxu0 0.0
    %3116 = vmatpush1.msra.mxu0 0.0
    %3117 = vmatprep.subr.mxu0 0.0
    %3118 = vmatpush1.msra.mxu0 0.0
    %3119 = vmatprep.subr.mxu0 0.0
    %3120 = vmatpush1.msra.mxu0 0.0
    %3121 = vmatprep.subr.mxu0 0.0
    %3122 = vmatpush1.msra.mxu0 0.0
    %3123 = vmatprep.subr.mxu0 0.0
    %3124 = vmatpush1.msra.mxu0 0.0
    %3125 = vmatprep.subr.mxu0 0.0
    %3126 = vmatpush1.msra.mxu0 0.0
    %3127 = vmatprep.subr.mxu0 0.0
    %3128 = vmatpush1.msra.mxu0 0.0
    %3129 = vmatprep.mubr.f32.mxu0 0.0
    %3130 = vmatmul.mubr.f32.gmra.mrb[0].mxu0 %v3063
    %v3131 = vpop.f32.mrb[0].mxu0
    %v3132 = vadd.f32 0.0, %v3131
    %v3133 = vpop.f32.mrb[0].mxu0
    %3134 = vdwg.mxu0
    %v3136 = vsel %vm1682, %v3043, 0
    %3138 = vmatprep.subr.mxu0 0.0
    %3139 = vmatpush1.msra.mxu0 %v3044
    %3140 = vmatprep.subr.mxu0 0.0
    %3141 = vmatpush1.msra.mxu0 %v3045
    %3142 = vmatprep.subr.mxu0 0.0
    %3143 = vmatpush1.msra.mxu0 %v3046
    %3144 = vmatprep.subr.mxu0 0.0
    %3145 = vmatpush1.msra.mxu0 %v3047
    %3146 = vmatprep.subr.mxu0 0.0
    %3147 = vmatpush1.msra.mxu0 %v3048
    %3148 = vmatprep.subr.mxu0 0.0
    %3149 = vmatpush1.msra.mxu0 %v3049
    %3150 = vmatprep.subr.mxu0 0.0
    %3151 = vmatpush1.msra.mxu0 %v3050
    %3152 = vmatprep.subr.mxu0 0.0
    %3153 = vmatpush1.msra.mxu0 %v3051
    %3154 = vmatprep.subr.mxu0 0.0
    %3155 = vmatpush1.msra.mxu0 0.0
    %3156 = vmatprep.subr.mxu0 0.0
    %3157 = vmatpush1.msra.mxu0 0.0
    %3158 = vmatprep.subr.mxu0 0.0
    %3159 = vmatpush1.msra.mxu0 0.0
    %3160 = vmatprep.subr.mxu0 0.0
    %3161 = vmatpush1.msra.mxu0 0.0
    %3162 = vmatprep.subr.mxu0 0.0
    %3163 = vmatpush1.msra.mxu0 0.0
    %3164 = vmatprep.subr.mxu0 0.0
    %3165 = vmatpush1.msra.mxu0 0.0
    %3166 = vmatprep.subr.mxu0 0.0
    %3167 = vmatpush1.msra.mxu0 0.0
    %3168 = vmatprep.subr.mxu0 0.0
    %3169 = vmatpush1.msra.mxu0 0.0
    %3170 = vmatprep.subr.mxu0 0.0
    %3171 = vmatpush1.msra.mxu0 0.0
    %3172 = vmatprep.subr.mxu0 0.0
    %3173 = vmatpush1.msra.mxu0 0.0
    %3174 = vmatprep.subr.mxu0 0.0
    %3175 = vmatpush1.msra.mxu0 0.0
    %3176 = vmatprep.subr.mxu0 0.0
    %3177 = vmatpush1.msra.mxu0 0.0
    %3178 = vmatprep.subr.mxu0 0.0
    %3179 = vmatpush1.msra.mxu0 0.0
    %3180 = vmatprep.subr.mxu0 0.0
    %3181 = vmatpush1.msra.mxu0 0.0
    %3182 = vmatprep.subr.mxu0 0.0
    %3183 = vmatpush1.msra.mxu0 0.0
    %3184 = vmatprep.subr.mxu0 0.0
    %3185 = vmatpush1.msra.mxu0 0.0
    %3186 = vmatprep.subr.mxu0 0.0
    %3187 = vmatpush1.msra.mxu0 0.0
    %3188 = vmatprep.subr.mxu0 0.0
    %3189 = vmatpush1.msra.mxu0 0.0
    %3190 = vmatprep.subr.mxu0 0.0
    %3191 = vmatpush1.msra.mxu0 0.0
    %3192 = vmatprep.subr.mxu0 0.0
    %3193 = vmatpush1.msra.mxu0 0.0
    %3194 = vmatprep.subr.mxu0 0.0
    %3195 = vmatpush1.msra.mxu0 0.0
    %3196 = vmatprep.subr.mxu0 0.0
    %3197 = vmatpush1.msra.mxu0 0.0
    %3198 = vmatprep.subr.mxu0 0.0
    %3199 = vmatpush1.msra.mxu0 0.0
    %3200 = vmatprep.subr.mxu0 0.0
    %3201 = vmatpush1.msra.mxu0 0.0
    %3202 = vmatprep.mubr.f32.mxu0 0.0
    %3203 = vmatmul.mubr.f32.gmra.mrb[0].mxu0 %v3136
    %v3204 = vpop.f32.mrb[0].mxu0
    %v3205 = vadd.f32 %v3132, %v3204
    %v3206 = vpop.f32.mrb[0].mxu0
    %3207 = vdwg.mxu0
    %s3208 = scalar_lea.vmem [#allocation3], 15
    %v3209 = vld [vmem:[%s3208] ss:$2 sm:$0x1f]
    %v3210 = vld [vmem:[%s2318] sm:$0xff]
    %v3211 = vld [vmem:[%s2318 + $0x8] sm:$0xff]
    %v3212 = vld [vmem:[%s2318 + $0x10] sm:$0xff]
    %v3213 = vld [vmem:[%s2318 + $0x18] sm:$0xff]
    %v3214 = vld [vmem:[%s2318 + $0x20] sm:$0xff]
    %v3215 = vld [vmem:[%s2318 + $0x28] sm:$0xff]
    %v3216 = vld [vmem:[%s2318 + $0x30] sm:$0xff]
    %v3217 = vld [vmem:[%s2318 + $0x38] sm:$0xff]
    %v3219 = vsel %vm1682, %v3209, 0
    %3221 = vmatprep.subr.mxu0 0.0
    %3222 = vmatpush1.msra.mxu0 %v3210
    %3223 = vmatprep.subr.mxu0 0.0
    %3224 = vmatpush1.msra.mxu0 %v3211
    %3225 = vmatprep.subr.mxu0 0.0
    %3226 = vmatpush1.msra.mxu0 %v3212
    %3227 = vmatprep.subr.mxu0 0.0
    %3228 = vmatpush1.msra.mxu0 %v3213
    %3229 = vmatprep.subr.mxu0 0.0
    %3230 = vmatpush1.msra.mxu0 %v3214
    %3231 = vmatprep.subr.mxu0 0.0
    %3232 = vmatpush1.msra.mxu0 %v3215
    %3233 = vmatprep.subr.mxu0 0.0
    %3234 = vmatpush1.msra.mxu0 %v3216
    %3235 = vmatprep.subr.mxu0 0.0
    %3236 = vmatpush1.msra.mxu0 %v3217
    %3237 = vmatprep.subr.mxu0 0.0
    %3238 = vmatpush1.msra.mxu0 0.0
    %3239 = vmatprep.subr.mxu0 0.0
    %3240 = vmatpush1.msra.mxu0 0.0
    %3241 = vmatprep.subr.mxu0 0.0
    %3242 = vmatpush1.msra.mxu0 0.0
    %3243 = vmatprep.subr.mxu0 0.0
    %3244 = vmatpush1.msra.mxu0 0.0
    %3245 = vmatprep.subr.mxu0 0.0
    %3246 = vmatpush1.msra.mxu0 0.0
    %3247 = vmatprep.subr.mxu0 0.0
    %3248 = vmatpush1.msra.mxu0 0.0
    %3249 = vmatprep.subr.mxu0 0.0
    %3250 = vmatpush1.msra.mxu0 0.0
    %3251 = vmatprep.subr.mxu0 0.0
    %3252 = vmatpush1.msra.mxu0 0.0
    %3253 = vmatprep.subr.mxu0 0.0
    %3254 = vmatpush1.msra.mxu0 0.0
    %3255 = vmatprep.subr.mxu0 0.0
    %3256 = vmatpush1.msra.mxu0 0.0
    %3257 = vmatprep.subr.mxu0 0.0
    %3258 = vmatpush1.msra.mxu0 0.0
    %3259 = vmatprep.subr.mxu0 0.0
    %3260 = vmatpush1.msra.mxu0 0.0
    %3261 = vmatprep.subr.mxu0 0.0
    %3262 = vmatpush1.msra.mxu0 0.0
    %3263 = vmatprep.subr.mxu0 0.0
    %3264 = vmatpush1.msra.mxu0 0.0
    %3265 = vmatprep.subr.mxu0 0.0
    %3266 = vmatpush1.msra.mxu0 0.0
    %3267 = vmatprep.subr.mxu0 0.0
    %3268 = vmatpush1.msra.mxu0 0.0
    %3269 = vmatprep.subr.mxu0 0.0
    %3270 = vmatpush1.msra.mxu0 0.0
    %3271 = vmatprep.subr.mxu0 0.0
    %3272 = vmatpush1.msra.mxu0 0.0
    %3273 = vmatprep.subr.mxu0 0.0
    %3274 = vmatpush1.msra.mxu0 0.0
    %3275 = vmatprep.subr.mxu0 0.0
    %3276 = vmatpush1.msra.mxu0 0.0
    %3277 = vmatprep.subr.mxu0 0.0
    %3278 = vmatpush1.msra.mxu0 0.0
    %3279 = vmatprep.subr.mxu0 0.0
    %3280 = vmatpush1.msra.mxu0 0.0
    %3281 = vmatprep.subr.mxu0 0.0
    %3282 = vmatpush1.msra.mxu0 0.0
    %3283 = vmatprep.subr.mxu0 0.0
    %3284 = vmatpush1.msra.mxu0 0.0
    %3285 = vmatprep.mubr.f32.mxu0 0.0
    %3286 = vmatmul.mubr.f32.gmra.mrb[0].mxu0 %v3219
    %v3287 = vpop.f32.mrb[0].mxu0
    %v3288 = vadd.f32 0.0, %v3287
    %v3289 = vpop.f32.mrb[0].mxu0
    %3290 = vdwg.mxu0
    %v3291 = vadd.f32 %v3205, %v3288
    %s3292 = scalar_lea.vmem [#allocation3], 16
    %v3293 = vld [vmem:[%s3292] ss:$2 sm:$0x1f]
    %v3294 = vld [vmem:[%s2403] sm:$0xff]
    %v3295 = vld [vmem:[%s2403 + $0x8] sm:$0xff]
    %v3296 = vld [vmem:[%s2403 + $0x10] sm:$0xff]
    %v3297 = vld [vmem:[%s2403 + $0x18] sm:$0xff]
    %v3298 = vld [vmem:[%s2403 + $0x20] sm:$0xff]
    %v3299 = vld [vmem:[%s2403 + $0x28] sm:$0xff]
    %v3300 = vld [vmem:[%s2403 + $0x30] sm:$0xff]
    %v3301 = vld [vmem:[%s2403 + $0x38] sm:$0xff]
    %v3303 = vsel %vm1682, %v3293, 0
    %3305 = vmatprep.subr.mxu0 0.0
    %3306 = vmatpush1.msra.mxu0 %v3294
    %3307 = vmatprep.subr.mxu0 0.0
    %3308 = vmatpush1.msra.mxu0 %v3295
    %3309 = vmatprep.subr.mxu0 0.0
    %3310 = vmatpush1.msra.mxu0 %v3296
    %3311 = vmatprep.subr.mxu0 0.0
    %3312 = vmatpush1.msra.mxu0 %v3297
    %3313 = vmatprep.subr.mxu0 0.0
    %3314 = vmatpush1.msra.mxu0 %v3298
    %3315 = vmatprep.subr.mxu0 0.0
    %3316 = vmatpush1.msra.mxu0 %v3299
    %3317 = vmatprep.subr.mxu0 0.0
    %3318 = vmatpush1.msra.mxu0 %v3300
    %3319 = vmatprep.subr.mxu0 0.0
    %3320 = vmatpush1.msra.mxu0 %v3301
    %3321 = vmatprep.subr.mxu0 0.0
    %3322 = vmatpush1.msra.mxu0 0.0
    %3323 = vmatprep.subr.mxu0 0.0
    %3324 = vmatpush1.msra.mxu0 0.0
    %3325 = vmatprep.subr.mxu0 0.0
    %3326 = vmatpush1.msra.mxu0 0.0
    %3327 = vmatprep.subr.mxu0 0.0
    %3328 = vmatpush1.msra.mxu0 0.0
    %3329 = vmatprep.subr.mxu0 0.0
    %3330 = vmatpush1.msra.mxu0 0.0
    %3331 = vmatprep.subr.mxu0 0.0
    %3332 = vmatpush1.msra.mxu0 0.0
    %3333 = vmatprep.subr.mxu0 0.0
    %3334 = vmatpush1.msra.mxu0 0.0
    %3335 = vmatprep.subr.mxu0 0.0
    %3336 = vmatpush1.msra.mxu0 0.0
    %3337 = vmatprep.subr.mxu0 0.0
    %3338 = vmatpush1.msra.mxu0 0.0
    %3339 = vmatprep.subr.mxu0 0.0
    %3340 = vmatpush1.msra.mxu0 0.0
    %3341 = vmatprep.subr.mxu0 0.0
    %3342 = vmatpush1.msra.mxu0 0.0
    %3343 = vmatprep.subr.mxu0 0.0
    %3344 = vmatpush1.msra.mxu0 0.0
    %3345 = vmatprep.subr.mxu0 0.0
    %3346 = vmatpush1.msra.mxu0 0.0
    %3347 = vmatprep.subr.mxu0 0.0
    %3348 = vmatpush1.msra.mxu0 0.0
    %3349 = vmatprep.subr.mxu0 0.0
    %3350 = vmatpush1.msra.mxu0 0.0
    %3351 = vmatprep.subr.mxu0 0.0
    %3352 = vmatpush1.msra.mxu0 0.0
    %3353 = vmatprep.subr.mxu0 0.0
    %3354 = vmatpush1.msra.mxu0 0.0
    %3355 = vmatprep.subr.mxu0 0.0
    %3356 = vmatpush1.msra.mxu0 0.0
    %3357 = vmatprep.subr.mxu0 0.0
    %3358 = vmatpush1.msra.mxu0 0.0
    %3359 = vmatprep.subr.mxu0 0.0
    %3360 = vmatpush1.msra.mxu0 0.0
    %3361 = vmatprep.subr.mxu0 0.0
    %3362 = vmatpush1.msra.mxu0 0.0
    %3363 = vmatprep.subr.mxu0 0.0
    %3364 = vmatpush1.msra.mxu0 0.0
    %3365 = vmatprep.subr.mxu0 0.0
    %3366 = vmatpush1.msra.mxu0 0.0
    %3367 = vmatprep.subr.mxu0 0.0
    %3368 = vmatpush1.msra.mxu0 0.0
    %3369 = vmatprep.mubr.f32.mxu0 0.0
    %3370 = vmatmul.mubr.f32.gmra.mrb[0].mxu0 %v3303
    %v3371 = vpop.f32.mrb[0].mxu0
    %v3372 = vadd.f32 0.0, %v3371
    %v3373 = vpop.f32.mrb[0].mxu0
    %3374 = vdwg.mxu0
    %v3375 = vadd.f32 %v3291, %v3372
    %s3376 = scalar_lea.vmem [#allocation3], 17
    %v3377 = vld [vmem:[%s3376] ss:$2 sm:$0x1f]
    %v3378 = vld [vmem:[%s2488] sm:$0xff]
    %v3379 = vld [vmem:[%s2488 + $0x8] sm:$0xff]
    %v3380 = vld [vmem:[%s2488 + $0x10] sm:$0xff]
    %v3381 = vld [vmem:[%s2488 + $0x18] sm:$0xff]
    %v3382 = vld [vmem:[%s2488 + $0x20] sm:$0xff]
    %v3383 = vld [vmem:[%s2488 + $0x28] sm:$0xff]
    %v3384 = vld [vmem:[%s2488 + $0x30] sm:$0xff]
    %v3385 = vld [vmem:[%s2488 + $0x38] sm:$0xff]
    %v3387 = vsel %vm1682, %v3377, 0
    %3389 = vmatprep.subr.mxu0 0.0
    %3390 = vmatpush1.msra.mxu0 %v3378
    %3391 = vmatprep.subr.mxu0 0.0
    %3392 = vmatpush1.msra.mxu0 %v3379
    %3393 = vmatprep.subr.mxu0 0.0
    %3394 = vmatpush1.msra.mxu0 %v3380
    %3395 = vmatprep.subr.mxu0 0.0
    %3396 = vmatpush1.msra.mxu0 %v3381
    %3397 = vmatprep.subr.mxu0 0.0
    %3398 = vmatpush1.msra.mxu0 %v3382
    %3399 = vmatprep.subr.mxu0 0.0
    %3400 = vmatpush1.msra.mxu0 %v3383
    %3401 = vmatprep.subr.mxu0 0.0
    %3402 = vmatpush1.msra.mxu0 %v3384
    %3403 = vmatprep.subr.mxu0 0.0
    %3404 = vmatpush1.msra.mxu0 %v3385
    %3405 = vmatprep.subr.mxu0 0.0
    %3406 = vmatpush1.msra.mxu0 0.0
    %3407 = vmatprep.subr.mxu0 0.0
    %3408 = vmatpush1.msra.mxu0 0.0
    %3409 = vmatprep.subr.mxu0 0.0
    %3410 = vmatpush1.msra.mxu0 0.0
    %3411 = vmatprep.subr.mxu0 0.0
    %3412 = vmatpush1.msra.mxu0 0.0
    %3413 = vmatprep.subr.mxu0 0.0
    %3414 = vmatpush1.msra.mxu0 0.0
    %3415 = vmatprep.subr.mxu0 0.0
    %3416 = vmatpush1.msra.mxu0 0.0
    %3417 = vmatprep.subr.mxu0 0.0
    %3418 = vmatpush1.msra.mxu0 0.0
    %3419 = vmatprep.subr.mxu0 0.0
    %3420 = vmatpush1.msra.mxu0 0.0
    %3421 = vmatprep.subr.mxu0 0.0
    %3422 = vmatpush1.msra.mxu0 0.0
    %3423 = vmatprep.subr.mxu0 0.0
    %3424 = vmatpush1.msra.mxu0 0.0
    %3425 = vmatprep.subr.mxu0 0.0
    %3426 = vmatpush1.msra.mxu0 0.0
    %3427 = vmatprep.subr.mxu0 0.0
    %3428 = vmatpush1.msra.mxu0 0.0
    %3429 = vmatprep.subr.mxu0 0.0
    %3430 = vmatpush1.msra.mxu0 0.0
    %3431 = vmatprep.subr.mxu0 0.0
    %3432 = vmatpush1.msra.mxu0 0.0
    %3433 = vmatprep.subr.mxu0 0.0
    %3434 = vmatpush1.msra.mxu0 0.0
    %3435 = vmatprep.subr.mxu0 0.0
    %3436 = vmatpush1.msra.mxu0 0.0
    %3437 = vmatprep.subr.mxu0 0.0
    %3438 = vmatpush1.msra.mxu0 0.0
    %3439 = vmatprep.subr.mxu0 0.0
    %3440 = vmatpush1.msra.mxu0 0.0
    %3441 = vmatprep.subr.mxu0 0.0
    %3442 = vmatpush1.msra.mxu0 0.0
    %3443 = vmatprep.subr.mxu0 0.0
    %3444 = vmatpush1.msra.mxu0 0.0
    %3445 = vmatprep.subr.mxu0 0.0
    %3446 = vmatpush1.msra.mxu0 0.0
    %3447 = vmatprep.subr.mxu0 0.0
    %3448 = vmatpush1.msra.mxu0 0.0
    %3449 = vmatprep.subr.mxu0 0.0
    %3450 = vmatpush1.msra.mxu0 0.0
    %3451 = vmatprep.subr.mxu0 0.0
    %3452 = vmatpush1.msra.mxu0 0.0
    %3453 = vmatprep.mubr.f32.mxu0 0.0
    %3454 = vmatmul.mubr.f32.gmra.mrb[0].mxu0 %v3387
    %v3455 = vpop.f32.mrb[0].mxu0
    %v3456 = vadd.f32 0.0, %v3455
    %v3457 = vpop.f32.mrb[0].mxu0
    %3458 = vdwg.mxu0
    %v3459 = vadd.f32 %v3375, %v3456
    %v3460 = vld [vmem:[%s6] sm:$0x1]
    %v3462 = vlaneseq
    %v3463 = vshrl.u32 %v3462, 7
    %v3464 = vsub.s32 0, %v3463
    %v3465 = vrot.slane %v3460, %v3464
    %v3467 = vadd.f32 %v3459, %v3465
    %v3468 = vmax.f32 %v3467, 0.0
    %v3469 = vld [vmem:[%s7] sm:$0xff]
    %v3470 = vld [vmem:[%s7 + $0x8] sm:$0xff]
    %v3471 = vld [vmem:[%s7 + $0x10] sm:$0xff]
    %v3472 = vld [vmem:[%s7 + $0x18] sm:$0xff]
    %v3473 = vld [vmem:[%s7 + $0x20] sm:$0xff]
    %v3474 = vld [vmem:[%s7 + $0x28] sm:$0xff]
    %v3475 = vld [vmem:[%s7 + $0x30] sm:$0xff]
    %v3476 = vld [vmem:[%s7 + $0x38] sm:$0xff]
    %v3477 = vld [vmem:[%s7 + $0x40] sm:$0xff]
    %v3478 = vld [vmem:[%s7 + $0x48] sm:$0xff]
    %v3479 = vld [vmem:[%s7 + $0x50] sm:$0xff]
    %v3480 = vld [vmem:[%s7 + $0x58] sm:$0xff]
    %v3481 = vld [vmem:[%s7 + $0x60] sm:$0xff]
    %v3482 = vld [vmem:[%s7 + $0x68] sm:$0xff]
    %v3483 = vld [vmem:[%s7 + $0x70] sm:$0xff]
    %v3484 = vld [vmem:[%s7 + $0x78] sm:$0xff]
    %v3485 = vld [vmem:[%s7 + $0x80] sm:$0xff]
    %v3486 = vld [vmem:[%s7 + $0x88] sm:$0xff]
    %v3487 = vld [vmem:[%s7 + $0x90] sm:$0xff]
    %v3488 = vld [vmem:[%s7 + $0x98] sm:$0xff]
    %v3489 = vld [vmem:[%s7 + $0xa0] sm:$0xff]
    %v3490 = vld [vmem:[%s7 + $0xa8] sm:$0xff]
    %v3491 = vld [vmem:[%s7 + $0xb0] sm:$0xff]
    %v3492 = vld [vmem:[%s7 + $0xb8] sm:$0xff]
    %v3493 = vld [vmem:[%s7 + $0xc0] sm:$0xff]
    %v3494 = vld [vmem:[%s7 + $0xc8] sm:$0xff]
    %v3495 = vld [vmem:[%s7 + $0xd0] sm:$0xff]
    %v3496 = vld [vmem:[%s7 + $0xd8] sm:$0xff]
    %v3497 = vld [vmem:[%s7 + $0xe0] sm:$0xff]
    %v3498 = vld [vmem:[%s7 + $0xe8] sm:$0xff]
    %v3499 = vld [vmem:[%s7 + $0xf0] sm:$0xff]
    %v3500 = vld [vmem:[%s7 + $0xf8] sm:$0xff]
    %v3501 = vld [vmem:[%s7 + $0x100] sm:$0xff]
    %v3502 = vld [vmem:[%s7 + $0x108] sm:$0xff]
    %v3503 = vld [vmem:[%s7 + $0x110] sm:$0xff]
    %v3504 = vld [vmem:[%s7 + $0x118] sm:$0xff]
    %v3505 = vld [vmem:[%s7 + $0x120] sm:$0xff]
    %v3506 = vld [vmem:[%s7 + $0x128] sm:$0xff]
    %v3507 = vld [vmem:[%s7 + $0x130] sm:$0xff]
    %v3508 = vld [vmem:[%s7 + $0x138] sm:$0xff]
    %v3509 = vld [vmem:[%s7 + $0x140] sm:$0xff]
    %v3510 = vld [vmem:[%s7 + $0x148] sm:$0xff]
    %v3511 = vld [vmem:[%s7 + $0x150] sm:$0xff]
    %v3512 = vld [vmem:[%s7 + $0x158] sm:$0xff]
    %v3513 = vld [vmem:[%s7 + $0x160] sm:$0xff]
    %v3514 = vld [vmem:[%s7 + $0x168] sm:$0xff]
    %v3515 = vld [vmem:[%s7 + $0x170] sm:$0xff]
    %v3516 = vld [vmem:[%s7 + $0x178] sm:$0xff]
    %v3517 = vld [vmem:[%s7 + $0x180] sm:$0xff]
    %v3518 = vld [vmem:[%s7 + $0x188] sm:$0xff]
    %v3519 = vld [vmem:[%s7 + $0x190] sm:$0xff]
    %v3520 = vld [vmem:[%s7 + $0x198] sm:$0xff]
    %v3521 = vld [vmem:[%s7 + $0x1a0] sm:$0xff]
    %v3522 = vld [vmem:[%s7 + $0x1a8] sm:$0xff]
    %v3523 = vld [vmem:[%s7 + $0x1b0] sm:$0xff]
    %v3524 = vld [vmem:[%s7 + $0x1b8] sm:$0xff]
    %v3525 = vld [vmem:[%s7 + $0x1c0] sm:$0xff]
    %v3526 = vld [vmem:[%s7 + $0x1c8] sm:$0xff]
    %v3527 = vld [vmem:[%s7 + $0x1d0] sm:$0xff]
    %v3528 = vld [vmem:[%s7 + $0x1d8] sm:$0xff]
    %v3529 = vld [vmem:[%s7 + $0x1e0] sm:$0xff]
    %v3530 = vld [vmem:[%s7 + $0x1e8] sm:$0xff]
    %v3531 = vld [vmem:[%s7 + $0x1f0] sm:$0xff]
    %v3532 = vld [vmem:[%s7 + $0x1f8] sm:$0xff]
    %v3533 = vld [vmem:[%s7 + $0x200] sm:$0xff]
    %v3534 = vld [vmem:[%s7 + $0x208] sm:$0xff]
    %v3535 = vld [vmem:[%s7 + $0x210] sm:$0xff]
    %v3536 = vld [vmem:[%s7 + $0x218] sm:$0xff]
    %v3537 = vld [vmem:[%s7 + $0x220] sm:$0xff]
    %v3538 = vld [vmem:[%s7 + $0x228] sm:$0xff]
    %v3539 = vld [vmem:[%s7 + $0x230] sm:$0xff]
    %v3540 = vld [vmem:[%s7 + $0x238] sm:$0xff]
    %v3541 = vld [vmem:[%s7 + $0x240] sm:$0xff]
    %v3542 = vld [vmem:[%s7 + $0x248] sm:$0xff]
    %v3543 = vld [vmem:[%s7 + $0x250] sm:$0xff]
    %v3544 = vld [vmem:[%s7 + $0x258] sm:$0xff]
    %v3545 = vld [vmem:[%s7 + $0x260] sm:$0xff]
    %v3546 = vld [vmem:[%s7 + $0x268] sm:$0xff]
    %v3547 = vld [vmem:[%s7 + $0x270] sm:$0xff]
    %v3548 = vld [vmem:[%s7 + $0x278] sm:$0xff]
    %v3549 = vld [vmem:[%s7 + $0x280] sm:$0xff]
    %v3550 = vld [vmem:[%s7 + $0x288] sm:$0xff]
    %v3551 = vld [vmem:[%s7 + $0x290] sm:$0xff]
    %v3552 = vld [vmem:[%s7 + $0x298] sm:$0xff]
    %v3553 = vld [vmem:[%s7 + $0x2a0] sm:$0xff]
    %v3554 = vld [vmem:[%s7 + $0x2a8] sm:$0xff]
    %v3555 = vld [vmem:[%s7 + $0x2b0] sm:$0xff]
    %v3556 = vld [vmem:[%s7 + $0x2b8] sm:$0xff]
    %v3557 = vld [vmem:[%s7 + $0x2c0] sm:$0xff]
    %v3558 = vld [vmem:[%s7 + $0x2c8] sm:$0xff]
    %v3559 = vld [vmem:[%s7 + $0x2d0] sm:$0xff]
    %v3560 = vld [vmem:[%s7 + $0x2d8] sm:$0xff]
    %v3561 = vld [vmem:[%s7 + $0x2e0] sm:$0xff]
    %v3562 = vld [vmem:[%s7 + $0x2e8] sm:$0xff]
    %v3563 = vld [vmem:[%s7 + $0x2f0] sm:$0xff]
    %v3564 = vld [vmem:[%s7 + $0x2f8] sm:$0xff]
    %v3565 = vld [vmem:[%s7 + $0x300] sm:$0xff]
    %v3566 = vld [vmem:[%s7 + $0x308] sm:$0xff]
    %v3567 = vld [vmem:[%s7 + $0x310] sm:$0xff]
    %v3568 = vld [vmem:[%s7 + $0x318] sm:$0xff]
    %v3569 = vld [vmem:[%s7 + $0x320] sm:$0xff]
    %v3570 = vld [vmem:[%s7 + $0x328] sm:$0xff]
    %v3571 = vld [vmem:[%s7 + $0x330] sm:$0xff]
    %v3572 = vld [vmem:[%s7 + $0x338] sm:$0xff]
    %v3573 = vld [vmem:[%s7 + $0x340] sm:$0xff]
    %v3574 = vld [vmem:[%s7 + $0x348] sm:$0xff]
    %v3575 = vld [vmem:[%s7 + $0x350] sm:$0xff]
    %v3576 = vld [vmem:[%s7 + $0x358] sm:$0xff]
    %v3577 = vld [vmem:[%s7 + $0x360] sm:$0xff]
    %v3578 = vld [vmem:[%s7 + $0x368] sm:$0xff]
    %v3579 = vld [vmem:[%s7 + $0x370] sm:$0xff]
    %v3580 = vld [vmem:[%s7 + $0x378] sm:$0xff]
    %v3581 = vld [vmem:[%s7 + $0x380] sm:$0xff]
    %v3582 = vld [vmem:[%s7 + $0x388] sm:$0xff]
    %v3583 = vld [vmem:[%s7 + $0x390] sm:$0xff]
    %v3584 = vld [vmem:[%s7 + $0x398] sm:$0xff]
    %v3585 = vld [vmem:[%s7 + $0x3a0] sm:$0xff]
    %v3586 = vld [vmem:[%s7 + $0x3a8] sm:$0xff]
    %v3587 = vld [vmem:[%s7 + $0x3b0] sm:$0xff]
    %v3588 = vld [vmem:[%s7 + $0x3b8] sm:$0xff]
    %v3589 = vld [vmem:[%s7 + $0x3c0] sm:$0xff]
    %v3590 = vld [vmem:[%s7 + $0x3c8] sm:$0xff]
    %v3591 = vld [vmem:[%s7 + $0x3d0] sm:$0xff]
    %v3592 = vld [vmem:[%s7 + $0x3d8] sm:$0xff]
    %v3593 = vld [vmem:[%s7 + $0x3e0] sm:$0xff]
    %v3594 = vld [vmem:[%s7 + $0x3e8] sm:$0xff]
    %v3595 = vld [vmem:[%s7 + $0x3f0] sm:$0xff]
    %v3596 = vld [vmem:[%s7 + $0x3f8] sm:$0xff]
    %v3597 = vld [vmem:[%s9] sm:$0xff]
    %v3599 = vlaneseq
    %v3600 = vshrl.u32 %v3599, 7
    %v3601 = vsub.s32 0, %v3600
    %v3602 = vrot.slane %v3597, %v3601
    %v3603 = vlaneseq
    %v3604 = vshrl.u32 %v3603, 7
    %v3605 = vsub.s32 1, %v3604
    %v3606 = vrot.slane %v3597, %v3605
    %v3607 = vlaneseq
    %v3608 = vshrl.u32 %v3607, 7
    %v3609 = vsub.s32 2, %v3608
    %v3610 = vrot.slane %v3597, %v3609
    %v3611 = vlaneseq
    %v3612 = vshrl.u32 %v3611, 7
    %v3613 = vsub.s32 3, %v3612
    %v3614 = vrot.slane %v3597, %v3613
    %v3615 = vlaneseq
    %v3616 = vshrl.u32 %v3615, 7
    %v3617 = vsub.s32 4, %v3616
    %v3618 = vrot.slane %v3597, %v3617
    %v3619 = vlaneseq
    %v3620 = vshrl.u32 %v3619, 7
    %v3621 = vsub.s32 5, %v3620
    %v3622 = vrot.slane %v3597, %v3621
    %v3623 = vlaneseq
    %v3624 = vshrl.u32 %v3623, 7
    %v3625 = vsub.s32 6, %v3624
    %v3626 = vrot.slane %v3597, %v3625
    %v3627 = vlaneseq
    %v3628 = vshrl.u32 %v3627, 7
    %v3629 = vsub.s32 7, %v3628
    %v3630 = vrot.slane %v3597, %v3629
    %3639 = vmatprep.subr.mxu0 %v3470
    %3640 = vmatpush1.msra.mxu0 %v3469
    %3641 = vmatprep.subr.mxu0 %v3478
    %3642 = vmatpush1.msra.mxu0 %v3477
    %3643 = vmatprep.subr.mxu0 %v3486
    %3644 = vmatpush1.msra.mxu0 %v3485
    %3645 = vmatprep.subr.mxu0 %v3494
    %3646 = vmatpush1.msra.mxu0 %v3493
    %3647 = vmatprep.subr.mxu0 %v3502
    %3648 = vmatpush1.msra.mxu0 %v3501
    %3649 = vmatprep.subr.mxu0 %v3510
    %3650 = vmatpush1.msra.mxu0 %v3509
    %3651 = vmatprep.subr.mxu0 %v3518
    %3652 = vmatpush1.msra.mxu0 %v3517
    %3653 = vmatprep.subr.mxu0 %v3526
    %3654 = vmatpush1.msra.mxu0 %v3525
    %3655 = vmatprep.subr.mxu0 %v3534
    %3656 = vmatpush1.msra.mxu0 %v3533
    %3657 = vmatprep.subr.mxu0 %v3542
    %3658 = vmatpush1.msra.mxu0 %v3541
    %3659 = vmatprep.subr.mxu0 %v3550
    %3660 = vmatpush1.msra.mxu0 %v3549
    %3661 = vmatprep.subr.mxu0 %v3558
    %3662 = vmatpush1.msra.mxu0 %v3557
    %3663 = vmatprep.subr.mxu0 %v3566
    %3664 = vmatpush1.msra.mxu0 %v3565
    %3665 = vmatprep.subr.mxu0 %v3574
    %3666 = vmatpush1.msra.mxu0 %v3573
    %3667 = vmatprep.subr.mxu0 %v3582
    %3668 = vmatpush1.msra.mxu0 %v3581
    %3669 = vmatprep.subr.mxu0 %v3590
    %3670 = vmatpush1.msra.mxu0 %v3589
    %3671 = vmatprep.subr.mxu0 0.0
    %3672 = vmatpush1.msra.mxu0 0.0
    %3673 = vmatprep.subr.mxu0 0.0
    %3674 = vmatpush1.msra.mxu0 0.0
    %3675 = vmatprep.subr.mxu0 0.0
    %3676 = vmatpush1.msra.mxu0 0.0
    %3677 = vmatprep.subr.mxu0 0.0
    %3678 = vmatpush1.msra.mxu0 0.0
    %3679 = vmatprep.subr.mxu0 0.0
    %3680 = vmatpush1.msra.mxu0 0.0
    %3681 = vmatprep.subr.mxu0 0.0
    %3682 = vmatpush1.msra.mxu0 0.0
    %3683 = vmatprep.subr.mxu0 0.0
    %3684 = vmatpush1.msra.mxu0 0.0
    %3685 = vmatprep.subr.mxu0 0.0
    %3686 = vmatpush1.msra.mxu0 0.0
    %3687 = vmatprep.subr.mxu0 0.0
    %3688 = vmatpush1.msra.mxu0 0.0
    %3689 = vmatprep.subr.mxu0 0.0
    %3690 = vmatpush1.msra.mxu0 0.0
    %3691 = vmatprep.subr.mxu0 0.0
    %3692 = vmatpush1.msra.mxu0 0.0
    %3693 = vmatprep.subr.mxu0 0.0
    %3694 = vmatpush1.msra.mxu0 0.0
    %3695 = vmatprep.subr.mxu0 0.0
    %3696 = vmatpush1.msra.mxu0 0.0
    %3697 = vmatprep.subr.mxu0 0.0
    %3698 = vmatpush1.msra.mxu0 0.0
    %3699 = vmatprep.subr.mxu0 0.0
    %3700 = vmatpush1.msra.mxu0 0.0
    %3701 = vmatprep.subr.mxu0 0.0
    %3702 = vmatpush1.msra.mxu0 0.0
    %3703 = vmatprep.mubr.f32.mxu0 0.0
    %3704 = vmatmul.mubr.f32.gmra.mrb[0].mxu0 %v3468
    %v3705 = vpop.f32.mrb[0].mxu0
    %v3706 = vadd.f32 %v3602, %v3705
    %v3707 = vpop.f32.mrb[0].mxu0
    %v3708 = vadd.f32 %v3606, %v3707
    %3709 = vdwg.mxu0
    %3710 = vmatprep.subr.mxu0 %v3472
    %3711 = vmatpush1.msra.mxu0 %v3471
    %3712 = vmatprep.subr.mxu0 %v3480
    %3713 = vmatpush1.msra.mxu0 %v3479
    %3714 = vmatprep.subr.mxu0 %v3488
    %3715 = vmatpush1.msra.mxu0 %v3487
    %3716 = vmatprep.subr.mxu0 %v3496
    %3717 = vmatpush1.msra.mxu0 %v3495
    %3718 = vmatprep.subr.mxu0 %v3504
    %3719 = vmatpush1.msra.mxu0 %v3503
    %3720 = vmatprep.subr.mxu0 %v3512
    %3721 = vmatpush1.msra.mxu0 %v3511
    %3722 = vmatprep.subr.mxu0 %v3520
    %3723 = vmatpush1.msra.mxu0 %v3519
    %3724 = vmatprep.subr.mxu0 %v3528
    %3725 = vmatpush1.msra.mxu0 %v3527
    %3726 = vmatprep.subr.mxu0 %v3536
    %3727 = vmatpush1.msra.mxu0 %v3535
    %3728 = vmatprep.subr.mxu0 %v3544
    %3729 = vmatpush1.msra.mxu0 %v3543
    %3730 = vmatprep.subr.mxu0 %v3552
    %3731 = vmatpush1.msra.mxu0 %v3551
    %3732 = vmatprep.subr.mxu0 %v3560
    %3733 = vmatpush1.msra.mxu0 %v3559
    %3734 = vmatprep.subr.mxu0 %v3568
    %3735 = vmatpush1.msra.mxu0 %v3567
    %3736 = vmatprep.subr.mxu0 %v3576
    %3737 = vmatpush1.msra.mxu0 %v3575
    %3738 = vmatprep.subr.mxu0 %v3584
    %3739 = vmatpush1.msra.mxu0 %v3583
    %3740 = vmatprep.subr.mxu0 %v3592
    %3741 = vmatpush1.msra.mxu0 %v3591
    %3742 = vmatprep.subr.mxu0 0.0
    %3743 = vmatpush1.msra.mxu0 0.0
    %3744 = vmatprep.subr.mxu0 0.0
    %3745 = vmatpush1.msra.mxu0 0.0
    %3746 = vmatprep.subr.mxu0 0.0
    %3747 = vmatpush1.msra.mxu0 0.0
    %3748 = vmatprep.subr.mxu0 0.0
    %3749 = vmatpush1.msra.mxu0 0.0
    %3750 = vmatprep.subr.mxu0 0.0
    %3751 = vmatpush1.msra.mxu0 0.0
    %3752 = vmatprep.subr.mxu0 0.0
    %3753 = vmatpush1.msra.mxu0 0.0
    %3754 = vmatprep.subr.mxu0 0.0
    %3755 = vmatpush1.msra.mxu0 0.0
    %3756 = vmatprep.subr.mxu0 0.0
    %3757 = vmatpush1.msra.mxu0 0.0
    %3758 = vmatprep.subr.mxu0 0.0
    %3759 = vmatpush1.msra.mxu0 0.0
    %3760 = vmatprep.subr.mxu0 0.0
    %3761 = vmatpush1.msra.mxu0 0.0
    %3762 = vmatprep.subr.mxu0 0.0
    %3763 = vmatpush1.msra.mxu0 0.0
    %3764 = vmatprep.subr.mxu0 0.0
    %3765 = vmatpush1.msra.mxu0 0.0
    %3766 = vmatprep.subr.mxu0 0.0
    %3767 = vmatpush1.msra.mxu0 0.0
    %3768 = vmatprep.subr.mxu0 0.0
    %3769 = vmatpush1.msra.mxu0 0.0
    %3770 = vmatprep.subr.mxu0 0.0
    %3771 = vmatpush1.msra.mxu0 0.0
    %3772 = vmatprep.subr.mxu0 0.0
    %3773 = vmatpush1.msra.mxu0 0.0
    %3774 = vmatprep.mubr.f32.mxu0 0.0
    %3775 = vmatmul.mubr.f32.gmra.mrb[0].mxu0 %v3468
    %v3776 = vpop.f32.mrb[0].mxu0
    %v3777 = vadd.f32 %v3610, %v3776
    %v3778 = vpop.f32.mrb[0].mxu0
    %v3779 = vadd.f32 %v3614, %v3778
    %3780 = vdwg.mxu0
    %3781 = vmatprep.subr.mxu0 %v3474
    %3782 = vmatpush1.msra.mxu0 %v3473
    %3783 = vmatprep.subr.mxu0 %v3482
    %3784 = vmatpush1.msra.mxu0 %v3481
    %3785 = vmatprep.subr.mxu0 %v3490
    %3786 = vmatpush1.msra.mxu0 %v3489
    %3787 = vmatprep.subr.mxu0 %v3498
    %3788 = vmatpush1.msra.mxu0 %v3497
    %3789 = vmatprep.subr.mxu0 %v3506
    %3790 = vmatpush1.msra.mxu0 %v3505
    %3791 = vmatprep.subr.mxu0 %v3514
    %3792 = vmatpush1.msra.mxu0 %v3513
    %3793 = vmatprep.subr.mxu0 %v3522
    %3794 = vmatpush1.msra.mxu0 %v3521
    %3795 = vmatprep.subr.mxu0 %v3530
    %3796 = vmatpush1.msra.mxu0 %v3529
    %3797 = vmatprep.subr.mxu0 %v3538
    %3798 = vmatpush1.msra.mxu0 %v3537
    %3799 = vmatprep.subr.mxu0 %v3546
    %3800 = vmatpush1.msra.mxu0 %v3545
    %3801 = vmatprep.subr.mxu0 %v3554
    %3802 = vmatpush1.msra.mxu0 %v3553
    %3803 = vmatprep.subr.mxu0 %v3562
    %3804 = vmatpush1.msra.mxu0 %v3561
    %3805 = vmatprep.subr.mxu0 %v3570
    %3806 = vmatpush1.msra.mxu0 %v3569
    %3807 = vmatprep.subr.mxu0 %v3578
    %3808 = vmatpush1.msra.mxu0 %v3577
    %3809 = vmatprep.subr.mxu0 %v3586
    %3810 = vmatpush1.msra.mxu0 %v3585
    %3811 = vmatprep.subr.mxu0 %v3594
    %3812 = vmatpush1.msra.mxu0 %v3593
    %3813 = vmatprep.subr.mxu0 0.0
    %3814 = vmatpush1.msra.mxu0 0.0
    %3815 = vmatprep.subr.mxu0 0.0
    %3816 = vmatpush1.msra.mxu0 0.0
    %3817 = vmatprep.subr.mxu0 0.0
    %3818 = vmatpush1.msra.mxu0 0.0
    %3819 = vmatprep.subr.mxu0 0.0
    %3820 = vmatpush1.msra.mxu0 0.0
    %3821 = vmatprep.subr.mxu0 0.0
    %3822 = vmatpush1.msra.mxu0 0.0
    %3823 = vmatprep.subr.mxu0 0.0
    %3824 = vmatpush1.msra.mxu0 0.0
    %3825 = vmatprep.subr.mxu0 0.0
    %3826 = vmatpush1.msra.mxu0 0.0
    %3827 = vmatprep.subr.mxu0 0.0
    %3828 = vmatpush1.msra.mxu0 0.0
    %3829 = vmatprep.subr.mxu0 0.0
    %3830 = vmatpush1.msra.mxu0 0.0
    %3831 = vmatprep.subr.mxu0 0.0
    %3832 = vmatpush1.msra.mxu0 0.0
    %3833 = vmatprep.subr.mxu0 0.0
    %3834 = vmatpush1.msra.mxu0 0.0
    %3835 = vmatprep.subr.mxu0 0.0
    %3836 = vmatpush1.msra.mxu0 0.0
    %3837 = vmatprep.subr.mxu0 0.0
    %3838 = vmatpush1.msra.mxu0 0.0
    %3839 = vmatprep.subr.mxu0 0.0
    %3840 = vmatpush1.msra.mxu0 0.0
    %3841 = vmatprep.subr.mxu0 0.0
    %3842 = vmatpush1.msra.mxu0 0.0
    %3843 = vmatprep.subr.mxu0 0.0
    %3844 = vmatpush1.msra.mxu0 0.0
    %3845 = vmatprep.mubr.f32.mxu0 0.0
    %3846 = vmatmul.mubr.f32.gmra.mrb[0].mxu0 %v3468
    %v3847 = vpop.f32.mrb[0].mxu0
    %v3848 = vadd.f32 %v3618, %v3847
    %v3849 = vpop.f32.mrb[0].mxu0
    %v3850 = vadd.f32 %v3622, %v3849
    %3851 = vdwg.mxu0
    %3852 = vmatprep.subr.mxu0 %v3476
    %3853 = vmatpush1.msra.mxu0 %v3475
    %3854 = vmatprep.subr.mxu0 %v3484
    %3855 = vmatpush1.msra.mxu0 %v3483
    %3856 = vmatprep.subr.mxu0 %v3492
    %3857 = vmatpush1.msra.mxu0 %v3491
    %3858 = vmatprep.subr.mxu0 %v3500
    %3859 = vmatpush1.msra.mxu0 %v3499
    %3860 = vmatprep.subr.mxu0 %v3508
    %3861 = vmatpush1.msra.mxu0 %v3507
    %3862 = vmatprep.subr.mxu0 %v3516
    %3863 = vmatpush1.msra.mxu0 %v3515
    %3864 = vmatprep.subr.mxu0 %v3524
    %3865 = vmatpush1.msra.mxu0 %v3523
    %3866 = vmatprep.subr.mxu0 %v3532
    %3867 = vmatpush1.msra.mxu0 %v3531
    %3868 = vmatprep.subr.mxu0 %v3540
    %3869 = vmatpush1.msra.mxu0 %v3539
    %3870 = vmatprep.subr.mxu0 %v3548
    %3871 = vmatpush1.msra.mxu0 %v3547
    %3872 = vmatprep.subr.mxu0 %v3556
    %3873 = vmatpush1.msra.mxu0 %v3555
    %3874 = vmatprep.subr.mxu0 %v3564
    %3875 = vmatpush1.msra.mxu0 %v3563
    %3876 = vmatprep.subr.mxu0 %v3572
    %3877 = vmatpush1.msra.mxu0 %v3571
    %3878 = vmatprep.subr.mxu0 %v3580
    %3879 = vmatpush1.msra.mxu0 %v3579
    %3880 = vmatprep.subr.mxu0 %v3588
    %3881 = vmatpush1.msra.mxu0 %v3587
    %3882 = vmatprep.subr.mxu0 %v3596
    %3883 = vmatpush1.msra.mxu0 %v3595
    %3884 = vmatprep.subr.mxu0 0.0
    %3885 = vmatpush1.msra.mxu0 0.0
    %3886 = vmatprep.subr.mxu0 0.0
    %3887 = vmatpush1.msra.mxu0 0.0
    %3888 = vmatprep.subr.mxu0 0.0
    %3889 = vmatpush1.msra.mxu0 0.0
    %3890 = vmatprep.subr.mxu0 0.0
    %3891 = vmatpush1.msra.mxu0 0.0
    %3892 = vmatprep.subr.mxu0 0.0
    %3893 = vmatpush1.msra.mxu0 0.0
    %3894 = vmatprep.subr.mxu0 0.0
    %3895 = vmatpush1.msra.mxu0 0.0
    %3896 = vmatprep.subr.mxu0 0.0
    %3897 = vmatpush1.msra.mxu0 0.0
    %3898 = vmatprep.subr.mxu0 0.0
    %3899 = vmatpush1.msra.mxu0 0.0
    %3900 = vmatprep.subr.mxu0 0.0
    %3901 = vmatpush1.msra.mxu0 0.0
    %3902 = vmatprep.subr.mxu0 0.0
    %3903 = vmatpush1.msra.mxu0 0.0
    %3904 = vmatprep.subr.mxu0 0.0
    %3905 = vmatpush1.msra.mxu0 0.0
    %3906 = vmatprep.subr.mxu0 0.0
    %3907 = vmatpush1.msra.mxu0 0.0
    %3908 = vmatprep.subr.mxu0 0.0
    %3909 = vmatpush1.msra.mxu0 0.0
    %3910 = vmatprep.subr.mxu0 0.0
    %3911 = vmatpush1.msra.mxu0 0.0
    %3912 = vmatprep.subr.mxu0 0.0
    %3913 = vmatpush1.msra.mxu0 0.0
    %3914 = vmatprep.subr.mxu0 0.0
    %3915 = vmatpush1.msra.mxu0 0.0
    %3916 = vmatprep.mubr.f32.mxu0 0.0
    %3917 = vmatmul.mubr.f32.gmra.mrb[0].mxu0 %v3468
    %v3918 = vpop.f32.mrb[0].mxu0
    %v3919 = vadd.f32 %v3626, %v3918
    %v3920 = vpop.f32.mrb[0].mxu0
    %v3921 = vadd.f32 %v3630, %v3920
    %3922 = vdwg.mxu0
    %s3923 = scalar_lea.vmem [#allocation4], 64
    %3924 = vst [vmem:[%s3923] sm:$0x1f] %v3706
    %3925 = vst [vmem:[%s3923 + $0x8] sm:$0x1f] %v3708
    %3926 = vst [vmem:[%s3923 + $0x10] sm:$0x1f] %v3777
    %3927 = vst [vmem:[%s3923 + $0x18] sm:$0x1f] %v3779
    %3928 = vst [vmem:[%s3923 + $0x20] sm:$0x1f] %v3848
    %3929 = vst [vmem:[%s3923 + $0x28] sm:$0x1f] %v3850
    %3930 = vst [vmem:[%s3923 + $0x30] sm:$0x1f] %v3919
    %3931 = vst [vmem:[%s3923 + $0x38] sm:$0x1f] %v3921
    %v3932 = vld [vmem:[%s8] sm:$0xff]
    %v3933 = vld [vmem:[%s8 + $0x8] sm:$0xff]
    %v3934 = vld [vmem:[%s8 + $0x10] sm:$0xff]
    %v3935 = vld [vmem:[%s8 + $0x18] sm:$0xff]
    %v3936 = vld [vmem:[%s8 + $0x20] sm:$0xff]
    %v3937 = vld [vmem:[%s8 + $0x28] sm:$0xff]
    %v3938 = vld [vmem:[%s8 + $0x30] sm:$0xff]
    %v3939 = vld [vmem:[%s8 + $0x38] sm:$0xff]
    %v3940 = vld [vmem:[%s8 + $0x40] sm:$0xff]
    %v3941 = vld [vmem:[%s8 + $0x48] sm:$0xff]
    %v3942 = vld [vmem:[%s8 + $0x50] sm:$0xff]
    %v3943 = vld [vmem:[%s8 + $0x58] sm:$0xff]
    %v3944 = vld [vmem:[%s8 + $0x60] sm:$0xff]
    %v3945 = vld [vmem:[%s8 + $0x68] sm:$0xff]
    %v3946 = vld [vmem:[%s8 + $0x70] sm:$0xff]
    %v3947 = vld [vmem:[%s8 + $0x78] sm:$0xff]
    %v3948 = vld [vmem:[%s8 + $0x80] sm:$0xff]
    %v3949 = vld [vmem:[%s8 + $0x88] sm:$0xff]
    %v3950 = vld [vmem:[%s8 + $0x90] sm:$0xff]
    %v3951 = vld [vmem:[%s8 + $0x98] sm:$0xff]
    %v3952 = vld [vmem:[%s8 + $0xa0] sm:$0xff]
    %v3953 = vld [vmem:[%s8 + $0xa8] sm:$0xff]
    %v3954 = vld [vmem:[%s8 + $0xb0] sm:$0xff]
    %v3955 = vld [vmem:[%s8 + $0xb8] sm:$0xff]
    %v3956 = vld [vmem:[%s8 + $0xc0] sm:$0xff]
    %v3957 = vld [vmem:[%s8 + $0xc8] sm:$0xff]
    %v3958 = vld [vmem:[%s8 + $0xd0] sm:$0xff]
    %v3959 = vld [vmem:[%s8 + $0xd8] sm:$0xff]
    %v3960 = vld [vmem:[%s8 + $0xe0] sm:$0xff]
    %v3961 = vld [vmem:[%s8 + $0xe8] sm:$0xff]
    %v3962 = vld [vmem:[%s8 + $0xf0] sm:$0xff]
    %v3963 = vld [vmem:[%s8 + $0xf8] sm:$0xff]
    %v3964 = vld [vmem:[%s8 + $0x100] sm:$0xff]
    %v3965 = vld [vmem:[%s8 + $0x108] sm:$0xff]
    %v3966 = vld [vmem:[%s8 + $0x110] sm:$0xff]
    %v3967 = vld [vmem:[%s8 + $0x118] sm:$0xff]
    %v3968 = vld [vmem:[%s8 + $0x120] sm:$0xff]
    %v3969 = vld [vmem:[%s8 + $0x128] sm:$0xff]
    %v3970 = vld [vmem:[%s8 + $0x130] sm:$0xff]
    %v3971 = vld [vmem:[%s8 + $0x138] sm:$0xff]
    %v3972 = vld [vmem:[%s8 + $0x140] sm:$0xff]
    %v3973 = vld [vmem:[%s8 + $0x148] sm:$0xff]
    %v3974 = vld [vmem:[%s8 + $0x150] sm:$0xff]
    %v3975 = vld [vmem:[%s8 + $0x158] sm:$0xff]
    %v3976 = vld [vmem:[%s8 + $0x160] sm:$0xff]
    %v3977 = vld [vmem:[%s8 + $0x168] sm:$0xff]
    %v3978 = vld [vmem:[%s8 + $0x170] sm:$0xff]
    %v3979 = vld [vmem:[%s8 + $0x178] sm:$0xff]
    %v3980 = vld [vmem:[%s8 + $0x180] sm:$0xff]
    %v3981 = vld [vmem:[%s8 + $0x188] sm:$0xff]
    %v3982 = vld [vmem:[%s8 + $0x190] sm:$0xff]
    %v3983 = vld [vmem:[%s8 + $0x198] sm:$0xff]
    %v3984 = vld [vmem:[%s8 + $0x1a0] sm:$0xff]
    %v3985 = vld [vmem:[%s8 + $0x1a8] sm:$0xff]
    %v3986 = vld [vmem:[%s8 + $0x1b0] sm:$0xff]
    %v3987 = vld [vmem:[%s8 + $0x1b8] sm:$0xff]
    %v3988 = vld [vmem:[%s8 + $0x1c0] sm:$0xff]
    %v3989 = vld [vmem:[%s8 + $0x1c8] sm:$0xff]
    %v3990 = vld [vmem:[%s8 + $0x1d0] sm:$0xff]
    %v3991 = vld [vmem:[%s8 + $0x1d8] sm:$0xff]
    %v3992 = vld [vmem:[%s8 + $0x1e0] sm:$0xff]
    %v3993 = vld [vmem:[%s8 + $0x1e8] sm:$0xff]
    %v3994 = vld [vmem:[%s8 + $0x1f0] sm:$0xff]
    %v3995 = vld [vmem:[%s8 + $0x1f8] sm:$0xff]
    %v3996 = vld [vmem:[%s8 + $0x200] sm:$0xff]
    %v3997 = vld [vmem:[%s8 + $0x208] sm:$0xff]
    %v3998 = vld [vmem:[%s8 + $0x210] sm:$0xff]
    %v3999 = vld [vmem:[%s8 + $0x218] sm:$0xff]
    %v4000 = vld [vmem:[%s8 + $0x220] sm:$0xff]
    %v4001 = vld [vmem:[%s8 + $0x228] sm:$0xff]
    %v4002 = vld [vmem:[%s8 + $0x230] sm:$0xff]
    %v4003 = vld [vmem:[%s8 + $0x238] sm:$0xff]
    %v4004 = vld [vmem:[%s8 + $0x240] sm:$0xff]
    %v4005 = vld [vmem:[%s8 + $0x248] sm:$0xff]
    %v4006 = vld [vmem:[%s8 + $0x250] sm:$0xff]
    %v4007 = vld [vmem:[%s8 + $0x258] sm:$0xff]
    %v4008 = vld [vmem:[%s8 + $0x260] sm:$0xff]
    %v4009 = vld [vmem:[%s8 + $0x268] sm:$0xff]
    %v4010 = vld [vmem:[%s8 + $0x270] sm:$0xff]
    %v4011 = vld [vmem:[%s8 + $0x278] sm:$0xff]
    %v4012 = vld [vmem:[%s8 + $0x280] sm:$0xff]
    %v4013 = vld [vmem:[%s8 + $0x288] sm:$0xff]
    %v4014 = vld [vmem:[%s8 + $0x290] sm:$0xff]
    %v4015 = vld [vmem:[%s8 + $0x298] sm:$0xff]
    %v4016 = vld [vmem:[%s8 + $0x2a0] sm:$0xff]
    %v4017 = vld [vmem:[%s8 + $0x2a8] sm:$0xff]
    %v4018 = vld [vmem:[%s8 + $0x2b0] sm:$0xff]
    %v4019 = vld [vmem:[%s8 + $0x2b8] sm:$0xff]
    %v4020 = vld [vmem:[%s8 + $0x2c0] sm:$0xff]
    %v4021 = vld [vmem:[%s8 + $0x2c8] sm:$0xff]
    %v4022 = vld [vmem:[%s8 + $0x2d0] sm:$0xff]
    %v4023 = vld [vmem:[%s8 + $0x2d8] sm:$0xff]
    %v4024 = vld [vmem:[%s8 + $0x2e0] sm:$0xff]
    %v4025 = vld [vmem:[%s8 + $0x2e8] sm:$0xff]
    %v4026 = vld [vmem:[%s8 + $0x2f0] sm:$0xff]
    %v4027 = vld [vmem:[%s8 + $0x2f8] sm:$0xff]
    %v4028 = vld [vmem:[%s8 + $0x300] sm:$0xff]
    %v4029 = vld [vmem:[%s8 + $0x308] sm:$0xff]
    %v4030 = vld [vmem:[%s8 + $0x310] sm:$0xff]
    %v4031 = vld [vmem:[%s8 + $0x318] sm:$0xff]
    %v4032 = vld [vmem:[%s8 + $0x320] sm:$0xff]
    %v4033 = vld [vmem:[%s8 + $0x328] sm:$0xff]
    %v4034 = vld [vmem:[%s8 + $0x330] sm:$0xff]
    %v4035 = vld [vmem:[%s8 + $0x338] sm:$0xff]
    %v4036 = vld [vmem:[%s8 + $0x340] sm:$0xff]
    %v4037 = vld [vmem:[%s8 + $0x348] sm:$0xff]
    %v4038 = vld [vmem:[%s8 + $0x350] sm:$0xff]
    %v4039 = vld [vmem:[%s8 + $0x358] sm:$0xff]
    %v4040 = vld [vmem:[%s8 + $0x360] sm:$0xff]
    %v4041 = vld [vmem:[%s8 + $0x368] sm:$0xff]
    %v4042 = vld [vmem:[%s8 + $0x370] sm:$0xff]
    %v4043 = vld [vmem:[%s8 + $0x378] sm:$0xff]
    %v4044 = vld [vmem:[%s8 + $0x380] sm:$0xff]
    %v4045 = vld [vmem:[%s8 + $0x388] sm:$0xff]
    %v4046 = vld [vmem:[%s8 + $0x390] sm:$0xff]
    %v4047 = vld [vmem:[%s8 + $0x398] sm:$0xff]
    %v4048 = vld [vmem:[%s8 + $0x3a0] sm:$0xff]
    %v4049 = vld [vmem:[%s8 + $0x3a8] sm:$0xff]
    %v4050 = vld [vmem:[%s8 + $0x3b0] sm:$0xff]
    %v4051 = vld [vmem:[%s8 + $0x3b8] sm:$0xff]
    %v4052 = vld [vmem:[%s8 + $0x3c0] sm:$0xff]
    %v4053 = vld [vmem:[%s8 + $0x3c8] sm:$0xff]
    %v4054 = vld [vmem:[%s8 + $0x3d0] sm:$0xff]
    %v4055 = vld [vmem:[%s8 + $0x3d8] sm:$0xff]
    %v4056 = vld [vmem:[%s8 + $0x3e0] sm:$0xff]
    %v4057 = vld [vmem:[%s8 + $0x3e8] sm:$0xff]
    %v4058 = vld [vmem:[%s8 + $0x3f0] sm:$0xff]
    %v4059 = vld [vmem:[%s8 + $0x3f8] sm:$0xff]
    %v4060 = vld [vmem:[%s8 + $0x400] sm:$0xff]
    %v4061 = vld [vmem:[%s8 + $0x408] sm:$0xff]
    %v4062 = vld [vmem:[%s8 + $0x410] sm:$0xff]
    %v4063 = vld [vmem:[%s8 + $0x418] sm:$0xff]
    %v4064 = vld [vmem:[%s8 + $0x420] sm:$0xff]
    %v4065 = vld [vmem:[%s8 + $0x428] sm:$0xff]
    %v4066 = vld [vmem:[%s8 + $0x430] sm:$0xff]
    %v4067 = vld [vmem:[%s8 + $0x438] sm:$0xff]
    %v4068 = vld [vmem:[%s8 + $0x440] sm:$0xff]
    %v4069 = vld [vmem:[%s8 + $0x448] sm:$0xff]
    %v4070 = vld [vmem:[%s8 + $0x450] sm:$0xff]
    %v4071 = vld [vmem:[%s8 + $0x458] sm:$0xff]
    %v4072 = vld [vmem:[%s8 + $0x460] sm:$0xff]
    %v4073 = vld [vmem:[%s8 + $0x468] sm:$0xff]
    %v4074 = vld [vmem:[%s8 + $0x470] sm:$0xff]
    %v4075 = vld [vmem:[%s8 + $0x478] sm:$0xff]
    %v4076 = vld [vmem:[%s8 + $0x480] sm:$0xff]
    %v4077 = vld [vmem:[%s8 + $0x488] sm:$0xff]
    %v4078 = vld [vmem:[%s8 + $0x490] sm:$0xff]
    %v4079 = vld [vmem:[%s8 + $0x498] sm:$0xff]
    %v4080 = vld [vmem:[%s8 + $0x4a0] sm:$0xff]
    %v4081 = vld [vmem:[%s8 + $0x4a8] sm:$0xff]
    %v4082 = vld [vmem:[%s8 + $0x4b0] sm:$0xff]
    %v4083 = vld [vmem:[%s8 + $0x4b8] sm:$0xff]
    %v4084 = vld [vmem:[%s8 + $0x4c0] sm:$0xff]
    %v4085 = vld [vmem:[%s8 + $0x4c8] sm:$0xff]
    %v4086 = vld [vmem:[%s8 + $0x4d0] sm:$0xff]
    %v4087 = vld [vmem:[%s8 + $0x4d8] sm:$0xff]
    %v4088 = vld [vmem:[%s8 + $0x4e0] sm:$0xff]
    %v4089 = vld [vmem:[%s8 + $0x4e8] sm:$0xff]
    %v4090 = vld [vmem:[%s8 + $0x4f0] sm:$0xff]
    %v4091 = vld [vmem:[%s8 + $0x4f8] sm:$0xff]
    %v4092 = vld [vmem:[%s8 + $0x500] sm:$0xff]
    %v4093 = vld [vmem:[%s8 + $0x508] sm:$0xff]
    %v4094 = vld [vmem:[%s8 + $0x510] sm:$0xff]
    %v4095 = vld [vmem:[%s8 + $0x518] sm:$0xff]
    %v4096 = vld [vmem:[%s8 + $0x520] sm:$0xff]
    %v4097 = vld [vmem:[%s8 + $0x528] sm:$0xff]
    %v4098 = vld [vmem:[%s8 + $0x530] sm:$0xff]
    %v4099 = vld [vmem:[%s8 + $0x538] sm:$0xff]
    %v4100 = vld [vmem:[%s8 + $0x540] sm:$0xff]
    %v4101 = vld [vmem:[%s8 + $0x548] sm:$0xff]
    %v4102 = vld [vmem:[%s8 + $0x550] sm:$0xff]
    %v4103 = vld [vmem:[%s8 + $0x558] sm:$0xff]
    %v4104 = vld [vmem:[%s8 + $0x560] sm:$0xff]
    %v4105 = vld [vmem:[%s8 + $0x568] sm:$0xff]
    %v4106 = vld [vmem:[%s8 + $0x570] sm:$0xff]
    %v4107 = vld [vmem:[%s8 + $0x578] sm:$0xff]
    %v4108 = vld [vmem:[%s8 + $0x580] sm:$0xff]
    %v4109 = vld [vmem:[%s8 + $0x588] sm:$0xff]
    %v4110 = vld [vmem:[%s8 + $0x590] sm:$0xff]
    %v4111 = vld [vmem:[%s8 + $0x598] sm:$0xff]
    %v4112 = vld [vmem:[%s8 + $0x5a0] sm:$0xff]
    %v4113 = vld [vmem:[%s8 + $0x5a8] sm:$0xff]
    %v4114 = vld [vmem:[%s8 + $0x5b0] sm:$0xff]
    %v4115 = vld [vmem:[%s8 + $0x5b8] sm:$0xff]
    %v4116 = vld [vmem:[%s8 + $0x5c0] sm:$0xff]
    %v4117 = vld [vmem:[%s8 + $0x5c8] sm:$0xff]
    %v4118 = vld [vmem:[%s8 + $0x5d0] sm:$0xff]
    %v4119 = vld [vmem:[%s8 + $0x5d8] sm:$0xff]
    %v4120 = vld [vmem:[%s8 + $0x5e0] sm:$0xff]
    %v4121 = vld [vmem:[%s8 + $0x5e8] sm:$0xff]
    %v4122 = vld [vmem:[%s8 + $0x5f0] sm:$0xff]
    %v4123 = vld [vmem:[%s8 + $0x5f8] sm:$0xff]
    %v4124 = vld [vmem:[%s8 + $0x600] sm:$0xff]
    %v4125 = vld [vmem:[%s8 + $0x608] sm:$0xff]
    %v4126 = vld [vmem:[%s8 + $0x610] sm:$0xff]
    %v4127 = vld [vmem:[%s8 + $0x618] sm:$0xff]
    %v4128 = vld [vmem:[%s8 + $0x620] sm:$0xff]
    %v4129 = vld [vmem:[%s8 + $0x628] sm:$0xff]
    %v4130 = vld [vmem:[%s8 + $0x630] sm:$0xff]
    %v4131 = vld [vmem:[%s8 + $0x638] sm:$0xff]
    %v4132 = vld [vmem:[%s8 + $0x640] sm:$0xff]
    %v4133 = vld [vmem:[%s8 + $0x648] sm:$0xff]
    %v4134 = vld [vmem:[%s8 + $0x650] sm:$0xff]
    %v4135 = vld [vmem:[%s8 + $0x658] sm:$0xff]
    %v4136 = vld [vmem:[%s8 + $0x660] sm:$0xff]
    %v4137 = vld [vmem:[%s8 + $0x668] sm:$0xff]
    %v4138 = vld [vmem:[%s8 + $0x670] sm:$0xff]
    %v4139 = vld [vmem:[%s8 + $0x678] sm:$0xff]
    %v4140 = vld [vmem:[%s8 + $0x680] sm:$0xff]
    %v4141 = vld [vmem:[%s8 + $0x688] sm:$0xff]
    %v4142 = vld [vmem:[%s8 + $0x690] sm:$0xff]
    %v4143 = vld [vmem:[%s8 + $0x698] sm:$0xff]
    %v4144 = vld [vmem:[%s8 + $0x6a0] sm:$0xff]
    %v4145 = vld [vmem:[%s8 + $0x6a8] sm:$0xff]
    %v4146 = vld [vmem:[%s8 + $0x6b0] sm:$0xff]
    %v4147 = vld [vmem:[%s8 + $0x6b8] sm:$0xff]
    %v4148 = vld [vmem:[%s8 + $0x6c0] sm:$0xff]
    %v4149 = vld [vmem:[%s8 + $0x6c8] sm:$0xff]
    %v4150 = vld [vmem:[%s8 + $0x6d0] sm:$0xff]
    %v4151 = vld [vmem:[%s8 + $0x6d8] sm:$0xff]
    %v4152 = vld [vmem:[%s8 + $0x6e0] sm:$0xff]
    %v4153 = vld [vmem:[%s8 + $0x6e8] sm:$0xff]
    %v4154 = vld [vmem:[%s8 + $0x6f0] sm:$0xff]
    %v4155 = vld [vmem:[%s8 + $0x6f8] sm:$0xff]
    %v4156 = vld [vmem:[%s8 + $0x700] sm:$0xff]
    %v4157 = vld [vmem:[%s8 + $0x708] sm:$0xff]
    %v4158 = vld [vmem:[%s8 + $0x710] sm:$0xff]
    %v4159 = vld [vmem:[%s8 + $0x718] sm:$0xff]
    %v4160 = vld [vmem:[%s8 + $0x720] sm:$0xff]
    %v4161 = vld [vmem:[%s8 + $0x728] sm:$0xff]
    %v4162 = vld [vmem:[%s8 + $0x730] sm:$0xff]
    %v4163 = vld [vmem:[%s8 + $0x738] sm:$0xff]
    %v4164 = vld [vmem:[%s8 + $0x740] sm:$0xff]
    %v4165 = vld [vmem:[%s8 + $0x748] sm:$0xff]
    %v4166 = vld [vmem:[%s8 + $0x750] sm:$0xff]
    %v4167 = vld [vmem:[%s8 + $0x758] sm:$0xff]
    %v4168 = vld [vmem:[%s8 + $0x760] sm:$0xff]
    %v4169 = vld [vmem:[%s8 + $0x768] sm:$0xff]
    %v4170 = vld [vmem:[%s8 + $0x770] sm:$0xff]
    %v4171 = vld [vmem:[%s8 + $0x778] sm:$0xff]
    %v4172 = vld [vmem:[%s8 + $0x780] sm:$0xff]
    %v4173 = vld [vmem:[%s8 + $0x788] sm:$0xff]
    %v4174 = vld [vmem:[%s8 + $0x790] sm:$0xff]
    %v4175 = vld [vmem:[%s8 + $0x798] sm:$0xff]
    %v4176 = vld [vmem:[%s8 + $0x7a0] sm:$0xff]
    %v4177 = vld [vmem:[%s8 + $0x7a8] sm:$0xff]
    %v4178 = vld [vmem:[%s8 + $0x7b0] sm:$0xff]
    %v4179 = vld [vmem:[%s8 + $0x7b8] sm:$0xff]
    %v4180 = vld [vmem:[%s8 + $0x7c0] sm:$0xff]
    %v4181 = vld [vmem:[%s8 + $0x7c8] sm:$0xff]
    %v4182 = vld [vmem:[%s8 + $0x7d0] sm:$0xff]
    %v4183 = vld [vmem:[%s8 + $0x7d8] sm:$0xff]
    %v4184 = vld [vmem:[%s8 + $0x7e0] sm:$0xff]
    %v4185 = vld [vmem:[%s8 + $0x7e8] sm:$0xff]
    %v4186 = vld [vmem:[%s8 + $0x7f0] sm:$0xff]
    %v4187 = vld [vmem:[%s8 + $0x7f8] sm:$0xff]
    %v4188 = vld [vmem:[%s10] sm:$0xff]
    %v4189 = vld [vmem:[%s10 + $0x8] sm:$0xff]
    %v4190 = vld [vmem:[%s10 + $0x10] sm:$0xff]
    %v4191 = vld [vmem:[%s10 + $0x18] sm:$0xff]
    %v4192 = vld [vmem:[%s10 + $0x20] sm:$0xff]
    %v4193 = vld [vmem:[%s10 + $0x28] sm:$0xff]
    %v4194 = vld [vmem:[%s10 + $0x30] sm:$0xff]
    %v4195 = vld [vmem:[%s10 + $0x38] sm:$0xff]
    %v4196 = vld [vmem:[%s10 + $0x40] sm:$0xff]
    %v4197 = vld [vmem:[%s10 + $0x48] sm:$0xff]
    %v4198 = vld [vmem:[%s10 + $0x50] sm:$0xff]
    %v4199 = vld [vmem:[%s10 + $0x58] sm:$0xff]
    %v4200 = vld [vmem:[%s10 + $0x60] sm:$0xff]
    %v4201 = vld [vmem:[%s10 + $0x68] sm:$0xff]
    %v4202 = vld [vmem:[%s10 + $0x70] sm:$0xff]
    %v4203 = vld [vmem:[%s10 + $0x78] sm:$0xff]
    %v4204 = vld [vmem:[%s10 + $0x80] sm:$0xff]
    %v4205 = vld [vmem:[%s10 + $0x88] sm:$0xff]
    %v4206 = vld [vmem:[%s10 + $0x90] sm:$0xff]
    %v4207 = vld [vmem:[%s10 + $0x98] sm:$0xff]
    %v4208 = vld [vmem:[%s10 + $0xa0] sm:$0xff]
    %v4209 = vld [vmem:[%s10 + $0xa8] sm:$0xff]
    %v4210 = vld [vmem:[%s10 + $0xb0] sm:$0xff]
    %v4211 = vld [vmem:[%s10 + $0xb8] sm:$0xff]
    %v4212 = vld [vmem:[%s10 + $0xc0] sm:$0xff]
    %v4213 = vld [vmem:[%s10 + $0xc8] sm:$0xff]
    %v4214 = vld [vmem:[%s10 + $0xd0] sm:$0xff]
    %v4215 = vld [vmem:[%s10 + $0xd8] sm:$0xff]
    %v4216 = vld [vmem:[%s10 + $0xe0] sm:$0xff]
    %v4217 = vld [vmem:[%s10 + $0xe8] sm:$0xff]
    %v4218 = vld [vmem:[%s10 + $0xf0] sm:$0xff]
    %v4219 = vld [vmem:[%s10 + $0xf8] sm:$0xff]
    %v4220 = vld [vmem:[%s10 + $0x100] sm:$0xff]
    %v4221 = vld [vmem:[%s10 + $0x108] sm:$0xff]
    %v4222 = vld [vmem:[%s10 + $0x110] sm:$0xff]
    %v4223 = vld [vmem:[%s10 + $0x118] sm:$0xff]
    %v4224 = vld [vmem:[%s10 + $0x120] sm:$0xff]
    %v4225 = vld [vmem:[%s10 + $0x128] sm:$0xff]
    %v4226 = vld [vmem:[%s10 + $0x130] sm:$0xff]
    %v4227 = vld [vmem:[%s10 + $0x138] sm:$0xff]
    %v4228 = vld [vmem:[%s10 + $0x140] sm:$0xff]
    %v4229 = vld [vmem:[%s10 + $0x148] sm:$0xff]
    %v4230 = vld [vmem:[%s10 + $0x150] sm:$0xff]
    %v4231 = vld [vmem:[%s10 + $0x158] sm:$0xff]
    %v4232 = vld [vmem:[%s10 + $0x160] sm:$0xff]
    %v4233 = vld [vmem:[%s10 + $0x168] sm:$0xff]
    %v4234 = vld [vmem:[%s10 + $0x170] sm:$0xff]
    %v4235 = vld [vmem:[%s10 + $0x178] sm:$0xff]
    %v4236 = vld [vmem:[%s10 + $0x180] sm:$0xff]
    %v4237 = vld [vmem:[%s10 + $0x188] sm:$0xff]
    %v4238 = vld [vmem:[%s10 + $0x190] sm:$0xff]
    %v4239 = vld [vmem:[%s10 + $0x198] sm:$0xff]
    %v4240 = vld [vmem:[%s10 + $0x1a0] sm:$0xff]
    %v4241 = vld [vmem:[%s10 + $0x1a8] sm:$0xff]
    %v4242 = vld [vmem:[%s10 + $0x1b0] sm:$0xff]
    %v4243 = vld [vmem:[%s10 + $0x1b8] sm:$0xff]
    %v4244 = vld [vmem:[%s10 + $0x1c0] sm:$0xff]
    %v4245 = vld [vmem:[%s10 + $0x1c8] sm:$0xff]
    %v4246 = vld [vmem:[%s10 + $0x1d0] sm:$0xff]
    %v4247 = vld [vmem:[%s10 + $0x1d8] sm:$0xff]
    %v4248 = vld [vmem:[%s10 + $0x1e0] sm:$0xff]
    %v4249 = vld [vmem:[%s10 + $0x1e8] sm:$0xff]
    %v4250 = vld [vmem:[%s10 + $0x1f0] sm:$0xff]
    %v4251 = vld [vmem:[%s10 + $0x1f8] sm:$0xff]
    %v4252 = vld [vmem:[%s10 + $0x200] sm:$0xff]
    %v4253 = vld [vmem:[%s10 + $0x208] sm:$0xff]
    %v4254 = vld [vmem:[%s10 + $0x210] sm:$0xff]
    %v4255 = vld [vmem:[%s10 + $0x218] sm:$0xff]
    %v4256 = vld [vmem:[%s10 + $0x220] sm:$0xff]
    %v4257 = vld [vmem:[%s10 + $0x228] sm:$0xff]
    %v4258 = vld [vmem:[%s10 + $0x230] sm:$0xff]
    %v4259 = vld [vmem:[%s10 + $0x238] sm:$0xff]
    %v4260 = vld [vmem:[%s10 + $0x240] sm:$0xff]
    %v4261 = vld [vmem:[%s10 + $0x248] sm:$0xff]
    %v4262 = vld [vmem:[%s10 + $0x250] sm:$0xff]
    %v4263 = vld [vmem:[%s10 + $0x258] sm:$0xff]
    %v4264 = vld [vmem:[%s10 + $0x260] sm:$0xff]
    %v4265 = vld [vmem:[%s10 + $0x268] sm:$0xff]
    %v4266 = vld [vmem:[%s10 + $0x270] sm:$0xff]
    %v4267 = vld [vmem:[%s10 + $0x278] sm:$0xff]
    %v4268 = vld [vmem:[%s10 + $0x280] sm:$0xff]
    %v4269 = vld [vmem:[%s10 + $0x288] sm:$0xff]
    %v4270 = vld [vmem:[%s10 + $0x290] sm:$0xff]
    %v4271 = vld [vmem:[%s10 + $0x298] sm:$0xff]
    %v4272 = vld [vmem:[%s10 + $0x2a0] sm:$0xff]
    %v4273 = vld [vmem:[%s10 + $0x2a8] sm:$0xff]
    %v4274 = vld [vmem:[%s10 + $0x2b0] sm:$0xff]
    %v4275 = vld [vmem:[%s10 + $0x2b8] sm:$0xff]
    %v4276 = vld [vmem:[%s10 + $0x2c0] sm:$0xff]
    %v4277 = vld [vmem:[%s10 + $0x2c8] sm:$0xff]
    %v4278 = vld [vmem:[%s10 + $0x2d0] sm:$0xff]
    %v4279 = vld [vmem:[%s10 + $0x2d8] sm:$0xff]
    %v4280 = vld [vmem:[%s10 + $0x2e0] sm:$0xff]
    %v4281 = vld [vmem:[%s10 + $0x2e8] sm:$0xff]
    %v4282 = vld [vmem:[%s10 + $0x2f0] sm:$0xff]
    %v4283 = vld [vmem:[%s10 + $0x2f8] sm:$0xff]
    %v4284 = vld [vmem:[%s10 + $0x300] sm:$0xff]
    %v4285 = vld [vmem:[%s10 + $0x308] sm:$0xff]
    %v4286 = vld [vmem:[%s10 + $0x310] sm:$0xff]
    %v4287 = vld [vmem:[%s10 + $0x318] sm:$0xff]
    %v4288 = vld [vmem:[%s10 + $0x320] sm:$0xff]
    %v4289 = vld [vmem:[%s10 + $0x328] sm:$0xff]
    %v4290 = vld [vmem:[%s10 + $0x330] sm:$0xff]
    %v4291 = vld [vmem:[%s10 + $0x338] sm:$0xff]
    %v4292 = vld [vmem:[%s10 + $0x340] sm:$0xff]
    %v4293 = vld [vmem:[%s10 + $0x348] sm:$0xff]
    %v4294 = vld [vmem:[%s10 + $0x350] sm:$0xff]
    %v4295 = vld [vmem:[%s10 + $0x358] sm:$0xff]
    %v4296 = vld [vmem:[%s10 + $0x360] sm:$0xff]
    %v4297 = vld [vmem:[%s10 + $0x368] sm:$0xff]
    %v4298 = vld [vmem:[%s10 + $0x370] sm:$0xff]
    %v4299 = vld [vmem:[%s10 + $0x378] sm:$0xff]
    %v4300 = vld [vmem:[%s10 + $0x380] sm:$0xff]
    %v4301 = vld [vmem:[%s10 + $0x388] sm:$0xff]
    %v4302 = vld [vmem:[%s10 + $0x390] sm:$0xff]
    %v4303 = vld [vmem:[%s10 + $0x398] sm:$0xff]
    %v4304 = vld [vmem:[%s10 + $0x3a0] sm:$0xff]
    %v4305 = vld [vmem:[%s10 + $0x3a8] sm:$0xff]
    %v4306 = vld [vmem:[%s10 + $0x3b0] sm:$0xff]
    %v4307 = vld [vmem:[%s10 + $0x3b8] sm:$0xff]
    %v4308 = vld [vmem:[%s10 + $0x3c0] sm:$0xff]
    %v4309 = vld [vmem:[%s10 + $0x3c8] sm:$0xff]
    %v4310 = vld [vmem:[%s10 + $0x3d0] sm:$0xff]
    %v4311 = vld [vmem:[%s10 + $0x3d8] sm:$0xff]
    %v4312 = vld [vmem:[%s10 + $0x3e0] sm:$0xff]
    %v4313 = vld [vmem:[%s10 + $0x3e8] sm:$0xff]
    %v4314 = vld [vmem:[%s10 + $0x3f0] sm:$0xff]
    %v4315 = vld [vmem:[%s10 + $0x3f8] sm:$0xff]
    %v4316 = vld [vmem:[%s10 + $0x400] sm:$0xff]
    %v4317 = vld [vmem:[%s10 + $0x408] sm:$0xff]
    %v4318 = vld [vmem:[%s10 + $0x410] sm:$0xff]
    %v4319 = vld [vmem:[%s10 + $0x418] sm:$0xff]
    %v4320 = vld [vmem:[%s10 + $0x420] sm:$0xff]
    %v4321 = vld [vmem:[%s10 + $0x428] sm:$0xff]
    %v4322 = vld [vmem:[%s10 + $0x430] sm:$0xff]
    %v4323 = vld [vmem:[%s10 + $0x438] sm:$0xff]
    %v4324 = vld [vmem:[%s10 + $0x440] sm:$0xff]
    %v4325 = vld [vmem:[%s10 + $0x448] sm:$0xff]
    %v4326 = vld [vmem:[%s10 + $0x450] sm:$0xff]
    %v4327 = vld [vmem:[%s10 + $0x458] sm:$0xff]
    %v4328 = vld [vmem:[%s10 + $0x460] sm:$0xff]
    %v4329 = vld [vmem:[%s10 + $0x468] sm:$0xff]
    %v4330 = vld [vmem:[%s10 + $0x470] sm:$0xff]
    %v4331 = vld [vmem:[%s10 + $0x478] sm:$0xff]
    %v4332 = vld [vmem:[%s10 + $0x480] sm:$0xff]
    %v4333 = vld [vmem:[%s10 + $0x488] sm:$0xff]
    %v4334 = vld [vmem:[%s10 + $0x490] sm:$0xff]
    %v4335 = vld [vmem:[%s10 + $0x498] sm:$0xff]
    %v4336 = vld [vmem:[%s10 + $0x4a0] sm:$0xff]
    %v4337 = vld [vmem:[%s10 + $0x4a8] sm:$0xff]
    %v4338 = vld [vmem:[%s10 + $0x4b0] sm:$0xff]
    %v4339 = vld [vmem:[%s10 + $0x4b8] sm:$0xff]
    %v4340 = vld [vmem:[%s10 + $0x4c0] sm:$0xff]
    %v4341 = vld [vmem:[%s10 + $0x4c8] sm:$0xff]
    %v4342 = vld [vmem:[%s10 + $0x4d0] sm:$0xff]
    %v4343 = vld [vmem:[%s10 + $0x4d8] sm:$0xff]
    %v4344 = vld [vmem:[%s10 + $0x4e0] sm:$0xff]
    %v4345 = vld [vmem:[%s10 + $0x4e8] sm:$0xff]
    %v4346 = vld [vmem:[%s10 + $0x4f0] sm:$0xff]
    %v4347 = vld [vmem:[%s10 + $0x4f8] sm:$0xff]
    %v4348 = vld [vmem:[%s10 + $0x500] sm:$0xff]
    %v4349 = vld [vmem:[%s10 + $0x508] sm:$0xff]
    %v4350 = vld [vmem:[%s10 + $0x510] sm:$0xff]
    %v4351 = vld [vmem:[%s10 + $0x518] sm:$0xff]
    %v4352 = vld [vmem:[%s10 + $0x520] sm:$0xff]
    %v4353 = vld [vmem:[%s10 + $0x528] sm:$0xff]
    %v4354 = vld [vmem:[%s10 + $0x530] sm:$0xff]
    %v4355 = vld [vmem:[%s10 + $0x538] sm:$0xff]
    %v4356 = vld [vmem:[%s10 + $0x540] sm:$0xff]
    %v4357 = vld [vmem:[%s10 + $0x548] sm:$0xff]
    %v4358 = vld [vmem:[%s10 + $0x550] sm:$0xff]
    %v4359 = vld [vmem:[%s10 + $0x558] sm:$0xff]
    %v4360 = vld [vmem:[%s10 + $0x560] sm:$0xff]
    %v4361 = vld [vmem:[%s10 + $0x568] sm:$0xff]
    %v4362 = vld [vmem:[%s10 + $0x570] sm:$0xff]
    %v4363 = vld [vmem:[%s10 + $0x578] sm:$0xff]
    %v4364 = vld [vmem:[%s10 + $0x580] sm:$0xff]
    %v4365 = vld [vmem:[%s10 + $0x588] sm:$0xff]
    %v4366 = vld [vmem:[%s10 + $0x590] sm:$0xff]
    %v4367 = vld [vmem:[%s10 + $0x598] sm:$0xff]
    %v4368 = vld [vmem:[%s10 + $0x5a0] sm:$0xff]
    %v4369 = vld [vmem:[%s10 + $0x5a8] sm:$0xff]
    %v4370 = vld [vmem:[%s10 + $0x5b0] sm:$0xff]
    %v4371 = vld [vmem:[%s10 + $0x5b8] sm:$0xff]
    %v4372 = vld [vmem:[%s10 + $0x5c0] sm:$0xff]
    %v4373 = vld [vmem:[%s10 + $0x5c8] sm:$0xff]
    %v4374 = vld [vmem:[%s10 + $0x5d0] sm:$0xff]
    %v4375 = vld [vmem:[%s10 + $0x5d8] sm:$0xff]
    %v4376 = vld [vmem:[%s10 + $0x5e0] sm:$0xff]
    %v4377 = vld [vmem:[%s10 + $0x5e8] sm:$0xff]
    %v4378 = vld [vmem:[%s10 + $0x5f0] sm:$0xff]
    %v4379 = vld [vmem:[%s10 + $0x5f8] sm:$0xff]
    %v4380 = vld [vmem:[%s10 + $0x600] sm:$0xff]
    %v4381 = vld [vmem:[%s10 + $0x608] sm:$0xff]
    %v4382 = vld [vmem:[%s10 + $0x610] sm:$0xff]
    %v4383 = vld [vmem:[%s10 + $0x618] sm:$0xff]
    %v4384 = vld [vmem:[%s10 + $0x620] sm:$0xff]
    %v4385 = vld [vmem:[%s10 + $0x628] sm:$0xff]
    %v4386 = vld [vmem:[%s10 + $0x630] sm:$0xff]
    %v4387 = vld [vmem:[%s10 + $0x638] sm:$0xff]
    %v4388 = vld [vmem:[%s10 + $0x640] sm:$0xff]
    %v4389 = vld [vmem:[%s10 + $0x648] sm:$0xff]
    %v4390 = vld [vmem:[%s10 + $0x650] sm:$0xff]
    %v4391 = vld [vmem:[%s10 + $0x658] sm:$0xff]
    %v4392 = vld [vmem:[%s10 + $0x660] sm:$0xff]
    %v4393 = vld [vmem:[%s10 + $0x668] sm:$0xff]
    %v4394 = vld [vmem:[%s10 + $0x670] sm:$0xff]
    %v4395 = vld [vmem:[%s10 + $0x678] sm:$0xff]
    %v4396 = vld [vmem:[%s10 + $0x680] sm:$0xff]
    %v4397 = vld [vmem:[%s10 + $0x688] sm:$0xff]
    %v4398 = vld [vmem:[%s10 + $0x690] sm:$0xff]
    %v4399 = vld [vmem:[%s10 + $0x698] sm:$0xff]
    %v4400 = vld [vmem:[%s10 + $0x6a0] sm:$0xff]
    %v4401 = vld [vmem:[%s10 + $0x6a8] sm:$0xff]
    %v4402 = vld [vmem:[%s10 + $0x6b0] sm:$0xff]
    %v4403 = vld [vmem:[%s10 + $0x6b8] sm:$0xff]
    %v4404 = vld [vmem:[%s10 + $0x6c0] sm:$0xff]
    %v4405 = vld [vmem:[%s10 + $0x6c8] sm:$0xff]
    %v4406 = vld [vmem:[%s10 + $0x6d0] sm:$0xff]
    %v4407 = vld [vmem:[%s10 + $0x6d8] sm:$0xff]
    %v4408 = vld [vmem:[%s10 + $0x6e0] sm:$0xff]
    %v4409 = vld [vmem:[%s10 + $0x6e8] sm:$0xff]
    %v4410 = vld [vmem:[%s10 + $0x6f0] sm:$0xff]
    %v4411 = vld [vmem:[%s10 + $0x6f8] sm:$0xff]
    %v4412 = vld [vmem:[%s10 + $0x700] sm:$0xff]
    %v4413 = vld [vmem:[%s10 + $0x708] sm:$0xff]
    %v4414 = vld [vmem:[%s10 + $0x710] sm:$0xff]
    %v4415 = vld [vmem:[%s10 + $0x718] sm:$0xff]
    %v4416 = vld [vmem:[%s10 + $0x720] sm:$0xff]
    %v4417 = vld [vmem:[%s10 + $0x728] sm:$0xff]
    %v4418 = vld [vmem:[%s10 + $0x730] sm:$0xff]
    %v4419 = vld [vmem:[%s10 + $0x738] sm:$0xff]
    %v4420 = vld [vmem:[%s10 + $0x740] sm:$0xff]
    %v4421 = vld [vmem:[%s10 + $0x748] sm:$0xff]
    %v4422 = vld [vmem:[%s10 + $0x750] sm:$0xff]
    %v4423 = vld [vmem:[%s10 + $0x758] sm:$0xff]
    %v4424 = vld [vmem:[%s10 + $0x760] sm:$0xff]
    %v4425 = vld [vmem:[%s10 + $0x768] sm:$0xff]
    %v4426 = vld [vmem:[%s10 + $0x770] sm:$0xff]
    %v4427 = vld [vmem:[%s10 + $0x778] sm:$0xff]
    %v4428 = vld [vmem:[%s10 + $0x780] sm:$0xff]
    %v4429 = vld [vmem:[%s10 + $0x788] sm:$0xff]
    %v4430 = vld [vmem:[%s10 + $0x790] sm:$0xff]
    %v4431 = vld [vmem:[%s10 + $0x798] sm:$0xff]
    %v4432 = vld [vmem:[%s10 + $0x7a0] sm:$0xff]
    %v4433 = vld [vmem:[%s10 + $0x7a8] sm:$0xff]
    %v4434 = vld [vmem:[%s10 + $0x7b0] sm:$0xff]
    %v4435 = vld [vmem:[%s10 + $0x7b8] sm:$0xff]
    %v4436 = vld [vmem:[%s10 + $0x7c0] sm:$0xff]
    %v4437 = vld [vmem:[%s10 + $0x7c8] sm:$0xff]
    %v4438 = vld [vmem:[%s10 + $0x7d0] sm:$0xff]
    %v4439 = vld [vmem:[%s10 + $0x7d8] sm:$0xff]
    %v4440 = vld [vmem:[%s10 + $0x7e0] sm:$0xff]
    %v4441 = vld [vmem:[%s10 + $0x7e8] sm:$0xff]
    %v4442 = vld [vmem:[%s10 + $0x7f0] sm:$0xff]
    %v4443 = vld [vmem:[%s10 + $0x7f8] sm:$0xff]
    %v4444 = vld [vmem:[%s10 + $0x800] sm:$0xff]
    %v4445 = vld [vmem:[%s10 + $0x808] sm:$0xff]
    %v4446 = vld [vmem:[%s10 + $0x810] sm:$0xff]
    %v4447 = vld [vmem:[%s10 + $0x818] sm:$0xff]
    %v4448 = vld [vmem:[%s10 + $0x820] sm:$0xff]
    %v4449 = vld [vmem:[%s10 + $0x828] sm:$0xff]
    %v4450 = vld [vmem:[%s10 + $0x830] sm:$0xff]
    %v4451 = vld [vmem:[%s10 + $0x838] sm:$0xff]
    %v4452 = vld [vmem:[%s10 + $0x840] sm:$0xff]
    %v4453 = vld [vmem:[%s10 + $0x848] sm:$0xff]
    %v4454 = vld [vmem:[%s10 + $0x850] sm:$0xff]
    %v4455 = vld [vmem:[%s10 + $0x858] sm:$0xff]
    %v4456 = vld [vmem:[%s10 + $0x860] sm:$0xff]
    %v4457 = vld [vmem:[%s10 + $0x868] sm:$0xff]
    %v4458 = vld [vmem:[%s10 + $0x870] sm:$0xff]
    %v4459 = vld [vmem:[%s10 + $0x878] sm:$0xff]
    %v4460 = vld [vmem:[%s10 + $0x880] sm:$0xff]
    %v4461 = vld [vmem:[%s10 + $0x888] sm:$0xff]
    %v4462 = vld [vmem:[%s10 + $0x890] sm:$0xff]
    %v4463 = vld [vmem:[%s10 + $0x898] sm:$0xff]
    %v4464 = vld [vmem:[%s10 + $0x8a0] sm:$0xff]
    %v4465 = vld [vmem:[%s10 + $0x8a8] sm:$0xff]
    %v4466 = vld [vmem:[%s10 + $0x8b0] sm:$0xff]
    %v4467 = vld [vmem:[%s10 + $0x8b8] sm:$0xff]
    %v4468 = vld [vmem:[%s10 + $0x8c0] sm:$0xff]
    %v4469 = vld [vmem:[%s10 + $0x8c8] sm:$0xff]
    %v4470 = vld [vmem:[%s10 + $0x8d0] sm:$0xff]
    %v4471 = vld [vmem:[%s10 + $0x8d8] sm:$0xff]
    %v4472 = vld [vmem:[%s10 + $0x8e0] sm:$0xff]
    %v4473 = vld [vmem:[%s10 + $0x8e8] sm:$0xff]
    %v4474 = vld [vmem:[%s10 + $0x8f0] sm:$0xff]
    %v4475 = vld [vmem:[%s10 + $0x8f8] sm:$0xff]
    %v4476 = vld [vmem:[%s10 + $0x900] sm:$0xff]
    %v4477 = vld [vmem:[%s10 + $0x908] sm:$0xff]
    %v4478 = vld [vmem:[%s10 + $0x910] sm:$0xff]
    %v4479 = vld [vmem:[%s10 + $0x918] sm:$0xff]
    %v4480 = vld [vmem:[%s10 + $0x920] sm:$0xff]
    %v4481 = vld [vmem:[%s10 + $0x928] sm:$0xff]
    %v4482 = vld [vmem:[%s10 + $0x930] sm:$0xff]
    %v4483 = vld [vmem:[%s10 + $0x938] sm:$0xff]
    %v4484 = vld [vmem:[%s10 + $0x940] sm:$0xff]
    %v4485 = vld [vmem:[%s10 + $0x948] sm:$0xff]
    %v4486 = vld [vmem:[%s10 + $0x950] sm:$0xff]
    %v4487 = vld [vmem:[%s10 + $0x958] sm:$0xff]
    %v4488 = vld [vmem:[%s10 + $0x960] sm:$0xff]
    %v4489 = vld [vmem:[%s10 + $0x968] sm:$0xff]
    %v4490 = vld [vmem:[%s10 + $0x970] sm:$0xff]
    %v4491 = vld [vmem:[%s10 + $0x978] sm:$0xff]
    %v4492 = vld [vmem:[%s10 + $0x980] sm:$0xff]
    %v4493 = vld [vmem:[%s10 + $0x988] sm:$0xff]
    %v4494 = vld [vmem:[%s10 + $0x990] sm:$0xff]
    %v4495 = vld [vmem:[%s10 + $0x998] sm:$0xff]
    %v4496 = vld [vmem:[%s10 + $0x9a0] sm:$0xff]
    %v4497 = vld [vmem:[%s10 + $0x9a8] sm:$0xff]
    %v4498 = vld [vmem:[%s10 + $0x9b0] sm:$0xff]
    %v4499 = vld [vmem:[%s10 + $0x9b8] sm:$0xff]
    %v4500 = vld [vmem:[%s10 + $0x9c0] sm:$0xff]
    %v4501 = vld [vmem:[%s10 + $0x9c8] sm:$0xff]
    %v4502 = vld [vmem:[%s10 + $0x9d0] sm:$0xff]
    %v4503 = vld [vmem:[%s10 + $0x9d8] sm:$0xff]
    %v4504 = vld [vmem:[%s10 + $0x9e0] sm:$0xff]
    %v4505 = vld [vmem:[%s10 + $0x9e8] sm:$0xff]
    %v4506 = vld [vmem:[%s10 + $0x9f0] sm:$0xff]
    %v4507 = vld [vmem:[%s10 + $0x9f8] sm:$0xff]
    %v4508 = vld [vmem:[%s10 + $0xa00] sm:$0xff]
    %v4509 = vld [vmem:[%s10 + $0xa08] sm:$0xff]
    %v4510 = vld [vmem:[%s10 + $0xa10] sm:$0xff]
    %v4511 = vld [vmem:[%s10 + $0xa18] sm:$0xff]
    %v4512 = vld [vmem:[%s10 + $0xa20] sm:$0xff]
    %v4513 = vld [vmem:[%s10 + $0xa28] sm:$0xff]
    %v4514 = vld [vmem:[%s10 + $0xa30] sm:$0xff]
    %v4515 = vld [vmem:[%s10 + $0xa38] sm:$0xff]
    %v4516 = vld [vmem:[%s10 + $0xa40] sm:$0xff]
    %v4517 = vld [vmem:[%s10 + $0xa48] sm:$0xff]
    %v4518 = vld [vmem:[%s10 + $0xa50] sm:$0xff]
    %v4519 = vld [vmem:[%s10 + $0xa58] sm:$0xff]
    %v4520 = vld [vmem:[%s10 + $0xa60] sm:$0xff]
    %v4521 = vld [vmem:[%s10 + $0xa68] sm:$0xff]
    %v4522 = vld [vmem:[%s10 + $0xa70] sm:$0xff]
    %v4523 = vld [vmem:[%s10 + $0xa78] sm:$0xff]
    %v4524 = vld [vmem:[%s10 + $0xa80] sm:$0xff]
    %v4525 = vld [vmem:[%s10 + $0xa88] sm:$0xff]
    %v4526 = vld [vmem:[%s10 + $0xa90] sm:$0xff]
    %v4527 = vld [vmem:[%s10 + $0xa98] sm:$0xff]
    %v4528 = vld [vmem:[%s10 + $0xaa0] sm:$0xff]
    %v4529 = vld [vmem:[%s10 + $0xaa8] sm:$0xff]
    %v4530 = vld [vmem:[%s10 + $0xab0] sm:$0xff]
    %v4531 = vld [vmem:[%s10 + $0xab8] sm:$0xff]
    %v4532 = vld [vmem:[%s10 + $0xac0] sm:$0xff]
    %v4533 = vld [vmem:[%s10 + $0xac8] sm:$0xff]
    %v4534 = vld [vmem:[%s10 + $0xad0] sm:$0xff]
    %v4535 = vld [vmem:[%s10 + $0xad8] sm:$0xff]
    %v4536 = vld [vmem:[%s10 + $0xae0] sm:$0xff]
    %v4537 = vld [vmem:[%s10 + $0xae8] sm:$0xff]
    %v4538 = vld [vmem:[%s10 + $0xaf0] sm:$0xff]
    %v4539 = vld [vmem:[%s10 + $0xaf8] sm:$0xff]
    %v4540 = vld [vmem:[%s10 + $0xb00] sm:$0xff]
    %v4541 = vld [vmem:[%s10 + $0xb08] sm:$0xff]
    %v4542 = vld [vmem:[%s10 + $0xb10] sm:$0xff]
    %v4543 = vld [vmem:[%s10 + $0xb18] sm:$0xff]
    %v4544 = vld [vmem:[%s10 + $0xb20] sm:$0xff]
    %v4545 = vld [vmem:[%s10 + $0xb28] sm:$0xff]
    %v4546 = vld [vmem:[%s10 + $0xb30] sm:$0xff]
    %v4547 = vld [vmem:[%s10 + $0xb38] sm:$0xff]
    %v4548 = vld [vmem:[%s10 + $0xb40] sm:$0xff]
    %v4549 = vld [vmem:[%s10 + $0xb48] sm:$0xff]
    %v4550 = vld [vmem:[%s10 + $0xb50] sm:$0xff]
    %v4551 = vld [vmem:[%s10 + $0xb58] sm:$0xff]
    %v4552 = vld [vmem:[%s10 + $0xb60] sm:$0xff]
    %v4553 = vld [vmem:[%s10 + $0xb68] sm:$0xff]
    %v4554 = vld [vmem:[%s10 + $0xb70] sm:$0xff]
    %v4555 = vld [vmem:[%s10 + $0xb78] sm:$0xff]
    %v4556 = vld [vmem:[%s10 + $0xb80] sm:$0xff]
    %v4557 = vld [vmem:[%s10 + $0xb88] sm:$0xff]
    %v4558 = vld [vmem:[%s10 + $0xb90] sm:$0xff]
    %v4559 = vld [vmem:[%s10 + $0xb98] sm:$0xff]
    %v4560 = vld [vmem:[%s10 + $0xba0] sm:$0xff]
    %v4561 = vld [vmem:[%s10 + $0xba8] sm:$0xff]
    %v4562 = vld [vmem:[%s10 + $0xbb0] sm:$0xff]
    %v4563 = vld [vmem:[%s10 + $0xbb8] sm:$0xff]
    %v4564 = vld [vmem:[%s10 + $0xbc0] sm:$0xff]
    %v4565 = vld [vmem:[%s10 + $0xbc8] sm:$0xff]
    %v4566 = vld [vmem:[%s10 + $0xbd0] sm:$0xff]
    %v4567 = vld [vmem:[%s10 + $0xbd8] sm:$0xff]
    %v4568 = vld [vmem:[%s10 + $0xbe0] sm:$0xff]
    %v4569 = vld [vmem:[%s10 + $0xbe8] sm:$0xff]
    %v4570 = vld [vmem:[%s10 + $0xbf0] sm:$0xff]
    %v4571 = vld [vmem:[%s10 + $0xbf8] sm:$0xff]
    %v4572 = vld [vmem:[%s10 + $0xc00] sm:$0xff]
    %v4573 = vld [vmem:[%s10 + $0xc08] sm:$0xff]
    %v4574 = vld [vmem:[%s10 + $0xc10] sm:$0xff]
    %v4575 = vld [vmem:[%s10 + $0xc18] sm:$0xff]
    %v4576 = vld [vmem:[%s10 + $0xc20] sm:$0xff]
    %v4577 = vld [vmem:[%s10 + $0xc28] sm:$0xff]
    %v4578 = vld [vmem:[%s10 + $0xc30] sm:$0xff]
    %v4579 = vld [vmem:[%s10 + $0xc38] sm:$0xff]
    %v4580 = vld [vmem:[%s10 + $0xc40] sm:$0xff]
    %v4581 = vld [vmem:[%s10 + $0xc48] sm:$0xff]
    %v4582 = vld [vmem:[%s10 + $0xc50] sm:$0xff]
    %v4583 = vld [vmem:[%s10 + $0xc58] sm:$0xff]
    %v4584 = vld [vmem:[%s10 + $0xc60] sm:$0xff]
    %v4585 = vld [vmem:[%s10 + $0xc68] sm:$0xff]
    %v4586 = vld [vmem:[%s10 + $0xc70] sm:$0xff]
    %v4587 = vld [vmem:[%s10 + $0xc78] sm:$0xff]
    %v4588 = vld [vmem:[%s10 + $0xc80] sm:$0xff]
    %v4589 = vld [vmem:[%s10 + $0xc88] sm:$0xff]
    %v4590 = vld [vmem:[%s10 + $0xc90] sm:$0xff]
    %v4591 = vld [vmem:[%s10 + $0xc98] sm:$0xff]
    %v4592 = vld [vmem:[%s10 + $0xca0] sm:$0xff]
    %v4593 = vld [vmem:[%s10 + $0xca8] sm:$0xff]
    %v4594 = vld [vmem:[%s10 + $0xcb0] sm:$0xff]
    %v4595 = vld [vmem:[%s10 + $0xcb8] sm:$0xff]
    %v4596 = vld [vmem:[%s10 + $0xcc0] sm:$0xff]
    %v4597 = vld [vmem:[%s10 + $0xcc8] sm:$0xff]
    %v4598 = vld [vmem:[%s10 + $0xcd0] sm:$0xff]
    %v4599 = vld [vmem:[%s10 + $0xcd8] sm:$0xff]
    %v4600 = vld [vmem:[%s10 + $0xce0] sm:$0xff]
    %v4601 = vld [vmem:[%s10 + $0xce8] sm:$0xff]
    %v4602 = vld [vmem:[%s10 + $0xcf0] sm:$0xff]
    %v4603 = vld [vmem:[%s10 + $0xcf8] sm:$0xff]
    %v4604 = vld [vmem:[%s10 + $0xd00] sm:$0xff]
    %v4605 = vld [vmem:[%s10 + $0xd08] sm:$0xff]
    %v4606 = vld [vmem:[%s10 + $0xd10] sm:$0xff]
    %v4607 = vld [vmem:[%s10 + $0xd18] sm:$0xff]
    %v4608 = vld [vmem:[%s10 + $0xd20] sm:$0xff]
    %v4609 = vld [vmem:[%s10 + $0xd28] sm:$0xff]
    %v4610 = vld [vmem:[%s10 + $0xd30] sm:$0xff]
    %v4611 = vld [vmem:[%s10 + $0xd38] sm:$0xff]
    %v4612 = vld [vmem:[%s10 + $0xd40] sm:$0xff]
    %v4613 = vld [vmem:[%s10 + $0xd48] sm:$0xff]
    %v4614 = vld [vmem:[%s10 + $0xd50] sm:$0xff]
    %v4615 = vld [vmem:[%s10 + $0xd58] sm:$0xff]
    %v4616 = vld [vmem:[%s10 + $0xd60] sm:$0xff]
    %v4617 = vld [vmem:[%s10 + $0xd68] sm:$0xff]
    %v4618 = vld [vmem:[%s10 + $0xd70] sm:$0xff]
    %v4619 = vld [vmem:[%s10 + $0xd78] sm:$0xff]
    %v4620 = vld [vmem:[%s10 + $0xd80] sm:$0xff]
    %v4621 = vld [vmem:[%s10 + $0xd88] sm:$0xff]
    %v4622 = vld [vmem:[%s10 + $0xd90] sm:$0xff]
    %v4623 = vld [vmem:[%s10 + $0xd98] sm:$0xff]
    %v4624 = vld [vmem:[%s10 + $0xda0] sm:$0xff]
    %v4625 = vld [vmem:[%s10 + $0xda8] sm:$0xff]
    %v4626 = vld [vmem:[%s10 + $0xdb0] sm:$0xff]
    %v4627 = vld [vmem:[%s10 + $0xdb8] sm:$0xff]
    %v4628 = vld [vmem:[%s10 + $0xdc0] sm:$0xff]
    %v4629 = vld [vmem:[%s10 + $0xdc8] sm:$0xff]
    %v4630 = vld [vmem:[%s10 + $0xdd0] sm:$0xff]
    %v4631 = vld [vmem:[%s10 + $0xdd8] sm:$0xff]
    %v4632 = vld [vmem:[%s10 + $0xde0] sm:$0xff]
    %v4633 = vld [vmem:[%s10 + $0xde8] sm:$0xff]
    %v4634 = vld [vmem:[%s10 + $0xdf0] sm:$0xff]
    %v4635 = vld [vmem:[%s10 + $0xdf8] sm:$0xff]
    %v4636 = vld [vmem:[%s10 + $0xe00] sm:$0xff]
    %v4637 = vld [vmem:[%s10 + $0xe08] sm:$0xff]
    %v4638 = vld [vmem:[%s10 + $0xe10] sm:$0xff]
    %v4639 = vld [vmem:[%s10 + $0xe18] sm:$0xff]
    %v4640 = vld [vmem:[%s10 + $0xe20] sm:$0xff]
    %v4641 = vld [vmem:[%s10 + $0xe28] sm:$0xff]
    %v4642 = vld [vmem:[%s10 + $0xe30] sm:$0xff]
    %v4643 = vld [vmem:[%s10 + $0xe38] sm:$0xff]
    %v4644 = vld [vmem:[%s10 + $0xe40] sm:$0xff]
    %v4645 = vld [vmem:[%s10 + $0xe48] sm:$0xff]
    %v4646 = vld [vmem:[%s10 + $0xe50] sm:$0xff]
    %v4647 = vld [vmem:[%s10 + $0xe58] sm:$0xff]
    %v4648 = vld [vmem:[%s10 + $0xe60] sm:$0xff]
    %v4649 = vld [vmem:[%s10 + $0xe68] sm:$0xff]
    %v4650 = vld [vmem:[%s10 + $0xe70] sm:$0xff]
    %v4651 = vld [vmem:[%s10 + $0xe78] sm:$0xff]
    %v4652 = vld [vmem:[%s10 + $0xe80] sm:$0xff]
    %v4653 = vld [vmem:[%s10 + $0xe88] sm:$0xff]
    %v4654 = vld [vmem:[%s10 + $0xe90] sm:$0xff]
    %v4655 = vld [vmem:[%s10 + $0xe98] sm:$0xff]
    %v4656 = vld [vmem:[%s10 + $0xea0] sm:$0xff]
    %v4657 = vld [vmem:[%s10 + $0xea8] sm:$0xff]
    %v4658 = vld [vmem:[%s10 + $0xeb0] sm:$0xff]
    %v4659 = vld [vmem:[%s10 + $0xeb8] sm:$0xff]
    %v4660 = vld [vmem:[%s10 + $0xec0] sm:$0xff]
    %v4661 = vld [vmem:[%s10 + $0xec8] sm:$0xff]
    %v4662 = vld [vmem:[%s10 + $0xed0] sm:$0xff]
    %v4663 = vld [vmem:[%s10 + $0xed8] sm:$0xff]
    %v4664 = vld [vmem:[%s10 + $0xee0] sm:$0xff]
    %v4665 = vld [vmem:[%s10 + $0xee8] sm:$0xff]
    %v4666 = vld [vmem:[%s10 + $0xef0] sm:$0xff]
    %v4667 = vld [vmem:[%s10 + $0xef8] sm:$0xff]
    %v4668 = vld [vmem:[%s10 + $0xf00] sm:$0xff]
    %v4669 = vld [vmem:[%s10 + $0xf08] sm:$0xff]
    %v4670 = vld [vmem:[%s10 + $0xf10] sm:$0xff]
    %v4671 = vld [vmem:[%s10 + $0xf18] sm:$0xff]
    %v4672 = vld [vmem:[%s10 + $0xf20] sm:$0xff]
    %v4673 = vld [vmem:[%s10 + $0xf28] sm:$0xff]
    %v4674 = vld [vmem:[%s10 + $0xf30] sm:$0xff]
    %v4675 = vld [vmem:[%s10 + $0xf38] sm:$0xff]
    %v4676 = vld [vmem:[%s10 + $0xf40] sm:$0xff]
    %v4677 = vld [vmem:[%s10 + $0xf48] sm:$0xff]
    %v4678 = vld [vmem:[%s10 + $0xf50] sm:$0xff]
    %v4679 = vld [vmem:[%s10 + $0xf58] sm:$0xff]
    %v4680 = vld [vmem:[%s10 + $0xf60] sm:$0xff]
    %v4681 = vld [vmem:[%s10 + $0xf68] sm:$0xff]
    %v4682 = vld [vmem:[%s10 + $0xf70] sm:$0xff]
    %v4683 = vld [vmem:[%s10 + $0xf78] sm:$0xff]
    %v4684 = vld [vmem:[%s10 + $0xf80] sm:$0xff]
    %v4685 = vld [vmem:[%s10 + $0xf88] sm:$0xff]
    %v4686 = vld [vmem:[%s10 + $0xf90] sm:$0xff]
    %v4687 = vld [vmem:[%s10 + $0xf98] sm:$0xff]
    %v4688 = vld [vmem:[%s10 + $0xfa0] sm:$0xff]
    %v4689 = vld [vmem:[%s10 + $0xfa8] sm:$0xff]
    %v4690 = vld [vmem:[%s10 + $0xfb0] sm:$0xff]
    %v4691 = vld [vmem:[%s10 + $0xfb8] sm:$0xff]
    %v4692 = vld [vmem:[%s10 + $0xfc0] sm:$0xff]
    %v4693 = vld [vmem:[%s10 + $0xfc8] sm:$0xff]
    %v4694 = vld [vmem:[%s10 + $0xfd0] sm:$0xff]
    %v4695 = vld [vmem:[%s10 + $0xfd8] sm:$0xff]
    %v4696 = vld [vmem:[%s10 + $0xfe0] sm:$0xff]
    %v4697 = vld [vmem:[%s10 + $0xfe8] sm:$0xff]
    %v4698 = vld [vmem:[%s10 + $0xff0] sm:$0xff]
    %v4699 = vld [vmem:[%s10 + $0xff8] sm:$0xff]
    %v4700 = vld [vmem:[%s11] sm:$0xff]
    %v4702 = vlaneseq
    %v4703 = vshrl.u32 %v4702, 7
    %v4704 = vsub.s32 0, %v4703
    %v4705 = vrot.slane %v4700, %v4704
    %v4706 = vlaneseq
    %v4707 = vshrl.u32 %v4706, 7
    %v4708 = vsub.s32 1, %v4707
    %v4709 = vrot.slane %v4700, %v4708
    %v4710 = vlaneseq
    %v4711 = vshrl.u32 %v4710, 7
    %v4712 = vsub.s32 2, %v4711
    %v4713 = vrot.slane %v4700, %v4712
    %v4714 = vlaneseq
    %v4715 = vshrl.u32 %v4714, 7
    %v4716 = vsub.s32 3, %v4715
    %v4717 = vrot.slane %v4700, %v4716
    %v4718 = vlaneseq
    %v4719 = vshrl.u32 %v4718, 7
    %v4720 = vsub.s32 4, %v4719
    %v4721 = vrot.slane %v4700, %v4720
    %v4722 = vlaneseq
    %v4723 = vshrl.u32 %v4722, 7
    %v4724 = vsub.s32 5, %v4723
    %v4725 = vrot.slane %v4700, %v4724
    %v4726 = vlaneseq
    %v4727 = vshrl.u32 %v4726, 7
    %v4728 = vsub.s32 6, %v4727
    %v4729 = vrot.slane %v4700, %v4728
    %v4730 = vlaneseq
    %v4731 = vshrl.u32 %v4730, 7
    %v4732 = vsub.s32 7, %v4731
    %v4733 = vrot.slane %v4700, %v4732
    %v4742 = vld [vmem:[#allocation4] ss:$8 sm:$0xf]
    %v4743 = vld [vmem:[#allocation4] ss:$8 sm:$0xf0]
    %v4744 = vor.u32 %v4742, %v4743
    %s4745 = scalar_lea.vmem [#allocation4], 64
    %v4746 = vld [vmem:[%s4745] ss:$8 sm:$0xf]
    %v4747 = vld [vmem:[%s4745] ss:$8 sm:$0xf0]
    %v4748 = vor.u32 %v4746, %v4747
    %4749 = vmatprep.subr.mxu0 %v3933
    %4750 = vmatpush1.msra.mxu0 %v3932
    %4751 = vmatprep.subr.mxu0 %v3941
    %4752 = vmatpush1.msra.mxu0 %v3940
    %4753 = vmatprep.subr.mxu0 %v3949
    %4754 = vmatpush1.msra.mxu0 %v3948
    %4755 = vmatprep.subr.mxu0 %v3957
    %4756 = vmatpush1.msra.mxu0 %v3956
    %4757 = vmatprep.subr.mxu0 %v3965
    %4758 = vmatpush1.msra.mxu0 %v3964
    %4759 = vmatprep.subr.mxu0 %v3973
    %4760 = vmatpush1.msra.mxu0 %v3972
    %4761 = vmatprep.subr.mxu0 %v3981
    %4762 = vmatpush1.msra.mxu0 %v3980
    %4763 = vmatprep.subr.mxu0 %v3989
    %4764 = vmatpush1.msra.mxu0 %v3988
    %4765 = vmatprep.subr.mxu0 %v3997
    %4766 = vmatpush1.msra.mxu0 %v3996
    %4767 = vmatprep.subr.mxu0 %v4005
    %4768 = vmatpush1.msra.mxu0 %v4004
    %4769 = vmatprep.subr.mxu0 %v4013
    %4770 = vmatpush1.msra.mxu0 %v4012
    %4771 = vmatprep.subr.mxu0 %v4021
    %4772 = vmatpush1.msra.mxu0 %v4020
    %4773 = vmatprep.subr.mxu0 %v4029
    %4774 = vmatpush1.msra.mxu0 %v4028
    %4775 = vmatprep.subr.mxu0 %v4037
    %4776 = vmatpush1.msra.mxu0 %v4036
    %4777 = vmatprep.subr.mxu0 %v4045
    %4778 = vmatpush1.msra.mxu0 %v4044
    %4779 = vmatprep.subr.mxu0 %v4053
    %4780 = vmatpush1.msra.mxu0 %v4052
    %4781 = vmatprep.subr.mxu0 %v4061
    %4782 = vmatpush1.msra.mxu0 %v4060
    %4783 = vmatprep.subr.mxu0 %v4069
    %4784 = vmatpush1.msra.mxu0 %v4068
    %4785 = vmatprep.subr.mxu0 %v4077
    %4786 = vmatpush1.msra.mxu0 %v4076
    %4787 = vmatprep.subr.mxu0 %v4085
    %4788 = vmatpush1.msra.mxu0 %v4084
    %4789 = vmatprep.subr.mxu0 %v4093
    %4790 = vmatpush1.msra.mxu0 %v4092
    %4791 = vmatprep.subr.mxu0 %v4101
    %4792 = vmatpush1.msra.mxu0 %v4100
    %4793 = vmatprep.subr.mxu0 %v4109
    %4794 = vmatpush1.msra.mxu0 %v4108
    %4795 = vmatprep.subr.mxu0 %v4117
    %4796 = vmatpush1.msra.mxu0 %v4116
    %4797 = vmatprep.subr.mxu0 %v4125
    %4798 = vmatpush1.msra.mxu0 %v4124
    %4799 = vmatprep.subr.mxu0 %v4133
    %4800 = vmatpush1.msra.mxu0 %v4132
    %4801 = vmatprep.subr.mxu0 %v4141
    %4802 = vmatpush1.msra.mxu0 %v4140
    %4803 = vmatprep.subr.mxu0 %v4149
    %4804 = vmatpush1.msra.mxu0 %v4148
    %4805 = vmatprep.subr.mxu0 %v4157
    %4806 = vmatpush1.msra.mxu0 %v4156
    %4807 = vmatprep.subr.mxu0 %v4165
    %4808 = vmatpush1.msra.mxu0 %v4164
    %4809 = vmatprep.subr.mxu0 %v4173
    %4810 = vmatpush1.msra.mxu0 %v4172
    %4811 = vmatprep.subr.mxu0 %v4181
    %4812 = vmatpush1.msra.mxu0 %v4180
    %4813 = vmatprep.mubr.f32.mxu0 0.0
    %4814 = vmatmul.mubr.f32.gmra.mrb[0].mxu0 0.0
    %v4815 = vpop.f32.mrb[0].mxu0
    %v4816 = vadd.f32 0.0, %v4815
    %v4817 = vpop.f32.mrb[0].mxu0
    %v4818 = vadd.f32 0.0, %v4817
    %4819 = vdwg.mxu0
    %4820 = vmatprep.subr.mxu0 %v3935
    %4821 = vmatpush1.msra.mxu0 %v3934
    %4822 = vmatprep.subr.mxu0 %v3943
    %4823 = vmatpush1.msra.mxu0 %v3942
    %4824 = vmatprep.subr.mxu0 %v3951
    %4825 = vmatpush1.msra.mxu0 %v3950
    %4826 = vmatprep.subr.mxu0 %v3959
    %4827 = vmatpush1.msra.mxu0 %v3958
    %4828 = vmatprep.subr.mxu0 %v3967
    %4829 = vmatpush1.msra.mxu0 %v3966
    %4830 = vmatprep.subr.mxu0 %v3975
    %4831 = vmatpush1.msra.mxu0 %v3974
    %4832 = vmatprep.subr.mxu0 %v3983
    %4833 = vmatpush1.msra.mxu0 %v3982
    %4834 = vmatprep.subr.mxu0 %v3991
    %4835 = vmatpush1.msra.mxu0 %v3990
    %4836 = vmatprep.subr.mxu0 %v3999
    %4837 = vmatpush1.msra.mxu0 %v3998
    %4838 = vmatprep.subr.mxu0 %v4007
    %4839 = vmatpush1.msra.mxu0 %v4006
    %4840 = vmatprep.subr.mxu0 %v4015
    %4841 = vmatpush1.msra.mxu0 %v4014
    %4842 = vmatprep.subr.mxu0 %v4023
    %4843 = vmatpush1.msra.mxu0 %v4022
    %4844 = vmatprep.subr.mxu0 %v4031
    %4845 = vmatpush1.msra.mxu0 %v4030
    %4846 = vmatprep.subr.mxu0 %v4039
    %4847 = vmatpush1.msra.mxu0 %v4038
    %4848 = vmatprep.subr.mxu0 %v4047
    %4849 = vmatpush1.msra.mxu0 %v4046
    %4850 = vmatprep.subr.mxu0 %v4055
    %4851 = vmatpush1.msra.mxu0 %v4054
    %4852 = vmatprep.subr.mxu0 %v4063
    %4853 = vmatpush1.msra.mxu0 %v4062
    %4854 = vmatprep.subr.mxu0 %v4071
    %4855 = vmatpush1.msra.mxu0 %v4070
    %4856 = vmatprep.subr.mxu0 %v4079
    %4857 = vmatpush1.msra.mxu0 %v4078
    %4858 = vmatprep.subr.mxu0 %v4087
    %4859 = vmatpush1.msra.mxu0 %v4086
    %4860 = vmatprep.subr.mxu0 %v4095
    %4861 = vmatpush1.msra.mxu0 %v4094
    %4862 = vmatprep.subr.mxu0 %v4103
    %4863 = vmatpush1.msra.mxu0 %v4102
    %4864 = vmatprep.subr.mxu0 %v4111
    %4865 = vmatpush1.msra.mxu0 %v4110
    %4866 = vmatprep.subr.mxu0 %v4119
    %4867 = vmatpush1.msra.mxu0 %v4118
    %4868 = vmatprep.subr.mxu0 %v4127
    %4869 = vmatpush1.msra.mxu0 %v4126
    %4870 = vmatprep.subr.mxu0 %v4135
    %4871 = vmatpush1.msra.mxu0 %v4134
    %4872 = vmatprep.subr.mxu0 %v4143
    %4873 = vmatpush1.msra.mxu0 %v4142
    %4874 = vmatprep.subr.mxu0 %v4151
    %4875 = vmatpush1.msra.mxu0 %v4150
    %4876 = vmatprep.subr.mxu0 %v4159
    %4877 = vmatpush1.msra.mxu0 %v4158
    %4878 = vmatprep.subr.mxu0 %v4167
    %4879 = vmatpush1.msra.mxu0 %v4166
    %4880 = vmatprep.subr.mxu0 %v4175
    %4881 = vmatpush1.msra.mxu0 %v4174
    %4882 = vmatprep.subr.mxu0 %v4183
    %4883 = vmatpush1.msra.mxu0 %v4182
    %4884 = vmatprep.mubr.f32.mxu0 0.0
    %4885 = vmatmul.mubr.f32.gmra.mrb[0].mxu0 0.0
    %v4886 = vpop.f32.mrb[0].mxu0
    %v4887 = vadd.f32 0.0, %v4886
    %v4888 = vpop.f32.mrb[0].mxu0
    %v4889 = vadd.f32 0.0, %v4888
    %4890 = vdwg.mxu0
    %4891 = vmatprep.subr.mxu0 %v3937
    %4892 = vmatpush1.msra.mxu0 %v3936
    %4893 = vmatprep.subr.mxu0 %v3945
    %4894 = vmatpush1.msra.mxu0 %v3944
    %4895 = vmatprep.subr.mxu0 %v3953
    %4896 = vmatpush1.msra.mxu0 %v3952
    %4897 = vmatprep.subr.mxu0 %v3961
    %4898 = vmatpush1.msra.mxu0 %v3960
    %4899 = vmatprep.subr.mxu0 %v3969
    %4900 = vmatpush1.msra.mxu0 %v3968
    %4901 = vmatprep.subr.mxu0 %v3977
    %4902 = vmatpush1.msra.mxu0 %v3976
    %4903 = vmatprep.subr.mxu0 %v3985
    %4904 = vmatpush1.msra.mxu0 %v3984
    %4905 = vmatprep.subr.mxu0 %v3993
    %4906 = vmatpush1.msra.mxu0 %v3992
    %4907 = vmatprep.subr.mxu0 %v4001
    %4908 = vmatpush1.msra.mxu0 %v4000
    %4909 = vmatprep.subr.mxu0 %v4009
    %4910 = vmatpush1.msra.mxu0 %v4008
    %4911 = vmatprep.subr.mxu0 %v4017
    %4912 = vmatpush1.msra.mxu0 %v4016
    %4913 = vmatprep.subr.mxu0 %v4025
    %4914 = vmatpush1.msra.mxu0 %v4024
    %4915 = vmatprep.subr.mxu0 %v4033
    %4916 = vmatpush1.msra.mxu0 %v4032
    %4917 = vmatprep.subr.mxu0 %v4041
    %4918 = vmatpush1.msra.mxu0 %v4040
    %4919 = vmatprep.subr.mxu0 %v4049
    %4920 = vmatpush1.msra.mxu0 %v4048
    %4921 = vmatprep.subr.mxu0 %v4057
    %4922 = vmatpush1.msra.mxu0 %v4056
    %4923 = vmatprep.subr.mxu0 %v4065
    %4924 = vmatpush1.msra.mxu0 %v4064
    %4925 = vmatprep.subr.mxu0 %v4073
    %4926 = vmatpush1.msra.mxu0 %v4072
    %4927 = vmatprep.subr.mxu0 %v4081
    %4928 = vmatpush1.msra.mxu0 %v4080
    %4929 = vmatprep.subr.mxu0 %v4089
    %4930 = vmatpush1.msra.mxu0 %v4088
    %4931 = vmatprep.subr.mxu0 %v4097
    %4932 = vmatpush1.msra.mxu0 %v4096
    %4933 = vmatprep.subr.mxu0 %v4105
    %4934 = vmatpush1.msra.mxu0 %v4104
    %4935 = vmatprep.subr.mxu0 %v4113
    %4936 = vmatpush1.msra.mxu0 %v4112
    %4937 = vmatprep.subr.mxu0 %v4121
    %4938 = vmatpush1.msra.mxu0 %v4120
    %4939 = vmatprep.subr.mxu0 %v4129
    %4940 = vmatpush1.msra.mxu0 %v4128
    %4941 = vmatprep.subr.mxu0 %v4137
    %4942 = vmatpush1.msra.mxu0 %v4136
    %4943 = vmatprep.subr.mxu0 %v4145
    %4944 = vmatpush1.msra.mxu0 %v4144
    %4945 = vmatprep.subr.mxu0 %v4153
    %4946 = vmatpush1.msra.mxu0 %v4152
    %4947 = vmatprep.subr.mxu0 %v4161
    %4948 = vmatpush1.msra.mxu0 %v4160
    %4949 = vmatprep.subr.mxu0 %v4169
    %4950 = vmatpush1.msra.mxu0 %v4168
    %4951 = vmatprep.subr.mxu0 %v4177
    %4952 = vmatpush1.msra.mxu0 %v4176
    %4953 = vmatprep.subr.mxu0 %v4185
    %4954 = vmatpush1.msra.mxu0 %v4184
    %4955 = vmatprep.mubr.f32.mxu0 0.0
    %4956 = vmatmul.mubr.f32.gmra.mrb[0].mxu0 0.0
    %v4957 = vpop.f32.mrb[0].mxu0
    %v4958 = vadd.f32 0.0, %v4957
    %v4959 = vpop.f32.mrb[0].mxu0
    %v4960 = vadd.f32 0.0, %v4959
    %4961 = vdwg.mxu0
    %4962 = vmatprep.subr.mxu0 %v3939
    %4963 = vmatpush1.msra.mxu0 %v3938
    %4964 = vmatprep.subr.mxu0 %v3947
    %4965 = vmatpush1.msra.mxu0 %v3946
    %4966 = vmatprep.subr.mxu0 %v3955
    %4967 = vmatpush1.msra.mxu0 %v3954
    %4968 = vmatprep.subr.mxu0 %v3963
    %4969 = vmatpush1.msra.mxu0 %v3962
    %4970 = vmatprep.subr.mxu0 %v3971
    %4971 = vmatpush1.msra.mxu0 %v3970
    %4972 = vmatprep.subr.mxu0 %v3979
    %4973 = vmatpush1.msra.mxu0 %v3978
    %4974 = vmatprep.subr.mxu0 %v3987
    %4975 = vmatpush1.msra.mxu0 %v3986
    %4976 = vmatprep.subr.mxu0 %v3995
    %4977 = vmatpush1.msra.mxu0 %v3994
    %4978 = vmatprep.subr.mxu0 %v4003
    %4979 = vmatpush1.msra.mxu0 %v4002
    %4980 = vmatprep.subr.mxu0 %v4011
    %4981 = vmatpush1.msra.mxu0 %v4010
    %4982 = vmatprep.subr.mxu0 %v4019
    %4983 = vmatpush1.msra.mxu0 %v4018
    %4984 = vmatprep.subr.mxu0 %v4027
    %4985 = vmatpush1.msra.mxu0 %v4026
    %4986 = vmatprep.subr.mxu0 %v4035
    %4987 = vmatpush1.msra.mxu0 %v4034
    %4988 = vmatprep.subr.mxu0 %v4043
    %4989 = vmatpush1.msra.mxu0 %v4042
    %4990 = vmatprep.subr.mxu0 %v4051
    %4991 = vmatpush1.msra.mxu0 %v4050
    %4992 = vmatprep.subr.mxu0 %v4059
    %4993 = vmatpush1.msra.mxu0 %v4058
    %4994 = vmatprep.subr.mxu0 %v4067
    %4995 = vmatpush1.msra.mxu0 %v4066
    %4996 = vmatprep.subr.mxu0 %v4075
    %4997 = vmatpush1.msra.mxu0 %v4074
    %4998 = vmatprep.subr.mxu0 %v4083
    %4999 = vmatpush1.msra.mxu0 %v4082
    %5000 = vmatprep.subr.mxu0 %v4091
    %5001 = vmatpush1.msra.mxu0 %v4090
    %5002 = vmatprep.subr.mxu0 %v4099
    %5003 = vmatpush1.msra.mxu0 %v4098
    %5004 = vmatprep.subr.mxu0 %v4107
    %5005 = vmatpush1.msra.mxu0 %v4106
    %5006 = vmatprep.subr.mxu0 %v4115
    %5007 = vmatpush1.msra.mxu0 %v4114
    %5008 = vmatprep.subr.mxu0 %v4123
    %5009 = vmatpush1.msra.mxu0 %v4122
    %5010 = vmatprep.subr.mxu0 %v4131
    %5011 = vmatpush1.msra.mxu0 %v4130
    %5012 = vmatprep.subr.mxu0 %v4139
    %5013 = vmatpush1.msra.mxu0 %v4138
    %5014 = vmatprep.subr.mxu0 %v4147
    %5015 = vmatpush1.msra.mxu0 %v4146
    %5016 = vmatprep.subr.mxu0 %v4155
    %5017 = vmatpush1.msra.mxu0 %v4154
    %5018 = vmatprep.subr.mxu0 %v4163
    %5019 = vmatpush1.msra.mxu0 %v4162
    %5020 = vmatprep.subr.mxu0 %v4171
    %5021 = vmatpush1.msra.mxu0 %v4170
    %5022 = vmatprep.subr.mxu0 %v4179
    %5023 = vmatpush1.msra.mxu0 %v4178
    %5024 = vmatprep.subr.mxu0 %v4187
    %5025 = vmatpush1.msra.mxu0 %v4186
    %5026 = vmatprep.mubr.f32.mxu0 0.0
    %5027 = vmatmul.mubr.f32.gmra.mrb[0].mxu0 0.0
    %v5028 = vpop.f32.mrb[0].mxu0
    %v5029 = vadd.f32 0.0, %v5028
    %v5030 = vpop.f32.mrb[0].mxu0
    %v5031 = vadd.f32 0.0, %v5030
    %5032 = vdwg.mxu0
    %v5041 = vcombine.low %v4816, %v4818
    %v5042 = vcombine.low %v4887, %v4889
    %v5043 = vcombine.low %v4958, %v4960
    %v5044 = vcombine.low %v5029, %v5031
    %v5046 = vunpack.c.l.s4 1966171168
    %v5047 = vunpack.c.0.s8 %v5046
    %v5048 = vlaneseq
    %v5049 = vshrl.u32 %v5048, 7
    %v5050 = vsub.s32 %v5047, %v5049
    %v5051 = vrot.slane %v5041, %v5050
    %v5053 = vunpack.c.l.s4 1966171168
    %v5054 = vunpack.c.0.s8 %v5053
    %v5055 = vlaneseq
    %v5056 = vshrl.u32 %v5055, 7
    %v5057 = vsub.s32 %v5054, %v5056
    %v5058 = vrot.slane %v5042, %v5057
    %v5060 = vunpack.c.l.s4 1966171168
    %v5061 = vunpack.c.0.s8 %v5060
    %v5062 = vlaneseq
    %v5063 = vshrl.u32 %v5062, 7
    %v5064 = vsub.s32 %v5061, %v5063
    %v5065 = vrot.slane %v5043, %v5064
    %v5067 = vunpack.c.l.s4 1966171168
    %v5068 = vunpack.c.0.s8 %v5067
    %v5069 = vlaneseq
    %v5070 = vshrl.u32 %v5069, 7
    %v5071 = vsub.s32 %v5068, %v5070
    %v5072 = vrot.slane %v5044, %v5071
    %v5073 = vcombine.low %v5051, %v5058
    %v5074 = vcombine.high %v5051, %v5058
    %v5075 = vcombine.low %v5065, %v5072
    %v5076 = vcombine.high %v5065, %v5072
    %v5078 = vunpack.c.l.s4 1966171168
    %v5079 = vunpack.c.0.s8 %v5078
    %v5080 = vlaneseq
    %v5081 = vshrl.u32 %v5080, 7
    %v5082 = vsub.s32 %v5079, %v5081
    %v5083 = vrot.slane %v5073, %v5082
    %v5085 = vunpack.c.l.s4 1966171168
    %v5086 = vunpack.c.0.s8 %v5085
    %v5087 = vlaneseq
    %v5088 = vshrl.u32 %v5087, 7
    %v5089 = vsub.s32 %v5086, %v5088
    %v5090 = vrot.slane %v5074, %v5089
    %v5092 = vunpack.c.l.s4 1966171168
    %v5093 = vunpack.c.0.s8 %v5092
    %v5094 = vlaneseq
    %v5095 = vshrl.u32 %v5094, 7
    %v5096 = vsub.s32 %v5093, %v5095
    %v5097 = vrot.slane %v5075, %v5096
    %v5099 = vunpack.c.l.s4 1966171168
    %v5100 = vunpack.c.0.s8 %v5099
    %v5101 = vlaneseq
    %v5102 = vshrl.u32 %v5101, 7
    %v5103 = vsub.s32 %v5100, %v5102
    %v5104 = vrot.slane %v5076, %v5103
    %v5105 = vcombine.low %v5083, %v5097
    %v5106 = vcombine.low %v5090, %v5104
    %v5109 = vadd.f32 %v4744, %v5105
    %v5110 = vadd.f32 %v4748, %v5106
    %v5111 = vxor.u32 %v5109, 2147483648
    %v5112 = vxor.u32 %v5110, 2147483648
    %v5113 = vmul.f32 %v5111, 1.442695
    %v5114 = vpow.pop %v5113
    %v5115 = vmul.f32 %v5112, 1.442695
    %v5116 = vpow.pop %v5115
    %v5117 = vadd.f32 %v5114, 1.0
    %v5118 = vadd.f32 %v5116, 1.0
    %v5119 = vrcp.pop %v5117
    %v5120 = vmul.f32 1.0, %v5119
    %v5121 = vrcp.pop %v5118
    %v5122 = vmul.f32 1.0, %v5121
    %v5125 = vrot.slane %v5109, 2
    %v5126 = vrot.slane %v5110, 2
    %v5129 = vxor.u32 %v5125, 2147483648
    %v5130 = vxor.u32 %v5126, 2147483648
    %v5131 = vmul.f32 %v5129, 1.442695
    %v5132 = vpow.pop %v5131
    %v5133 = vmul.f32 %v5130, 1.442695
    %v5134 = vpow.pop %v5133
    %v5135 = vadd.f32 %v5132, 1.0
    %v5136 = vadd.f32 %v5134, 1.0
    %v5137 = vrcp.pop %v5135
    %v5138 = vmul.f32 1.0, %v5137
    %v5139 = vrcp.pop %v5136
    %v5140 = vmul.f32 1.0, %v5139
    %v5141 = vrot.slane %v5109, 4
    %v5142 = vrot.slane %v5110, 4
    %v5145 = vtanh.pop %v5141
    %v5146 = vtanh.pop %v5142
    %v5147 = vrot.slane %v5109, 6
    %v5148 = vrot.slane %v5110, 6
    %v5151 = vxor.u32 %v5147, 2147483648
    %v5152 = vxor.u32 %v5148, 2147483648
    %v5153 = vmul.f32 %v5151, 1.442695
    %v5154 = vpow.pop %v5153
    %v5155 = vmul.f32 %v5152, 1.442695
    %v5156 = vpow.pop %v5155
    %v5157 = vadd.f32 %v5154, 1.0
    %v5158 = vadd.f32 %v5156, 1.0
    %v5159 = vrcp.pop %v5157
    %v5160 = vmul.f32 1.0, %v5159
    %v5161 = vrcp.pop %v5158
    %v5162 = vmul.f32 1.0, %v5161
    %v5163 = vmul.f32 %v5138, 0.0
    %v5164 = vmul.f32 %v5140, 0.0
    %v5165 = vmul.f32 %v5120, %v5145
    %v5166 = vmul.f32 %v5122, %v5146
    %v5167 = vadd.f32 %v5163, %v5165
    %v5168 = vadd.f32 %v5164, %v5166
    %v5169 = vtanh.pop %v5167
    %v5170 = vtanh.pop %v5168
    %v5171 = vmul.f32 %v5160, %v5169
    %v5172 = vmul.f32 %v5162, %v5170
    %v5175 = vcombine.low %v5171, %v5172
    %v5177 = vunpack.c.l.s4 1966171168
    %v5178 = vunpack.c.0.s8 %v5177
    %v5179 = vlaneseq
    %v5180 = vshrl.u32 %v5179, 7
    %v5181 = vsub.s32 %v5178, %v5180
    %v5182 = vrot.slane %v5175, %v5181
    %v5183 = vcombine.high %v5182, %v5182
    %v5185 = vunpack.c.l.s4 1966171168
    %v5186 = vunpack.c.0.s8 %v5185
    %v5187 = vlaneseq
    %v5188 = vshrl.u32 %v5187, 7
    %v5189 = vsub.s32 %v5186, %v5188
    %v5190 = vrot.slane %v5182, %v5189
    %v5192 = vunpack.c.l.s4 1966171168
    %v5193 = vunpack.c.0.s8 %v5192
    %v5194 = vlaneseq
    %v5195 = vshrl.u32 %v5194, 7
    %v5196 = vsub.s32 %v5193, %v5195
    %v5197 = vrot.slane %v5183, %v5196
    %5200 = vmatprep.subr.mxu0 %v4189
    %5201 = vmatpush1.msra.mxu0 %v4188
    %5202 = vmatprep.subr.mxu0 %v4197
    %5203 = vmatpush1.msra.mxu0 %v4196
    %5204 = vmatprep.subr.mxu0 %v4205
    %5205 = vmatpush1.msra.mxu0 %v4204
    %5206 = vmatprep.subr.mxu0 %v4213
    %5207 = vmatpush1.msra.mxu0 %v4212
    %5208 = vmatprep.subr.mxu0 %v4221
    %5209 = vmatpush1.msra.mxu0 %v4220
    %5210 = vmatprep.subr.mxu0 %v4229
    %5211 = vmatpush1.msra.mxu0 %v4228
    %5212 = vmatprep.subr.mxu0 %v4237
    %5213 = vmatpush1.msra.mxu0 %v4236
    %5214 = vmatprep.subr.mxu0 %v4245
    %5215 = vmatpush1.msra.mxu0 %v4244
    %5216 = vmatprep.subr.mxu0 %v4253
    %5217 = vmatpush1.msra.mxu0 %v4252
    %5218 = vmatprep.subr.mxu0 %v4261
    %5219 = vmatpush1.msra.mxu0 %v4260
    %5220 = vmatprep.subr.mxu0 %v4269
    %5221 = vmatpush1.msra.mxu0 %v4268
    %5222 = vmatprep.subr.mxu0 %v4277
    %5223 = vmatpush1.msra.mxu0 %v4276
    %5224 = vmatprep.subr.mxu0 %v4285
    %5225 = vmatpush1.msra.mxu0 %v4284
    %5226 = vmatprep.subr.mxu0 %v4293
    %5227 = vmatpush1.msra.mxu0 %v4292
    %5228 = vmatprep.subr.mxu0 %v4301
    %5229 = vmatpush1.msra.mxu0 %v4300
    %5230 = vmatprep.subr.mxu0 %v4309
    %5231 = vmatpush1.msra.mxu0 %v4308
    %5232 = vmatprep.subr.mxu0 %v4317
    %5233 = vmatpush1.msra.mxu0 %v4316
    %5234 = vmatprep.subr.mxu0 %v4325
    %5235 = vmatpush1.msra.mxu0 %v4324
    %5236 = vmatprep.subr.mxu0 %v4333
    %5237 = vmatpush1.msra.mxu0 %v4332
    %5238 = vmatprep.subr.mxu0 %v4341
    %5239 = vmatpush1.msra.mxu0 %v4340
    %5240 = vmatprep.subr.mxu0 %v4349
    %5241 = vmatpush1.msra.mxu0 %v4348
    %5242 = vmatprep.subr.mxu0 %v4357
    %5243 = vmatpush1.msra.mxu0 %v4356
    %5244 = vmatprep.subr.mxu0 %v4365
    %5245 = vmatpush1.msra.mxu0 %v4364
    %5246 = vmatprep.subr.mxu0 %v4373
    %5247 = vmatpush1.msra.mxu0 %v4372
    %5248 = vmatprep.subr.mxu0 %v4381
    %5249 = vmatpush1.msra.mxu0 %v4380
    %5250 = vmatprep.subr.mxu0 %v4389
    %5251 = vmatpush1.msra.mxu0 %v4388
    %5252 = vmatprep.subr.mxu0 %v4397
    %5253 = vmatpush1.msra.mxu0 %v4396
    %5254 = vmatprep.subr.mxu0 %v4405
    %5255 = vmatpush1.msra.mxu0 %v4404
    %5256 = vmatprep.subr.mxu0 %v4413
    %5257 = vmatpush1.msra.mxu0 %v4412
    %5258 = vmatprep.subr.mxu0 %v4421
    %5259 = vmatpush1.msra.mxu0 %v4420
    %5260 = vmatprep.subr.mxu0 %v4429
    %5261 = vmatpush1.msra.mxu0 %v4428
    %5262 = vmatprep.subr.mxu0 %v4437
    %5263 = vmatpush1.msra.mxu0 %v4436
    %5264 = vmatprep.mubr.f32.mxu0 %v5197
    %5265 = vmatmul.mubr.f32.gmra.mrb[0].mxu0 %v5190
    %v5266 = vpop.f32.mrb[0].mxu0
    %v5267 = vadd.f32 %v4705, %v5266
    %v5268 = vpop.f32.mrb[0].mxu0
    %v5269 = vadd.f32 %v4709, %v5268
    %5270 = vdwg.mxu0
    %5271 = vmatprep.subr.mxu0 %v4445
    %5272 = vmatpush1.msra.mxu0 %v4444
    %5273 = vmatprep.subr.mxu0 %v4453
    %5274 = vmatpush1.msra.mxu0 %v4452
    %5275 = vmatprep.subr.mxu0 %v4461
    %5276 = vmatpush1.msra.mxu0 %v4460
    %5277 = vmatprep.subr.mxu0 %v4469
    %5278 = vmatpush1.msra.mxu0 %v4468
    %5279 = vmatprep.subr.mxu0 %v4477
    %5280 = vmatpush1.msra.mxu0 %v4476
    %5281 = vmatprep.subr.mxu0 %v4485
    %5282 = vmatpush1.msra.mxu0 %v4484
    %5283 = vmatprep.subr.mxu0 %v4493
    %5284 = vmatpush1.msra.mxu0 %v4492
    %5285 = vmatprep.subr.mxu0 %v4501
    %5286 = vmatpush1.msra.mxu0 %v4500
    %5287 = vmatprep.subr.mxu0 %v4509
    %5288 = vmatpush1.msra.mxu0 %v4508
    %5289 = vmatprep.subr.mxu0 %v4517
    %5290 = vmatpush1.msra.mxu0 %v4516
    %5291 = vmatprep.subr.mxu0 %v4525
    %5292 = vmatpush1.msra.mxu0 %v4524
    %5293 = vmatprep.subr.mxu0 %v4533
    %5294 = vmatpush1.msra.mxu0 %v4532
    %5295 = vmatprep.subr.mxu0 %v4541
    %5296 = vmatpush1.msra.mxu0 %v4540
    %5297 = vmatprep.subr.mxu0 %v4549
    %5298 = vmatpush1.msra.mxu0 %v4548
    %5299 = vmatprep.subr.mxu0 %v4557
    %5300 = vmatpush1.msra.mxu0 %v4556
    %5301 = vmatprep.subr.mxu0 %v4565
    %5302 = vmatpush1.msra.mxu0 %v4564
    %5303 = vmatprep.subr.mxu0 %v4573
    %5304 = vmatpush1.msra.mxu0 %v4572
    %5305 = vmatprep.subr.mxu0 %v4581
    %5306 = vmatpush1.msra.mxu0 %v4580
    %5307 = vmatprep.subr.mxu0 %v4589
    %5308 = vmatpush1.msra.mxu0 %v4588
    %5309 = vmatprep.subr.mxu0 %v4597
    %5310 = vmatpush1.msra.mxu0 %v4596
    %5311 = vmatprep.subr.mxu0 %v4605
    %5312 = vmatpush1.msra.mxu0 %v4604
    %5313 = vmatprep.subr.mxu0 %v4613
    %5314 = vmatpush1.msra.mxu0 %v4612
    %5315 = vmatprep.subr.mxu0 %v4621
    %5316 = vmatpush1.msra.mxu0 %v4620
    %5317 = vmatprep.subr.mxu0 %v4629
    %5318 = vmatpush1.msra.mxu0 %v4628
    %5319 = vmatprep.subr.mxu0 %v4637
    %5320 = vmatpush1.msra.mxu0 %v4636
    %5321 = vmatprep.subr.mxu0 %v4645
    %5322 = vmatpush1.msra.mxu0 %v4644
    %5323 = vmatprep.subr.mxu0 %v4653
    %5324 = vmatpush1.msra.mxu0 %v4652
    %5325 = vmatprep.subr.mxu0 %v4661
    %5326 = vmatpush1.msra.mxu0 %v4660
    %5327 = vmatprep.subr.mxu0 %v4669
    %5328 = vmatpush1.msra.mxu0 %v4668
    %5329 = vmatprep.subr.mxu0 %v4677
    %5330 = vmatpush1.msra.mxu0 %v4676
    %5331 = vmatprep.subr.mxu0 %v4685
    %5332 = vmatpush1.msra.mxu0 %v4684
    %5333 = vmatprep.subr.mxu0 %v4693
    %5334 = vmatpush1.msra.mxu0 %v4692
    %5335 = vmatprep.mubr.f32.mxu0 0.0
    %5336 = vmatmul.mubr.f32.gmra.mrb[0].mxu0 0.0
    %v5337 = vpop.f32.mrb[0].mxu0
    %v5338 = vadd.f32 %v5267, %v5337
    %v5339 = vpop.f32.mrb[0].mxu0
    %v5340 = vadd.f32 %v5269, %v5339
    %5341 = vdwg.mxu0
    %5342 = vmatprep.subr.mxu0 %v4191
    %5343 = vmatpush1.msra.mxu0 %v4190
    %5344 = vmatprep.subr.mxu0 %v4199
    %5345 = vmatpush1.msra.mxu0 %v4198
    %5346 = vmatprep.subr.mxu0 %v4207
    %5347 = vmatpush1.msra.mxu0 %v4206
    %5348 = vmatprep.subr.mxu0 %v4215
    %5349 = vmatpush1.msra.mxu0 %v4214
    %5350 = vmatprep.subr.mxu0 %v4223
    %5351 = vmatpush1.msra.mxu0 %v4222
    %5352 = vmatprep.subr.mxu0 %v4231
    %5353 = vmatpush1.msra.mxu0 %v4230
    %5354 = vmatprep.subr.mxu0 %v4239
    %5355 = vmatpush1.msra.mxu0 %v4238
    %5356 = vmatprep.subr.mxu0 %v4247
    %5357 = vmatpush1.msra.mxu0 %v4246
    %5358 = vmatprep.subr.mxu0 %v4255
    %5359 = vmatpush1.msra.mxu0 %v4254
    %5360 = vmatprep.subr.mxu0 %v4263
    %5361 = vmatpush1.msra.mxu0 %v4262
    %5362 = vmatprep.subr.mxu0 %v4271
    %5363 = vmatpush1.msra.mxu0 %v4270
    %5364 = vmatprep.subr.mxu0 %v4279
    %5365 = vmatpush1.msra.mxu0 %v4278
    %5366 = vmatprep.subr.mxu0 %v4287
    %5367 = vmatpush1.msra.mxu0 %v4286
    %5368 = vmatprep.subr.mxu0 %v4295
    %5369 = vmatpush1.msra.mxu0 %v4294
    %5370 = vmatprep.subr.mxu0 %v4303
    %5371 = vmatpush1.msra.mxu0 %v4302
    %5372 = vmatprep.subr.mxu0 %v4311
    %5373 = vmatpush1.msra.mxu0 %v4310
    %5374 = vmatprep.subr.mxu0 %v4319
    %5375 = vmatpush1.msra.mxu0 %v4318
    %5376 = vmatprep.subr.mxu0 %v4327
    %5377 = vmatpush1.msra.mxu0 %v4326
    %5378 = vmatprep.subr.mxu0 %v4335
    %5379 = vmatpush1.msra.mxu0 %v4334
    %5380 = vmatprep.subr.mxu0 %v4343
    %5381 = vmatpush1.msra.mxu0 %v4342
    %5382 = vmatprep.subr.mxu0 %v4351
    %5383 = vmatpush1.msra.mxu0 %v4350
    %5384 = vmatprep.subr.mxu0 %v4359
    %5385 = vmatpush1.msra.mxu0 %v4358
    %5386 = vmatprep.subr.mxu0 %v4367
    %5387 = vmatpush1.msra.mxu0 %v4366
    %5388 = vmatprep.subr.mxu0 %v4375
    %5389 = vmatpush1.msra.mxu0 %v4374
    %5390 = vmatprep.subr.mxu0 %v4383
    %5391 = vmatpush1.msra.mxu0 %v4382
    %5392 = vmatprep.subr.mxu0 %v4391
    %5393 = vmatpush1.msra.mxu0 %v4390
    %5394 = vmatprep.subr.mxu0 %v4399
    %5395 = vmatpush1.msra.mxu0 %v4398
    %5396 = vmatprep.subr.mxu0 %v4407
    %5397 = vmatpush1.msra.mxu0 %v4406
    %5398 = vmatprep.subr.mxu0 %v4415
    %5399 = vmatpush1.msra.mxu0 %v4414
    %5400 = vmatprep.subr.mxu0 %v4423
    %5401 = vmatpush1.msra.mxu0 %v4422
    %5402 = vmatprep.subr.mxu0 %v4431
    %5403 = vmatpush1.msra.mxu0 %v4430
    %5404 = vmatprep.subr.mxu0 %v4439
    %5405 = vmatpush1.msra.mxu0 %v4438
    %5406 = vmatprep.mubr.f32.mxu0 %v5197
    %5407 = vmatmul.mubr.f32.gmra.mrb[0].mxu0 %v5190
    %v5408 = vpop.f32.mrb[0].mxu0
    %v5409 = vadd.f32 %v4713, %v5408
    %v5410 = vpop.f32.mrb[0].mxu0
    %v5411 = vadd.f32 %v4717, %v5410
    %5412 = vdwg.mxu0
    %5413 = vmatprep.subr.mxu0 %v4447
    %5414 = vmatpush1.msra.mxu0 %v4446
    %5415 = vmatprep.subr.mxu0 %v4455
    %5416 = vmatpush1.msra.mxu0 %v4454
    %5417 = vmatprep.subr.mxu0 %v4463
    %5418 = vmatpush1.msra.mxu0 %v4462
    %5419 = vmatprep.subr.mxu0 %v4471
    %5420 = vmatpush1.msra.mxu0 %v4470
    %5421 = vmatprep.subr.mxu0 %v4479
    %5422 = vmatpush1.msra.mxu0 %v4478
    %5423 = vmatprep.subr.mxu0 %v4487
    %5424 = vmatpush1.msra.mxu0 %v4486
    %5425 = vmatprep.subr.mxu0 %v4495
    %5426 = vmatpush1.msra.mxu0 %v4494
    %5427 = vmatprep.subr.mxu0 %v4503
    %5428 = vmatpush1.msra.mxu0 %v4502
    %5429 = vmatprep.subr.mxu0 %v4511
    %5430 = vmatpush1.msra.mxu0 %v4510
    %5431 = vmatprep.subr.mxu0 %v4519
    %5432 = vmatpush1.msra.mxu0 %v4518
    %5433 = vmatprep.subr.mxu0 %v4527
    %5434 = vmatpush1.msra.mxu0 %v4526
    %5435 = vmatprep.subr.mxu0 %v4535
    %5436 = vmatpush1.msra.mxu0 %v4534
    %5437 = vmatprep.subr.mxu0 %v4543
    %5438 = vmatpush1.msra.mxu0 %v4542
    %5439 = vmatprep.subr.mxu0 %v4551
    %5440 = vmatpush1.msra.mxu0 %v4550
    %5441 = vmatprep.subr.mxu0 %v4559
    %5442 = vmatpush1.msra.mxu0 %v4558
    %5443 = vmatprep.subr.mxu0 %v4567
    %5444 = vmatpush1.msra.mxu0 %v4566
    %5445 = vmatprep.subr.mxu0 %v4575
    %5446 = vmatpush1.msra.mxu0 %v4574
    %5447 = vmatprep.subr.mxu0 %v4583
    %5448 = vmatpush1.msra.mxu0 %v4582
    %5449 = vmatprep.subr.mxu0 %v4591
    %5450 = vmatpush1.msra.mxu0 %v4590
    %5451 = vmatprep.subr.mxu0 %v4599
    %5452 = vmatpush1.msra.mxu0 %v4598
    %5453 = vmatprep.subr.mxu0 %v4607
    %5454 = vmatpush1.msra.mxu0 %v4606
    %5455 = vmatprep.subr.mxu0 %v4615
    %5456 = vmatpush1.msra.mxu0 %v4614
    %5457 = vmatprep.subr.mxu0 %v4623
    %5458 = vmatpush1.msra.mxu0 %v4622
    %5459 = vmatprep.subr.mxu0 %v4631
    %5460 = vmatpush1.msra.mxu0 %v4630
    %5461 = vmatprep.subr.mxu0 %v4639
    %5462 = vmatpush1.msra.mxu0 %v4638
    %5463 = vmatprep.subr.mxu0 %v4647
    %5464 = vmatpush1.msra.mxu0 %v4646
    %5465 = vmatprep.subr.mxu0 %v4655
    %5466 = vmatpush1.msra.mxu0 %v4654
    %5467 = vmatprep.subr.mxu0 %v4663
    %5468 = vmatpush1.msra.mxu0 %v4662
    %5469 = vmatprep.subr.mxu0 %v4671
    %5470 = vmatpush1.msra.mxu0 %v4670
    %5471 = vmatprep.subr.mxu0 %v4679
    %5472 = vmatpush1.msra.mxu0 %v4678
    %5473 = vmatprep.subr.mxu0 %v4687
    %5474 = vmatpush1.msra.mxu0 %v4686
    %5475 = vmatprep.subr.mxu0 %v4695
    %5476 = vmatpush1.msra.mxu0 %v4694
    %5477 = vmatprep.mubr.f32.mxu0 0.0
    %5478 = vmatmul.mubr.f32.gmra.mrb[0].mxu0 0.0
    %v5479 = vpop.f32.mrb[0].mxu0
    %v5480 = vadd.f32 %v5409, %v5479
    %v5481 = vpop.f32.mrb[0].mxu0
    %v5482 = vadd.f32 %v5411, %v5481
    %5483 = vdwg.mxu0
    %5484 = vmatprep.subr.mxu0 %v4193
    %5485 = vmatpush1.msra.mxu0 %v4192
    %5486 = vmatprep.subr.mxu0 %v4201
    %5487 = vmatpush1.msra.mxu0 %v4200
    %5488 = vmatprep.subr.mxu0 %v4209
    %5489 = vmatpush1.msra.mxu0 %v4208
    %5490 = vmatprep.subr.mxu0 %v4217
    %5491 = vmatpush1.msra.mxu0 %v4216
    %5492 = vmatprep.subr.mxu0 %v4225
    %5493 = vmatpush1.msra.mxu0 %v4224
    %5494 = vmatprep.subr.mxu0 %v4233
    %5495 = vmatpush1.msra.mxu0 %v4232
    %5496 = vmatprep.subr.mxu0 %v4241
    %5497 = vmatpush1.msra.mxu0 %v4240
    %5498 = vmatprep.subr.mxu0 %v4249
    %5499 = vmatpush1.msra.mxu0 %v4248
    %5500 = vmatprep.subr.mxu0 %v4257
    %5501 = vmatpush1.msra.mxu0 %v4256
    %5502 = vmatprep.subr.mxu0 %v4265
    %5503 = vmatpush1.msra.mxu0 %v4264
    %5504 = vmatprep.subr.mxu0 %v4273
    %5505 = vmatpush1.msra.mxu0 %v4272
    %5506 = vmatprep.subr.mxu0 %v4281
    %5507 = vmatpush1.msra.mxu0 %v4280
    %5508 = vmatprep.subr.mxu0 %v4289
    %5509 = vmatpush1.msra.mxu0 %v4288
    %5510 = vmatprep.subr.mxu0 %v4297
    %5511 = vmatpush1.msra.mxu0 %v4296
    %5512 = vmatprep.subr.mxu0 %v4305
    %5513 = vmatpush1.msra.mxu0 %v4304
    %5514 = vmatprep.subr.mxu0 %v4313
    %5515 = vmatpush1.msra.mxu0 %v4312
    %5516 = vmatprep.subr.mxu0 %v4321
    %5517 = vmatpush1.msra.mxu0 %v4320
    %5518 = vmatprep.subr.mxu0 %v4329
    %5519 = vmatpush1.msra.mxu0 %v4328
    %5520 = vmatprep.subr.mxu0 %v4337
    %5521 = vmatpush1.msra.mxu0 %v4336
    %5522 = vmatprep.subr.mxu0 %v4345
    %5523 = vmatpush1.msra.mxu0 %v4344
    %5524 = vmatprep.subr.mxu0 %v4353
    %5525 = vmatpush1.msra.mxu0 %v4352
    %5526 = vmatprep.subr.mxu0 %v4361
    %5527 = vmatpush1.msra.mxu0 %v4360
    %5528 = vmatprep.subr.mxu0 %v4369
    %5529 = vmatpush1.msra.mxu0 %v4368
    %5530 = vmatprep.subr.mxu0 %v4377
    %5531 = vmatpush1.msra.mxu0 %v4376
    %5532 = vmatprep.subr.mxu0 %v4385
    %5533 = vmatpush1.msra.mxu0 %v4384
    %5534 = vmatprep.subr.mxu0 %v4393
    %5535 = vmatpush1.msra.mxu0 %v4392
    %5536 = vmatprep.subr.mxu0 %v4401
    %5537 = vmatpush1.msra.mxu0 %v4400
    %5538 = vmatprep.subr.mxu0 %v4409
    %5539 = vmatpush1.msra.mxu0 %v4408
    %5540 = vmatprep.subr.mxu0 %v4417
    %5541 = vmatpush1.msra.mxu0 %v4416
    %5542 = vmatprep.subr.mxu0 %v4425
    %5543 = vmatpush1.msra.mxu0 %v4424
    %5544 = vmatprep.subr.mxu0 %v4433
    %5545 = vmatpush1.msra.mxu0 %v4432
    %5546 = vmatprep.subr.mxu0 %v4441
    %5547 = vmatpush1.msra.mxu0 %v4440
    %5548 = vmatprep.mubr.f32.mxu0 %v5197
    %5549 = vmatmul.mubr.f32.gmra.mrb[0].mxu0 %v5190
    %v5550 = vpop.f32.mrb[0].mxu0
    %v5551 = vadd.f32 %v4721, %v5550
    %v5552 = vpop.f32.mrb[0].mxu0
    %v5553 = vadd.f32 %v4725, %v5552
    %5554 = vdwg.mxu0
    %5555 = vmatprep.subr.mxu0 %v4449
    %5556 = vmatpush1.msra.mxu0 %v4448
    %5557 = vmatprep.subr.mxu0 %v4457
    %5558 = vmatpush1.msra.mxu0 %v4456
    %5559 = vmatprep.subr.mxu0 %v4465
    %5560 = vmatpush1.msra.mxu0 %v4464
    %5561 = vmatprep.subr.mxu0 %v4473
    %5562 = vmatpush1.msra.mxu0 %v4472
    %5563 = vmatprep.subr.mxu0 %v4481
    %5564 = vmatpush1.msra.mxu0 %v4480
    %5565 = vmatprep.subr.mxu0 %v4489
    %5566 = vmatpush1.msra.mxu0 %v4488
    %5567 = vmatprep.subr.mxu0 %v4497
    %5568 = vmatpush1.msra.mxu0 %v4496
    %5569 = vmatprep.subr.mxu0 %v4505
    %5570 = vmatpush1.msra.mxu0 %v4504
    %5571 = vmatprep.subr.mxu0 %v4513
    %5572 = vmatpush1.msra.mxu0 %v4512
    %5573 = vmatprep.subr.mxu0 %v4521
    %5574 = vmatpush1.msra.mxu0 %v4520
    %5575 = vmatprep.subr.mxu0 %v4529
    %5576 = vmatpush1.msra.mxu0 %v4528
    %5577 = vmatprep.subr.mxu0 %v4537
    %5578 = vmatpush1.msra.mxu0 %v4536
    %5579 = vmatprep.subr.mxu0 %v4545
    %5580 = vmatpush1.msra.mxu0 %v4544
    %5581 = vmatprep.subr.mxu0 %v4553
    %5582 = vmatpush1.msra.mxu0 %v4552
    %5583 = vmatprep.subr.mxu0 %v4561
    %5584 = vmatpush1.msra.mxu0 %v4560
    %5585 = vmatprep.subr.mxu0 %v4569
    %5586 = vmatpush1.msra.mxu0 %v4568
    %5587 = vmatprep.subr.mxu0 %v4577
    %5588 = vmatpush1.msra.mxu0 %v4576
    %5589 = vmatprep.subr.mxu0 %v4585
    %5590 = vmatpush1.msra.mxu0 %v4584
    %5591 = vmatprep.subr.mxu0 %v4593
    %5592 = vmatpush1.msra.mxu0 %v4592
    %5593 = vmatprep.subr.mxu0 %v4601
    %5594 = vmatpush1.msra.mxu0 %v4600
    %5595 = vmatprep.subr.mxu0 %v4609
    %5596 = vmatpush1.msra.mxu0 %v4608
    %5597 = vmatprep.subr.mxu0 %v4617
    %5598 = vmatpush1.msra.mxu0 %v4616
    %5599 = vmatprep.subr.mxu0 %v4625
    %5600 = vmatpush1.msra.mxu0 %v4624
    %5601 = vmatprep.subr.mxu0 %v4633
    %5602 = vmatpush1.msra.mxu0 %v4632
    %5603 = vmatprep.subr.mxu0 %v4641
    %5604 = vmatpush1.msra.mxu0 %v4640
    %5605 = vmatprep.subr.mxu0 %v4649
    %5606 = vmatpush1.msra.mxu0 %v4648
    %5607 = vmatprep.subr.mxu0 %v4657
    %5608 = vmatpush1.msra.mxu0 %v4656
    %5609 = vmatprep.subr.mxu0 %v4665
    %5610 = vmatpush1.msra.mxu0 %v4664
    %5611 = vmatprep.subr.mxu0 %v4673
    %5612 = vmatpush1.msra.mxu0 %v4672
    %5613 = vmatprep.subr.mxu0 %v4681
    %5614 = vmatpush1.msra.mxu0 %v4680
    %5615 = vmatprep.subr.mxu0 %v4689
    %5616 = vmatpush1.msra.mxu0 %v4688
    %5617 = vmatprep.subr.mxu0 %v4697
    %5618 = vmatpush1.msra.mxu0 %v4696
    %5619 = vmatprep.mubr.f32.mxu0 0.0
    %5620 = vmatmul.mubr.f32.gmra.mrb[0].mxu0 0.0
    %v5621 = vpop.f32.mrb[0].mxu0
    %v5622 = vadd.f32 %v5551, %v5621
    %v5623 = vpop.f32.mrb[0].mxu0
    %v5624 = vadd.f32 %v5553, %v5623
    %5625 = vdwg.mxu0
    %5626 = vmatprep.subr.mxu0 %v4195
    %5627 = vmatpush1.msra.mxu0 %v4194
    %5628 = vmatprep.subr.mxu0 %v4203
    %5629 = vmatpush1.msra.mxu0 %v4202
    %5630 = vmatprep.subr.mxu0 %v4211
    %5631 = vmatpush1.msra.mxu0 %v4210
    %5632 = vmatprep.subr.mxu0 %v4219
    %5633 = vmatpush1.msra.mxu0 %v4218
    %5634 = vmatprep.subr.mxu0 %v4227
    %5635 = vmatpush1.msra.mxu0 %v4226
    %5636 = vmatprep.subr.mxu0 %v4235
    %5637 = vmatpush1.msra.mxu0 %v4234
    %5638 = vmatprep.subr.mxu0 %v4243
    %5639 = vmatpush1.msra.mxu0 %v4242
    %5640 = vmatprep.subr.mxu0 %v4251
    %5641 = vmatpush1.msra.mxu0 %v4250
    %5642 = vmatprep.subr.mxu0 %v4259
    %5643 = vmatpush1.msra.mxu0 %v4258
    %5644 = vmatprep.subr.mxu0 %v4267
    %5645 = vmatpush1.msra.mxu0 %v4266
    %5646 = vmatprep.subr.mxu0 %v4275
    %5647 = vmatpush1.msra.mxu0 %v4274
    %5648 = vmatprep.subr.mxu0 %v4283
    %5649 = vmatpush1.msra.mxu0 %v4282
    %5650 = vmatprep.subr.mxu0 %v4291
    %5651 = vmatpush1.msra.mxu0 %v4290
    %5652 = vmatprep.subr.mxu0 %v4299
    %5653 = vmatpush1.msra.mxu0 %v4298
    %5654 = vmatprep.subr.mxu0 %v4307
    %5655 = vmatpush1.msra.mxu0 %v4306
    %5656 = vmatprep.subr.mxu0 %v4315
    %5657 = vmatpush1.msra.mxu0 %v4314
    %5658 = vmatprep.subr.mxu0 %v4323
    %5659 = vmatpush1.msra.mxu0 %v4322
    %5660 = vmatprep.subr.mxu0 %v4331
    %5661 = vmatpush1.msra.mxu0 %v4330
    %5662 = vmatprep.subr.mxu0 %v4339
    %5663 = vmatpush1.msra.mxu0 %v4338
    %5664 = vmatprep.subr.mxu0 %v4347
    %5665 = vmatpush1.msra.mxu0 %v4346
    %5666 = vmatprep.subr.mxu0 %v4355
    %5667 = vmatpush1.msra.mxu0 %v4354
    %5668 = vmatprep.subr.mxu0 %v4363
    %5669 = vmatpush1.msra.mxu0 %v4362
    %5670 = vmatprep.subr.mxu0 %v4371
    %5671 = vmatpush1.msra.mxu0 %v4370
    %5672 = vmatprep.subr.mxu0 %v4379
    %5673 = vmatpush1.msra.mxu0 %v4378
    %5674 = vmatprep.subr.mxu0 %v4387
    %5675 = vmatpush1.msra.mxu0 %v4386
    %5676 = vmatprep.subr.mxu0 %v4395
    %5677 = vmatpush1.msra.mxu0 %v4394
    %5678 = vmatprep.subr.mxu0 %v4403
    %5679 = vmatpush1.msra.mxu0 %v4402
    %5680 = vmatprep.subr.mxu0 %v4411
    %5681 = vmatpush1.msra.mxu0 %v4410
    %5682 = vmatprep.subr.mxu0 %v4419
    %5683 = vmatpush1.msra.mxu0 %v4418
    %5684 = vmatprep.subr.mxu0 %v4427
    %5685 = vmatpush1.msra.mxu0 %v4426
    %5686 = vmatprep.subr.mxu0 %v4435
    %5687 = vmatpush1.msra.mxu0 %v4434
    %5688 = vmatprep.subr.mxu0 %v4443
    %5689 = vmatpush1.msra.mxu0 %v4442
    %5690 = vmatprep.mubr.f32.mxu0 %v5197
    %5691 = vmatmul.mubr.f32.gmra.mrb[0].mxu0 %v5190
    %v5692 = vpop.f32.mrb[0].mxu0
    %v5693 = vadd.f32 %v4729, %v5692
    %v5694 = vpop.f32.mrb[0].mxu0
    %v5695 = vadd.f32 %v4733, %v5694
    %5696 = vdwg.mxu0
    %5697 = vmatprep.subr.mxu0 %v4451
    %5698 = vmatpush1.msra.mxu0 %v4450
    %5699 = vmatprep.subr.mxu0 %v4459
    %5700 = vmatpush1.msra.mxu0 %v4458
    %5701 = vmatprep.subr.mxu0 %v4467
    %5702 = vmatpush1.msra.mxu0 %v4466
    %5703 = vmatprep.subr.mxu0 %v4475
    %5704 = vmatpush1.msra.mxu0 %v4474
    %5705 = vmatprep.subr.mxu0 %v4483
    %5706 = vmatpush1.msra.mxu0 %v4482
    %5707 = vmatprep.subr.mxu0 %v4491
    %5708 = vmatpush1.msra.mxu0 %v4490
    %5709 = vmatprep.subr.mxu0 %v4499
    %5710 = vmatpush1.msra.mxu0 %v4498
    %5711 = vmatprep.subr.mxu0 %v4507
    %5712 = vmatpush1.msra.mxu0 %v4506
    %5713 = vmatprep.subr.mxu0 %v4515
    %5714 = vmatpush1.msra.mxu0 %v4514
    %5715 = vmatprep.subr.mxu0 %v4523
    %5716 = vmatpush1.msra.mxu0 %v4522
    %5717 = vmatprep.subr.mxu0 %v4531
    %5718 = vmatpush1.msra.mxu0 %v4530
    %5719 = vmatprep.subr.mxu0 %v4539
    %5720 = vmatpush1.msra.mxu0 %v4538
    %5721 = vmatprep.subr.mxu0 %v4547
    %5722 = vmatpush1.msra.mxu0 %v4546
    %5723 = vmatprep.subr.mxu0 %v4555
    %5724 = vmatpush1.msra.mxu0 %v4554
    %5725 = vmatprep.subr.mxu0 %v4563
    %5726 = vmatpush1.msra.mxu0 %v4562
    %5727 = vmatprep.subr.mxu0 %v4571
    %5728 = vmatpush1.msra.mxu0 %v4570
    %5729 = vmatprep.subr.mxu0 %v4579
    %5730 = vmatpush1.msra.mxu0 %v4578
    %5731 = vmatprep.subr.mxu0 %v4587
    %5732 = vmatpush1.msra.mxu0 %v4586
    %5733 = vmatprep.subr.mxu0 %v4595
    %5734 = vmatpush1.msra.mxu0 %v4594
    %5735 = vmatprep.subr.mxu0 %v4603
    %5736 = vmatpush1.msra.mxu0 %v4602
    %5737 = vmatprep.subr.mxu0 %v4611
    %5738 = vmatpush1.msra.mxu0 %v4610
    %5739 = vmatprep.subr.mxu0 %v4619
    %5740 = vmatpush1.msra.mxu0 %v4618
    %5741 = vmatprep.subr.mxu0 %v4627
    %5742 = vmatpush1.msra.mxu0 %v4626
    %5743 = vmatprep.subr.mxu0 %v4635
    %5744 = vmatpush1.msra.mxu0 %v4634
    %5745 = vmatprep.subr.mxu0 %v4643
    %5746 = vmatpush1.msra.mxu0 %v4642
    %5747 = vmatprep.subr.mxu0 %v4651
    %5748 = vmatpush1.msra.mxu0 %v4650
    %5749 = vmatprep.subr.mxu0 %v4659
    %5750 = vmatpush1.msra.mxu0 %v4658
    %5751 = vmatprep.subr.mxu0 %v4667
    %5752 = vmatpush1.msra.mxu0 %v4666
    %5753 = vmatprep.subr.mxu0 %v4675
    %5754 = vmatpush1.msra.mxu0 %v4674
    %5755 = vmatprep.subr.mxu0 %v4683
    %5756 = vmatpush1.msra.mxu0 %v4682
    %5757 = vmatprep.subr.mxu0 %v4691
    %5758 = vmatpush1.msra.mxu0 %v4690
    %5759 = vmatprep.subr.mxu0 %v4699
    %5760 = vmatpush1.msra.mxu0 %v4698
    %5761 = vmatprep.mubr.f32.mxu0 0.0
    %5762 = vmatmul.mubr.f32.gmra.mrb[0].mxu0 0.0
    %v5763 = vpop.f32.mrb[0].mxu0
    %v5764 = vadd.f32 %v5693, %v5763
    %v5765 = vpop.f32.mrb[0].mxu0
    %v5766 = vadd.f32 %v5695, %v5765
    %5767 = vdwg.mxu0
    %v5768 = vxor.u32 %v5338, 2147483648
    %v5769 = vxor.u32 %v5340, 2147483648
    %v5770 = vmul.f32 %v5768, 1.442695
    %v5771 = vpow.pop %v5770
    %v5772 = vmul.f32 %v5769, 1.442695
    %v5773 = vpow.pop %v5772
    %v5774 = vadd.f32 %v5771, 1.0
    %v5775 = vadd.f32 %v5773, 1.0
    %v5776 = vrcp.pop %v5774
    %v5777 = vmul.f32 1.0, %v5776
    %v5778 = vrcp.pop %v5775
    %v5779 = vmul.f32 1.0, %v5778
    %v5780 = vxor.u32 %v5480, 2147483648
    %v5781 = vxor.u32 %v5482, 2147483648
    %v5782 = vmul.f32 %v5780, 1.442695
    %v5783 = vpow.pop %v5782
    %v5784 = vmul.f32 %v5781, 1.442695
    %v5785 = vpow.pop %v5784
    %v5786 = vadd.f32 %v5783, 1.0
    %v5787 = vadd.f32 %v5785, 1.0
    %v5788 = vrcp.pop %v5786
    %v5789 = vmul.f32 1.0, %v5788
    %v5790 = vrcp.pop %v5787
    %v5791 = vmul.f32 1.0, %v5790
    %v5792 = vtanh.pop %v5622
    %v5793 = vtanh.pop %v5624
    %v5794 = vxor.u32 %v5764, 2147483648
    %v5795 = vxor.u32 %v5766, 2147483648
    %v5796 = vmul.f32 %v5794, 1.442695
    %v5797 = vpow.pop %v5796
    %v5798 = vmul.f32 %v5795, 1.442695
    %v5799 = vpow.pop %v5798
    %v5800 = vadd.f32 %v5797, 1.0
    %v5801 = vadd.f32 %v5799, 1.0
    %v5802 = vrcp.pop %v5800
    %v5803 = vmul.f32 1.0, %v5802
    %v5804 = vrcp.pop %v5801
    %v5805 = vmul.f32 1.0, %v5804
    %v5806 = vmul.f32 %v5789, 0.0
    %v5807 = vmul.f32 %v5791, 0.0
    %v5808 = vmul.f32 %v5777, %v5792
    %v5809 = vmul.f32 %v5779, %v5793
    %v5810 = vadd.f32 %v5806, %v5808
    %v5811 = vadd.f32 %v5807, %v5809
    %v5812 = vtanh.pop %v5810
    %v5813 = vtanh.pop %v5811
    %v5814 = vmul.f32 %v5803, %v5812
    %v5815 = vmul.f32 %v5805, %v5813
    %s5816 = scalar_lea.vmem [#allocation4], 1
    %v5817 = vld [vmem:[%s5816] ss:$8 sm:$0xf]
    %v5818 = vld [vmem:[%s5816] ss:$8 sm:$0xf0]
    %v5819 = vor.u32 %v5817, %v5818
    %s5820 = scalar_lea.vmem [#allocation4], 65
    %v5821 = vld [vmem:[%s5820] ss:$8 sm:$0xf]
    %v5822 = vld [vmem:[%s5820] ss:$8 sm:$0xf0]
    %v5823 = vor.u32 %v5821, %v5822
    %5824 = vmatprep.subr.mxu0 %v3933
    %5825 = vmatpush1.msra.mxu0 %v3932
    %5826 = vmatprep.subr.mxu0 %v3941
    %5827 = vmatpush1.msra.mxu0 %v3940
    %5828 = vmatprep.subr.mxu0 %v3949
    %5829 = vmatpush1.msra.mxu0 %v3948
    %5830 = vmatprep.subr.mxu0 %v3957
    %5831 = vmatpush1.msra.mxu0 %v3956
    %5832 = vmatprep.subr.mxu0 %v3965
    %5833 = vmatpush1.msra.mxu0 %v3964
    %5834 = vmatprep.subr.mxu0 %v3973
    %5835 = vmatpush1.msra.mxu0 %v3972
    %5836 = vmatprep.subr.mxu0 %v3981
    %5837 = vmatpush1.msra.mxu0 %v3980
    %5838 = vmatprep.subr.mxu0 %v3989
    %5839 = vmatpush1.msra.mxu0 %v3988
    %5840 = vmatprep.subr.mxu0 %v3997
    %5841 = vmatpush1.msra.mxu0 %v3996
    %5842 = vmatprep.subr.mxu0 %v4005
    %5843 = vmatpush1.msra.mxu0 %v4004
    %5844 = vmatprep.subr.mxu0 %v4013
    %5845 = vmatpush1.msra.mxu0 %v4012
    %5846 = vmatprep.subr.mxu0 %v4021
    %5847 = vmatpush1.msra.mxu0 %v4020
    %5848 = vmatprep.subr.mxu0 %v4029
    %5849 = vmatpush1.msra.mxu0 %v4028
    %5850 = vmatprep.subr.mxu0 %v4037
    %5851 = vmatpush1.msra.mxu0 %v4036
    %5852 = vmatprep.subr.mxu0 %v4045
    %5853 = vmatpush1.msra.mxu0 %v4044
    %5854 = vmatprep.subr.mxu0 %v4053
    %5855 = vmatpush1.msra.mxu0 %v4052
    %5856 = vmatprep.subr.mxu0 %v4061
    %5857 = vmatpush1.msra.mxu0 %v4060
    %5858 = vmatprep.subr.mxu0 %v4069
    %5859 = vmatpush1.msra.mxu0 %v4068
    %5860 = vmatprep.subr.mxu0 %v4077
    %5861 = vmatpush1.msra.mxu0 %v4076
    %5862 = vmatprep.subr.mxu0 %v4085
    %5863 = vmatpush1.msra.mxu0 %v4084
    %5864 = vmatprep.subr.mxu0 %v4093
    %5865 = vmatpush1.msra.mxu0 %v4092
    %5866 = vmatprep.subr.mxu0 %v4101
    %5867 = vmatpush1.msra.mxu0 %v4100
    %5868 = vmatprep.subr.mxu0 %v4109
    %5869 = vmatpush1.msra.mxu0 %v4108
    %5870 = vmatprep.subr.mxu0 %v4117
    %5871 = vmatpush1.msra.mxu0 %v4116
    %5872 = vmatprep.subr.mxu0 %v4125
    %5873 = vmatpush1.msra.mxu0 %v4124
    %5874 = vmatprep.subr.mxu0 %v4133
    %5875 = vmatpush1.msra.mxu0 %v4132
    %5876 = vmatprep.subr.mxu0 %v4141
    %5877 = vmatpush1.msra.mxu0 %v4140
    %5878 = vmatprep.subr.mxu0 %v4149
    %5879 = vmatpush1.msra.mxu0 %v4148
    %5880 = vmatprep.subr.mxu0 %v4157
    %5881 = vmatpush1.msra.mxu0 %v4156
    %5882 = vmatprep.subr.mxu0 %v4165
    %5883 = vmatpush1.msra.mxu0 %v4164
    %5884 = vmatprep.subr.mxu0 %v4173
    %5885 = vmatpush1.msra.mxu0 %v4172
    %5886 = vmatprep.subr.mxu0 %v4181
    %5887 = vmatpush1.msra.mxu0 %v4180
    %5888 = vmatprep.mubr.f32.mxu0 %v5197
    %5889 = vmatmul.mubr.f32.gmra.mrb[0].mxu0 %v5190
    %v5890 = vpop.f32.mrb[0].mxu0
    %v5891 = vadd.f32 0.0, %v5890
    %v5892 = vpop.f32.mrb[0].mxu0
    %v5893 = vadd.f32 0.0, %v5892
    %5894 = vdwg.mxu0
    %5895 = vmatprep.subr.mxu0 %v3935
    %5896 = vmatpush1.msra.mxu0 %v3934
    %5897 = vmatprep.subr.mxu0 %v3943
    %5898 = vmatpush1.msra.mxu0 %v3942
    %5899 = vmatprep.subr.mxu0 %v3951
    %5900 = vmatpush1.msra.mxu0 %v3950
    %5901 = vmatprep.subr.mxu0 %v3959
    %5902 = vmatpush1.msra.mxu0 %v3958
    %5903 = vmatprep.subr.mxu0 %v3967
    %5904 = vmatpush1.msra.mxu0 %v3966
    %5905 = vmatprep.subr.mxu0 %v3975
    %5906 = vmatpush1.msra.mxu0 %v3974
    %5907 = vmatprep.subr.mxu0 %v3983
    %5908 = vmatpush1.msra.mxu0 %v3982
    %5909 = vmatprep.subr.mxu0 %v3991
    %5910 = vmatpush1.msra.mxu0 %v3990
    %5911 = vmatprep.subr.mxu0 %v3999
    %5912 = vmatpush1.msra.mxu0 %v3998
    %5913 = vmatprep.subr.mxu0 %v4007
    %5914 = vmatpush1.msra.mxu0 %v4006
    %5915 = vmatprep.subr.mxu0 %v4015
    %5916 = vmatpush1.msra.mxu0 %v4014
    %5917 = vmatprep.subr.mxu0 %v4023
    %5918 = vmatpush1.msra.mxu0 %v4022
    %5919 = vmatprep.subr.mxu0 %v4031
    %5920 = vmatpush1.msra.mxu0 %v4030
    %5921 = vmatprep.subr.mxu0 %v4039
    %5922 = vmatpush1.msra.mxu0 %v4038
    %5923 = vmatprep.subr.mxu0 %v4047
    %5924 = vmatpush1.msra.mxu0 %v4046
    %5925 = vmatprep.subr.mxu0 %v4055
    %5926 = vmatpush1.msra.mxu0 %v4054
    %5927 = vmatprep.subr.mxu0 %v4063
    %5928 = vmatpush1.msra.mxu0 %v4062
    %5929 = vmatprep.subr.mxu0 %v4071
    %5930 = vmatpush1.msra.mxu0 %v4070
    %5931 = vmatprep.subr.mxu0 %v4079
    %5932 = vmatpush1.msra.mxu0 %v4078
    %5933 = vmatprep.subr.mxu0 %v4087
    %5934 = vmatpush1.msra.mxu0 %v4086
    %5935 = vmatprep.subr.mxu0 %v4095
    %5936 = vmatpush1.msra.mxu0 %v4094
    %5937 = vmatprep.subr.mxu0 %v4103
    %5938 = vmatpush1.msra.mxu0 %v4102
    %5939 = vmatprep.subr.mxu0 %v4111
    %5940 = vmatpush1.msra.mxu0 %v4110
    %5941 = vmatprep.subr.mxu0 %v4119
    %5942 = vmatpush1.msra.mxu0 %v4118
    %5943 = vmatprep.subr.mxu0 %v4127
    %5944 = vmatpush1.msra.mxu0 %v4126
    %5945 = vmatprep.subr.mxu0 %v4135
    %5946 = vmatpush1.msra.mxu0 %v4134
    %5947 = vmatprep.subr.mxu0 %v4143
    %5948 = vmatpush1.msra.mxu0 %v4142
    %5949 = vmatprep.subr.mxu0 %v4151
    %5950 = vmatpush1.msra.mxu0 %v4150
    %5951 = vmatprep.subr.mxu0 %v4159
    %5952 = vmatpush1.msra.mxu0 %v4158
    %5953 = vmatprep.subr.mxu0 %v4167
    %5954 = vmatpush1.msra.mxu0 %v4166
    %5955 = vmatprep.subr.mxu0 %v4175
    %5956 = vmatpush1.msra.mxu0 %v4174
    %5957 = vmatprep.subr.mxu0 %v4183
    %5958 = vmatpush1.msra.mxu0 %v4182
    %5959 = vmatprep.mubr.f32.mxu0 %v5197
    %5960 = vmatmul.mubr.f32.gmra.mrb[0].mxu0 %v5190
    %v5961 = vpop.f32.mrb[0].mxu0
    %v5962 = vadd.f32 0.0, %v5961
    %v5963 = vpop.f32.mrb[0].mxu0
    %v5964 = vadd.f32 0.0, %v5963
    %5965 = vdwg.mxu0
    %5966 = vmatprep.subr.mxu0 %v3937
    %5967 = vmatpush1.msra.mxu0 %v3936
    %5968 = vmatprep.subr.mxu0 %v3945
    %5969 = vmatpush1.msra.mxu0 %v3944
    %5970 = vmatprep.subr.mxu0 %v3953
    %5971 = vmatpush1.msra.mxu0 %v3952
    %5972 = vmatprep.subr.mxu0 %v3961
    %5973 = vmatpush1.msra.mxu0 %v3960
    %5974 = vmatprep.subr.mxu0 %v3969
    %5975 = vmatpush1.msra.mxu0 %v3968
    %5976 = vmatprep.subr.mxu0 %v3977
    %5977 = vmatpush1.msra.mxu0 %v3976
    %5978 = vmatprep.subr.mxu0 %v3985
    %5979 = vmatpush1.msra.mxu0 %v3984
    %5980 = vmatprep.subr.mxu0 %v3993
    %5981 = vmatpush1.msra.mxu0 %v3992
    %5982 = vmatprep.subr.mxu0 %v4001
    %5983 = vmatpush1.msra.mxu0 %v4000
    %5984 = vmatprep.subr.mxu0 %v4009
    %5985 = vmatpush1.msra.mxu0 %v4008
    %5986 = vmatprep.subr.mxu0 %v4017
    %5987 = vmatpush1.msra.mxu0 %v4016
    %5988 = vmatprep.subr.mxu0 %v4025
    %5989 = vmatpush1.msra.mxu0 %v4024
    %5990 = vmatprep.subr.mxu0 %v4033
    %5991 = vmatpush1.msra.mxu0 %v4032
    %5992 = vmatprep.subr.mxu0 %v4041
    %5993 = vmatpush1.msra.mxu0 %v4040
    %5994 = vmatprep.subr.mxu0 %v4049
    %5995 = vmatpush1.msra.mxu0 %v4048
    %5996 = vmatprep.subr.mxu0 %v4057
    %5997 = vmatpush1.msra.mxu0 %v4056
    %5998 = vmatprep.subr.mxu0 %v4065
    %5999 = vmatpush1.msra.mxu0 %v4064
    %6000 = vmatprep.subr.mxu0 %v4073
    %6001 = vmatpush1.msra.mxu0 %v4072
    %6002 = vmatprep.subr.mxu0 %v4081
    %6003 = vmatpush1.msra.mxu0 %v4080
    %6004 = vmatprep.subr.mxu0 %v4089
    %6005 = vmatpush1.msra.mxu0 %v4088
    %6006 = vmatprep.subr.mxu0 %v4097
    %6007 = vmatpush1.msra.mxu0 %v4096
    %6008 = vmatprep.subr.mxu0 %v4105
    %6009 = vmatpush1.msra.mxu0 %v4104
    %6010 = vmatprep.subr.mxu0 %v4113
    %6011 = vmatpush1.msra.mxu0 %v4112
    %6012 = vmatprep.subr.mxu0 %v4121
    %6013 = vmatpush1.msra.mxu0 %v4120
    %6014 = vmatprep.subr.mxu0 %v4129
    %6015 = vmatpush1.msra.mxu0 %v4128
    %6016 = vmatprep.subr.mxu0 %v4137
    %6017 = vmatpush1.msra.mxu0 %v4136
    %6018 = vmatprep.subr.mxu0 %v4145
    %6019 = vmatpush1.msra.mxu0 %v4144
    %6020 = vmatprep.subr.mxu0 %v4153
    %6021 = vmatpush1.msra.mxu0 %v4152
    %6022 = vmatprep.subr.mxu0 %v4161
    %6023 = vmatpush1.msra.mxu0 %v4160
    %6024 = vmatprep.subr.mxu0 %v4169
    %6025 = vmatpush1.msra.mxu0 %v4168
    %6026 = vmatprep.subr.mxu0 %v4177
    %6027 = vmatpush1.msra.mxu0 %v4176
    %6028 = vmatprep.subr.mxu0 %v4185
    %6029 = vmatpush1.msra.mxu0 %v4184
    %6030 = vmatprep.mubr.f32.mxu0 %v5197
    %6031 = vmatmul.mubr.f32.gmra.mrb[0].mxu0 %v5190
    %v6032 = vpop.f32.mrb[0].mxu0
    %v6033 = vadd.f32 0.0, %v6032
    %v6034 = vpop.f32.mrb[0].mxu0
    %v6035 = vadd.f32 0.0, %v6034
    %6036 = vdwg.mxu0
    %6037 = vmatprep.subr.mxu0 %v3939
    %6038 = vmatpush1.msra.mxu0 %v3938
    %6039 = vmatprep.subr.mxu0 %v3947
    %6040 = vmatpush1.msra.mxu0 %v3946
    %6041 = vmatprep.subr.mxu0 %v3955
    %6042 = vmatpush1.msra.mxu0 %v3954
    %6043 = vmatprep.subr.mxu0 %v3963
    %6044 = vmatpush1.msra.mxu0 %v3962
    %6045 = vmatprep.subr.mxu0 %v3971
    %6046 = vmatpush1.msra.mxu0 %v3970
    %6047 = vmatprep.subr.mxu0 %v3979
    %6048 = vmatpush1.msra.mxu0 %v3978
    %6049 = vmatprep.subr.mxu0 %v3987
    %6050 = vmatpush1.msra.mxu0 %v3986
    %6051 = vmatprep.subr.mxu0 %v3995
    %6052 = vmatpush1.msra.mxu0 %v3994
    %6053 = vmatprep.subr.mxu0 %v4003
    %6054 = vmatpush1.msra.mxu0 %v4002
    %6055 = vmatprep.subr.mxu0 %v4011
    %6056 = vmatpush1.msra.mxu0 %v4010
    %6057 = vmatprep.subr.mxu0 %v4019
    %6058 = vmatpush1.msra.mxu0 %v4018
    %6059 = vmatprep.subr.mxu0 %v4027
    %6060 = vmatpush1.msra.mxu0 %v4026
    %6061 = vmatprep.subr.mxu0 %v4035
    %6062 = vmatpush1.msra.mxu0 %v4034
    %6063 = vmatprep.subr.mxu0 %v4043
    %6064 = vmatpush1.msra.mxu0 %v4042
    %6065 = vmatprep.subr.mxu0 %v4051
    %6066 = vmatpush1.msra.mxu0 %v4050
    %6067 = vmatprep.subr.mxu0 %v4059
    %6068 = vmatpush1.msra.mxu0 %v4058
    %6069 = vmatprep.subr.mxu0 %v4067
    %6070 = vmatpush1.msra.mxu0 %v4066
    %6071 = vmatprep.subr.mxu0 %v4075
    %6072 = vmatpush1.msra.mxu0 %v4074
    %6073 = vmatprep.subr.mxu0 %v4083
    %6074 = vmatpush1.msra.mxu0 %v4082
    %6075 = vmatprep.subr.mxu0 %v4091
    %6076 = vmatpush1.msra.mxu0 %v4090
    %6077 = vmatprep.subr.mxu0 %v4099
    %6078 = vmatpush1.msra.mxu0 %v4098
    %6079 = vmatprep.subr.mxu0 %v4107
    %6080 = vmatpush1.msra.mxu0 %v4106
    %6081 = vmatprep.subr.mxu0 %v4115
    %6082 = vmatpush1.msra.mxu0 %v4114
    %6083 = vmatprep.subr.mxu0 %v4123
    %6084 = vmatpush1.msra.mxu0 %v4122
    %6085 = vmatprep.subr.mxu0 %v4131
    %6086 = vmatpush1.msra.mxu0 %v4130
    %6087 = vmatprep.subr.mxu0 %v4139
    %6088 = vmatpush1.msra.mxu0 %v4138
    %6089 = vmatprep.subr.mxu0 %v4147
    %6090 = vmatpush1.msra.mxu0 %v4146
    %6091 = vmatprep.subr.mxu0 %v4155
    %6092 = vmatpush1.msra.mxu0 %v4154
    %6093 = vmatprep.subr.mxu0 %v4163
    %6094 = vmatpush1.msra.mxu0 %v4162
    %6095 = vmatprep.subr.mxu0 %v4171
    %6096 = vmatpush1.msra.mxu0 %v4170
    %6097 = vmatprep.subr.mxu0 %v4179
    %6098 = vmatpush1.msra.mxu0 %v4178
    %6099 = vmatprep.subr.mxu0 %v4187
    %6100 = vmatpush1.msra.mxu0 %v4186
    %6101 = vmatprep.mubr.f32.mxu0 %v5197
    %6102 = vmatmul.mubr.f32.gmra.mrb[0].mxu0 %v5190
    %v6103 = vpop.f32.mrb[0].mxu0
    %v6104 = vadd.f32 0.0, %v6103
    %v6105 = vpop.f32.mrb[0].mxu0
    %v6106 = vadd.f32 0.0, %v6105
    %6107 = vdwg.mxu0
    %v6116 = vcombine.low %v5891, %v5893
    %v6117 = vcombine.low %v5962, %v5964
    %v6118 = vcombine.low %v6033, %v6035
    %v6119 = vcombine.low %v6104, %v6106
    %v6121 = vunpack.c.l.s4 1966171168
    %v6122 = vunpack.c.0.s8 %v6121
    %v6123 = vlaneseq
    %v6124 = vshrl.u32 %v6123, 7
    %v6125 = vsub.s32 %v6122, %v6124
    %v6126 = vrot.slane %v6116, %v6125
    %v6128 = vunpack.c.l.s4 1966171168
    %v6129 = vunpack.c.0.s8 %v6128
    %v6130 = vlaneseq
    %v6131 = vshrl.u32 %v6130, 7
    %v6132 = vsub.s32 %v6129, %v6131
    %v6133 = vrot.slane %v6117, %v6132
    %v6135 = vunpack.c.l.s4 1966171168
    %v6136 = vunpack.c.0.s8 %v6135
    %v6137 = vlaneseq
    %v6138 = vshrl.u32 %v6137, 7
    %v6139 = vsub.s32 %v6136, %v6138
    %v6140 = vrot.slane %v6118, %v6139
    %v6142 = vunpack.c.l.s4 1966171168
    %v6143 = vunpack.c.0.s8 %v6142
    %v6144 = vlaneseq
    %v6145 = vshrl.u32 %v6144, 7
    %v6146 = vsub.s32 %v6143, %v6145
    %v6147 = vrot.slane %v6119, %v6146
    %v6148 = vcombine.low %v6126, %v6133
    %v6149 = vcombine.high %v6126, %v6133
    %v6150 = vcombine.low %v6140, %v6147
    %v6151 = vcombine.high %v6140, %v6147
    %v6153 = vunpack.c.l.s4 1966171168
    %v6154 = vunpack.c.0.s8 %v6153
    %v6155 = vlaneseq
    %v6156 = vshrl.u32 %v6155, 7
    %v6157 = vsub.s32 %v6154, %v6156
    %v6158 = vrot.slane %v6148, %v6157
    %v6160 = vunpack.c.l.s4 1966171168
    %v6161 = vunpack.c.0.s8 %v6160
    %v6162 = vlaneseq
    %v6163 = vshrl.u32 %v6162, 7
    %v6164 = vsub.s32 %v6161, %v6163
    %v6165 = vrot.slane %v6149, %v6164
    %v6167 = vunpack.c.l.s4 1966171168
    %v6168 = vunpack.c.0.s8 %v6167
    %v6169 = vlaneseq
    %v6170 = vshrl.u32 %v6169, 7
    %v6171 = vsub.s32 %v6168, %v6170
    %v6172 = vrot.slane %v6150, %v6171
    %v6174 = vunpack.c.l.s4 1966171168
    %v6175 = vunpack.c.0.s8 %v6174
    %v6176 = vlaneseq
    %v6177 = vshrl.u32 %v6176, 7
    %v6178 = vsub.s32 %v6175, %v6177
    %v6179 = vrot.slane %v6151, %v6178
    %v6180 = vcombine.low %v6158, %v6172
    %v6181 = vcombine.low %v6165, %v6179
    %v6184 = vadd.f32 %v5819, %v6180
    %v6185 = vadd.f32 %v5823, %v6181
    %v6186 = vxor.u32 %v6184, 2147483648
    %v6187 = vxor.u32 %v6185, 2147483648
    %v6188 = vmul.f32 %v6186, 1.442695
    %v6189 = vpow.pop %v6188
    %v6190 = vmul.f32 %v6187, 1.442695
    %v6191 = vpow.pop %v6190
    %v6192 = vadd.f32 %v6189, 1.0
    %v6193 = vadd.f32 %v6191, 1.0
    %v6194 = vrcp.pop %v6192
    %v6195 = vmul.f32 1.0, %v6194
    %v6196 = vrcp.pop %v6193
    %v6197 = vmul.f32 1.0, %v6196
    %v6200 = vrot.slane %v6184, 2
    %v6201 = vrot.slane %v6185, 2
    %v6204 = vxor.u32 %v6200, 2147483648
    %v6205 = vxor.u32 %v6201, 2147483648
    %v6206 = vmul.f32 %v6204, 1.442695
    %v6207 = vpow.pop %v6206
    %v6208 = vmul.f32 %v6205, 1.442695
    %v6209 = vpow.pop %v6208
    %v6210 = vadd.f32 %v6207, 1.0
    %v6211 = vadd.f32 %v6209, 1.0
    %v6212 = vrcp.pop %v6210
    %v6213 = vmul.f32 1.0, %v6212
    %v6214 = vrcp.pop %v6211
    %v6215 = vmul.f32 1.0, %v6214
    %v6216 = vrot.slane %v6184, 4
    %v6217 = vrot.slane %v6185, 4
    %v6220 = vtanh.pop %v6216
    %v6221 = vtanh.pop %v6217
    %v6222 = vrot.slane %v6184, 6
    %v6223 = vrot.slane %v6185, 6
    %v6226 = vxor.u32 %v6222, 2147483648
    %v6227 = vxor.u32 %v6223, 2147483648
    %v6228 = vmul.f32 %v6226, 1.442695
    %v6229 = vpow.pop %v6228
    %v6230 = vmul.f32 %v6227, 1.442695
    %v6231 = vpow.pop %v6230
    %v6232 = vadd.f32 %v6229, 1.0
    %v6233 = vadd.f32 %v6231, 1.0
    %v6234 = vrcp.pop %v6232
    %v6235 = vmul.f32 1.0, %v6234
    %v6236 = vrcp.pop %v6233
    %v6237 = vmul.f32 1.0, %v6236
    %v6238 = vmul.f32 %v6213, %v5167
    %v6239 = vmul.f32 %v6215, %v5168
    %v6240 = vmul.f32 %v6195, %v6220
    %v6241 = vmul.f32 %v6197, %v6221
    %v6242 = vadd.f32 %v6238, %v6240
    %v6243 = vadd.f32 %v6239, %v6241
    %v6244 = vtanh.pop %v6242
    %v6245 = vtanh.pop %v6243
    %v6246 = vmul.f32 %v6235, %v6244
    %v6247 = vmul.f32 %v6237, %v6245
    %v6250 = vcombine.low %v6246, %v6247
    %v6252 = vunpack.c.l.s4 1966171168
    %v6253 = vunpack.c.0.s8 %v6252
    %v6254 = vlaneseq
    %v6255 = vshrl.u32 %v6254, 7
    %v6256 = vsub.s32 %v6253, %v6255
    %v6257 = vrot.slane %v6250, %v6256
    %v6258 = vcombine.high %v6257, %v6257
    %v6260 = vunpack.c.l.s4 1966171168
    %v6261 = vunpack.c.0.s8 %v6260
    %v6262 = vlaneseq
    %v6263 = vshrl.u32 %v6262, 7
    %v6264 = vsub.s32 %v6261, %v6263
    %v6265 = vrot.slane %v6257, %v6264
    %v6267 = vunpack.c.l.s4 1966171168
    %v6268 = vunpack.c.0.s8 %v6267
    %v6269 = vlaneseq
    %v6270 = vshrl.u32 %v6269, 7
    %v6271 = vsub.s32 %v6268, %v6270
    %v6272 = vrot.slane %v6258, %v6271
    %6275 = vmatprep.subr.mxu0 %v4189
    %6276 = vmatpush1.msra.mxu0 %v4188
    %6277 = vmatprep.subr.mxu0 %v4197
    %6278 = vmatpush1.msra.mxu0 %v4196
    %6279 = vmatprep.subr.mxu0 %v4205
    %6280 = vmatpush1.msra.mxu0 %v4204
    %6281 = vmatprep.subr.mxu0 %v4213
    %6282 = vmatpush1.msra.mxu0 %v4212
    %6283 = vmatprep.subr.mxu0 %v4221
    %6284 = vmatpush1.msra.mxu0 %v4220
    %6285 = vmatprep.subr.mxu0 %v4229
    %6286 = vmatpush1.msra.mxu0 %v4228
    %6287 = vmatprep.subr.mxu0 %v4237
    %6288 = vmatpush1.msra.mxu0 %v4236
    %6289 = vmatprep.subr.mxu0 %v4245
    %6290 = vmatpush1.msra.mxu0 %v4244
    %6291 = vmatprep.subr.mxu0 %v4253
    %6292 = vmatpush1.msra.mxu0 %v4252
    %6293 = vmatprep.subr.mxu0 %v4261
    %6294 = vmatpush1.msra.mxu0 %v4260
    %6295 = vmatprep.subr.mxu0 %v4269
    %6296 = vmatpush1.msra.mxu0 %v4268
    %6297 = vmatprep.subr.mxu0 %v4277
    %6298 = vmatpush1.msra.mxu0 %v4276
    %6299 = vmatprep.subr.mxu0 %v4285
    %6300 = vmatpush1.msra.mxu0 %v4284
    %6301 = vmatprep.subr.mxu0 %v4293
    %6302 = vmatpush1.msra.mxu0 %v4292
    %6303 = vmatprep.subr.mxu0 %v4301
    %6304 = vmatpush1.msra.mxu0 %v4300
    %6305 = vmatprep.subr.mxu0 %v4309
    %6306 = vmatpush1.msra.mxu0 %v4308
    %6307 = vmatprep.subr.mxu0 %v4317
    %6308 = vmatpush1.msra.mxu0 %v4316
    %6309 = vmatprep.subr.mxu0 %v4325
    %6310 = vmatpush1.msra.mxu0 %v4324
    %6311 = vmatprep.subr.mxu0 %v4333
    %6312 = vmatpush1.msra.mxu0 %v4332
    %6313 = vmatprep.subr.mxu0 %v4341
    %6314 = vmatpush1.msra.mxu0 %v4340
    %6315 = vmatprep.subr.mxu0 %v4349
    %6316 = vmatpush1.msra.mxu0 %v4348
    %6317 = vmatprep.subr.mxu0 %v4357
    %6318 = vmatpush1.msra.mxu0 %v4356
    %6319 = vmatprep.subr.mxu0 %v4365
    %6320 = vmatpush1.msra.mxu0 %v4364
    %6321 = vmatprep.subr.mxu0 %v4373
    %6322 = vmatpush1.msra.mxu0 %v4372
    %6323 = vmatprep.subr.mxu0 %v4381
    %6324 = vmatpush1.msra.mxu0 %v4380
    %6325 = vmatprep.subr.mxu0 %v4389
    %6326 = vmatpush1.msra.mxu0 %v4388
    %6327 = vmatprep.subr.mxu0 %v4397
    %6328 = vmatpush1.msra.mxu0 %v4396
    %6329 = vmatprep.subr.mxu0 %v4405
    %6330 = vmatpush1.msra.mxu0 %v4404
    %6331 = vmatprep.subr.mxu0 %v4413
    %6332 = vmatpush1.msra.mxu0 %v4412
    %6333 = vmatprep.subr.mxu0 %v4421
    %6334 = vmatpush1.msra.mxu0 %v4420
    %6335 = vmatprep.subr.mxu0 %v4429
    %6336 = vmatpush1.msra.mxu0 %v4428
    %6337 = vmatprep.subr.mxu0 %v4437
    %6338 = vmatpush1.msra.mxu0 %v4436
    %6339 = vmatprep.mubr.f32.mxu0 %v6272
    %6340 = vmatmul.mubr.f32.gmra.mrb[0].mxu0 %v6265
    %v6341 = vpop.f32.mrb[0].mxu0
    %v6342 = vadd.f32 %v4705, %v6341
    %v6343 = vpop.f32.mrb[0].mxu0
    %v6344 = vadd.f32 %v4709, %v6343
    %6345 = vdwg.mxu0
    %6346 = vmatprep.subr.mxu0 %v4445
    %6347 = vmatpush1.msra.mxu0 %v4444
    %6348 = vmatprep.subr.mxu0 %v4453
    %6349 = vmatpush1.msra.mxu0 %v4452
    %6350 = vmatprep.subr.mxu0 %v4461
    %6351 = vmatpush1.msra.mxu0 %v4460
    %6352 = vmatprep.subr.mxu0 %v4469
    %6353 = vmatpush1.msra.mxu0 %v4468
    %6354 = vmatprep.subr.mxu0 %v4477
    %6355 = vmatpush1.msra.mxu0 %v4476
    %6356 = vmatprep.subr.mxu0 %v4485
    %6357 = vmatpush1.msra.mxu0 %v4484
    %6358 = vmatprep.subr.mxu0 %v4493
    %6359 = vmatpush1.msra.mxu0 %v4492
    %6360 = vmatprep.subr.mxu0 %v4501
    %6361 = vmatpush1.msra.mxu0 %v4500
    %6362 = vmatprep.subr.mxu0 %v4509
    %6363 = vmatpush1.msra.mxu0 %v4508
    %6364 = vmatprep.subr.mxu0 %v4517
    %6365 = vmatpush1.msra.mxu0 %v4516
    %6366 = vmatprep.subr.mxu0 %v4525
    %6367 = vmatpush1.msra.mxu0 %v4524
    %6368 = vmatprep.subr.mxu0 %v4533
    %6369 = vmatpush1.msra.mxu0 %v4532
    %6370 = vmatprep.subr.mxu0 %v4541
    %6371 = vmatpush1.msra.mxu0 %v4540
    %6372 = vmatprep.subr.mxu0 %v4549
    %6373 = vmatpush1.msra.mxu0 %v4548
    %6374 = vmatprep.subr.mxu0 %v4557
    %6375 = vmatpush1.msra.mxu0 %v4556
    %6376 = vmatprep.subr.mxu0 %v4565
    %6377 = vmatpush1.msra.mxu0 %v4564
    %6378 = vmatprep.subr.mxu0 %v4573
    %6379 = vmatpush1.msra.mxu0 %v4572
    %6380 = vmatprep.subr.mxu0 %v4581
    %6381 = vmatpush1.msra.mxu0 %v4580
    %6382 = vmatprep.subr.mxu0 %v4589
    %6383 = vmatpush1.msra.mxu0 %v4588
    %6384 = vmatprep.subr.mxu0 %v4597
    %6385 = vmatpush1.msra.mxu0 %v4596
    %6386 = vmatprep.subr.mxu0 %v4605
    %6387 = vmatpush1.msra.mxu0 %v4604
    %6388 = vmatprep.subr.mxu0 %v4613
    %6389 = vmatpush1.msra.mxu0 %v4612
    %6390 = vmatprep.subr.mxu0 %v4621
    %6391 = vmatpush1.msra.mxu0 %v4620
    %6392 = vmatprep.subr.mxu0 %v4629
    %6393 = vmatpush1.msra.mxu0 %v4628
    %6394 = vmatprep.subr.mxu0 %v4637
    %6395 = vmatpush1.msra.mxu0 %v4636
    %6396 = vmatprep.subr.mxu0 %v4645
    %6397 = vmatpush1.msra.mxu0 %v4644
    %6398 = vmatprep.subr.mxu0 %v4653
    %6399 = vmatpush1.msra.mxu0 %v4652
    %6400 = vmatprep.subr.mxu0 %v4661
    %6401 = vmatpush1.msra.mxu0 %v4660
    %6402 = vmatprep.subr.mxu0 %v4669
    %6403 = vmatpush1.msra.mxu0 %v4668
    %6404 = vmatprep.subr.mxu0 %v4677
    %6405 = vmatpush1.msra.mxu0 %v4676
    %6406 = vmatprep.subr.mxu0 %v4685
    %6407 = vmatpush1.msra.mxu0 %v4684
    %6408 = vmatprep.subr.mxu0 %v4693
    %6409 = vmatpush1.msra.mxu0 %v4692
    %6410 = vmatprep.mubr.f32.mxu0 %v5815
    %6411 = vmatmul.mubr.f32.gmra.mrb[0].mxu0 %v5814
    %v6412 = vpop.f32.mrb[0].mxu0
    %v6413 = vadd.f32 %v6342, %v6412
    %v6414 = vpop.f32.mrb[0].mxu0
    %v6415 = vadd.f32 %v6344, %v6414
    %6416 = vdwg.mxu0
    %6417 = vmatprep.subr.mxu0 %v4191
    %6418 = vmatpush1.msra.mxu0 %v4190
    %6419 = vmatprep.subr.mxu0 %v4199
    %6420 = vmatpush1.msra.mxu0 %v4198
    %6421 = vmatprep.subr.mxu0 %v4207
    %6422 = vmatpush1.msra.mxu0 %v4206
    %6423 = vmatprep.subr.mxu0 %v4215
    %6424 = vmatpush1.msra.mxu0 %v4214
    %6425 = vmatprep.subr.mxu0 %v4223
    %6426 = vmatpush1.msra.mxu0 %v4222
    %6427 = vmatprep.subr.mxu0 %v4231
    %6428 = vmatpush1.msra.mxu0 %v4230
    %6429 = vmatprep.subr.mxu0 %v4239
    %6430 = vmatpush1.msra.mxu0 %v4238
    %6431 = vmatprep.subr.mxu0 %v4247
    %6432 = vmatpush1.msra.mxu0 %v4246
    %6433 = vmatprep.subr.mxu0 %v4255
    %6434 = vmatpush1.msra.mxu0 %v4254
    %6435 = vmatprep.subr.mxu0 %v4263
    %6436 = vmatpush1.msra.mxu0 %v4262
    %6437 = vmatprep.subr.mxu0 %v4271
    %6438 = vmatpush1.msra.mxu0 %v4270
    %6439 = vmatprep.subr.mxu0 %v4279
    %6440 = vmatpush1.msra.mxu0 %v4278
    %6441 = vmatprep.subr.mxu0 %v4287
    %6442 = vmatpush1.msra.mxu0 %v4286
    %6443 = vmatprep.subr.mxu0 %v4295
    %6444 = vmatpush1.msra.mxu0 %v4294
    %6445 = vmatprep.subr.mxu0 %v4303
    %6446 = vmatpush1.msra.mxu0 %v4302
    %6447 = vmatprep.subr.mxu0 %v4311
    %6448 = vmatpush1.msra.mxu0 %v4310
    %6449 = vmatprep.subr.mxu0 %v4319
    %6450 = vmatpush1.msra.mxu0 %v4318
    %6451 = vmatprep.subr.mxu0 %v4327
    %6452 = vmatpush1.msra.mxu0 %v4326
    %6453 = vmatprep.subr.mxu0 %v4335
    %6454 = vmatpush1.msra.mxu0 %v4334
    %6455 = vmatprep.subr.mxu0 %v4343
    %6456 = vmatpush1.msra.mxu0 %v4342
    %6457 = vmatprep.subr.mxu0 %v4351
    %6458 = vmatpush1.msra.mxu0 %v4350
    %6459 = vmatprep.subr.mxu0 %v4359
    %6460 = vmatpush1.msra.mxu0 %v4358
    %6461 = vmatprep.subr.mxu0 %v4367
    %6462 = vmatpush1.msra.mxu0 %v4366
    %6463 = vmatprep.subr.mxu0 %v4375
    %6464 = vmatpush1.msra.mxu0 %v4374
    %6465 = vmatprep.subr.mxu0 %v4383
    %6466 = vmatpush1.msra.mxu0 %v4382
    %6467 = vmatprep.subr.mxu0 %v4391
    %6468 = vmatpush1.msra.mxu0 %v4390
    %6469 = vmatprep.subr.mxu0 %v4399
    %6470 = vmatpush1.msra.mxu0 %v4398
    %6471 = vmatprep.subr.mxu0 %v4407
    %6472 = vmatpush1.msra.mxu0 %v4406
    %6473 = vmatprep.subr.mxu0 %v4415
    %6474 = vmatpush1.msra.mxu0 %v4414
    %6475 = vmatprep.subr.mxu0 %v4423
    %6476 = vmatpush1.msra.mxu0 %v4422
    %6477 = vmatprep.subr.mxu0 %v4431
    %6478 = vmatpush1.msra.mxu0 %v4430
    %6479 = vmatprep.subr.mxu0 %v4439
    %6480 = vmatpush1.msra.mxu0 %v4438
    %6481 = vmatprep.mubr.f32.mxu0 %v6272
    %6482 = vmatmul.mubr.f32.gmra.mrb[0].mxu0 %v6265
    %v6483 = vpop.f32.mrb[0].mxu0
    %v6484 = vadd.f32 %v4713, %v6483
    %v6485 = vpop.f32.mrb[0].mxu0
    %v6486 = vadd.f32 %v4717, %v6485
    %6487 = vdwg.mxu0
    %6488 = vmatprep.subr.mxu0 %v4447
    %6489 = vmatpush1.msra.mxu0 %v4446
    %6490 = vmatprep.subr.mxu0 %v4455
    %6491 = vmatpush1.msra.mxu0 %v4454
    %6492 = vmatprep.subr.mxu0 %v4463
    %6493 = vmatpush1.msra.mxu0 %v4462
    %6494 = vmatprep.subr.mxu0 %v4471
    %6495 = vmatpush1.msra.mxu0 %v4470
    %6496 = vmatprep.subr.mxu0 %v4479
    %6497 = vmatpush1.msra.mxu0 %v4478
    %6498 = vmatprep.subr.mxu0 %v4487
    %6499 = vmatpush1.msra.mxu0 %v4486
    %6500 = vmatprep.subr.mxu0 %v4495
    %6501 = vmatpush1.msra.mxu0 %v4494
    %6502 = vmatprep.subr.mxu0 %v4503
    %6503 = vmatpush1.msra.mxu0 %v4502
    %6504 = vmatprep.subr.mxu0 %v4511
    %6505 = vmatpush1.msra.mxu0 %v4510
    %6506 = vmatprep.subr.mxu0 %v4519
    %6507 = vmatpush1.msra.mxu0 %v4518
    %6508 = vmatprep.subr.mxu0 %v4527
    %6509 = vmatpush1.msra.mxu0 %v4526
    %6510 = vmatprep.subr.mxu0 %v4535
    %6511 = vmatpush1.msra.mxu0 %v4534
    %6512 = vmatprep.subr.mxu0 %v4543
    %6513 = vmatpush1.msra.mxu0 %v4542
    %6514 = vmatprep.subr.mxu0 %v4551
    %6515 = vmatpush1.msra.mxu0 %v4550
    %6516 = vmatprep.subr.mxu0 %v4559
    %6517 = vmatpush1.msra.mxu0 %v4558
    %6518 = vmatprep.subr.mxu0 %v4567
    %6519 = vmatpush1.msra.mxu0 %v4566
    %6520 = vmatprep.subr.mxu0 %v4575
    %6521 = vmatpush1.msra.mxu0 %v4574
    %6522 = vmatprep.subr.mxu0 %v4583
    %6523 = vmatpush1.msra.mxu0 %v4582
    %6524 = vmatprep.subr.mxu0 %v4591
    %6525 = vmatpush1.msra.mxu0 %v4590
    %6526 = vmatprep.subr.mxu0 %v4599
    %6527 = vmatpush1.msra.mxu0 %v4598
    %6528 = vmatprep.subr.mxu0 %v4607
    %6529 = vmatpush1.msra.mxu0 %v4606
    %6530 = vmatprep.subr.mxu0 %v4615
    %6531 = vmatpush1.msra.mxu0 %v4614
    %6532 = vmatprep.subr.mxu0 %v4623
    %6533 = vmatpush1.msra.mxu0 %v4622
    %6534 = vmatprep.subr.mxu0 %v4631
    %6535 = vmatpush1.msra.mxu0 %v4630
    %6536 = vmatprep.subr.mxu0 %v4639
    %6537 = vmatpush1.msra.mxu0 %v4638
    %6538 = vmatprep.subr.mxu0 %v4647
    %6539 = vmatpush1.msra.mxu0 %v4646
    %6540 = vmatprep.subr.mxu0 %v4655
    %6541 = vmatpush1.msra.mxu0 %v4654
    %6542 = vmatprep.subr.mxu0 %v4663
    %6543 = vmatpush1.msra.mxu0 %v4662
    %6544 = vmatprep.subr.mxu0 %v4671
    %6545 = vmatpush1.msra.mxu0 %v4670
    %6546 = vmatprep.subr.mxu0 %v4679
    %6547 = vmatpush1.msra.mxu0 %v4678
    %6548 = vmatprep.subr.mxu0 %v4687
    %6549 = vmatpush1.msra.mxu0 %v4686
    %6550 = vmatprep.subr.mxu0 %v4695
    %6551 = vmatpush1.msra.mxu0 %v4694
    %6552 = vmatprep.mubr.f32.mxu0 %v5815
    %6553 = vmatmul.mubr.f32.gmra.mrb[0].mxu0 %v5814
    %v6554 = vpop.f32.mrb[0].mxu0
    %v6555 = vadd.f32 %v6484, %v6554
    %v6556 = vpop.f32.mrb[0].mxu0
    %v6557 = vadd.f32 %v6486, %v6556
    %6558 = vdwg.mxu0
    %6559 = vmatprep.subr.mxu0 %v4193
    %6560 = vmatpush1.msra.mxu0 %v4192
    %6561 = vmatprep.subr.mxu0 %v4201
    %6562 = vmatpush1.msra.mxu0 %v4200
    %6563 = vmatprep.subr.mxu0 %v4209
    %6564 = vmatpush1.msra.mxu0 %v4208
    %6565 = vmatprep.subr.mxu0 %v4217
    %6566 = vmatpush1.msra.mxu0 %v4216
    %6567 = vmatprep.subr.mxu0 %v4225
    %6568 = vmatpush1.msra.mxu0 %v4224
    %6569 = vmatprep.subr.mxu0 %v4233
    %6570 = vmatpush1.msra.mxu0 %v4232
    %6571 = vmatprep.subr.mxu0 %v4241
    %6572 = vmatpush1.msra.mxu0 %v4240
    %6573 = vmatprep.subr.mxu0 %v4249
    %6574 = vmatpush1.msra.mxu0 %v4248
    %6575 = vmatprep.subr.mxu0 %v4257
    %6576 = vmatpush1.msra.mxu0 %v4256
    %6577 = vmatprep.subr.mxu0 %v4265
    %6578 = vmatpush1.msra.mxu0 %v4264
    %6579 = vmatprep.subr.mxu0 %v4273
    %6580 = vmatpush1.msra.mxu0 %v4272
    %6581 = vmatprep.subr.mxu0 %v4281
    %6582 = vmatpush1.msra.mxu0 %v4280
    %6583 = vmatprep.subr.mxu0 %v4289
    %6584 = vmatpush1.msra.mxu0 %v4288
    %6585 = vmatprep.subr.mxu0 %v4297
    %6586 = vmatpush1.msra.mxu0 %v4296
    %6587 = vmatprep.subr.mxu0 %v4305
    %6588 = vmatpush1.msra.mxu0 %v4304
    %6589 = vmatprep.subr.mxu0 %v4313
    %6590 = vmatpush1.msra.mxu0 %v4312
    %6591 = vmatprep.subr.mxu0 %v4321
    %6592 = vmatpush1.msra.mxu0 %v4320
    %6593 = vmatprep.subr.mxu0 %v4329
    %6594 = vmatpush1.msra.mxu0 %v4328
    %6595 = vmatprep.subr.mxu0 %v4337
    %6596 = vmatpush1.msra.mxu0 %v4336
    %6597 = vmatprep.subr.mxu0 %v4345
    %6598 = vmatpush1.msra.mxu0 %v4344
    %6599 = vmatprep.subr.mxu0 %v4353
    %6600 = vmatpush1.msra.mxu0 %v4352
    %6601 = vmatprep.subr.mxu0 %v4361
    %6602 = vmatpush1.msra.mxu0 %v4360
    %6603 = vmatprep.subr.mxu0 %v4369
    %6604 = vmatpush1.msra.mxu0 %v4368
    %6605 = vmatprep.subr.mxu0 %v4377
    %6606 = vmatpush1.msra.mxu0 %v4376
    %6607 = vmatprep.subr.mxu0 %v4385
    %6608 = vmatpush1.msra.mxu0 %v4384
    %6609 = vmatprep.subr.mxu0 %v4393
    %6610 = vmatpush1.msra.mxu0 %v4392
    %6611 = vmatprep.subr.mxu0 %v4401
    %6612 = vmatpush1.msra.mxu0 %v4400
    %6613 = vmatprep.subr.mxu0 %v4409
    %6614 = vmatpush1.msra.mxu0 %v4408
    %6615 = vmatprep.subr.mxu0 %v4417
    %6616 = vmatpush1.msra.mxu0 %v4416
    %6617 = vmatprep.subr.mxu0 %v4425
    %6618 = vmatpush1.msra.mxu0 %v4424
    %6619 = vmatprep.subr.mxu0 %v4433
    %6620 = vmatpush1.msra.mxu0 %v4432
    %6621 = vmatprep.subr.mxu0 %v4441
    %6622 = vmatpush1.msra.mxu0 %v4440
    %6623 = vmatprep.mubr.f32.mxu0 %v6272
    %6624 = vmatmul.mubr.f32.gmra.mrb[0].mxu0 %v6265
    %v6625 = vpop.f32.mrb[0].mxu0
    %v6626 = vadd.f32 %v4721, %v6625
    %v6627 = vpop.f32.mrb[0].mxu0
    %v6628 = vadd.f32 %v4725, %v6627
    %6629 = vdwg.mxu0
    %6630 = vmatprep.subr.mxu0 %v4449
    %6631 = vmatpush1.msra.mxu0 %v4448
    %6632 = vmatprep.subr.mxu0 %v4457
    %6633 = vmatpush1.msra.mxu0 %v4456
    %6634 = vmatprep.subr.mxu0 %v4465
    %6635 = vmatpush1.msra.mxu0 %v4464
    %6636 = vmatprep.subr.mxu0 %v4473
    %6637 = vmatpush1.msra.mxu0 %v4472
    %6638 = vmatprep.subr.mxu0 %v4481
    %6639 = vmatpush1.msra.mxu0 %v4480
    %6640 = vmatprep.subr.mxu0 %v4489
    %6641 = vmatpush1.msra.mxu0 %v4488
    %6642 = vmatprep.subr.mxu0 %v4497
    %6643 = vmatpush1.msra.mxu0 %v4496
    %6644 = vmatprep.subr.mxu0 %v4505
    %6645 = vmatpush1.msra.mxu0 %v4504
    %6646 = vmatprep.subr.mxu0 %v4513
    %6647 = vmatpush1.msra.mxu0 %v4512
    %6648 = vmatprep.subr.mxu0 %v4521
    %6649 = vmatpush1.msra.mxu0 %v4520
    %6650 = vmatprep.subr.mxu0 %v4529
    %6651 = vmatpush1.msra.mxu0 %v4528
    %6652 = vmatprep.subr.mxu0 %v4537
    %6653 = vmatpush1.msra.mxu0 %v4536
    %6654 = vmatprep.subr.mxu0 %v4545
    %6655 = vmatpush1.msra.mxu0 %v4544
    %6656 = vmatprep.subr.mxu0 %v4553
    %6657 = vmatpush1.msra.mxu0 %v4552
    %6658 = vmatprep.subr.mxu0 %v4561
    %6659 = vmatpush1.msra.mxu0 %v4560
    %6660 = vmatprep.subr.mxu0 %v4569
    %6661 = vmatpush1.msra.mxu0 %v4568
    %6662 = vmatprep.subr.mxu0 %v4577
    %6663 = vmatpush1.msra.mxu0 %v4576
    %6664 = vmatprep.subr.mxu0 %v4585
    %6665 = vmatpush1.msra.mxu0 %v4584
    %6666 = vmatprep.subr.mxu0 %v4593
    %6667 = vmatpush1.msra.mxu0 %v4592
    %6668 = vmatprep.subr.mxu0 %v4601
    %6669 = vmatpush1.msra.mxu0 %v4600
    %6670 = vmatprep.subr.mxu0 %v4609
    %6671 = vmatpush1.msra.mxu0 %v4608
    %6672 = vmatprep.subr.mxu0 %v4617
    %6673 = vmatpush1.msra.mxu0 %v4616
    %6674 = vmatprep.subr.mxu0 %v4625
    %6675 = vmatpush1.msra.mxu0 %v4624
    %6676 = vmatprep.subr.mxu0 %v4633
    %6677 = vmatpush1.msra.mxu0 %v4632
    %6678 = vmatprep.subr.mxu0 %v4641
    %6679 = vmatpush1.msra.mxu0 %v4640
    %6680 = vmatprep.subr.mxu0 %v4649
    %6681 = vmatpush1.msra.mxu0 %v4648
    %6682 = vmatprep.subr.mxu0 %v4657
    %6683 = vmatpush1.msra.mxu0 %v4656
    %6684 = vmatprep.subr.mxu0 %v4665
    %6685 = vmatpush1.msra.mxu0 %v4664
    %6686 = vmatprep.subr.mxu0 %v4673
    %6687 = vmatpush1.msra.mxu0 %v4672
    %6688 = vmatprep.subr.mxu0 %v4681
    %6689 = vmatpush1.msra.mxu0 %v4680
    %6690 = vmatprep.subr.mxu0 %v4689
    %6691 = vmatpush1.msra.mxu0 %v4688
    %6692 = vmatprep.subr.mxu0 %v4697
    %6693 = vmatpush1.msra.mxu0 %v4696
    %6694 = vmatprep.mubr.f32.mxu0 %v5815
    %6695 = vmatmul.mubr.f32.gmra.mrb[0].mxu0 %v5814
    %v6696 = vpop.f32.mrb[0].mxu0
    %v6697 = vadd.f32 %v6626, %v6696
    %v6698 = vpop.f32.mrb[0].mxu0
    %v6699 = vadd.f32 %v6628, %v6698
    %6700 = vdwg.mxu0
    %6701 = vmatprep.subr.mxu0 %v4195
    %6702 = vmatpush1.msra.mxu0 %v4194
    %6703 = vmatprep.subr.mxu0 %v4203
    %6704 = vmatpush1.msra.mxu0 %v4202
    %6705 = vmatprep.subr.mxu0 %v4211
    %6706 = vmatpush1.msra.mxu0 %v4210
    %6707 = vmatprep.subr.mxu0 %v4219
    %6708 = vmatpush1.msra.mxu0 %v4218
    %6709 = vmatprep.subr.mxu0 %v4227
    %6710 = vmatpush1.msra.mxu0 %v4226
    %6711 = vmatprep.subr.mxu0 %v4235
    %6712 = vmatpush1.msra.mxu0 %v4234
    %6713 = vmatprep.subr.mxu0 %v4243
    %6714 = vmatpush1.msra.mxu0 %v4242
    %6715 = vmatprep.subr.mxu0 %v4251
    %6716 = vmatpush1.msra.mxu0 %v4250
    %6717 = vmatprep.subr.mxu0 %v4259
    %6718 = vmatpush1.msra.mxu0 %v4258
    %6719 = vmatprep.subr.mxu0 %v4267
    %6720 = vmatpush1.msra.mxu0 %v4266
    %6721 = vmatprep.subr.mxu0 %v4275
    %6722 = vmatpush1.msra.mxu0 %v4274
    %6723 = vmatprep.subr.mxu0 %v4283
    %6724 = vmatpush1.msra.mxu0 %v4282
    %6725 = vmatprep.subr.mxu0 %v4291
    %6726 = vmatpush1.msra.mxu0 %v4290
    %6727 = vmatprep.subr.mxu0 %v4299
    %6728 = vmatpush1.msra.mxu0 %v4298
    %6729 = vmatprep.subr.mxu0 %v4307
    %6730 = vmatpush1.msra.mxu0 %v4306
    %6731 = vmatprep.subr.mxu0 %v4315
    %6732 = vmatpush1.msra.mxu0 %v4314
    %6733 = vmatprep.subr.mxu0 %v4323
    %6734 = vmatpush1.msra.mxu0 %v4322
    %6735 = vmatprep.subr.mxu0 %v4331
    %6736 = vmatpush1.msra.mxu0 %v4330
    %6737 = vmatprep.subr.mxu0 %v4339
    %6738 = vmatpush1.msra.mxu0 %v4338
    %6739 = vmatprep.subr.mxu0 %v4347
    %6740 = vmatpush1.msra.mxu0 %v4346
    %6741 = vmatprep.subr.mxu0 %v4355
    %6742 = vmatpush1.msra.mxu0 %v4354
    %6743 = vmatprep.subr.mxu0 %v4363
    %6744 = vmatpush1.msra.mxu0 %v4362
    %6745 = vmatprep.subr.mxu0 %v4371
    %6746 = vmatpush1.msra.mxu0 %v4370
    %6747 = vmatprep.subr.mxu0 %v4379
    %6748 = vmatpush1.msra.mxu0 %v4378
    %6749 = vmatprep.subr.mxu0 %v4387
    %6750 = vmatpush1.msra.mxu0 %v4386
    %6751 = vmatprep.subr.mxu0 %v4395
    %6752 = vmatpush1.msra.mxu0 %v4394
    %6753 = vmatprep.subr.mxu0 %v4403
    %6754 = vmatpush1.msra.mxu0 %v4402
    %6755 = vmatprep.subr.mxu0 %v4411
    %6756 = vmatpush1.msra.mxu0 %v4410
    %6757 = vmatprep.subr.mxu0 %v4419
    %6758 = vmatpush1.msra.mxu0 %v4418
    %6759 = vmatprep.subr.mxu0 %v4427
    %6760 = vmatpush1.msra.mxu0 %v4426
    %6761 = vmatprep.subr.mxu0 %v4435
    %6762 = vmatpush1.msra.mxu0 %v4434
    %6763 = vmatprep.subr.mxu0 %v4443
    %6764 = vmatpush1.msra.mxu0 %v4442
    %6765 = vmatprep.mubr.f32.mxu0 %v6272
    %6766 = vmatmul.mubr.f32.gmra.mrb[0].mxu0 %v6265
    %v6767 = vpop.f32.mrb[0].mxu0
    %v6768 = vadd.f32 %v4729, %v6767
    %v6769 = vpop.f32.mrb[0].mxu0
    %v6770 = vadd.f32 %v4733, %v6769
    %6771 = vdwg.mxu0
    %6772 = vmatprep.subr.mxu0 %v4451
    %6773 = vmatpush1.msra.mxu0 %v4450
    %6774 = vmatprep.subr.mxu0 %v4459
    %6775 = vmatpush1.msra.mxu0 %v4458
    %6776 = vmatprep.subr.mxu0 %v4467
    %6777 = vmatpush1.msra.mxu0 %v4466
    %6778 = vmatprep.subr.mxu0 %v4475
    %6779 = vmatpush1.msra.mxu0 %v4474
    %6780 = vmatprep.subr.mxu0 %v4483
    %6781 = vmatpush1.msra.mxu0 %v4482
    %6782 = vmatprep.subr.mxu0 %v4491
    %6783 = vmatpush1.msra.mxu0 %v4490
    %6784 = vmatprep.subr.mxu0 %v4499
    %6785 = vmatpush1.msra.mxu0 %v4498
    %6786 = vmatprep.subr.mxu0 %v4507
    %6787 = vmatpush1.msra.mxu0 %v4506
    %6788 = vmatprep.subr.mxu0 %v4515
    %6789 = vmatpush1.msra.mxu0 %v4514
    %6790 = vmatprep.subr.mxu0 %v4523
    %6791 = vmatpush1.msra.mxu0 %v4522
    %6792 = vmatprep.subr.mxu0 %v4531
    %6793 = vmatpush1.msra.mxu0 %v4530
    %6794 = vmatprep.subr.mxu0 %v4539
    %6795 = vmatpush1.msra.mxu0 %v4538
    %6796 = vmatprep.subr.mxu0 %v4547
    %6797 = vmatpush1.msra.mxu0 %v4546
    %6798 = vmatprep.subr.mxu0 %v4555
    %6799 = vmatpush1.msra.mxu0 %v4554
    %6800 = vmatprep.subr.mxu0 %v4563
    %6801 = vmatpush1.msra.mxu0 %v4562
    %6802 = vmatprep.subr.mxu0 %v4571
    %6803 = vmatpush1.msra.mxu0 %v4570
    %6804 = vmatprep.subr.mxu0 %v4579
    %6805 = vmatpush1.msra.mxu0 %v4578
    %6806 = vmatprep.subr.mxu0 %v4587
    %6807 = vmatpush1.msra.mxu0 %v4586
    %6808 = vmatprep.subr.mxu0 %v4595
    %6809 = vmatpush1.msra.mxu0 %v4594
    %6810 = vmatprep.subr.mxu0 %v4603
    %6811 = vmatpush1.msra.mxu0 %v4602
    %6812 = vmatprep.subr.mxu0 %v4611
    %6813 = vmatpush1.msra.mxu0 %v4610
    %6814 = vmatprep.subr.mxu0 %v4619
    %6815 = vmatpush1.msra.mxu0 %v4618
    %6816 = vmatprep.subr.mxu0 %v4627
    %6817 = vmatpush1.msra.mxu0 %v4626
    %6818 = vmatprep.subr.mxu0 %v4635
    %6819 = vmatpush1.msra.mxu0 %v4634
    %6820 = vmatprep.subr.mxu0 %v4643
    %6821 = vmatpush1.msra.mxu0 %v4642
    %6822 = vmatprep.subr.mxu0 %v4651
    %6823 = vmatpush1.msra.mxu0 %v4650
    %6824 = vmatprep.subr.mxu0 %v4659
    %6825 = vmatpush1.msra.mxu0 %v4658
    %6826 = vmatprep.subr.mxu0 %v4667
    %6827 = vmatpush1.msra.mxu0 %v4666
    %6828 = vmatprep.subr.mxu0 %v4675
    %6829 = vmatpush1.msra.mxu0 %v4674
    %6830 = vmatprep.subr.mxu0 %v4683
    %6831 = vmatpush1.msra.mxu0 %v4682
    %6832 = vmatprep.subr.mxu0 %v4691
    %6833 = vmatpush1.msra.mxu0 %v4690
    %6834 = vmatprep.subr.mxu0 %v4699
    %6835 = vmatpush1.msra.mxu0 %v4698
    %6836 = vmatprep.mubr.f32.mxu0 %v5815
    %6837 = vmatmul.mubr.f32.gmra.mrb[0].mxu0 %v5814
    %v6838 = vpop.f32.mrb[0].mxu0
    %v6839 = vadd.f32 %v6768, %v6838
    %v6840 = vpop.f32.mrb[0].mxu0
    %v6841 = vadd.f32 %v6770, %v6840
    %6842 = vdwg.mxu0
    %v6843 = vxor.u32 %v6413, 2147483648
    %v6844 = vxor.u32 %v6415, 2147483648
    %v6845 = vmul.f32 %v6843, 1.442695
    %v6846 = vpow.pop %v6845
    %v6847 = vmul.f32 %v6844, 1.442695
    %v6848 = vpow.pop %v6847
    %v6849 = vadd.f32 %v6846, 1.0
    %v6850 = vadd.f32 %v6848, 1.0
    %v6851 = vrcp.pop %v6849
    %v6852 = vmul.f32 1.0, %v6851
    %v6853 = vrcp.pop %v6850
    %v6854 = vmul.f32 1.0, %v6853
    %v6855 = vxor.u32 %v6555, 2147483648
    %v6856 = vxor.u32 %v6557, 2147483648
    %v6857 = vmul.f32 %v6855, 1.442695
    %v6858 = vpow.pop %v6857
    %v6859 = vmul.f32 %v6856, 1.442695
    %v6860 = vpow.pop %v6859
    %v6861 = vadd.f32 %v6858, 1.0
    %v6862 = vadd.f32 %v6860, 1.0
    %v6863 = vrcp.pop %v6861
    %v6864 = vmul.f32 1.0, %v6863
    %v6865 = vrcp.pop %v6862
    %v6866 = vmul.f32 1.0, %v6865
    %v6867 = vtanh.pop %v6697
    %v6868 = vtanh.pop %v6699
    %v6869 = vxor.u32 %v6839, 2147483648
    %v6870 = vxor.u32 %v6841, 2147483648
    %v6871 = vmul.f32 %v6869, 1.442695
    %v6872 = vpow.pop %v6871
    %v6873 = vmul.f32 %v6870, 1.442695
    %v6874 = vpow.pop %v6873
    %v6875 = vadd.f32 %v6872, 1.0
    %v6876 = vadd.f32 %v6874, 1.0
    %v6877 = vrcp.pop %v6875
    %v6878 = vmul.f32 1.0, %v6877
    %v6879 = vrcp.pop %v6876
    %v6880 = vmul.f32 1.0, %v6879
    %v6881 = vmul.f32 %v6864, %v5810
    %v6882 = vmul.f32 %v6866, %v5811
    %v6883 = vmul.f32 %v6852, %v6867
    %v6884 = vmul.f32 %v6854, %v6868
    %v6885 = vadd.f32 %v6881, %v6883
    %v6886 = vadd.f32 %v6882, %v6884
    %v6887 = vtanh.pop %v6885
    %v6888 = vtanh.pop %v6886
    %v6889 = vmul.f32 %v6878, %v6887
    %v6890 = vmul.f32 %v6880, %v6888
    %s6891 = scalar_lea.vmem [#allocation4], 2
    %v6892 = vld [vmem:[%s6891] ss:$8 sm:$0xf]
    %v6893 = vld [vmem:[%s6891] ss:$8 sm:$0xf0]
    %v6894 = vor.u32 %v6892, %v6893
    %s6895 = scalar_lea.vmem [#allocation4], 66
    %v6896 = vld [vmem:[%s6895] ss:$8 sm:$0xf]
    %v6897 = vld [vmem:[%s6895] ss:$8 sm:$0xf0]
    %v6898 = vor.u32 %v6896, %v6897
    %6899 = vmatprep.subr.mxu0 %v3933
    %6900 = vmatpush1.msra.mxu0 %v3932
    %6901 = vmatprep.subr.mxu0 %v3941
    %6902 = vmatpush1.msra.mxu0 %v3940
    %6903 = vmatprep.subr.mxu0 %v3949
    %6904 = vmatpush1.msra.mxu0 %v3948
    %6905 = vmatprep.subr.mxu0 %v3957
    %6906 = vmatpush1.msra.mxu0 %v3956
    %6907 = vmatprep.subr.mxu0 %v3965
    %6908 = vmatpush1.msra.mxu0 %v3964
    %6909 = vmatprep.subr.mxu0 %v3973
    %6910 = vmatpush1.msra.mxu0 %v3972
    %6911 = vmatprep.subr.mxu0 %v3981
    %6912 = vmatpush1.msra.mxu0 %v3980
    %6913 = vmatprep.subr.mxu0 %v3989
    %6914 = vmatpush1.msra.mxu0 %v3988
    %6915 = vmatprep.subr.mxu0 %v3997
    %6916 = vmatpush1.msra.mxu0 %v3996
    %6917 = vmatprep.subr.mxu0 %v4005
    %6918 = vmatpush1.msra.mxu0 %v4004
    %6919 = vmatprep.subr.mxu0 %v4013
    %6920 = vmatpush1.msra.mxu0 %v4012
    %6921 = vmatprep.subr.mxu0 %v4021
    %6922 = vmatpush1.msra.mxu0 %v4020
    %6923 = vmatprep.subr.mxu0 %v4029
    %6924 = vmatpush1.msra.mxu0 %v4028
    %6925 = vmatprep.subr.mxu0 %v4037
    %6926 = vmatpush1.msra.mxu0 %v4036
    %6927 = vmatprep.subr.mxu0 %v4045
    %6928 = vmatpush1.msra.mxu0 %v4044
    %6929 = vmatprep.subr.mxu0 %v4053
    %6930 = vmatpush1.msra.mxu0 %v4052
    %6931 = vmatprep.subr.mxu0 %v4061
    %6932 = vmatpush1.msra.mxu0 %v4060
    %6933 = vmatprep.subr.mxu0 %v4069
    %6934 = vmatpush1.msra.mxu0 %v4068
    %6935 = vmatprep.subr.mxu0 %v4077
    %6936 = vmatpush1.msra.mxu0 %v4076
    %6937 = vmatprep.subr.mxu0 %v4085
    %6938 = vmatpush1.msra.mxu0 %v4084
    %6939 = vmatprep.subr.mxu0 %v4093
    %6940 = vmatpush1.msra.mxu0 %v4092
    %6941 = vmatprep.subr.mxu0 %v4101
    %6942 = vmatpush1.msra.mxu0 %v4100
    %6943 = vmatprep.subr.mxu0 %v4109
    %6944 = vmatpush1.msra.mxu0 %v4108
    %6945 = vmatprep.subr.mxu0 %v4117
    %6946 = vmatpush1.msra.mxu0 %v4116
    %6947 = vmatprep.subr.mxu0 %v4125
    %6948 = vmatpush1.msra.mxu0 %v4124
    %6949 = vmatprep.subr.mxu0 %v4133
    %6950 = vmatpush1.msra.mxu0 %v4132
    %6951 = vmatprep.subr.mxu0 %v4141
    %6952 = vmatpush1.msra.mxu0 %v4140
    %6953 = vmatprep.subr.mxu0 %v4149
    %6954 = vmatpush1.msra.mxu0 %v4148
    %6955 = vmatprep.subr.mxu0 %v4157
    %6956 = vmatpush1.msra.mxu0 %v4156
    %6957 = vmatprep.subr.mxu0 %v4165
    %6958 = vmatpush1.msra.mxu0 %v4164
    %6959 = vmatprep.subr.mxu0 %v4173
    %6960 = vmatpush1.msra.mxu0 %v4172
    %6961 = vmatprep.subr.mxu0 %v4181
    %6962 = vmatpush1.msra.mxu0 %v4180
    %6963 = vmatprep.mubr.f32.mxu0 %v6272
    %6964 = vmatmul.mubr.f32.gmra.mrb[0].mxu0 %v6265
    %v6965 = vpop.f32.mrb[0].mxu0
    %v6966 = vadd.f32 0.0, %v6965
    %v6967 = vpop.f32.mrb[0].mxu0
    %v6968 = vadd.f32 0.0, %v6967
    %6969 = vdwg.mxu0
    %6970 = vmatprep.subr.mxu0 %v3935
    %6971 = vmatpush1.msra.mxu0 %v3934
    %6972 = vmatprep.subr.mxu0 %v3943
    %6973 = vmatpush1.msra.mxu0 %v3942
    %6974 = vmatprep.subr.mxu0 %v3951
    %6975 = vmatpush1.msra.mxu0 %v3950
    %6976 = vmatprep.subr.mxu0 %v3959
    %6977 = vmatpush1.msra.mxu0 %v3958
    %6978 = vmatprep.subr.mxu0 %v3967
    %6979 = vmatpush1.msra.mxu0 %v3966
    %6980 = vmatprep.subr.mxu0 %v3975
    %6981 = vmatpush1.msra.mxu0 %v3974
    %6982 = vmatprep.subr.mxu0 %v3983
    %6983 = vmatpush1.msra.mxu0 %v3982
    %6984 = vmatprep.subr.mxu0 %v3991
    %6985 = vmatpush1.msra.mxu0 %v3990
    %6986 = vmatprep.subr.mxu0 %v3999
    %6987 = vmatpush1.msra.mxu0 %v3998
    %6988 = vmatprep.subr.mxu0 %v4007
    %6989 = vmatpush1.msra.mxu0 %v4006
    %6990 = vmatprep.subr.mxu0 %v4015
    %6991 = vmatpush1.msra.mxu0 %v4014
    %6992 = vmatprep.subr.mxu0 %v4023
    %6993 = vmatpush1.msra.mxu0 %v4022
    %6994 = vmatprep.subr.mxu0 %v4031
    %6995 = vmatpush1.msra.mxu0 %v4030
    %6996 = vmatprep.subr.mxu0 %v4039
    %6997 = vmatpush1.msra.mxu0 %v4038
    %6998 = vmatprep.subr.mxu0 %v4047
    %6999 = vmatpush1.msra.mxu0 %v4046
    %7000 = vmatprep.subr.mxu0 %v4055
    %7001 = vmatpush1.msra.mxu0 %v4054
    %7002 = vmatprep.subr.mxu0 %v4063
    %7003 = vmatpush1.msra.mxu0 %v4062
    %7004 = vmatprep.subr.mxu0 %v4071
    %7005 = vmatpush1.msra.mxu0 %v4070
    %7006 = vmatprep.subr.mxu0 %v4079
    %7007 = vmatpush1.msra.mxu0 %v4078
    %7008 = vmatprep.subr.mxu0 %v4087
    %7009 = vmatpush1.msra.mxu0 %v4086
    %7010 = vmatprep.subr.mxu0 %v4095
    %7011 = vmatpush1.msra.mxu0 %v4094
    %7012 = vmatprep.subr.mxu0 %v4103
    %7013 = vmatpush1.msra.mxu0 %v4102
    %7014 = vmatprep.subr.mxu0 %v4111
    %7015 = vmatpush1.msra.mxu0 %v4110
    %7016 = vmatprep.subr.mxu0 %v4119
    %7017 = vmatpush1.msra.mxu0 %v4118
    %7018 = vmatprep.subr.mxu0 %v4127
    %7019 = vmatpush1.msra.mxu0 %v4126
    %7020 = vmatprep.subr.mxu0 %v4135
    %7021 = vmatpush1.msra.mxu0 %v4134
    %7022 = vmatprep.subr.mxu0 %v4143
    %7023 = vmatpush1.msra.mxu0 %v4142
    %7024 = vmatprep.subr.mxu0 %v4151
    %7025 = vmatpush1.msra.mxu0 %v4150
    %7026 = vmatprep.subr.mxu0 %v4159
    %7027 = vmatpush1.msra.mxu0 %v4158
    %7028 = vmatprep.subr.mxu0 %v4167
    %7029 = vmatpush1.msra.mxu0 %v4166
    %7030 = vmatprep.subr.mxu0 %v4175
    %7031 = vmatpush1.msra.mxu0 %v4174
    %7032 = vmatprep.subr.mxu0 %v4183
    %7033 = vmatpush1.msra.mxu0 %v4182
    %7034 = vmatprep.mubr.f32.mxu0 %v6272
    %7035 = vmatmul.mubr.f32.gmra.mrb[0].mxu0 %v6265
    %v7036 = vpop.f32.mrb[0].mxu0
    %v7037 = vadd.f32 0.0, %v7036
    %v7038 = vpop.f32.mrb[0].mxu0
    %v7039 = vadd.f32 0.0, %v7038
    %7040 = vdwg.mxu0
    %7041 = vmatprep.subr.mxu0 %v3937
    %7042 = vmatpush1.msra.mxu0 %v3936
    %7043 = vmatprep.subr.mxu0 %v3945
    %7044 = vmatpush1.msra.mxu0 %v3944
    %7045 = vmatprep.subr.mxu0 %v3953
    %7046 = vmatpush1.msra.mxu0 %v3952
    %7047 = vmatprep.subr.mxu0 %v3961
    %7048 = vmatpush1.msra.mxu0 %v3960
    %7049 = vmatprep.subr.mxu0 %v3969
    %7050 = vmatpush1.msra.mxu0 %v3968
    %7051 = vmatprep.subr.mxu0 %v3977
    %7052 = vmatpush1.msra.mxu0 %v3976
    %7053 = vmatprep.subr.mxu0 %v3985
    %7054 = vmatpush1.msra.mxu0 %v3984
    %7055 = vmatprep.subr.mxu0 %v3993
    %7056 = vmatpush1.msra.mxu0 %v3992
    %7057 = vmatprep.subr.mxu0 %v4001
    %7058 = vmatpush1.msra.mxu0 %v4000
    %7059 = vmatprep.subr.mxu0 %v4009
    %7060 = vmatpush1.msra.mxu0 %v4008
    %7061 = vmatprep.subr.mxu0 %v4017
    %7062 = vmatpush1.msra.mxu0 %v4016
    %7063 = vmatprep.subr.mxu0 %v4025
    %7064 = vmatpush1.msra.mxu0 %v4024
    %7065 = vmatprep.subr.mxu0 %v4033
    %7066 = vmatpush1.msra.mxu0 %v4032
    %7067 = vmatprep.subr.mxu0 %v4041
    %7068 = vmatpush1.msra.mxu0 %v4040
    %7069 = vmatprep.subr.mxu0 %v4049
    %7070 = vmatpush1.msra.mxu0 %v4048
    %7071 = vmatprep.subr.mxu0 %v4057
    %7072 = vmatpush1.msra.mxu0 %v4056
    %7073 = vmatprep.subr.mxu0 %v4065
    %7074 = vmatpush1.msra.mxu0 %v4064
    %7075 = vmatprep.subr.mxu0 %v4073
    %7076 = vmatpush1.msra.mxu0 %v4072
    %7077 = vmatprep.subr.mxu0 %v4081
    %7078 = vmatpush1.msra.mxu0 %v4080
    %7079 = vmatprep.subr.mxu0 %v4089
    %7080 = vmatpush1.msra.mxu0 %v4088
    %7081 = vmatprep.subr.mxu0 %v4097
    %7082 = vmatpush1.msra.mxu0 %v4096
    %7083 = vmatprep.subr.mxu0 %v4105
    %7084 = vmatpush1.msra.mxu0 %v4104
    %7085 = vmatprep.subr.mxu0 %v4113
    %7086 = vmatpush1.msra.mxu0 %v4112
    %7087 = vmatprep.subr.mxu0 %v4121
    %7088 = vmatpush1.msra.mxu0 %v4120
    %7089 = vmatprep.subr.mxu0 %v4129
    %7090 = vmatpush1.msra.mxu0 %v4128
    %7091 = vmatprep.subr.mxu0 %v4137
    %7092 = vmatpush1.msra.mxu0 %v4136
    %7093 = vmatprep.subr.mxu0 %v4145
    %7094 = vmatpush1.msra.mxu0 %v4144
    %7095 = vmatprep.subr.mxu0 %v4153
    %7096 = vmatpush1.msra.mxu0 %v4152
    %7097 = vmatprep.subr.mxu0 %v4161
    %7098 = vmatpush1.msra.mxu0 %v4160
    %7099 = vmatprep.subr.mxu0 %v4169
    %7100 = vmatpush1.msra.mxu0 %v4168
    %7101 = vmatprep.subr.mxu0 %v4177
    %7102 = vmatpush1.msra.mxu0 %v4176
    %7103 = vmatprep.subr.mxu0 %v4185
    %7104 = vmatpush1.msra.mxu0 %v4184
    %7105 = vmatprep.mubr.f32.mxu0 %v6272
    %7106 = vmatmul.mubr.f32.gmra.mrb[0].mxu0 %v6265
    %v7107 = vpop.f32.mrb[0].mxu0
    %v7108 = vadd.f32 0.0, %v7107
    %v7109 = vpop.f32.mrb[0].mxu0
    %v7110 = vadd.f32 0.0, %v7109
    %7111 = vdwg.mxu0
    %7112 = vmatprep.subr.mxu0 %v3939
    %7113 = vmatpush1.msra.mxu0 %v3938
    %7114 = vmatprep.subr.mxu0 %v3947
    %7115 = vmatpush1.msra.mxu0 %v3946
    %7116 = vmatprep.subr.mxu0 %v3955
    %7117 = vmatpush1.msra.mxu0 %v3954
    %7118 = vmatprep.subr.mxu0 %v3963
    %7119 = vmatpush1.msra.mxu0 %v3962
    %7120 = vmatprep.subr.mxu0 %v3971
    %7121 = vmatpush1.msra.mxu0 %v3970
    %7122 = vmatprep.subr.mxu0 %v3979
    %7123 = vmatpush1.msra.mxu0 %v3978
    %7124 = vmatprep.subr.mxu0 %v3987
    %7125 = vmatpush1.msra.mxu0 %v3986
    %7126 = vmatprep.subr.mxu0 %v3995
    %7127 = vmatpush1.msra.mxu0 %v3994
    %7128 = vmatprep.subr.mxu0 %v4003
    %7129 = vmatpush1.msra.mxu0 %v4002
    %7130 = vmatprep.subr.mxu0 %v4011
    %7131 = vmatpush1.msra.mxu0 %v4010
    %7132 = vmatprep.subr.mxu0 %v4019
    %7133 = vmatpush1.msra.mxu0 %v4018
    %7134 = vmatprep.subr.mxu0 %v4027
    %7135 = vmatpush1.msra.mxu0 %v4026
    %7136 = vmatprep.subr.mxu0 %v4035
    %7137 = vmatpush1.msra.mxu0 %v4034
    %7138 = vmatprep.subr.mxu0 %v4043
    %7139 = vmatpush1.msra.mxu0 %v4042
    %7140 = vmatprep.subr.mxu0 %v4051
    %7141 = vmatpush1.msra.mxu0 %v4050
    %7142 = vmatprep.subr.mxu0 %v4059
    %7143 = vmatpush1.msra.mxu0 %v4058
    %7144 = vmatprep.subr.mxu0 %v4067
    %7145 = vmatpush1.msra.mxu0 %v4066
    %7146 = vmatprep.subr.mxu0 %v4075
    %7147 = vmatpush1.msra.mxu0 %v4074
    %7148 = vmatprep.subr.mxu0 %v4083
    %7149 = vmatpush1.msra.mxu0 %v4082
    %7150 = vmatprep.subr.mxu0 %v4091
    %7151 = vmatpush1.msra.mxu0 %v4090
    %7152 = vmatprep.subr.mxu0 %v4099
    %7153 = vmatpush1.msra.mxu0 %v4098
    %7154 = vmatprep.subr.mxu0 %v4107
    %7155 = vmatpush1.msra.mxu0 %v4106
    %7156 = vmatprep.subr.mxu0 %v4115
    %7157 = vmatpush1.msra.mxu0 %v4114
    %7158 = vmatprep.subr.mxu0 %v4123
    %7159 = vmatpush1.msra.mxu0 %v4122
    %7160 = vmatprep.subr.mxu0 %v4131
    %7161 = vmatpush1.msra.mxu0 %v4130
    %7162 = vmatprep.subr.mxu0 %v4139
    %7163 = vmatpush1.msra.mxu0 %v4138
    %7164 = vmatprep.subr.mxu0 %v4147
    %7165 = vmatpush1.msra.mxu0 %v4146
    %7166 = vmatprep.subr.mxu0 %v4155
    %7167 = vmatpush1.msra.mxu0 %v4154
    %7168 = vmatprep.subr.mxu0 %v4163
    %7169 = vmatpush1.msra.mxu0 %v4162
    %7170 = vmatprep.subr.mxu0 %v4171
    %7171 = vmatpush1.msra.mxu0 %v4170
    %7172 = vmatprep.subr.mxu0 %v4179
    %7173 = vmatpush1.msra.mxu0 %v4178
    %7174 = vmatprep.subr.mxu0 %v4187
    %7175 = vmatpush1.msra.mxu0 %v4186
    %7176 = vmatprep.mubr.f32.mxu0 %v6272
    %7177 = vmatmul.mubr.f32.gmra.mrb[0].mxu0 %v6265
    %v7178 = vpop.f32.mrb[0].mxu0
    %v7179 = vadd.f32 0.0, %v7178
    %v7180 = vpop.f32.mrb[0].mxu0
    %v7181 = vadd.f32 0.0, %v7180
    %7182 = vdwg.mxu0
    %v7191 = vcombine.low %v6966, %v6968
    %v7192 = vcombine.low %v7037, %v7039
    %v7193 = vcombine.low %v7108, %v7110
    %v7194 = vcombine.low %v7179, %v7181
    %v7196 = vunpack.c.l.s4 1966171168
    %v7197 = vunpack.c.0.s8 %v7196
    %v7198 = vlaneseq
    %v7199 = vshrl.u32 %v7198, 7
    %v7200 = vsub.s32 %v7197, %v7199
    %v7201 = vrot.slane %v7191, %v7200
    %v7203 = vunpack.c.l.s4 1966171168
    %v7204 = vunpack.c.0.s8 %v7203
    %v7205 = vlaneseq
    %v7206 = vshrl.u32 %v7205, 7
    %v7207 = vsub.s32 %v7204, %v7206
    %v7208 = vrot.slane %v7192, %v7207
    %v7210 = vunpack.c.l.s4 1966171168
    %v7211 = vunpack.c.0.s8 %v7210
    %v7212 = vlaneseq
    %v7213 = vshrl.u32 %v7212, 7
    %v7214 = vsub.s32 %v7211, %v7213
    %v7215 = vrot.slane %v7193, %v7214
    %v7217 = vunpack.c.l.s4 1966171168
    %v7218 = vunpack.c.0.s8 %v7217
    %v7219 = vlaneseq
    %v7220 = vshrl.u32 %v7219, 7
    %v7221 = vsub.s32 %v7218, %v7220
    %v7222 = vrot.slane %v7194, %v7221
    %v7223 = vcombine.low %v7201, %v7208
    %v7224 = vcombine.high %v7201, %v7208
    %v7225 = vcombine.low %v7215, %v7222
    %v7226 = vcombine.high %v7215, %v7222
    %v7228 = vunpack.c.l.s4 1966171168
    %v7229 = vunpack.c.0.s8 %v7228
    %v7230 = vlaneseq
    %v7231 = vshrl.u32 %v7230, 7
    %v7232 = vsub.s32 %v7229, %v7231
    %v7233 = vrot.slane %v7223, %v7232
    %v7235 = vunpack.c.l.s4 1966171168
    %v7236 = vunpack.c.0.s8 %v7235
    %v7237 = vlaneseq
    %v7238 = vshrl.u32 %v7237, 7
    %v7239 = vsub.s32 %v7236, %v7238
    %v7240 = vrot.slane %v7224, %v7239
    %v7242 = vunpack.c.l.s4 1966171168
    %v7243 = vunpack.c.0.s8 %v7242
    %v7244 = vlaneseq
    %v7245 = vshrl.u32 %v7244, 7
    %v7246 = vsub.s32 %v7243, %v7245
    %v7247 = vrot.slane %v7225, %v7246
    %v7249 = vunpack.c.l.s4 1966171168
    %v7250 = vunpack.c.0.s8 %v7249
    %v7251 = vlaneseq
    %v7252 = vshrl.u32 %v7251, 7
    %v7253 = vsub.s32 %v7250, %v7252
    %v7254 = vrot.slane %v7226, %v7253
    %v7255 = vcombine.low %v7233, %v7247
    %v7256 = vcombine.low %v7240, %v7254
    %v7259 = vadd.f32 %v6894, %v7255
    %v7260 = vadd.f32 %v6898, %v7256
    %v7261 = vxor.u32 %v7259, 2147483648
    %v7262 = vxor.u32 %v7260, 2147483648
    %v7263 = vmul.f32 %v7261, 1.442695
    %v7264 = vpow.pop %v7263
    %v7265 = vmul.f32 %v7262, 1.442695
    %v7266 = vpow.pop %v7265
    %v7267 = vadd.f32 %v7264, 1.0
    %v7268 = vadd.f32 %v7266, 1.0
    %v7269 = vrcp.pop %v7267
    %v7270 = vmul.f32 1.0, %v7269
    %v7271 = vrcp.pop %v7268
    %v7272 = vmul.f32 1.0, %v7271
    %v7275 = vrot.slane %v7259, 2
    %v7276 = vrot.slane %v7260, 2
    %v7279 = vxor.u32 %v7275, 2147483648
    %v7280 = vxor.u32 %v7276, 2147483648
    %v7281 = vmul.f32 %v7279, 1.442695
    %v7282 = vpow.pop %v7281
    %v7283 = vmul.f32 %v7280, 1.442695
    %v7284 = vpow.pop %v7283
    %v7285 = vadd.f32 %v7282, 1.0
    %v7286 = vadd.f32 %v7284, 1.0
    %v7287 = vrcp.pop %v7285
    %v7288 = vmul.f32 1.0, %v7287
    %v7289 = vrcp.pop %v7286
    %v7290 = vmul.f32 1.0, %v7289
    %v7291 = vrot.slane %v7259, 4
    %v7292 = vrot.slane %v7260, 4
    %v7295 = vtanh.pop %v7291
    %v7296 = vtanh.pop %v7292
    %v7297 = vrot.slane %v7259, 6
    %v7298 = vrot.slane %v7260, 6
    %v7301 = vxor.u32 %v7297, 2147483648
    %v7302 = vxor.u32 %v7298, 2147483648
    %v7303 = vmul.f32 %v7301, 1.442695
    %v7304 = vpow.pop %v7303
    %v7305 = vmul.f32 %v7302, 1.442695
    %v7306 = vpow.pop %v7305
    %v7307 = vadd.f32 %v7304, 1.0
    %v7308 = vadd.f32 %v7306, 1.0
    %v7309 = vrcp.pop %v7307
    %v7310 = vmul.f32 1.0, %v7309
    %v7311 = vrcp.pop %v7308
    %v7312 = vmul.f32 1.0, %v7311
    %v7313 = vmul.f32 %v7288, %v6242
    %v7314 = vmul.f32 %v7290, %v6243
    %v7315 = vmul.f32 %v7270, %v7295
    %v7316 = vmul.f32 %v7272, %v7296
    %v7317 = vadd.f32 %v7313, %v7315
    %v7318 = vadd.f32 %v7314, %v7316
    %v7319 = vtanh.pop %v7317
    %v7320 = vtanh.pop %v7318
    %v7321 = vmul.f32 %v7310, %v7319
    %v7322 = vmul.f32 %v7312, %v7320
    %v7325 = vcombine.low %v7321, %v7322
    %v7327 = vunpack.c.l.s4 1966171168
    %v7328 = vunpack.c.0.s8 %v7327
    %v7329 = vlaneseq
    %v7330 = vshrl.u32 %v7329, 7
    %v7331 = vsub.s32 %v7328, %v7330
    %v7332 = vrot.slane %v7325, %v7331
    %v7333 = vcombine.high %v7332, %v7332
    %v7335 = vunpack.c.l.s4 1966171168
    %v7336 = vunpack.c.0.s8 %v7335
    %v7337 = vlaneseq
    %v7338 = vshrl.u32 %v7337, 7
    %v7339 = vsub.s32 %v7336, %v7338
    %v7340 = vrot.slane %v7332, %v7339
    %v7342 = vunpack.c.l.s4 1966171168
    %v7343 = vunpack.c.0.s8 %v7342
    %v7344 = vlaneseq
    %v7345 = vshrl.u32 %v7344, 7
    %v7346 = vsub.s32 %v7343, %v7345
    %v7347 = vrot.slane %v7333, %v7346
    %7350 = vmatprep.subr.mxu0 %v4189
    %7351 = vmatpush1.msra.mxu0 %v4188
    %7352 = vmatprep.subr.mxu0 %v4197
    %7353 = vmatpush1.msra.mxu0 %v4196
    %7354 = vmatprep.subr.mxu0 %v4205
    %7355 = vmatpush1.msra.mxu0 %v4204
    %7356 = vmatprep.subr.mxu0 %v4213
    %7357 = vmatpush1.msra.mxu0 %v4212
    %7358 = vmatprep.subr.mxu0 %v4221
    %7359 = vmatpush1.msra.mxu0 %v4220
    %7360 = vmatprep.subr.mxu0 %v4229
    %7361 = vmatpush1.msra.mxu0 %v4228
    %7362 = vmatprep.subr.mxu0 %v4237
    %7363 = vmatpush1.msra.mxu0 %v4236
    %7364 = vmatprep.subr.mxu0 %v4245
    %7365 = vmatpush1.msra.mxu0 %v4244
    %7366 = vmatprep.subr.mxu0 %v4253
    %7367 = vmatpush1.msra.mxu0 %v4252
    %7368 = vmatprep.subr.mxu0 %v4261
    %7369 = vmatpush1.msra.mxu0 %v4260
    %7370 = vmatprep.subr.mxu0 %v4269
    %7371 = vmatpush1.msra.mxu0 %v4268
    %7372 = vmatprep.subr.mxu0 %v4277
    %7373 = vmatpush1.msra.mxu0 %v4276
    %7374 = vmatprep.subr.mxu0 %v4285
    %7375 = vmatpush1.msra.mxu0 %v4284
    %7376 = vmatprep.subr.mxu0 %v4293
    %7377 = vmatpush1.msra.mxu0 %v4292
    %7378 = vmatprep.subr.mxu0 %v4301
    %7379 = vmatpush1.msra.mxu0 %v4300
    %7380 = vmatprep.subr.mxu0 %v4309
    %7381 = vmatpush1.msra.mxu0 %v4308
    %7382 = vmatprep.subr.mxu0 %v4317
    %7383 = vmatpush1.msra.mxu0 %v4316
    %7384 = vmatprep.subr.mxu0 %v4325
    %7385 = vmatpush1.msra.mxu0 %v4324
    %7386 = vmatprep.subr.mxu0 %v4333
    %7387 = vmatpush1.msra.mxu0 %v4332
    %7388 = vmatprep.subr.mxu0 %v4341
    %7389 = vmatpush1.msra.mxu0 %v4340
    %7390 = vmatprep.subr.mxu0 %v4349
    %7391 = vmatpush1.msra.mxu0 %v4348
    %7392 = vmatprep.subr.mxu0 %v4357
    %7393 = vmatpush1.msra.mxu0 %v4356
    %7394 = vmatprep.subr.mxu0 %v4365
    %7395 = vmatpush1.msra.mxu0 %v4364
    %7396 = vmatprep.subr.mxu0 %v4373
    %7397 = vmatpush1.msra.mxu0 %v4372
    %7398 = vmatprep.subr.mxu0 %v4381
    %7399 = vmatpush1.msra.mxu0 %v4380
    %7400 = vmatprep.subr.mxu0 %v4389
    %7401 = vmatpush1.msra.mxu0 %v4388
    %7402 = vmatprep.subr.mxu0 %v4397
    %7403 = vmatpush1.msra.mxu0 %v4396
    %7404 = vmatprep.subr.mxu0 %v4405
    %7405 = vmatpush1.msra.mxu0 %v4404
    %7406 = vmatprep.subr.mxu0 %v4413
    %7407 = vmatpush1.msra.mxu0 %v4412
    %7408 = vmatprep.subr.mxu0 %v4421
    %7409 = vmatpush1.msra.mxu0 %v4420
    %7410 = vmatprep.subr.mxu0 %v4429
    %7411 = vmatpush1.msra.mxu0 %v4428
    %7412 = vmatprep.subr.mxu0 %v4437
    %7413 = vmatpush1.msra.mxu0 %v4436
    %7414 = vmatprep.mubr.f32.mxu0 %v7347
    %7415 = vmatmul.mubr.f32.gmra.mrb[0].mxu0 %v7340
    %v7416 = vpop.f32.mrb[0].mxu0
    %v7417 = vadd.f32 %v4705, %v7416
    %v7418 = vpop.f32.mrb[0].mxu0
    %v7419 = vadd.f32 %v4709, %v7418
    %7420 = vdwg.mxu0
    %7421 = vmatprep.subr.mxu0 %v4445
    %7422 = vmatpush1.msra.mxu0 %v4444
    %7423 = vmatprep.subr.mxu0 %v4453
    %7424 = vmatpush1.msra.mxu0 %v4452
    %7425 = vmatprep.subr.mxu0 %v4461
    %7426 = vmatpush1.msra.mxu0 %v4460
    %7427 = vmatprep.subr.mxu0 %v4469
    %7428 = vmatpush1.msra.mxu0 %v4468
    %7429 = vmatprep.subr.mxu0 %v4477
    %7430 = vmatpush1.msra.mxu0 %v4476
    %7431 = vmatprep.subr.mxu0 %v4485
    %7432 = vmatpush1.msra.mxu0 %v4484
    %7433 = vmatprep.subr.mxu0 %v4493
    %7434 = vmatpush1.msra.mxu0 %v4492
    %7435 = vmatprep.subr.mxu0 %v4501
    %7436 = vmatpush1.msra.mxu0 %v4500
    %7437 = vmatprep.subr.mxu0 %v4509
    %7438 = vmatpush1.msra.mxu0 %v4508
    %7439 = vmatprep.subr.mxu0 %v4517
    %7440 = vmatpush1.msra.mxu0 %v4516
    %7441 = vmatprep.subr.mxu0 %v4525
    %7442 = vmatpush1.msra.mxu0 %v4524
    %7443 = vmatprep.subr.mxu0 %v4533
    %7444 = vmatpush1.msra.mxu0 %v4532
    %7445 = vmatprep.subr.mxu0 %v4541
    %7446 = vmatpush1.msra.mxu0 %v4540
    %7447 = vmatprep.subr.mxu0 %v4549
    %7448 = vmatpush1.msra.mxu0 %v4548
    %7449 = vmatprep.subr.mxu0 %v4557
    %7450 = vmatpush1.msra.mxu0 %v4556
    %7451 = vmatprep.subr.mxu0 %v4565
    %7452 = vmatpush1.msra.mxu0 %v4564
    %7453 = vmatprep.subr.mxu0 %v4573
    %7454 = vmatpush1.msra.mxu0 %v4572
    %7455 = vmatprep.subr.mxu0 %v4581
    %7456 = vmatpush1.msra.mxu0 %v4580
    %7457 = vmatprep.subr.mxu0 %v4589
    %7458 = vmatpush1.msra.mxu0 %v4588
    %7459 = vmatprep.subr.mxu0 %v4597
    %7460 = vmatpush1.msra.mxu0 %v4596
    %7461 = vmatprep.subr.mxu0 %v4605
    %7462 = vmatpush1.msra.mxu0 %v4604
    %7463 = vmatprep.subr.mxu0 %v4613
    %7464 = vmatpush1.msra.mxu0 %v4612
    %7465 = vmatprep.subr.mxu0 %v4621
    %7466 = vmatpush1.msra.mxu0 %v4620
    %7467 = vmatprep.subr.mxu0 %v4629
    %7468 = vmatpush1.msra.mxu0 %v4628
    %7469 = vmatprep.subr.mxu0 %v4637
    %7470 = vmatpush1.msra.mxu0 %v4636
    %7471 = vmatprep.subr.mxu0 %v4645
    %7472 = vmatpush1.msra.mxu0 %v4644
    %7473 = vmatprep.subr.mxu0 %v4653
    %7474 = vmatpush1.msra.mxu0 %v4652
    %7475 = vmatprep.subr.mxu0 %v4661
    %7476 = vmatpush1.msra.mxu0 %v4660
    %7477 = vmatprep.subr.mxu0 %v4669
    %7478 = vmatpush1.msra.mxu0 %v4668
    %7479 = vmatprep.subr.mxu0 %v4677
    %7480 = vmatpush1.msra.mxu0 %v4676
    %7481 = vmatprep.subr.mxu0 %v4685
    %7482 = vmatpush1.msra.mxu0 %v4684
    %7483 = vmatprep.subr.mxu0 %v4693
    %7484 = vmatpush1.msra.mxu0 %v4692
    %7485 = vmatprep.mubr.f32.mxu0 %v6890
    %7486 = vmatmul.mubr.f32.gmra.mrb[0].mxu0 %v6889
    %v7487 = vpop.f32.mrb[0].mxu0
    %v7488 = vadd.f32 %v7417, %v7487
    %v7489 = vpop.f32.mrb[0].mxu0
    %v7490 = vadd.f32 %v7419, %v7489
    %7491 = vdwg.mxu0
    %7492 = vmatprep.subr.mxu0 %v4191
    %7493 = vmatpush1.msra.mxu0 %v4190
    %7494 = vmatprep.subr.mxu0 %v4199
    %7495 = vmatpush1.msra.mxu0 %v4198
    %7496 = vmatprep.subr.mxu0 %v4207
    %7497 = vmatpush1.msra.mxu0 %v4206
    %7498 = vmatprep.subr.mxu0 %v4215
    %7499 = vmatpush1.msra.mxu0 %v4214
    %7500 = vmatprep.subr.mxu0 %v4223
    %7501 = vmatpush1.msra.mxu0 %v4222
    %7502 = vmatprep.subr.mxu0 %v4231
    %7503 = vmatpush1.msra.mxu0 %v4230
    %7504 = vmatprep.subr.mxu0 %v4239
    %7505 = vmatpush1.msra.mxu0 %v4238
    %7506 = vmatprep.subr.mxu0 %v4247
    %7507 = vmatpush1.msra.mxu0 %v4246
    %7508 = vmatprep.subr.mxu0 %v4255
    %7509 = vmatpush1.msra.mxu0 %v4254
    %7510 = vmatprep.subr.mxu0 %v4263
    %7511 = vmatpush1.msra.mxu0 %v4262
    %7512 = vmatprep.subr.mxu0 %v4271
    %7513 = vmatpush1.msra.mxu0 %v4270
    %7514 = vmatprep.subr.mxu0 %v4279
    %7515 = vmatpush1.msra.mxu0 %v4278
    %7516 = vmatprep.subr.mxu0 %v4287
    %7517 = vmatpush1.msra.mxu0 %v4286
    %7518 = vmatprep.subr.mxu0 %v4295
    %7519 = vmatpush1.msra.mxu0 %v4294
    %7520 = vmatprep.subr.mxu0 %v4303
    %7521 = vmatpush1.msra.mxu0 %v4302
    %7522 = vmatprep.subr.mxu0 %v4311
    %7523 = vmatpush1.msra.mxu0 %v4310
    %7524 = vmatprep.subr.mxu0 %v4319
    %7525 = vmatpush1.msra.mxu0 %v4318
    %7526 = vmatprep.subr.mxu0 %v4327
    %7527 = vmatpush1.msra.mxu0 %v4326
    %7528 = vmatprep.subr.mxu0 %v4335
    %7529 = vmatpush1.msra.mxu0 %v4334
    %7530 = vmatprep.subr.mxu0 %v4343
    %7531 = vmatpush1.msra.mxu0 %v4342
    %7532 = vmatprep.subr.mxu0 %v4351
    %7533 = vmatpush1.msra.mxu0 %v4350
    %7534 = vmatprep.subr.mxu0 %v4359
    %7535 = vmatpush1.msra.mxu0 %v4358
    %7536 = vmatprep.subr.mxu0 %v4367
    %7537 = vmatpush1.msra.mxu0 %v4366
    %7538 = vmatprep.subr.mxu0 %v4375
    %7539 = vmatpush1.msra.mxu0 %v4374
    %7540 = vmatprep.subr.mxu0 %v4383
    %7541 = vmatpush1.msra.mxu0 %v4382
    %7542 = vmatprep.subr.mxu0 %v4391
    %7543 = vmatpush1.msra.mxu0 %v4390
    %7544 = vmatprep.subr.mxu0 %v4399
    %7545 = vmatpush1.msra.mxu0 %v4398
    %7546 = vmatprep.subr.mxu0 %v4407
    %7547 = vmatpush1.msra.mxu0 %v4406
    %7548 = vmatprep.subr.mxu0 %v4415
    %7549 = vmatpush1.msra.mxu0 %v4414
    %7550 = vmatprep.subr.mxu0 %v4423
    %7551 = vmatpush1.msra.mxu0 %v4422
    %7552 = vmatprep.subr.mxu0 %v4431
    %7553 = vmatpush1.msra.mxu0 %v4430
    %7554 = vmatprep.subr.mxu0 %v4439
    %7555 = vmatpush1.msra.mxu0 %v4438
    %7556 = vmatprep.mubr.f32.mxu0 %v7347
    %7557 = vmatmul.mubr.f32.gmra.mrb[0].mxu0 %v7340
    %v7558 = vpop.f32.mrb[0].mxu0
    %v7559 = vadd.f32 %v4713, %v7558
    %v7560 = vpop.f32.mrb[0].mxu0
    %v7561 = vadd.f32 %v4717, %v7560
    %7562 = vdwg.mxu0
    %7563 = vmatprep.subr.mxu0 %v4447
    %7564 = vmatpush1.msra.mxu0 %v4446
    %7565 = vmatprep.subr.mxu0 %v4455
    %7566 = vmatpush1.msra.mxu0 %v4454
    %7567 = vmatprep.subr.mxu0 %v4463
    %7568 = vmatpush1.msra.mxu0 %v4462
    %7569 = vmatprep.subr.mxu0 %v4471
    %7570 = vmatpush1.msra.mxu0 %v4470
    %7571 = vmatprep.subr.mxu0 %v4479
    %7572 = vmatpush1.msra.mxu0 %v4478
    %7573 = vmatprep.subr.mxu0 %v4487
    %7574 = vmatpush1.msra.mxu0 %v4486
    %7575 = vmatprep.subr.mxu0 %v4495
    %7576 = vmatpush1.msra.mxu0 %v4494
    %7577 = vmatprep.subr.mxu0 %v4503
    %7578 = vmatpush1.msra.mxu0 %v4502
    %7579 = vmatprep.subr.mxu0 %v4511
    %7580 = vmatpush1.msra.mxu0 %v4510
    %7581 = vmatprep.subr.mxu0 %v4519
    %7582 = vmatpush1.msra.mxu0 %v4518
    %7583 = vmatprep.subr.mxu0 %v4527
    %7584 = vmatpush1.msra.mxu0 %v4526
    %7585 = vmatprep.subr.mxu0 %v4535
    %7586 = vmatpush1.msra.mxu0 %v4534
    %7587 = vmatprep.subr.mxu0 %v4543
    %7588 = vmatpush1.msra.mxu0 %v4542
    %7589 = vmatprep.subr.mxu0 %v4551
    %7590 = vmatpush1.msra.mxu0 %v4550
    %7591 = vmatprep.subr.mxu0 %v4559
    %7592 = vmatpush1.msra.mxu0 %v4558
    %7593 = vmatprep.subr.mxu0 %v4567
    %7594 = vmatpush1.msra.mxu0 %v4566
    %7595 = vmatprep.subr.mxu0 %v4575
    %7596 = vmatpush1.msra.mxu0 %v4574
    %7597 = vmatprep.subr.mxu0 %v4583
    %7598 = vmatpush1.msra.mxu0 %v4582
    %7599 = vmatprep.subr.mxu0 %v4591
    %7600 = vmatpush1.msra.mxu0 %v4590
    %7601 = vmatprep.subr.mxu0 %v4599
    %7602 = vmatpush1.msra.mxu0 %v4598
    %7603 = vmatprep.subr.mxu0 %v4607
    %7604 = vmatpush1.msra.mxu0 %v4606
    %7605 = vmatprep.subr.mxu0 %v4615
    %7606 = vmatpush1.msra.mxu0 %v4614
    %7607 = vmatprep.subr.mxu0 %v4623
    %7608 = vmatpush1.msra.mxu0 %v4622
    %7609 = vmatprep.subr.mxu0 %v4631
    %7610 = vmatpush1.msra.mxu0 %v4630
    %7611 = vmatprep.subr.mxu0 %v4639
    %7612 = vmatpush1.msra.mxu0 %v4638
    %7613 = vmatprep.subr.mxu0 %v4647
    %7614 = vmatpush1.msra.mxu0 %v4646
    %7615 = vmatprep.subr.mxu0 %v4655
    %7616 = vmatpush1.msra.mxu0 %v4654
    %7617 = vmatprep.subr.mxu0 %v4663
    %7618 = vmatpush1.msra.mxu0 %v4662
    %7619 = vmatprep.subr.mxu0 %v4671
    %7620 = vmatpush1.msra.mxu0 %v4670
    %7621 = vmatprep.subr.mxu0 %v4679
    %7622 = vmatpush1.msra.mxu0 %v4678
    %7623 = vmatprep.subr.mxu0 %v4687
    %7624 = vmatpush1.msra.mxu0 %v4686
    %7625 = vmatprep.subr.mxu0 %v4695
    %7626 = vmatpush1.msra.mxu0 %v4694
    %7627 = vmatprep.mubr.f32.mxu0 %v6890
    %7628 = vmatmul.mubr.f32.gmra.mrb[0].mxu0 %v6889
    %v7629 = vpop.f32.mrb[0].mxu0
    %v7630 = vadd.f32 %v7559, %v7629
    %v7631 = vpop.f32.mrb[0].mxu0
    %v7632 = vadd.f32 %v7561, %v7631
    %7633 = vdwg.mxu0
    %7634 = vmatprep.subr.mxu0 %v4193
    %7635 = vmatpush1.msra.mxu0 %v4192
    %7636 = vmatprep.subr.mxu0 %v4201
    %7637 = vmatpush1.msra.mxu0 %v4200
    %7638 = vmatprep.subr.mxu0 %v4209
    %7639 = vmatpush1.msra.mxu0 %v4208
    %7640 = vmatprep.subr.mxu0 %v4217
    %7641 = vmatpush1.msra.mxu0 %v4216
    %7642 = vmatprep.subr.mxu0 %v4225
    %7643 = vmatpush1.msra.mxu0 %v4224
    %7644 = vmatprep.subr.mxu0 %v4233
    %7645 = vmatpush1.msra.mxu0 %v4232
    %7646 = vmatprep.subr.mxu0 %v4241
    %7647 = vmatpush1.msra.mxu0 %v4240
    %7648 = vmatprep.subr.mxu0 %v4249
    %7649 = vmatpush1.msra.mxu0 %v4248
    %7650 = vmatprep.subr.mxu0 %v4257
    %7651 = vmatpush1.msra.mxu0 %v4256
    %7652 = vmatprep.subr.mxu0 %v4265
    %7653 = vmatpush1.msra.mxu0 %v4264
    %7654 = vmatprep.subr.mxu0 %v4273
    %7655 = vmatpush1.msra.mxu0 %v4272
    %7656 = vmatprep.subr.mxu0 %v4281
    %7657 = vmatpush1.msra.mxu0 %v4280
    %7658 = vmatprep.subr.mxu0 %v4289
    %7659 = vmatpush1.msra.mxu0 %v4288
    %7660 = vmatprep.subr.mxu0 %v4297
    %7661 = vmatpush1.msra.mxu0 %v4296
    %7662 = vmatprep.subr.mxu0 %v4305
    %7663 = vmatpush1.msra.mxu0 %v4304
    %7664 = vmatprep.subr.mxu0 %v4313
    %7665 = vmatpush1.msra.mxu0 %v4312
    %7666 = vmatprep.subr.mxu0 %v4321
    %7667 = vmatpush1.msra.mxu0 %v4320
    %7668 = vmatprep.subr.mxu0 %v4329
    %7669 = vmatpush1.msra.mxu0 %v4328
    %7670 = vmatprep.subr.mxu0 %v4337
    %7671 = vmatpush1.msra.mxu0 %v4336
    %7672 = vmatprep.subr.mxu0 %v4345
    %7673 = vmatpush1.msra.mxu0 %v4344
    %7674 = vmatprep.subr.mxu0 %v4353
    %7675 = vmatpush1.msra.mxu0 %v4352
    %7676 = vmatprep.subr.mxu0 %v4361
    %7677 = vmatpush1.msra.mxu0 %v4360
    %7678 = vmatprep.subr.mxu0 %v4369
    %7679 = vmatpush1.msra.mxu0 %v4368
    %7680 = vmatprep.subr.mxu0 %v4377
    %7681 = vmatpush1.msra.mxu0 %v4376
    %7682 = vmatprep.subr.mxu0 %v4385
    %7683 = vmatpush1.msra.mxu0 %v4384
    %7684 = vmatprep.subr.mxu0 %v4393
    %7685 = vmatpush1.msra.mxu0 %v4392
    %7686 = vmatprep.subr.mxu0 %v4401
    %7687 = vmatpush1.msra.mxu0 %v4400
    %7688 = vmatprep.subr.mxu0 %v4409
    %7689 = vmatpush1.msra.mxu0 %v4408
    %7690 = vmatprep.subr.mxu0 %v4417
    %7691 = vmatpush1.msra.mxu0 %v4416
    %7692 = vmatprep.subr.mxu0 %v4425
    %7693 = vmatpush1.msra.mxu0 %v4424
    %7694 = vmatprep.subr.mxu0 %v4433
    %7695 = vmatpush1.msra.mxu0 %v4432
    %7696 = vmatprep.subr.mxu0 %v4441
    %7697 = vmatpush1.msra.mxu0 %v4440
    %7698 = vmatprep.mubr.f32.mxu0 %v7347
    %7699 = vmatmul.mubr.f32.gmra.mrb[0].mxu0 %v7340
    %v7700 = vpop.f32.mrb[0].mxu0
    %v7701 = vadd.f32 %v4721, %v7700
    %v7702 = vpop.f32.mrb[0].mxu0
    %v7703 = vadd.f32 %v4725, %v7702
    %7704 = vdwg.mxu0
    %7705 = vmatprep.subr.mxu0 %v4449
    %7706 = vmatpush1.msra.mxu0 %v4448
    %7707 = vmatprep.subr.mxu0 %v4457
    %7708 = vmatpush1.msra.mxu0 %v4456
    %7709 = vmatprep.subr.mxu0 %v4465
    %7710 = vmatpush1.msra.mxu0 %v4464
    %7711 = vmatprep.subr.mxu0 %v4473
    %7712 = vmatpush1.msra.mxu0 %v4472
    %7713 = vmatprep.subr.mxu0 %v4481
    %7714 = vmatpush1.msra.mxu0 %v4480
    %7715 = vmatprep.subr.mxu0 %v4489
    %7716 = vmatpush1.msra.mxu0 %v4488
    %7717 = vmatprep.subr.mxu0 %v4497
    %7718 = vmatpush1.msra.mxu0 %v4496
    %7719 = vmatprep.subr.mxu0 %v4505
    %7720 = vmatpush1.msra.mxu0 %v4504
    %7721 = vmatprep.subr.mxu0 %v4513
    %7722 = vmatpush1.msra.mxu0 %v4512
    %7723 = vmatprep.subr.mxu0 %v4521
    %7724 = vmatpush1.msra.mxu0 %v4520
    %7725 = vmatprep.subr.mxu0 %v4529
    %7726 = vmatpush1.msra.mxu0 %v4528
    %7727 = vmatprep.subr.mxu0 %v4537
    %7728 = vmatpush1.msra.mxu0 %v4536
    %7729 = vmatprep.subr.mxu0 %v4545
    %7730 = vmatpush1.msra.mxu0 %v4544
    %7731 = vmatprep.subr.mxu0 %v4553
    %7732 = vmatpush1.msra.mxu0 %v4552
    %7733 = vmatprep.subr.mxu0 %v4561
    %7734 = vmatpush1.msra.mxu0 %v4560
    %7735 = vmatprep.subr.mxu0 %v4569
    %7736 = vmatpush1.msra.mxu0 %v4568
    %7737 = vmatprep.subr.mxu0 %v4577
    %7738 = vmatpush1.msra.mxu0 %v4576
    %7739 = vmatprep.subr.mxu0 %v4585
    %7740 = vmatpush1.msra.mxu0 %v4584
    %7741 = vmatprep.subr.mxu0 %v4593
    %7742 = vmatpush1.msra.mxu0 %v4592
    %7743 = vmatprep.subr.mxu0 %v4601
    %7744 = vmatpush1.msra.mxu0 %v4600
    %7745 = vmatprep.subr.mxu0 %v4609
    %7746 = vmatpush1.msra.mxu0 %v4608
    %7747 = vmatprep.subr.mxu0 %v4617
    %7748 = vmatpush1.msra.mxu0 %v4616
    %7749 = vmatprep.subr.mxu0 %v4625
    %7750 = vmatpush1.msra.mxu0 %v4624
    %7751 = vmatprep.subr.mxu0 %v4633
    %7752 = vmatpush1.msra.mxu0 %v4632
    %7753 = vmatprep.subr.mxu0 %v4641
    %7754 = vmatpush1.msra.mxu0 %v4640
    %7755 = vmatprep.subr.mxu0 %v4649
    %7756 = vmatpush1.msra.mxu0 %v4648
    %7757 = vmatprep.subr.mxu0 %v4657
    %7758 = vmatpush1.msra.mxu0 %v4656
    %7759 = vmatprep.subr.mxu0 %v4665
    %7760 = vmatpush1.msra.mxu0 %v4664
    %7761 = vmatprep.subr.mxu0 %v4673
    %7762 = vmatpush1.msra.mxu0 %v4672
    %7763 = vmatprep.subr.mxu0 %v4681
    %7764 = vmatpush1.msra.mxu0 %v4680
    %7765 = vmatprep.subr.mxu0 %v4689
    %7766 = vmatpush1.msra.mxu0 %v4688
    %7767 = vmatprep.subr.mxu0 %v4697
    %7768 = vmatpush1.msra.mxu0 %v4696
    %7769 = vmatprep.mubr.f32.mxu0 %v6890
    %7770 = vmatmul.mubr.f32.gmra.mrb[0].mxu0 %v6889
    %v7771 = vpop.f32.mrb[0].mxu0
    %v7772 = vadd.f32 %v7701, %v7771
    %v7773 = vpop.f32.mrb[0].mxu0
    %v7774 = vadd.f32 %v7703, %v7773
    %7775 = vdwg.mxu0
    %7776 = vmatprep.subr.mxu0 %v4195
    %7777 = vmatpush1.msra.mxu0 %v4194
    %7778 = vmatprep.subr.mxu0 %v4203
    %7779 = vmatpush1.msra.mxu0 %v4202
    %7780 = vmatprep.subr.mxu0 %v4211
    %7781 = vmatpush1.msra.mxu0 %v4210
    %7782 = vmatprep.subr.mxu0 %v4219
    %7783 = vmatpush1.msra.mxu0 %v4218
    %7784 = vmatprep.subr.mxu0 %v4227
    %7785 = vmatpush1.msra.mxu0 %v4226
    %7786 = vmatprep.subr.mxu0 %v4235
    %7787 = vmatpush1.msra.mxu0 %v4234
    %7788 = vmatprep.subr.mxu0 %v4243
    %7789 = vmatpush1.msra.mxu0 %v4242
    %7790 = vmatprep.subr.mxu0 %v4251
    %7791 = vmatpush1.msra.mxu0 %v4250
    %7792 = vmatprep.subr.mxu0 %v4259
    %7793 = vmatpush1.msra.mxu0 %v4258
    %7794 = vmatprep.subr.mxu0 %v4267
    %7795 = vmatpush1.msra.mxu0 %v4266
    %7796 = vmatprep.subr.mxu0 %v4275
    %7797 = vmatpush1.msra.mxu0 %v4274
    %7798 = vmatprep.subr.mxu0 %v4283
    %7799 = vmatpush1.msra.mxu0 %v4282
    %7800 = vmatprep.subr.mxu0 %v4291
    %7801 = vmatpush1.msra.mxu0 %v4290
    %7802 = vmatprep.subr.mxu0 %v4299
    %7803 = vmatpush1.msra.mxu0 %v4298
    %7804 = vmatprep.subr.mxu0 %v4307
    %7805 = vmatpush1.msra.mxu0 %v4306
    %7806 = vmatprep.subr.mxu0 %v4315
    %7807 = vmatpush1.msra.mxu0 %v4314
    %7808 = vmatprep.subr.mxu0 %v4323
    %7809 = vmatpush1.msra.mxu0 %v4322
    %7810 = vmatprep.subr.mxu0 %v4331
    %7811 = vmatpush1.msra.mxu0 %v4330
    %7812 = vmatprep.subr.mxu0 %v4339
    %7813 = vmatpush1.msra.mxu0 %v4338
    %7814 = vmatprep.subr.mxu0 %v4347
    %7815 = vmatpush1.msra.mxu0 %v4346
    %7816 = vmatprep.subr.mxu0 %v4355
    %7817 = vmatpush1.msra.mxu0 %v4354
    %7818 = vmatprep.subr.mxu0 %v4363
    %7819 = vmatpush1.msra.mxu0 %v4362
    %7820 = vmatprep.subr.mxu0 %v4371
    %7821 = vmatpush1.msra.mxu0 %v4370
    %7822 = vmatprep.subr.mxu0 %v4379
    %7823 = vmatpush1.msra.mxu0 %v4378
    %7824 = vmatprep.subr.mxu0 %v4387
    %7825 = vmatpush1.msra.mxu0 %v4386
    %7826 = vmatprep.subr.mxu0 %v4395
    %7827 = vmatpush1.msra.mxu0 %v4394
    %7828 = vmatprep.subr.mxu0 %v4403
    %7829 = vmatpush1.msra.mxu0 %v4402
    %7830 = vmatprep.subr.mxu0 %v4411
    %7831 = vmatpush1.msra.mxu0 %v4410
    %7832 = vmatprep.subr.mxu0 %v4419
    %7833 = vmatpush1.msra.mxu0 %v4418
    %7834 = vmatprep.subr.mxu0 %v4427
    %7835 = vmatpush1.msra.mxu0 %v4426
    %7836 = vmatprep.subr.mxu0 %v4435
    %7837 = vmatpush1.msra.mxu0 %v4434
    %7838 = vmatprep.subr.mxu0 %v4443
    %7839 = vmatpush1.msra.mxu0 %v4442
    %7840 = vmatprep.mubr.f32.mxu0 %v7347
    %7841 = vmatmul.mubr.f32.gmra.mrb[0].mxu0 %v7340
    %v7842 = vpop.f32.mrb[0].mxu0
    %v7843 = vadd.f32 %v4729, %v7842
    %v7844 = vpop.f32.mrb[0].mxu0
    %v7845 = vadd.f32 %v4733, %v7844
    %7846 = vdwg.mxu0
    %7847 = vmatprep.subr.mxu0 %v4451
    %7848 = vmatpush1.msra.mxu0 %v4450
    %7849 = vmatprep.subr.mxu0 %v4459
    %7850 = vmatpush1.msra.mxu0 %v4458
    %7851 = vmatprep.subr.mxu0 %v4467
    %7852 = vmatpush1.msra.mxu0 %v4466
    %7853 = vmatprep.subr.mxu0 %v4475
    %7854 = vmatpush1.msra.mxu0 %v4474
    %7855 = vmatprep.subr.mxu0 %v4483
    %7856 = vmatpush1.msra.mxu0 %v4482
    %7857 = vmatprep.subr.mxu0 %v4491
    %7858 = vmatpush1.msra.mxu0 %v4490
    %7859 = vmatprep.subr.mxu0 %v4499
    %7860 = vmatpush1.msra.mxu0 %v4498
    %7861 = vmatprep.subr.mxu0 %v4507
    %7862 = vmatpush1.msra.mxu0 %v4506
    %7863 = vmatprep.subr.mxu0 %v4515
    %7864 = vmatpush1.msra.mxu0 %v4514
    %7865 = vmatprep.subr.mxu0 %v4523
    %7866 = vmatpush1.msra.mxu0 %v4522
    %7867 = vmatprep.subr.mxu0 %v4531
    %7868 = vmatpush1.msra.mxu0 %v4530
    %7869 = vmatprep.subr.mxu0 %v4539
    %7870 = vmatpush1.msra.mxu0 %v4538
    %7871 = vmatprep.subr.mxu0 %v4547
    %7872 = vmatpush1.msra.mxu0 %v4546
    %7873 = vmatprep.subr.mxu0 %v4555
    %7874 = vmatpush1.msra.mxu0 %v4554
    %7875 = vmatprep.subr.mxu0 %v4563
    %7876 = vmatpush1.msra.mxu0 %v4562
    %7877 = vmatprep.subr.mxu0 %v4571
    %7878 = vmatpush1.msra.mxu0 %v4570
    %7879 = vmatprep.subr.mxu0 %v4579
    %7880 = vmatpush1.msra.mxu0 %v4578
    %7881 = vmatprep.subr.mxu0 %v4587
    %7882 = vmatpush1.msra.mxu0 %v4586
    %7883 = vmatprep.subr.mxu0 %v4595
    %7884 = vmatpush1.msra.mxu0 %v4594
    %7885 = vmatprep.subr.mxu0 %v4603
    %7886 = vmatpush1.msra.mxu0 %v4602
    %7887 = vmatprep.subr.mxu0 %v4611
    %7888 = vmatpush1.msra.mxu0 %v4610
    %7889 = vmatprep.subr.mxu0 %v4619
    %7890 = vmatpush1.msra.mxu0 %v4618
    %7891 = vmatprep.subr.mxu0 %v4627
    %7892 = vmatpush1.msra.mxu0 %v4626
    %7893 = vmatprep.subr.mxu0 %v4635
    %7894 = vmatpush1.msra.mxu0 %v4634
    %7895 = vmatprep.subr.mxu0 %v4643
    %7896 = vmatpush1.msra.mxu0 %v4642
    %7897 = vmatprep.subr.mxu0 %v4651
    %7898 = vmatpush1.msra.mxu0 %v4650
    %7899 = vmatprep.subr.mxu0 %v4659
    %7900 = vmatpush1.msra.mxu0 %v4658
    %7901 = vmatprep.subr.mxu0 %v4667
    %7902 = vmatpush1.msra.mxu0 %v4666
    %7903 = vmatprep.subr.mxu0 %v4675
    %7904 = vmatpush1.msra.mxu0 %v4674
    %7905 = vmatprep.subr.mxu0 %v4683
    %7906 = vmatpush1.msra.mxu0 %v4682
    %7907 = vmatprep.subr.mxu0 %v4691
    %7908 = vmatpush1.msra.mxu0 %v4690
    %7909 = vmatprep.subr.mxu0 %v4699
    %7910 = vmatpush1.msra.mxu0 %v4698
    %7911 = vmatprep.mubr.f32.mxu0 %v6890
    %7912 = vmatmul.mubr.f32.gmra.mrb[0].mxu0 %v6889
    %v7913 = vpop.f32.mrb[0].mxu0
    %v7914 = vadd.f32 %v7843, %v7913
    %v7915 = vpop.f32.mrb[0].mxu0
    %v7916 = vadd.f32 %v7845, %v7915
    %7917 = vdwg.mxu0
    %v7918 = vxor.u32 %v7488, 2147483648
    %v7919 = vxor.u32 %v7490, 2147483648
    %v7920 = vmul.f32 %v7918, 1.442695
    %v7921 = vpow.pop %v7920
    %v7922 = vmul.f32 %v7919, 1.442695
    %v7923 = vpow.pop %v7922
    %v7924 = vadd.f32 %v7921, 1.0
    %v7925 = vadd.f32 %v7923, 1.0
    %v7926 = vrcp.pop %v7924
    %v7927 = vmul.f32 1.0, %v7926
    %v7928 = vrcp.pop %v7925
    %v7929 = vmul.f32 1.0, %v7928
    %v7930 = vxor.u32 %v7630, 2147483648
    %v7931 = vxor.u32 %v7632, 2147483648
    %v7932 = vmul.f32 %v7930, 1.442695
    %v7933 = vpow.pop %v7932
    %v7934 = vmul.f32 %v7931, 1.442695
    %v7935 = vpow.pop %v7934
    %v7936 = vadd.f32 %v7933, 1.0
    %v7937 = vadd.f32 %v7935, 1.0
    %v7938 = vrcp.pop %v7936
    %v7939 = vmul.f32 1.0, %v7938
    %v7940 = vrcp.pop %v7937
    %v7941 = vmul.f32 1.0, %v7940
    %v7942 = vtanh.pop %v7772
    %v7943 = vtanh.pop %v7774
    %v7944 = vxor.u32 %v7914, 2147483648
    %v7945 = vxor.u32 %v7916, 2147483648
    %v7946 = vmul.f32 %v7944, 1.442695
    %v7947 = vpow.pop %v7946
    %v7948 = vmul.f32 %v7945, 1.442695
    %v7949 = vpow.pop %v7948
    %v7950 = vadd.f32 %v7947, 1.0
    %v7951 = vadd.f32 %v7949, 1.0
    %v7952 = vrcp.pop %v7950
    %v7953 = vmul.f32 1.0, %v7952
    %v7954 = vrcp.pop %v7951
    %v7955 = vmul.f32 1.0, %v7954
    %v7956 = vmul.f32 %v7939, %v6885
    %v7957 = vmul.f32 %v7941, %v6886
    %v7958 = vmul.f32 %v7927, %v7942
    %v7959 = vmul.f32 %v7929, %v7943
    %v7960 = vadd.f32 %v7956, %v7958
    %v7961 = vadd.f32 %v7957, %v7959
    %v7962 = vtanh.pop %v7960
    %v7963 = vtanh.pop %v7961
    %v7964 = vmul.f32 %v7953, %v7962
    %v7965 = vmul.f32 %v7955, %v7963
    %s7966 = scalar_lea.vmem [#allocation4], 3
    %v7967 = vld [vmem:[%s7966] ss:$8 sm:$0xf]
    %v7968 = vld [vmem:[%s7966] ss:$8 sm:$0xf0]
    %v7969 = vor.u32 %v7967, %v7968
    %s7970 = scalar_lea.vmem [#allocation4], 67
    %v7971 = vld [vmem:[%s7970] ss:$8 sm:$0xf]
    %v7972 = vld [vmem:[%s7970] ss:$8 sm:$0xf0]
    %v7973 = vor.u32 %v7971, %v7972
    %7974 = vmatprep.subr.mxu0 %v3933
    %7975 = vmatpush1.msra.mxu0 %v3932
    %7976 = vmatprep.subr.mxu0 %v3941
    %7977 = vmatpush1.msra.mxu0 %v3940
    %7978 = vmatprep.subr.mxu0 %v3949
    %7979 = vmatpush1.msra.mxu0 %v3948
    %7980 = vmatprep.subr.mxu0 %v3957
    %7981 = vmatpush1.msra.mxu0 %v3956
    %7982 = vmatprep.subr.mxu0 %v3965
    %7983 = vmatpush1.msra.mxu0 %v3964
    %7984 = vmatprep.subr.mxu0 %v3973
    %7985 = vmatpush1.msra.mxu0 %v3972
    %7986 = vmatprep.subr.mxu0 %v3981
    %7987 = vmatpush1.msra.mxu0 %v3980
    %7988 = vmatprep.subr.mxu0 %v3989
    %7989 = vmatpush1.msra.mxu0 %v3988
    %7990 = vmatprep.subr.mxu0 %v3997
    %7991 = vmatpush1.msra.mxu0 %v3996
    %7992 = vmatprep.subr.mxu0 %v4005
    %7993 = vmatpush1.msra.mxu0 %v4004
    %7994 = vmatprep.subr.mxu0 %v4013
    %7995 = vmatpush1.msra.mxu0 %v4012
    %7996 = vmatprep.subr.mxu0 %v4021
    %7997 = vmatpush1.msra.mxu0 %v4020
    %7998 = vmatprep.subr.mxu0 %v4029
    %7999 = vmatpush1.msra.mxu0 %v4028
    %8000 = vmatprep.subr.mxu0 %v4037
    %8001 = vmatpush1.msra.mxu0 %v4036
    %8002 = vmatprep.subr.mxu0 %v4045
    %8003 = vmatpush1.msra.mxu0 %v4044
    %8004 = vmatprep.subr.mxu0 %v4053
    %8005 = vmatpush1.msra.mxu0 %v4052
    %8006 = vmatprep.subr.mxu0 %v4061
    %8007 = vmatpush1.msra.mxu0 %v4060
    %8008 = vmatprep.subr.mxu0 %v4069
    %8009 = vmatpush1.msra.mxu0 %v4068
    %8010 = vmatprep.subr.mxu0 %v4077
    %8011 = vmatpush1.msra.mxu0 %v4076
    %8012 = vmatprep.subr.mxu0 %v4085
    %8013 = vmatpush1.msra.mxu0 %v4084
    %8014 = vmatprep.subr.mxu0 %v4093
    %8015 = vmatpush1.msra.mxu0 %v4092
    %8016 = vmatprep.subr.mxu0 %v4101
    %8017 = vmatpush1.msra.mxu0 %v4100
    %8018 = vmatprep.subr.mxu0 %v4109
    %8019 = vmatpush1.msra.mxu0 %v4108
    %8020 = vmatprep.subr.mxu0 %v4117
    %8021 = vmatpush1.msra.mxu0 %v4116
    %8022 = vmatprep.subr.mxu0 %v4125
    %8023 = vmatpush1.msra.mxu0 %v4124
    %8024 = vmatprep.subr.mxu0 %v4133
    %8025 = vmatpush1.msra.mxu0 %v4132
    %8026 = vmatprep.subr.mxu0 %v4141
    %8027 = vmatpush1.msra.mxu0 %v4140
    %8028 = vmatprep.subr.mxu0 %v4149
    %8029 = vmatpush1.msra.mxu0 %v4148
    %8030 = vmatprep.subr.mxu0 %v4157
    %8031 = vmatpush1.msra.mxu0 %v4156
    %8032 = vmatprep.subr.mxu0 %v4165
    %8033 = vmatpush1.msra.mxu0 %v4164
    %8034 = vmatprep.subr.mxu0 %v4173
    %8035 = vmatpush1.msra.mxu0 %v4172
    %8036 = vmatprep.subr.mxu0 %v4181
    %8037 = vmatpush1.msra.mxu0 %v4180
    %8038 = vmatprep.mubr.f32.mxu0 %v7347
    %8039 = vmatmul.mubr.f32.gmra.mrb[0].mxu0 %v7340
    %v8040 = vpop.f32.mrb[0].mxu0
    %v8041 = vadd.f32 0.0, %v8040
    %v8042 = vpop.f32.mrb[0].mxu0
    %v8043 = vadd.f32 0.0, %v8042
    %8044 = vdwg.mxu0
    %8045 = vmatprep.subr.mxu0 %v3935
    %8046 = vmatpush1.msra.mxu0 %v3934
    %8047 = vmatprep.subr.mxu0 %v3943
    %8048 = vmatpush1.msra.mxu0 %v3942
    %8049 = vmatprep.subr.mxu0 %v3951
    %8050 = vmatpush1.msra.mxu0 %v3950
    %8051 = vmatprep.subr.mxu0 %v3959
    %8052 = vmatpush1.msra.mxu0 %v3958
    %8053 = vmatprep.subr.mxu0 %v3967
    %8054 = vmatpush1.msra.mxu0 %v3966
    %8055 = vmatprep.subr.mxu0 %v3975
    %8056 = vmatpush1.msra.mxu0 %v3974
    %8057 = vmatprep.subr.mxu0 %v3983
    %8058 = vmatpush1.msra.mxu0 %v3982
    %8059 = vmatprep.subr.mxu0 %v3991
    %8060 = vmatpush1.msra.mxu0 %v3990
    %8061 = vmatprep.subr.mxu0 %v3999
    %8062 = vmatpush1.msra.mxu0 %v3998
    %8063 = vmatprep.subr.mxu0 %v4007
    %8064 = vmatpush1.msra.mxu0 %v4006
    %8065 = vmatprep.subr.mxu0 %v4015
    %8066 = vmatpush1.msra.mxu0 %v4014
    %8067 = vmatprep.subr.mxu0 %v4023
    %8068 = vmatpush1.msra.mxu0 %v4022
    %8069 = vmatprep.subr.mxu0 %v4031
    %8070 = vmatpush1.msra.mxu0 %v4030
    %8071 = vmatprep.subr.mxu0 %v4039
    %8072 = vmatpush1.msra.mxu0 %v4038
    %8073 = vmatprep.subr.mxu0 %v4047
    %8074 = vmatpush1.msra.mxu0 %v4046
    %8075 = vmatprep.subr.mxu0 %v4055
    %8076 = vmatpush1.msra.mxu0 %v4054
    %8077 = vmatprep.subr.mxu0 %v4063
    %8078 = vmatpush1.msra.mxu0 %v4062
    %8079 = vmatprep.subr.mxu0 %v4071
    %8080 = vmatpush1.msra.mxu0 %v4070
    %8081 = vmatprep.subr.mxu0 %v4079
    %8082 = vmatpush1.msra.mxu0 %v4078
    %8083 = vmatprep.subr.mxu0 %v4087
    %8084 = vmatpush1.msra.mxu0 %v4086
    %8085 = vmatprep.subr.mxu0 %v4095
    %8086 = vmatpush1.msra.mxu0 %v4094
    %8087 = vmatprep.subr.mxu0 %v4103
    %8088 = vmatpush1.msra.mxu0 %v4102
    %8089 = vmatprep.subr.mxu0 %v4111
    %8090 = vmatpush1.msra.mxu0 %v4110
    %8091 = vmatprep.subr.mxu0 %v4119
    %8092 = vmatpush1.msra.mxu0 %v4118
    %8093 = vmatprep.subr.mxu0 %v4127
    %8094 = vmatpush1.msra.mxu0 %v4126
    %8095 = vmatprep.subr.mxu0 %v4135
    %8096 = vmatpush1.msra.mxu0 %v4134
    %8097 = vmatprep.subr.mxu0 %v4143
    %8098 = vmatpush1.msra.mxu0 %v4142
    %8099 = vmatprep.subr.mxu0 %v4151
    %8100 = vmatpush1.msra.mxu0 %v4150
    %8101 = vmatprep.subr.mxu0 %v4159
    %8102 = vmatpush1.msra.mxu0 %v4158
    %8103 = vmatprep.subr.mxu0 %v4167
    %8104 = vmatpush1.msra.mxu0 %v4166
    %8105 = vmatprep.subr.mxu0 %v4175
    %8106 = vmatpush1.msra.mxu0 %v4174
    %8107 = vmatprep.subr.mxu0 %v4183
    %8108 = vmatpush1.msra.mxu0 %v4182
    %8109 = vmatprep.mubr.f32.mxu0 %v7347
    %8110 = vmatmul.mubr.f32.gmra.mrb[0].mxu0 %v7340
    %v8111 = vpop.f32.mrb[0].mxu0
    %v8112 = vadd.f32 0.0, %v8111
    %v8113 = vpop.f32.mrb[0].mxu0
    %v8114 = vadd.f32 0.0, %v8113
    %8115 = vdwg.mxu0
    %8116 = vmatprep.subr.mxu0 %v3937
    %8117 = vmatpush1.msra.mxu0 %v3936
    %8118 = vmatprep.subr.mxu0 %v3945
    %8119 = vmatpush1.msra.mxu0 %v3944
    %8120 = vmatprep.subr.mxu0 %v3953
    %8121 = vmatpush1.msra.mxu0 %v3952
    %8122 = vmatprep.subr.mxu0 %v3961
    %8123 = vmatpush1.msra.mxu0 %v3960
    %8124 = vmatprep.subr.mxu0 %v3969
    %8125 = vmatpush1.msra.mxu0 %v3968
    %8126 = vmatprep.subr.mxu0 %v3977
    %8127 = vmatpush1.msra.mxu0 %v3976
    %8128 = vmatprep.subr.mxu0 %v3985
    %8129 = vmatpush1.msra.mxu0 %v3984
    %8130 = vmatprep.subr.mxu0 %v3993
    %8131 = vmatpush1.msra.mxu0 %v3992
    %8132 = vmatprep.subr.mxu0 %v4001
    %8133 = vmatpush1.msra.mxu0 %v4000
    %8134 = vmatprep.subr.mxu0 %v4009
    %8135 = vmatpush1.msra.mxu0 %v4008
    %8136 = vmatprep.subr.mxu0 %v4017
    %8137 = vmatpush1.msra.mxu0 %v4016
    %8138 = vmatprep.subr.mxu0 %v4025
    %8139 = vmatpush1.msra.mxu0 %v4024
    %8140 = vmatprep.subr.mxu0 %v4033
    %8141 = vmatpush1.msra.mxu0 %v4032
    %8142 = vmatprep.subr.mxu0 %v4041
    %8143 = vmatpush1.msra.mxu0 %v4040
    %8144 = vmatprep.subr.mxu0 %v4049
    %8145 = vmatpush1.msra.mxu0 %v4048
    %8146 = vmatprep.subr.mxu0 %v4057
    %8147 = vmatpush1.msra.mxu0 %v4056
    %8148 = vmatprep.subr.mxu0 %v4065
    %8149 = vmatpush1.msra.mxu0 %v4064
    %8150 = vmatprep.subr.mxu0 %v4073
    %8151 = vmatpush1.msra.mxu0 %v4072
    %8152 = vmatprep.subr.mxu0 %v4081
    %8153 = vmatpush1.msra.mxu0 %v4080
    %8154 = vmatprep.subr.mxu0 %v4089
    %8155 = vmatpush1.msra.mxu0 %v4088
    %8156 = vmatprep.subr.mxu0 %v4097
    %8157 = vmatpush1.msra.mxu0 %v4096
    %8158 = vmatprep.subr.mxu0 %v4105
    %8159 = vmatpush1.msra.mxu0 %v4104
    %8160 = vmatprep.subr.mxu0 %v4113
    %8161 = vmatpush1.msra.mxu0 %v4112
    %8162 = vmatprep.subr.mxu0 %v4121
    %8163 = vmatpush1.msra.mxu0 %v4120
    %8164 = vmatprep.subr.mxu0 %v4129
    %8165 = vmatpush1.msra.mxu0 %v4128
    %8166 = vmatprep.subr.mxu0 %v4137
    %8167 = vmatpush1.msra.mxu0 %v4136
    %8168 = vmatprep.subr.mxu0 %v4145
    %8169 = vmatpush1.msra.mxu0 %v4144
    %8170 = vmatprep.subr.mxu0 %v4153
    %8171 = vmatpush1.msra.mxu0 %v4152
    %8172 = vmatprep.subr.mxu0 %v4161
    %8173 = vmatpush1.msra.mxu0 %v4160
    %8174 = vmatprep.subr.mxu0 %v4169
    %8175 = vmatpush1.msra.mxu0 %v4168
    %8176 = vmatprep.subr.mxu0 %v4177
    %8177 = vmatpush1.msra.mxu0 %v4176
    %8178 = vmatprep.subr.mxu0 %v4185
    %8179 = vmatpush1.msra.mxu0 %v4184
    %8180 = vmatprep.mubr.f32.mxu0 %v7347
    %8181 = vmatmul.mubr.f32.gmra.mrb[0].mxu0 %v7340
    %v8182 = vpop.f32.mrb[0].mxu0
    %v8183 = vadd.f32 0.0, %v8182
    %v8184 = vpop.f32.mrb[0].mxu0
    %v8185 = vadd.f32 0.0, %v8184
    %8186 = vdwg.mxu0
    %8187 = vmatprep.subr.mxu0 %v3939
    %8188 = vmatpush1.msra.mxu0 %v3938
    %8189 = vmatprep.subr.mxu0 %v3947
    %8190 = vmatpush1.msra.mxu0 %v3946
    %8191 = vmatprep.subr.mxu0 %v3955
    %8192 = vmatpush1.msra.mxu0 %v3954
    %8193 = vmatprep.subr.mxu0 %v3963
    %8194 = vmatpush1.msra.mxu0 %v3962
    %8195 = vmatprep.subr.mxu0 %v3971
    %8196 = vmatpush1.msra.mxu0 %v3970
    %8197 = vmatprep.subr.mxu0 %v3979
    %8198 = vmatpush1.msra.mxu0 %v3978
    %8199 = vmatprep.subr.mxu0 %v3987
    %8200 = vmatpush1.msra.mxu0 %v3986
    %8201 = vmatprep.subr.mxu0 %v3995
    %8202 = vmatpush1.msra.mxu0 %v3994
    %8203 = vmatprep.subr.mxu0 %v4003
    %8204 = vmatpush1.msra.mxu0 %v4002
    %8205 = vmatprep.subr.mxu0 %v4011
    %8206 = vmatpush1.msra.mxu0 %v4010
    %8207 = vmatprep.subr.mxu0 %v4019
    %8208 = vmatpush1.msra.mxu0 %v4018
    %8209 = vmatprep.subr.mxu0 %v4027
    %8210 = vmatpush1.msra.mxu0 %v4026
    %8211 = vmatprep.subr.mxu0 %v4035
    %8212 = vmatpush1.msra.mxu0 %v4034
    %8213 = vmatprep.subr.mxu0 %v4043
    %8214 = vmatpush1.msra.mxu0 %v4042
    %8215 = vmatprep.subr.mxu0 %v4051
    %8216 = vmatpush1.msra.mxu0 %v4050
    %8217 = vmatprep.subr.mxu0 %v4059
    %8218 = vmatpush1.msra.mxu0 %v4058
    %8219 = vmatprep.subr.mxu0 %v4067
    %8220 = vmatpush1.msra.mxu0 %v4066
    %8221 = vmatprep.subr.mxu0 %v4075
    %8222 = vmatpush1.msra.mxu0 %v4074
    %8223 = vmatprep.subr.mxu0 %v4083
    %8224 = vmatpush1.msra.mxu0 %v4082
    %8225 = vmatprep.subr.mxu0 %v4091
    %8226 = vmatpush1.msra.mxu0 %v4090
    %8227 = vmatprep.subr.mxu0 %v4099
    %8228 = vmatpush1.msra.mxu0 %v4098
    %8229 = vmatprep.subr.mxu0 %v4107
    %8230 = vmatpush1.msra.mxu0 %v4106
    %8231 = vmatprep.subr.mxu0 %v4115
    %8232 = vmatpush1.msra.mxu0 %v4114
    %8233 = vmatprep.subr.mxu0 %v4123
    %8234 = vmatpush1.msra.mxu0 %v4122
    %8235 = vmatprep.subr.mxu0 %v4131
    %8236 = vmatpush1.msra.mxu0 %v4130
    %8237 = vmatprep.subr.mxu0 %v4139
    %8238 = vmatpush1.msra.mxu0 %v4138
    %8239 = vmatprep.subr.mxu0 %v4147
    %8240 = vmatpush1.msra.mxu0 %v4146
    %8241 = vmatprep.subr.mxu0 %v4155
    %8242 = vmatpush1.msra.mxu0 %v4154
    %8243 = vmatprep.subr.mxu0 %v4163
    %8244 = vmatpush1.msra.mxu0 %v4162
    %8245 = vmatprep.subr.mxu0 %v4171
    %8246 = vmatpush1.msra.mxu0 %v4170
    %8247 = vmatprep.subr.mxu0 %v4179
    %8248 = vmatpush1.msra.mxu0 %v4178
    %8249 = vmatprep.subr.mxu0 %v4187
    %8250 = vmatpush1.msra.mxu0 %v4186
    %8251 = vmatprep.mubr.f32.mxu0 %v7347
    %8252 = vmatmul.mubr.f32.gmra.mrb[0].mxu0 %v7340
    %v8253 = vpop.f32.mrb[0].mxu0
    %v8254 = vadd.f32 0.0, %v8253
    %v8255 = vpop.f32.mrb[0].mxu0
    %v8256 = vadd.f32 0.0, %v8255
    %8257 = vdwg.mxu0
    %v8266 = vcombine.low %v8041, %v8043
    %v8267 = vcombine.low %v8112, %v8114
    %v8268 = vcombine.low %v8183, %v8185
    %v8269 = vcombine.low %v8254, %v8256
    %v8271 = vunpack.c.l.s4 1966171168
    %v8272 = vunpack.c.0.s8 %v8271
    %v8273 = vlaneseq
    %v8274 = vshrl.u32 %v8273, 7
    %v8275 = vsub.s32 %v8272, %v8274
    %v8276 = vrot.slane %v8266, %v8275
    %v8278 = vunpack.c.l.s4 1966171168
    %v8279 = vunpack.c.0.s8 %v8278
    %v8280 = vlaneseq
    %v8281 = vshrl.u32 %v8280, 7
    %v8282 = vsub.s32 %v8279, %v8281
    %v8283 = vrot.slane %v8267, %v8282
    %v8285 = vunpack.c.l.s4 1966171168
    %v8286 = vunpack.c.0.s8 %v8285
    %v8287 = vlaneseq
    %v8288 = vshrl.u32 %v8287, 7
    %v8289 = vsub.s32 %v8286, %v8288
    %v8290 = vrot.slane %v8268, %v8289
    %v8292 = vunpack.c.l.s4 1966171168
    %v8293 = vunpack.c.0.s8 %v8292
    %v8294 = vlaneseq
    %v8295 = vshrl.u32 %v8294, 7
    %v8296 = vsub.s32 %v8293, %v8295
    %v8297 = vrot.slane %v8269, %v8296
    %v8298 = vcombine.low %v8276, %v8283
    %v8299 = vcombine.high %v8276, %v8283
    %v8300 = vcombine.low %v8290, %v8297
    %v8301 = vcombine.high %v8290, %v8297
    %v8303 = vunpack.c.l.s4 1966171168
    %v8304 = vunpack.c.0.s8 %v8303
    %v8305 = vlaneseq
    %v8306 = vshrl.u32 %v8305, 7
    %v8307 = vsub.s32 %v8304, %v8306
    %v8308 = vrot.slane %v8298, %v8307
    %v8310 = vunpack.c.l.s4 1966171168
    %v8311 = vunpack.c.0.s8 %v8310
    %v8312 = vlaneseq
    %v8313 = vshrl.u32 %v8312, 7
    %v8314 = vsub.s32 %v8311, %v8313
    %v8315 = vrot.slane %v8299, %v8314
    %v8317 = vunpack.c.l.s4 1966171168
    %v8318 = vunpack.c.0.s8 %v8317
    %v8319 = vlaneseq
    %v8320 = vshrl.u32 %v8319, 7
    %v8321 = vsub.s32 %v8318, %v8320
    %v8322 = vrot.slane %v8300, %v8321
    %v8324 = vunpack.c.l.s4 1966171168
    %v8325 = vunpack.c.0.s8 %v8324
    %v8326 = vlaneseq
    %v8327 = vshrl.u32 %v8326, 7
    %v8328 = vsub.s32 %v8325, %v8327
    %v8329 = vrot.slane %v8301, %v8328
    %v8330 = vcombine.low %v8308, %v8322
    %v8331 = vcombine.low %v8315, %v8329
    %v8334 = vadd.f32 %v7969, %v8330
    %v8335 = vadd.f32 %v7973, %v8331
    %v8336 = vxor.u32 %v8334, 2147483648
    %v8337 = vxor.u32 %v8335, 2147483648
    %v8338 = vmul.f32 %v8336, 1.442695
    %v8339 = vpow.pop %v8338
    %v8340 = vmul.f32 %v8337, 1.442695
    %v8341 = vpow.pop %v8340
    %v8342 = vadd.f32 %v8339, 1.0
    %v8343 = vadd.f32 %v8341, 1.0
    %v8344 = vrcp.pop %v8342
    %v8345 = vmul.f32 1.0, %v8344
    %v8346 = vrcp.pop %v8343
    %v8347 = vmul.f32 1.0, %v8346
    %v8350 = vrot.slane %v8334, 2
    %v8351 = vrot.slane %v8335, 2
    %v8354 = vxor.u32 %v8350, 2147483648
    %v8355 = vxor.u32 %v8351, 2147483648
    %v8356 = vmul.f32 %v8354, 1.442695
    %v8357 = vpow.pop %v8356
    %v8358 = vmul.f32 %v8355, 1.442695
    %v8359 = vpow.pop %v8358
    %v8360 = vadd.f32 %v8357, 1.0
    %v8361 = vadd.f32 %v8359, 1.0
    %v8362 = vrcp.pop %v8360
    %v8363 = vmul.f32 1.0, %v8362
    %v8364 = vrcp.pop %v8361
    %v8365 = vmul.f32 1.0, %v8364
    %v8366 = vrot.slane %v8334, 4
    %v8367 = vrot.slane %v8335, 4
    %v8370 = vtanh.pop %v8366
    %v8371 = vtanh.pop %v8367
    %v8372 = vrot.slane %v8334, 6
    %v8373 = vrot.slane %v8335, 6
    %v8376 = vxor.u32 %v8372, 2147483648
    %v8377 = vxor.u32 %v8373, 2147483648
    %v8378 = vmul.f32 %v8376, 1.442695
    %v8379 = vpow.pop %v8378
    %v8380 = vmul.f32 %v8377, 1.442695
    %v8381 = vpow.pop %v8380
    %v8382 = vadd.f32 %v8379, 1.0
    %v8383 = vadd.f32 %v8381, 1.0
    %v8384 = vrcp.pop %v8382
    %v8385 = vmul.f32 1.0, %v8384
    %v8386 = vrcp.pop %v8383
    %v8387 = vmul.f32 1.0, %v8386
    %v8388 = vmul.f32 %v8363, %v7317
    %v8389 = vmul.f32 %v8365, %v7318
    %v8390 = vmul.f32 %v8345, %v8370
    %v8391 = vmul.f32 %v8347, %v8371
    %v8392 = vadd.f32 %v8388, %v8390
    %v8393 = vadd.f32 %v8389, %v8391
    %v8394 = vtanh.pop %v8392
    %v8395 = vtanh.pop %v8393
    %v8396 = vmul.f32 %v8385, %v8394
    %v8397 = vmul.f32 %v8387, %v8395
    %v8400 = vcombine.low %v8396, %v8397
    %v8402 = vunpack.c.l.s4 1966171168
    %v8403 = vunpack.c.0.s8 %v8402
    %v8404 = vlaneseq
    %v8405 = vshrl.u32 %v8404, 7
    %v8406 = vsub.s32 %v8403, %v8405
    %v8407 = vrot.slane %v8400, %v8406
    %v8408 = vcombine.high %v8407, %v8407
    %v8410 = vunpack.c.l.s4 1966171168
    %v8411 = vunpack.c.0.s8 %v8410
    %v8412 = vlaneseq
    %v8413 = vshrl.u32 %v8412, 7
    %v8414 = vsub.s32 %v8411, %v8413
    %v8415 = vrot.slane %v8407, %v8414
    %v8417 = vunpack.c.l.s4 1966171168
    %v8418 = vunpack.c.0.s8 %v8417
    %v8419 = vlaneseq
    %v8420 = vshrl.u32 %v8419, 7
    %v8421 = vsub.s32 %v8418, %v8420
    %v8422 = vrot.slane %v8408, %v8421
    %8425 = vmatprep.subr.mxu0 %v4189
    %8426 = vmatpush1.msra.mxu0 %v4188
    %8427 = vmatprep.subr.mxu0 %v4197
    %8428 = vmatpush1.msra.mxu0 %v4196
    %8429 = vmatprep.subr.mxu0 %v4205
    %8430 = vmatpush1.msra.mxu0 %v4204
    %8431 = vmatprep.subr.mxu0 %v4213
    %8432 = vmatpush1.msra.mxu0 %v4212
    %8433 = vmatprep.subr.mxu0 %v4221
    %8434 = vmatpush1.msra.mxu0 %v4220
    %8435 = vmatprep.subr.mxu0 %v4229
    %8436 = vmatpush1.msra.mxu0 %v4228
    %8437 = vmatprep.subr.mxu0 %v4237
    %8438 = vmatpush1.msra.mxu0 %v4236
    %8439 = vmatprep.subr.mxu0 %v4245
    %8440 = vmatpush1.msra.mxu0 %v4244
    %8441 = vmatprep.subr.mxu0 %v4253
    %8442 = vmatpush1.msra.mxu0 %v4252
    %8443 = vmatprep.subr.mxu0 %v4261
    %8444 = vmatpush1.msra.mxu0 %v4260
    %8445 = vmatprep.subr.mxu0 %v4269
    %8446 = vmatpush1.msra.mxu0 %v4268
    %8447 = vmatprep.subr.mxu0 %v4277
    %8448 = vmatpush1.msra.mxu0 %v4276
    %8449 = vmatprep.subr.mxu0 %v4285
    %8450 = vmatpush1.msra.mxu0 %v4284
    %8451 = vmatprep.subr.mxu0 %v4293
    %8452 = vmatpush1.msra.mxu0 %v4292
    %8453 = vmatprep.subr.mxu0 %v4301
    %8454 = vmatpush1.msra.mxu0 %v4300
    %8455 = vmatprep.subr.mxu0 %v4309
    %8456 = vmatpush1.msra.mxu0 %v4308
    %8457 = vmatprep.subr.mxu0 %v4317
    %8458 = vmatpush1.msra.mxu0 %v4316
    %8459 = vmatprep.subr.mxu0 %v4325
    %8460 = vmatpush1.msra.mxu0 %v4324
    %8461 = vmatprep.subr.mxu0 %v4333
    %8462 = vmatpush1.msra.mxu0 %v4332
    %8463 = vmatprep.subr.mxu0 %v4341
    %8464 = vmatpush1.msra.mxu0 %v4340
    %8465 = vmatprep.subr.mxu0 %v4349
    %8466 = vmatpush1.msra.mxu0 %v4348
    %8467 = vmatprep.subr.mxu0 %v4357
    %8468 = vmatpush1.msra.mxu0 %v4356
    %8469 = vmatprep.subr.mxu0 %v4365
    %8470 = vmatpush1.msra.mxu0 %v4364
    %8471 = vmatprep.subr.mxu0 %v4373
    %8472 = vmatpush1.msra.mxu0 %v4372
    %8473 = vmatprep.subr.mxu0 %v4381
    %8474 = vmatpush1.msra.mxu0 %v4380
    %8475 = vmatprep.subr.mxu0 %v4389
    %8476 = vmatpush1.msra.mxu0 %v4388
    %8477 = vmatprep.subr.mxu0 %v4397
    %8478 = vmatpush1.msra.mxu0 %v4396
    %8479 = vmatprep.subr.mxu0 %v4405
    %8480 = vmatpush1.msra.mxu0 %v4404
    %8481 = vmatprep.subr.mxu0 %v4413
    %8482 = vmatpush1.msra.mxu0 %v4412
    %8483 = vmatprep.subr.mxu0 %v4421
    %8484 = vmatpush1.msra.mxu0 %v4420
    %8485 = vmatprep.subr.mxu0 %v4429
    %8486 = vmatpush1.msra.mxu0 %v4428
    %8487 = vmatprep.subr.mxu0 %v4437
    %8488 = vmatpush1.msra.mxu0 %v4436
    %8489 = vmatprep.mubr.f32.mxu0 %v8422
    %8490 = vmatmul.mubr.f32.gmra.mrb[0].mxu0 %v8415
    %v8491 = vpop.f32.mrb[0].mxu0
    %v8492 = vadd.f32 %v4705, %v8491
    %v8493 = vpop.f32.mrb[0].mxu0
    %v8494 = vadd.f32 %v4709, %v8493
    %8495 = vdwg.mxu0
    %8496 = vmatprep.subr.mxu0 %v4445
    %8497 = vmatpush1.msra.mxu0 %v4444
    %8498 = vmatprep.subr.mxu0 %v4453
    %8499 = vmatpush1.msra.mxu0 %v4452
    %8500 = vmatprep.subr.mxu0 %v4461
    %8501 = vmatpush1.msra.mxu0 %v4460
    %8502 = vmatprep.subr.mxu0 %v4469
    %8503 = vmatpush1.msra.mxu0 %v4468
    %8504 = vmatprep.subr.mxu0 %v4477
    %8505 = vmatpush1.msra.mxu0 %v4476
    %8506 = vmatprep.subr.mxu0 %v4485
    %8507 = vmatpush1.msra.mxu0 %v4484
    %8508 = vmatprep.subr.mxu0 %v4493
    %8509 = vmatpush1.msra.mxu0 %v4492
    %8510 = vmatprep.subr.mxu0 %v4501
    %8511 = vmatpush1.msra.mxu0 %v4500
    %8512 = vmatprep.subr.mxu0 %v4509
    %8513 = vmatpush1.msra.mxu0 %v4508
    %8514 = vmatprep.subr.mxu0 %v4517
    %8515 = vmatpush1.msra.mxu0 %v4516
    %8516 = vmatprep.subr.mxu0 %v4525
    %8517 = vmatpush1.msra.mxu0 %v4524
    %8518 = vmatprep.subr.mxu0 %v4533
    %8519 = vmatpush1.msra.mxu0 %v4532
    %8520 = vmatprep.subr.mxu0 %v4541
    %8521 = vmatpush1.msra.mxu0 %v4540
    %8522 = vmatprep.subr.mxu0 %v4549
    %8523 = vmatpush1.msra.mxu0 %v4548
    %8524 = vmatprep.subr.mxu0 %v4557
    %8525 = vmatpush1.msra.mxu0 %v4556
    %8526 = vmatprep.subr.mxu0 %v4565
    %8527 = vmatpush1.msra.mxu0 %v4564
    %8528 = vmatprep.subr.mxu0 %v4573
    %8529 = vmatpush1.msra.mxu0 %v4572
    %8530 = vmatprep.subr.mxu0 %v4581
    %8531 = vmatpush1.msra.mxu0 %v4580
    %8532 = vmatprep.subr.mxu0 %v4589
    %8533 = vmatpush1.msra.mxu0 %v4588
    %8534 = vmatprep.subr.mxu0 %v4597
    %8535 = vmatpush1.msra.mxu0 %v4596
    %8536 = vmatprep.subr.mxu0 %v4605
    %8537 = vmatpush1.msra.mxu0 %v4604
    %8538 = vmatprep.subr.mxu0 %v4613
    %8539 = vmatpush1.msra.mxu0 %v4612
    %8540 = vmatprep.subr.mxu0 %v4621
    %8541 = vmatpush1.msra.mxu0 %v4620
    %8542 = vmatprep.subr.mxu0 %v4629
    %8543 = vmatpush1.msra.mxu0 %v4628
    %8544 = vmatprep.subr.mxu0 %v4637
    %8545 = vmatpush1.msra.mxu0 %v4636
    %8546 = vmatprep.subr.mxu0 %v4645
    %8547 = vmatpush1.msra.mxu0 %v4644
    %8548 = vmatprep.subr.mxu0 %v4653
    %8549 = vmatpush1.msra.mxu0 %v4652
    %8550 = vmatprep.subr.mxu0 %v4661
    %8551 = vmatpush1.msra.mxu0 %v4660
    %8552 = vmatprep.subr.mxu0 %v4669
    %8553 = vmatpush1.msra.mxu0 %v4668
    %8554 = vmatprep.subr.mxu0 %v4677
    %8555 = vmatpush1.msra.mxu0 %v4676
    %8556 = vmatprep.subr.mxu0 %v4685
    %8557 = vmatpush1.msra.mxu0 %v4684
    %8558 = vmatprep.subr.mxu0 %v4693
    %8559 = vmatpush1.msra.mxu0 %v4692
    %8560 = vmatprep.mubr.f32.mxu0 %v7965
    %8561 = vmatmul.mubr.f32.gmra.mrb[0].mxu0 %v7964
    %v8562 = vpop.f32.mrb[0].mxu0
    %v8563 = vadd.f32 %v8492, %v8562
    %v8564 = vpop.f32.mrb[0].mxu0
    %v8565 = vadd.f32 %v8494, %v8564
    %8566 = vdwg.mxu0
    %8567 = vmatprep.subr.mxu0 %v4191
    %8568 = vmatpush1.msra.mxu0 %v4190
    %8569 = vmatprep.subr.mxu0 %v4199
    %8570 = vmatpush1.msra.mxu0 %v4198
    %8571 = vmatprep.subr.mxu0 %v4207
    %8572 = vmatpush1.msra.mxu0 %v4206
    %8573 = vmatprep.subr.mxu0 %v4215
    %8574 = vmatpush1.msra.mxu0 %v4214
    %8575 = vmatprep.subr.mxu0 %v4223
    %8576 = vmatpush1.msra.mxu0 %v4222
    %8577 = vmatprep.subr.mxu0 %v4231
    %8578 = vmatpush1.msra.mxu0 %v4230
    %8579 = vmatprep.subr.mxu0 %v4239
    %8580 = vmatpush1.msra.mxu0 %v4238
    %8581 = vmatprep.subr.mxu0 %v4247
    %8582 = vmatpush1.msra.mxu0 %v4246
    %8583 = vmatprep.subr.mxu0 %v4255
    %8584 = vmatpush1.msra.mxu0 %v4254
    %8585 = vmatprep.subr.mxu0 %v4263
    %8586 = vmatpush1.msra.mxu0 %v4262
    %8587 = vmatprep.subr.mxu0 %v4271
    %8588 = vmatpush1.msra.mxu0 %v4270
    %8589 = vmatprep.subr.mxu0 %v4279
    %8590 = vmatpush1.msra.mxu0 %v4278
    %8591 = vmatprep.subr.mxu0 %v4287
    %8592 = vmatpush1.msra.mxu0 %v4286
    %8593 = vmatprep.subr.mxu0 %v4295
    %8594 = vmatpush1.msra.mxu0 %v4294
    %8595 = vmatprep.subr.mxu0 %v4303
    %8596 = vmatpush1.msra.mxu0 %v4302
    %8597 = vmatprep.subr.mxu0 %v4311
    %8598 = vmatpush1.msra.mxu0 %v4310
    %8599 = vmatprep.subr.mxu0 %v4319
    %8600 = vmatpush1.msra.mxu0 %v4318
    %8601 = vmatprep.subr.mxu0 %v4327
    %8602 = vmatpush1.msra.mxu0 %v4326
    %8603 = vmatprep.subr.mxu0 %v4335
    %8604 = vmatpush1.msra.mxu0 %v4334
    %8605 = vmatprep.subr.mxu0 %v4343
    %8606 = vmatpush1.msra.mxu0 %v4342
    %8607 = vmatprep.subr.mxu0 %v4351
    %8608 = vmatpush1.msra.mxu0 %v4350
    %8609 = vmatprep.subr.mxu0 %v4359
    %8610 = vmatpush1.msra.mxu0 %v4358
    %8611 = vmatprep.subr.mxu0 %v4367
    %8612 = vmatpush1.msra.mxu0 %v4366
    %8613 = vmatprep.subr.mxu0 %v4375
    %8614 = vmatpush1.msra.mxu0 %v4374
    %8615 = vmatprep.subr.mxu0 %v4383
    %8616 = vmatpush1.msra.mxu0 %v4382
    %8617 = vmatprep.subr.mxu0 %v4391
    %8618 = vmatpush1.msra.mxu0 %v4390
    %8619 = vmatprep.subr.mxu0 %v4399
    %8620 = vmatpush1.msra.mxu0 %v4398
    %8621 = vmatprep.subr.mxu0 %v4407
    %8622 = vmatpush1.msra.mxu0 %v4406
    %8623 = vmatprep.subr.mxu0 %v4415
    %8624 = vmatpush1.msra.mxu0 %v4414
    %8625 = vmatprep.subr.mxu0 %v4423
    %8626 = vmatpush1.msra.mxu0 %v4422
    %8627 = vmatprep.subr.mxu0 %v4431
    %8628 = vmatpush1.msra.mxu0 %v4430
    %8629 = vmatprep.subr.mxu0 %v4439
    %8630 = vmatpush1.msra.mxu0 %v4438
    %8631 = vmatprep.mubr.f32.mxu0 %v8422
    %8632 = vmatmul.mubr.f32.gmra.mrb[0].mxu0 %v8415
    %v8633 = vpop.f32.mrb[0].mxu0
    %v8634 = vadd.f32 %v4713, %v8633
    %v8635 = vpop.f32.mrb[0].mxu0
    %v8636 = vadd.f32 %v4717, %v8635
    %8637 = vdwg.mxu0
    %8638 = vmatprep.subr.mxu0 %v4447
    %8639 = vmatpush1.msra.mxu0 %v4446
    %8640 = vmatprep.subr.mxu0 %v4455
    %8641 = vmatpush1.msra.mxu0 %v4454
    %8642 = vmatprep.subr.mxu0 %v4463
    %8643 = vmatpush1.msra.mxu0 %v4462
    %8644 = vmatprep.subr.mxu0 %v4471
    %8645 = vmatpush1.msra.mxu0 %v4470
    %8646 = vmatprep.subr.mxu0 %v4479
    %8647 = vmatpush1.msra.mxu0 %v4478
    %8648 = vmatprep.subr.mxu0 %v4487
    %8649 = vmatpush1.msra.mxu0 %v4486
    %8650 = vmatprep.subr.mxu0 %v4495
    %8651 = vmatpush1.msra.mxu0 %v4494
    %8652 = vmatprep.subr.mxu0 %v4503
    %8653 = vmatpush1.msra.mxu0 %v4502
    %8654 = vmatprep.subr.mxu0 %v4511
    %8655 = vmatpush1.msra.mxu0 %v4510
    %8656 = vmatprep.subr.mxu0 %v4519
    %8657 = vmatpush1.msra.mxu0 %v4518
    %8658 = vmatprep.subr.mxu0 %v4527
    %8659 = vmatpush1.msra.mxu0 %v4526
    %8660 = vmatprep.subr.mxu0 %v4535
    %8661 = vmatpush1.msra.mxu0 %v4534
    %8662 = vmatprep.subr.mxu0 %v4543
    %8663 = vmatpush1.msra.mxu0 %v4542
    %8664 = vmatprep.subr.mxu0 %v4551
    %8665 = vmatpush1.msra.mxu0 %v4550
    %8666 = vmatprep.subr.mxu0 %v4559
    %8667 = vmatpush1.msra.mxu0 %v4558
    %8668 = vmatprep.subr.mxu0 %v4567
    %8669 = vmatpush1.msra.mxu0 %v4566
    %8670 = vmatprep.subr.mxu0 %v4575
    %8671 = vmatpush1.msra.mxu0 %v4574
    %8672 = vmatprep.subr.mxu0 %v4583
    %8673 = vmatpush1.msra.mxu0 %v4582
    %8674 = vmatprep.subr.mxu0 %v4591
    %8675 = vmatpush1.msra.mxu0 %v4590
    %8676 = vmatprep.subr.mxu0 %v4599
    %8677 = vmatpush1.msra.mxu0 %v4598
    %8678 = vmatprep.subr.mxu0 %v4607
    %8679 = vmatpush1.msra.mxu0 %v4606
    %8680 = vmatprep.subr.mxu0 %v4615
    %8681 = vmatpush1.msra.mxu0 %v4614
    %8682 = vmatprep.subr.mxu0 %v4623
    %8683 = vmatpush1.msra.mxu0 %v4622
    %8684 = vmatprep.subr.mxu0 %v4631
    %8685 = vmatpush1.msra.mxu0 %v4630
    %8686 = vmatprep.subr.mxu0 %v4639
    %8687 = vmatpush1.msra.mxu0 %v4638
    %8688 = vmatprep.subr.mxu0 %v4647
    %8689 = vmatpush1.msra.mxu0 %v4646
    %8690 = vmatprep.subr.mxu0 %v4655
    %8691 = vmatpush1.msra.mxu0 %v4654
    %8692 = vmatprep.subr.mxu0 %v4663
    %8693 = vmatpush1.msra.mxu0 %v4662
    %8694 = vmatprep.subr.mxu0 %v4671
    %8695 = vmatpush1.msra.mxu0 %v4670
    %8696 = vmatprep.subr.mxu0 %v4679
    %8697 = vmatpush1.msra.mxu0 %v4678
    %8698 = vmatprep.subr.mxu0 %v4687
    %8699 = vmatpush1.msra.mxu0 %v4686
    %8700 = vmatprep.subr.mxu0 %v4695
    %8701 = vmatpush1.msra.mxu0 %v4694
    %8702 = vmatprep.mubr.f32.mxu0 %v7965
    %8703 = vmatmul.mubr.f32.gmra.mrb[0].mxu0 %v7964
    %v8704 = vpop.f32.mrb[0].mxu0
    %v8705 = vadd.f32 %v8634, %v8704
    %v8706 = vpop.f32.mrb[0].mxu0
    %v8707 = vadd.f32 %v8636, %v8706
    %8708 = vdwg.mxu0
    %8709 = vmatprep.subr.mxu0 %v4193
    %8710 = vmatpush1.msra.mxu0 %v4192
    %8711 = vmatprep.subr.mxu0 %v4201
    %8712 = vmatpush1.msra.mxu0 %v4200
    %8713 = vmatprep.subr.mxu0 %v4209
    %8714 = vmatpush1.msra.mxu0 %v4208
    %8715 = vmatprep.subr.mxu0 %v4217
    %8716 = vmatpush1.msra.mxu0 %v4216
    %8717 = vmatprep.subr.mxu0 %v4225
    %8718 = vmatpush1.msra.mxu0 %v4224
    %8719 = vmatprep.subr.mxu0 %v4233
    %8720 = vmatpush1.msra.mxu0 %v4232
    %8721 = vmatprep.subr.mxu0 %v4241
    %8722 = vmatpush1.msra.mxu0 %v4240
    %8723 = vmatprep.subr.mxu0 %v4249
    %8724 = vmatpush1.msra.mxu0 %v4248
    %8725 = vmatprep.subr.mxu0 %v4257
    %8726 = vmatpush1.msra.mxu0 %v4256
    %8727 = vmatprep.subr.mxu0 %v4265
    %8728 = vmatpush1.msra.mxu0 %v4264
    %8729 = vmatprep.subr.mxu0 %v4273
    %8730 = vmatpush1.msra.mxu0 %v4272
    %8731 = vmatprep.subr.mxu0 %v4281
    %8732 = vmatpush1.msra.mxu0 %v4280
    %8733 = vmatprep.subr.mxu0 %v4289
    %8734 = vmatpush1.msra.mxu0 %v4288
    %8735 = vmatprep.subr.mxu0 %v4297
    %8736 = vmatpush1.msra.mxu0 %v4296
    %8737 = vmatprep.subr.mxu0 %v4305
    %8738 = vmatpush1.msra.mxu0 %v4304
    %8739 = vmatprep.subr.mxu0 %v4313
    %8740 = vmatpush1.msra.mxu0 %v4312
    %8741 = vmatprep.subr.mxu0 %v4321
    %8742 = vmatpush1.msra.mxu0 %v4320
    %8743 = vmatprep.subr.mxu0 %v4329
    %8744 = vmatpush1.msra.mxu0 %v4328
    %8745 = vmatprep.subr.mxu0 %v4337
    %8746 = vmatpush1.msra.mxu0 %v4336
    %8747 = vmatprep.subr.mxu0 %v4345
    %8748 = vmatpush1.msra.mxu0 %v4344
    %8749 = vmatprep.subr.mxu0 %v4353
    %8750 = vmatpush1.msra.mxu0 %v4352
    %8751 = vmatprep.subr.mxu0 %v4361
    %8752 = vmatpush1.msra.mxu0 %v4360
    %8753 = vmatprep.subr.mxu0 %v4369
    %8754 = vmatpush1.msra.mxu0 %v4368
    %8755 = vmatprep.subr.mxu0 %v4377
    %8756 = vmatpush1.msra.mxu0 %v4376
    %8757 = vmatprep.subr.mxu0 %v4385
    %8758 = vmatpush1.msra.mxu0 %v4384
    %8759 = vmatprep.subr.mxu0 %v4393
    %8760 = vmatpush1.msra.mxu0 %v4392
    %8761 = vmatprep.subr.mxu0 %v4401
    %8762 = vmatpush1.msra.mxu0 %v4400
    %8763 = vmatprep.subr.mxu0 %v4409
    %8764 = vmatpush1.msra.mxu0 %v4408
    %8765 = vmatprep.subr.mxu0 %v4417
    %8766 = vmatpush1.msra.mxu0 %v4416
    %8767 = vmatprep.subr.mxu0 %v4425
    %8768 = vmatpush1.msra.mxu0 %v4424
    %8769 = vmatprep.subr.mxu0 %v4433
    %8770 = vmatpush1.msra.mxu0 %v4432
    %8771 = vmatprep.subr.mxu0 %v4441
    %8772 = vmatpush1.msra.mxu0 %v4440
    %8773 = vmatprep.mubr.f32.mxu0 %v8422
    %8774 = vmatmul.mubr.f32.gmra.mrb[0].mxu0 %v8415
    %v8775 = vpop.f32.mrb[0].mxu0
    %v8776 = vadd.f32 %v4721, %v8775
    %v8777 = vpop.f32.mrb[0].mxu0
    %v8778 = vadd.f32 %v4725, %v8777
    %8779 = vdwg.mxu0
    %8780 = vmatprep.subr.mxu0 %v4449
    %8781 = vmatpush1.msra.mxu0 %v4448
    %8782 = vmatprep.subr.mxu0 %v4457
    %8783 = vmatpush1.msra.mxu0 %v4456
    %8784 = vmatprep.subr.mxu0 %v4465
    %8785 = vmatpush1.msra.mxu0 %v4464
    %8786 = vmatprep.subr.mxu0 %v4473
    %8787 = vmatpush1.msra.mxu0 %v4472
    %8788 = vmatprep.subr.mxu0 %v4481
    %8789 = vmatpush1.msra.mxu0 %v4480
    %8790 = vmatprep.subr.mxu0 %v4489
    %8791 = vmatpush1.msra.mxu0 %v4488
    %8792 = vmatprep.subr.mxu0 %v4497
    %8793 = vmatpush1.msra.mxu0 %v4496
    %8794 = vmatprep.subr.mxu0 %v4505
    %8795 = vmatpush1.msra.mxu0 %v4504
    %8796 = vmatprep.subr.mxu0 %v4513
    %8797 = vmatpush1.msra.mxu0 %v4512
    %8798 = vmatprep.subr.mxu0 %v4521
    %8799 = vmatpush1.msra.mxu0 %v4520
    %8800 = vmatprep.subr.mxu0 %v4529
    %8801 = vmatpush1.msra.mxu0 %v4528
    %8802 = vmatprep.subr.mxu0 %v4537
    %8803 = vmatpush1.msra.mxu0 %v4536
    %8804 = vmatprep.subr.mxu0 %v4545
    %8805 = vmatpush1.msra.mxu0 %v4544
    %8806 = vmatprep.subr.mxu0 %v4553
    %8807 = vmatpush1.msra.mxu0 %v4552
    %8808 = vmatprep.subr.mxu0 %v4561
    %8809 = vmatpush1.msra.mxu0 %v4560
    %8810 = vmatprep.subr.mxu0 %v4569
    %8811 = vmatpush1.msra.mxu0 %v4568
    %8812 = vmatprep.subr.mxu0 %v4577
    %8813 = vmatpush1.msra.mxu0 %v4576
    %8814 = vmatprep.subr.mxu0 %v4585
    %8815 = vmatpush1.msra.mxu0 %v4584
    %8816 = vmatprep.subr.mxu0 %v4593
    %8817 = vmatpush1.msra.mxu0 %v4592
    %8818 = vmatprep.subr.mxu0 %v4601
    %8819 = vmatpush1.msra.mxu0 %v4600
    %8820 = vmatprep.subr.mxu0 %v4609
    %8821 = vmatpush1.msra.mxu0 %v4608
    %8822 = vmatprep.subr.mxu0 %v4617
    %8823 = vmatpush1.msra.mxu0 %v4616
    %8824 = vmatprep.subr.mxu0 %v4625
    %8825 = vmatpush1.msra.mxu0 %v4624
    %8826 = vmatprep.subr.mxu0 %v4633
    %8827 = vmatpush1.msra.mxu0 %v4632
    %8828 = vmatprep.subr.mxu0 %v4641
    %8829 = vmatpush1.msra.mxu0 %v4640
    %8830 = vmatprep.subr.mxu0 %v4649
    %8831 = vmatpush1.msra.mxu0 %v4648
    %8832 = vmatprep.subr.mxu0 %v4657
    %8833 = vmatpush1.msra.mxu0 %v4656
    %8834 = vmatprep.subr.mxu0 %v4665
    %8835 = vmatpush1.msra.mxu0 %v4664
    %8836 = vmatprep.subr.mxu0 %v4673
    %8837 = vmatpush1.msra.mxu0 %v4672
    %8838 = vmatprep.subr.mxu0 %v4681
    %8839 = vmatpush1.msra.mxu0 %v4680
    %8840 = vmatprep.subr.mxu0 %v4689
    %8841 = vmatpush1.msra.mxu0 %v4688
    %8842 = vmatprep.subr.mxu0 %v4697
    %8843 = vmatpush1.msra.mxu0 %v4696
    %8844 = vmatprep.mubr.f32.mxu0 %v7965
    %8845 = vmatmul.mubr.f32.gmra.mrb[0].mxu0 %v7964
    %v8846 = vpop.f32.mrb[0].mxu0
    %v8847 = vadd.f32 %v8776, %v8846
    %v8848 = vpop.f32.mrb[0].mxu0
    %v8849 = vadd.f32 %v8778, %v8848
    %8850 = vdwg.mxu0
    %8851 = vmatprep.subr.mxu0 %v4195
    %8852 = vmatpush1.msra.mxu0 %v4194
    %8853 = vmatprep.subr.mxu0 %v4203
    %8854 = vmatpush1.msra.mxu0 %v4202
    %8855 = vmatprep.subr.mxu0 %v4211
    %8856 = vmatpush1.msra.mxu0 %v4210
    %8857 = vmatprep.subr.mxu0 %v4219
    %8858 = vmatpush1.msra.mxu0 %v4218
    %8859 = vmatprep.subr.mxu0 %v4227
    %8860 = vmatpush1.msra.mxu0 %v4226
    %8861 = vmatprep.subr.mxu0 %v4235
    %8862 = vmatpush1.msra.mxu0 %v4234
    %8863 = vmatprep.subr.mxu0 %v4243
    %8864 = vmatpush1.msra.mxu0 %v4242
    %8865 = vmatprep.subr.mxu0 %v4251
    %8866 = vmatpush1.msra.mxu0 %v4250
    %8867 = vmatprep.subr.mxu0 %v4259
    %8868 = vmatpush1.msra.mxu0 %v4258
    %8869 = vmatprep.subr.mxu0 %v4267
    %8870 = vmatpush1.msra.mxu0 %v4266
    %8871 = vmatprep.subr.mxu0 %v4275
    %8872 = vmatpush1.msra.mxu0 %v4274
    %8873 = vmatprep.subr.mxu0 %v4283
    %8874 = vmatpush1.msra.mxu0 %v4282
    %8875 = vmatprep.subr.mxu0 %v4291
    %8876 = vmatpush1.msra.mxu0 %v4290
    %8877 = vmatprep.subr.mxu0 %v4299
    %8878 = vmatpush1.msra.mxu0 %v4298
    %8879 = vmatprep.subr.mxu0 %v4307
    %8880 = vmatpush1.msra.mxu0 %v4306
    %8881 = vmatprep.subr.mxu0 %v4315
    %8882 = vmatpush1.msra.mxu0 %v4314
    %8883 = vmatprep.subr.mxu0 %v4323
    %8884 = vmatpush1.msra.mxu0 %v4322
    %8885 = vmatprep.subr.mxu0 %v4331
    %8886 = vmatpush1.msra.mxu0 %v4330
    %8887 = vmatprep.subr.mxu0 %v4339
    %8888 = vmatpush1.msra.mxu0 %v4338
    %8889 = vmatprep.subr.mxu0 %v4347
    %8890 = vmatpush1.msra.mxu0 %v4346
    %8891 = vmatprep.subr.mxu0 %v4355
    %8892 = vmatpush1.msra.mxu0 %v4354
    %8893 = vmatprep.subr.mxu0 %v4363
    %8894 = vmatpush1.msra.mxu0 %v4362
    %8895 = vmatprep.subr.mxu0 %v4371
    %8896 = vmatpush1.msra.mxu0 %v4370
    %8897 = vmatprep.subr.mxu0 %v4379
    %8898 = vmatpush1.msra.mxu0 %v4378
    %8899 = vmatprep.subr.mxu0 %v4387
    %8900 = vmatpush1.msra.mxu0 %v4386
    %8901 = vmatprep.subr.mxu0 %v4395
    %8902 = vmatpush1.msra.mxu0 %v4394
    %8903 = vmatprep.subr.mxu0 %v4403
    %8904 = vmatpush1.msra.mxu0 %v4402
    %8905 = vmatprep.subr.mxu0 %v4411
    %8906 = vmatpush1.msra.mxu0 %v4410
    %8907 = vmatprep.subr.mxu0 %v4419
    %8908 = vmatpush1.msra.mxu0 %v4418
    %8909 = vmatprep.subr.mxu0 %v4427
    %8910 = vmatpush1.msra.mxu0 %v4426
    %8911 = vmatprep.subr.mxu0 %v4435
    %8912 = vmatpush1.msra.mxu0 %v4434
    %8913 = vmatprep.subr.mxu0 %v4443
    %8914 = vmatpush1.msra.mxu0 %v4442
    %8915 = vmatprep.mubr.f32.mxu0 %v8422
    %8916 = vmatmul.mubr.f32.gmra.mrb[0].mxu0 %v8415
    %v8917 = vpop.f32.mrb[0].mxu0
    %v8918 = vadd.f32 %v4729, %v8917
    %v8919 = vpop.f32.mrb[0].mxu0
    %v8920 = vadd.f32 %v4733, %v8919
    %8921 = vdwg.mxu0
    %8922 = vmatprep.subr.mxu0 %v4451
    %8923 = vmatpush1.msra.mxu0 %v4450
    %8924 = vmatprep.subr.mxu0 %v4459
    %8925 = vmatpush1.msra.mxu0 %v4458
    %8926 = vmatprep.subr.mxu0 %v4467
    %8927 = vmatpush1.msra.mxu0 %v4466
    %8928 = vmatprep.subr.mxu0 %v4475
    %8929 = vmatpush1.msra.mxu0 %v4474
    %8930 = vmatprep.subr.mxu0 %v4483
    %8931 = vmatpush1.msra.mxu0 %v4482
    %8932 = vmatprep.subr.mxu0 %v4491
    %8933 = vmatpush1.msra.mxu0 %v4490
    %8934 = vmatprep.subr.mxu0 %v4499
    %8935 = vmatpush1.msra.mxu0 %v4498
    %8936 = vmatprep.subr.mxu0 %v4507
    %8937 = vmatpush1.msra.mxu0 %v4506
    %8938 = vmatprep.subr.mxu0 %v4515
    %8939 = vmatpush1.msra.mxu0 %v4514
    %8940 = vmatprep.subr.mxu0 %v4523
    %8941 = vmatpush1.msra.mxu0 %v4522
    %8942 = vmatprep.subr.mxu0 %v4531
    %8943 = vmatpush1.msra.mxu0 %v4530
    %8944 = vmatprep.subr.mxu0 %v4539
    %8945 = vmatpush1.msra.mxu0 %v4538
    %8946 = vmatprep.subr.mxu0 %v4547
    %8947 = vmatpush1.msra.mxu0 %v4546
    %8948 = vmatprep.subr.mxu0 %v4555
    %8949 = vmatpush1.msra.mxu0 %v4554
    %8950 = vmatprep.subr.mxu0 %v4563
    %8951 = vmatpush1.msra.mxu0 %v4562
    %8952 = vmatprep.subr.mxu0 %v4571
    %8953 = vmatpush1.msra.mxu0 %v4570
    %8954 = vmatprep.subr.mxu0 %v4579
    %8955 = vmatpush1.msra.mxu0 %v4578
    %8956 = vmatprep.subr.mxu0 %v4587
    %8957 = vmatpush1.msra.mxu0 %v4586
    %8958 = vmatprep.subr.mxu0 %v4595
    %8959 = vmatpush1.msra.mxu0 %v4594
    %8960 = vmatprep.subr.mxu0 %v4603
    %8961 = vmatpush1.msra.mxu0 %v4602
    %8962 = vmatprep.subr.mxu0 %v4611
    %8963 = vmatpush1.msra.mxu0 %v4610
    %8964 = vmatprep.subr.mxu0 %v4619
    %8965 = vmatpush1.msra.mxu0 %v4618
    %8966 = vmatprep.subr.mxu0 %v4627
    %8967 = vmatpush1.msra.mxu0 %v4626
    %8968 = vmatprep.subr.mxu0 %v4635
    %8969 = vmatpush1.msra.mxu0 %v4634
    %8970 = vmatprep.subr.mxu0 %v4643
    %8971 = vmatpush1.msra.mxu0 %v4642
    %8972 = vmatprep.subr.mxu0 %v4651
    %8973 = vmatpush1.msra.mxu0 %v4650
    %8974 = vmatprep.subr.mxu0 %v4659
    %8975 = vmatpush1.msra.mxu0 %v4658
    %8976 = vmatprep.subr.mxu0 %v4667
    %8977 = vmatpush1.msra.mxu0 %v4666
    %8978 = vmatprep.subr.mxu0 %v4675
    %8979 = vmatpush1.msra.mxu0 %v4674
    %8980 = vmatprep.subr.mxu0 %v4683
    %8981 = vmatpush1.msra.mxu0 %v4682
    %8982 = vmatprep.subr.mxu0 %v4691
    %8983 = vmatpush1.msra.mxu0 %v4690
    %8984 = vmatprep.subr.mxu0 %v4699
    %8985 = vmatpush1.msra.mxu0 %v4698
    %8986 = vmatprep.mubr.f32.mxu0 %v7965
    %8987 = vmatmul.mubr.f32.gmra.mrb[0].mxu0 %v7964
    %v8988 = vpop.f32.mrb[0].mxu0
    %v8989 = vadd.f32 %v8918, %v8988
    %v8990 = vpop.f32.mrb[0].mxu0
    %v8991 = vadd.f32 %v8920, %v8990
    %8992 = vdwg.mxu0
    %v8993 = vxor.u32 %v8563, 2147483648
    %v8994 = vxor.u32 %v8565, 2147483648
    %v8995 = vmul.f32 %v8993, 1.442695
    %v8996 = vpow.pop %v8995
    %v8997 = vmul.f32 %v8994, 1.442695
    %v8998 = vpow.pop %v8997
    %v8999 = vadd.f32 %v8996, 1.0
    %v9000 = vadd.f32 %v8998, 1.0
    %v9001 = vrcp.pop %v8999
    %v9002 = vmul.f32 1.0, %v9001
    %v9003 = vrcp.pop %v9000
    %v9004 = vmul.f32 1.0, %v9003
    %v9005 = vxor.u32 %v8705, 2147483648
    %v9006 = vxor.u32 %v8707, 2147483648
    %v9007 = vmul.f32 %v9005, 1.442695
    %v9008 = vpow.pop %v9007
    %v9009 = vmul.f32 %v9006, 1.442695
    %v9010 = vpow.pop %v9009
    %v9011 = vadd.f32 %v9008, 1.0
    %v9012 = vadd.f32 %v9010, 1.0
    %v9013 = vrcp.pop %v9011
    %v9014 = vmul.f32 1.0, %v9013
    %v9015 = vrcp.pop %v9012
    %v9016 = vmul.f32 1.0, %v9015
    %v9017 = vtanh.pop %v8847
    %v9018 = vtanh.pop %v8849
    %v9019 = vxor.u32 %v8989, 2147483648
    %v9020 = vxor.u32 %v8991, 2147483648
    %v9021 = vmul.f32 %v9019, 1.442695
    %v9022 = vpow.pop %v9021
    %v9023 = vmul.f32 %v9020, 1.442695
    %v9024 = vpow.pop %v9023
    %v9025 = vadd.f32 %v9022, 1.0
    %v9026 = vadd.f32 %v9024, 1.0
    %v9027 = vrcp.pop %v9025
    %v9028 = vmul.f32 1.0, %v9027
    %v9029 = vrcp.pop %v9026
    %v9030 = vmul.f32 1.0, %v9029
    %v9031 = vmul.f32 %v9014, %v7960
    %v9032 = vmul.f32 %v9016, %v7961
    %v9033 = vmul.f32 %v9002, %v9017
    %v9034 = vmul.f32 %v9004, %v9018
    %v9035 = vadd.f32 %v9031, %v9033
    %v9036 = vadd.f32 %v9032, %v9034
    %v9037 = vtanh.pop %v9035
    %v9038 = vtanh.pop %v9036
    %v9039 = vmul.f32 %v9028, %v9037
    %v9040 = vmul.f32 %v9030, %v9038
    %s9041 = scalar_lea.vmem [#allocation4], 4
    %v9042 = vld [vmem:[%s9041] ss:$8 sm:$0xf]
    %v9043 = vld [vmem:[%s9041] ss:$8 sm:$0xf0]
    %v9044 = vor.u32 %v9042, %v9043
    %s9045 = scalar_lea.vmem [#allocation4], 68
    %v9046 = vld [vmem:[%s9045] ss:$8 sm:$0xf]
    %v9047 = vld [vmem:[%s9045] ss:$8 sm:$0xf0]
    %v9048 = vor.u32 %v9046, %v9047
    %9049 = vmatprep.subr.mxu0 %v3933
    %9050 = vmatpush1.msra.mxu0 %v3932
    %9051 = vmatprep.subr.mxu0 %v3941
    %9052 = vmatpush1.msra.mxu0 %v3940
    %9053 = vmatprep.subr.mxu0 %v3949
    %9054 = vmatpush1.msra.mxu0 %v3948
    %9055 = vmatprep.subr.mxu0 %v3957
    %9056 = vmatpush1.msra.mxu0 %v3956
    %9057 = vmatprep.subr.mxu0 %v3965
    %9058 = vmatpush1.msra.mxu0 %v3964
    %9059 = vmatprep.subr.mxu0 %v3973
    %9060 = vmatpush1.msra.mxu0 %v3972
    %9061 = vmatprep.subr.mxu0 %v3981
    %9062 = vmatpush1.msra.mxu0 %v3980
    %9063 = vmatprep.subr.mxu0 %v3989
    %9064 = vmatpush1.msra.mxu0 %v3988
    %9065 = vmatprep.subr.mxu0 %v3997
    %9066 = vmatpush1.msra.mxu0 %v3996
    %9067 = vmatprep.subr.mxu0 %v4005
    %9068 = vmatpush1.msra.mxu0 %v4004
    %9069 = vmatprep.subr.mxu0 %v4013
    %9070 = vmatpush1.msra.mxu0 %v4012
    %9071 = vmatprep.subr.mxu0 %v4021
    %9072 = vmatpush1.msra.mxu0 %v4020
    %9073 = vmatprep.subr.mxu0 %v4029
    %9074 = vmatpush1.msra.mxu0 %v4028
    %9075 = vmatprep.subr.mxu0 %v4037
    %9076 = vmatpush1.msra.mxu0 %v4036
    %9077 = vmatprep.subr.mxu0 %v4045
    %9078 = vmatpush1.msra.mxu0 %v4044
    %9079 = vmatprep.subr.mxu0 %v4053
    %9080 = vmatpush1.msra.mxu0 %v4052
    %9081 = vmatprep.subr.mxu0 %v4061
    %9082 = vmatpush1.msra.mxu0 %v4060
    %9083 = vmatprep.subr.mxu0 %v4069
    %9084 = vmatpush1.msra.mxu0 %v4068
    %9085 = vmatprep.subr.mxu0 %v4077
    %9086 = vmatpush1.msra.mxu0 %v4076
    %9087 = vmatprep.subr.mxu0 %v4085
    %9088 = vmatpush1.msra.mxu0 %v4084
    %9089 = vmatprep.subr.mxu0 %v4093
    %9090 = vmatpush1.msra.mxu0 %v4092
    %9091 = vmatprep.subr.mxu0 %v4101
    %9092 = vmatpush1.msra.mxu0 %v4100
    %9093 = vmatprep.subr.mxu0 %v4109
    %9094 = vmatpush1.msra.mxu0 %v4108
    %9095 = vmatprep.subr.mxu0 %v4117
    %9096 = vmatpush1.msra.mxu0 %v4116
    %9097 = vmatprep.subr.mxu0 %v4125
    %9098 = vmatpush1.msra.mxu0 %v4124
    %9099 = vmatprep.subr.mxu0 %v4133
    %9100 = vmatpush1.msra.mxu0 %v4132
    %9101 = vmatprep.subr.mxu0 %v4141
    %9102 = vmatpush1.msra.mxu0 %v4140
    %9103 = vmatprep.subr.mxu0 %v4149
    %9104 = vmatpush1.msra.mxu0 %v4148
    %9105 = vmatprep.subr.mxu0 %v4157
    %9106 = vmatpush1.msra.mxu0 %v4156
    %9107 = vmatprep.subr.mxu0 %v4165
    %9108 = vmatpush1.msra.mxu0 %v4164
    %9109 = vmatprep.subr.mxu0 %v4173
    %9110 = vmatpush1.msra.mxu0 %v4172
    %9111 = vmatprep.subr.mxu0 %v4181
    %9112 = vmatpush1.msra.mxu0 %v4180
    %9113 = vmatprep.mubr.f32.mxu0 %v8422
    %9114 = vmatmul.mubr.f32.gmra.mrb[0].mxu0 %v8415
    %v9115 = vpop.f32.mrb[0].mxu0
    %v9116 = vadd.f32 0.0, %v9115
    %v9117 = vpop.f32.mrb[0].mxu0
    %v9118 = vadd.f32 0.0, %v9117
    %9119 = vdwg.mxu0
    %9120 = vmatprep.subr.mxu0 %v3935
    %9121 = vmatpush1.msra.mxu0 %v3934
    %9122 = vmatprep.subr.mxu0 %v3943
    %9123 = vmatpush1.msra.mxu0 %v3942
    %9124 = vmatprep.subr.mxu0 %v3951
    %9125 = vmatpush1.msra.mxu0 %v3950
    %9126 = vmatprep.subr.mxu0 %v3959
    %9127 = vmatpush1.msra.mxu0 %v3958
    %9128 = vmatprep.subr.mxu0 %v3967
    %9129 = vmatpush1.msra.mxu0 %v3966
    %9130 = vmatprep.subr.mxu0 %v3975
    %9131 = vmatpush1.msra.mxu0 %v3974
    %9132 = vmatprep.subr.mxu0 %v3983
    %9133 = vmatpush1.msra.mxu0 %v3982
    %9134 = vmatprep.subr.mxu0 %v3991
    %9135 = vmatpush1.msra.mxu0 %v3990
    %9136 = vmatprep.subr.mxu0 %v3999
    %9137 = vmatpush1.msra.mxu0 %v3998
    %9138 = vmatprep.subr.mxu0 %v4007
    %9139 = vmatpush1.msra.mxu0 %v4006
    %9140 = vmatprep.subr.mxu0 %v4015
    %9141 = vmatpush1.msra.mxu0 %v4014
    %9142 = vmatprep.subr.mxu0 %v4023
    %9143 = vmatpush1.msra.mxu0 %v4022
    %9144 = vmatprep.subr.mxu0 %v4031
    %9145 = vmatpush1.msra.mxu0 %v4030
    %9146 = vmatprep.subr.mxu0 %v4039
    %9147 = vmatpush1.msra.mxu0 %v4038
    %9148 = vmatprep.subr.mxu0 %v4047
    %9149 = vmatpush1.msra.mxu0 %v4046
    %9150 = vmatprep.subr.mxu0 %v4055
    %9151 = vmatpush1.msra.mxu0 %v4054
    %9152 = vmatprep.subr.mxu0 %v4063
    %9153 = vmatpush1.msra.mxu0 %v4062
    %9154 = vmatprep.subr.mxu0 %v4071
    %9155 = vmatpush1.msra.mxu0 %v4070
    %9156 = vmatprep.subr.mxu0 %v4079
    %9157 = vmatpush1.msra.mxu0 %v4078
    %9158 = vmatprep.subr.mxu0 %v4087
    %9159 = vmatpush1.msra.mxu0 %v4086
    %9160 = vmatprep.subr.mxu0 %v4095
    %9161 = vmatpush1.msra.mxu0 %v4094
    %9162 = vmatprep.subr.mxu0 %v4103
    %9163 = vmatpush1.msra.mxu0 %v4102
    %9164 = vmatprep.subr.mxu0 %v4111
    %9165 = vmatpush1.msra.mxu0 %v4110
    %9166 = vmatprep.subr.mxu0 %v4119
    %9167 = vmatpush1.msra.mxu0 %v4118
    %9168 = vmatprep.subr.mxu0 %v4127
    %9169 = vmatpush1.msra.mxu0 %v4126
    %9170 = vmatprep.subr.mxu0 %v4135
    %9171 = vmatpush1.msra.mxu0 %v4134
    %9172 = vmatprep.subr.mxu0 %v4143
    %9173 = vmatpush1.msra.mxu0 %v4142
    %9174 = vmatprep.subr.mxu0 %v4151
    %9175 = vmatpush1.msra.mxu0 %v4150
    %9176 = vmatprep.subr.mxu0 %v4159
    %9177 = vmatpush1.msra.mxu0 %v4158
    %9178 = vmatprep.subr.mxu0 %v4167
    %9179 = vmatpush1.msra.mxu0 %v4166
    %9180 = vmatprep.subr.mxu0 %v4175
    %9181 = vmatpush1.msra.mxu0 %v4174
    %9182 = vmatprep.subr.mxu0 %v4183
    %9183 = vmatpush1.msra.mxu0 %v4182
    %9184 = vmatprep.mubr.f32.mxu0 %v8422
    %9185 = vmatmul.mubr.f32.gmra.mrb[0].mxu0 %v8415
    %v9186 = vpop.f32.mrb[0].mxu0
    %v9187 = vadd.f32 0.0, %v9186
    %v9188 = vpop.f32.mrb[0].mxu0
    %v9189 = vadd.f32 0.0, %v9188
    %9190 = vdwg.mxu0
    %9191 = vmatprep.subr.mxu0 %v3937
    %9192 = vmatpush1.msra.mxu0 %v3936
    %9193 = vmatprep.subr.mxu0 %v3945
    %9194 = vmatpush1.msra.mxu0 %v3944
    %9195 = vmatprep.subr.mxu0 %v3953
    %9196 = vmatpush1.msra.mxu0 %v3952
    %9197 = vmatprep.subr.mxu0 %v3961
    %9198 = vmatpush1.msra.mxu0 %v3960
    %9199 = vmatprep.subr.mxu0 %v3969
    %9200 = vmatpush1.msra.mxu0 %v3968
    %9201 = vmatprep.subr.mxu0 %v3977
    %9202 = vmatpush1.msra.mxu0 %v3976
    %9203 = vmatprep.subr.mxu0 %v3985
    %9204 = vmatpush1.msra.mxu0 %v3984
    %9205 = vmatprep.subr.mxu0 %v3993
    %9206 = vmatpush1.msra.mxu0 %v3992
    %9207 = vmatprep.subr.mxu0 %v4001
    %9208 = vmatpush1.msra.mxu0 %v4000
    %9209 = vmatprep.subr.mxu0 %v4009
    %9210 = vmatpush1.msra.mxu0 %v4008
    %9211 = vmatprep.subr.mxu0 %v4017
    %9212 = vmatpush1.msra.mxu0 %v4016
    %9213 = vmatprep.subr.mxu0 %v4025
    %9214 = vmatpush1.msra.mxu0 %v4024
    %9215 = vmatprep.subr.mxu0 %v4033
    %9216 = vmatpush1.msra.mxu0 %v4032
    %9217 = vmatprep.subr.mxu0 %v4041
    %9218 = vmatpush1.msra.mxu0 %v4040
    %9219 = vmatprep.subr.mxu0 %v4049
    %9220 = vmatpush1.msra.mxu0 %v4048
    %9221 = vmatprep.subr.mxu0 %v4057
    %9222 = vmatpush1.msra.mxu0 %v4056
    %9223 = vmatprep.subr.mxu0 %v4065
    %9224 = vmatpush1.msra.mxu0 %v4064
    %9225 = vmatprep.subr.mxu0 %v4073
    %9226 = vmatpush1.msra.mxu0 %v4072
    %9227 = vmatprep.subr.mxu0 %v4081
    %9228 = vmatpush1.msra.mxu0 %v4080
    %9229 = vmatprep.subr.mxu0 %v4089
    %9230 = vmatpush1.msra.mxu0 %v4088
    %9231 = vmatprep.subr.mxu0 %v4097
    %9232 = vmatpush1.msra.mxu0 %v4096
    %9233 = vmatprep.subr.mxu0 %v4105
    %9234 = vmatpush1.msra.mxu0 %v4104
    %9235 = vmatprep.subr.mxu0 %v4113
    %9236 = vmatpush1.msra.mxu0 %v4112
    %9237 = vmatprep.subr.mxu0 %v4121
    %9238 = vmatpush1.msra.mxu0 %v4120
    %9239 = vmatprep.subr.mxu0 %v4129
    %9240 = vmatpush1.msra.mxu0 %v4128
    %9241 = vmatprep.subr.mxu0 %v4137
    %9242 = vmatpush1.msra.mxu0 %v4136
    %9243 = vmatprep.subr.mxu0 %v4145
    %9244 = vmatpush1.msra.mxu0 %v4144
    %9245 = vmatprep.subr.mxu0 %v4153
    %9246 = vmatpush1.msra.mxu0 %v4152
    %9247 = vmatprep.subr.mxu0 %v4161
    %9248 = vmatpush1.msra.mxu0 %v4160
    %9249 = vmatprep.subr.mxu0 %v4169
    %9250 = vmatpush1.msra.mxu0 %v4168
    %9251 = vmatprep.subr.mxu0 %v4177
    %9252 = vmatpush1.msra.mxu0 %v4176
    %9253 = vmatprep.subr.mxu0 %v4185
    %9254 = vmatpush1.msra.mxu0 %v4184
    %9255 = vmatprep.mubr.f32.mxu0 %v8422
    %9256 = vmatmul.mubr.f32.gmra.mrb[0].mxu0 %v8415
    %v9257 = vpop.f32.mrb[0].mxu0
    %v9258 = vadd.f32 0.0, %v9257
    %v9259 = vpop.f32.mrb[0].mxu0
    %v9260 = vadd.f32 0.0, %v9259
    %9261 = vdwg.mxu0
    %9262 = vmatprep.subr.mxu0 %v3939
    %9263 = vmatpush1.msra.mxu0 %v3938
    %9264 = vmatprep.subr.mxu0 %v3947
    %9265 = vmatpush1.msra.mxu0 %v3946
    %9266 = vmatprep.subr.mxu0 %v3955
    %9267 = vmatpush1.msra.mxu0 %v3954
    %9268 = vmatprep.subr.mxu0 %v3963
    %9269 = vmatpush1.msra.mxu0 %v3962
    %9270 = vmatprep.subr.mxu0 %v3971
    %9271 = vmatpush1.msra.mxu0 %v3970
    %9272 = vmatprep.subr.mxu0 %v3979
    %9273 = vmatpush1.msra.mxu0 %v3978
    %9274 = vmatprep.subr.mxu0 %v3987
    %9275 = vmatpush1.msra.mxu0 %v3986
    %9276 = vmatprep.subr.mxu0 %v3995
    %9277 = vmatpush1.msra.mxu0 %v3994
    %9278 = vmatprep.subr.mxu0 %v4003
    %9279 = vmatpush1.msra.mxu0 %v4002
    %9280 = vmatprep.subr.mxu0 %v4011
    %9281 = vmatpush1.msra.mxu0 %v4010
    %9282 = vmatprep.subr.mxu0 %v4019
    %9283 = vmatpush1.msra.mxu0 %v4018
    %9284 = vmatprep.subr.mxu0 %v4027
    %9285 = vmatpush1.msra.mxu0 %v4026
    %9286 = vmatprep.subr.mxu0 %v4035
    %9287 = vmatpush1.msra.mxu0 %v4034
    %9288 = vmatprep.subr.mxu0 %v4043
    %9289 = vmatpush1.msra.mxu0 %v4042
    %9290 = vmatprep.subr.mxu0 %v4051
    %9291 = vmatpush1.msra.mxu0 %v4050
    %9292 = vmatprep.subr.mxu0 %v4059
    %9293 = vmatpush1.msra.mxu0 %v4058
    %9294 = vmatprep.subr.mxu0 %v4067
    %9295 = vmatpush1.msra.mxu0 %v4066
    %9296 = vmatprep.subr.mxu0 %v4075
    %9297 = vmatpush1.msra.mxu0 %v4074
    %9298 = vmatprep.subr.mxu0 %v4083
    %9299 = vmatpush1.msra.mxu0 %v4082
    %9300 = vmatprep.subr.mxu0 %v4091
    %9301 = vmatpush1.msra.mxu0 %v4090
    %9302 = vmatprep.subr.mxu0 %v4099
    %9303 = vmatpush1.msra.mxu0 %v4098
    %9304 = vmatprep.subr.mxu0 %v4107
    %9305 = vmatpush1.msra.mxu0 %v4106
    %9306 = vmatprep.subr.mxu0 %v4115
    %9307 = vmatpush1.msra.mxu0 %v4114
    %9308 = vmatprep.subr.mxu0 %v4123
    %9309 = vmatpush1.msra.mxu0 %v4122
    %9310 = vmatprep.subr.mxu0 %v4131
    %9311 = vmatpush1.msra.mxu0 %v4130
    %9312 = vmatprep.subr.mxu0 %v4139
    %9313 = vmatpush1.msra.mxu0 %v4138
    %9314 = vmatprep.subr.mxu0 %v4147
    %9315 = vmatpush1.msra.mxu0 %v4146
    %9316 = vmatprep.subr.mxu0 %v4155
    %9317 = vmatpush1.msra.mxu0 %v4154
    %9318 = vmatprep.subr.mxu0 %v4163
    %9319 = vmatpush1.msra.mxu0 %v4162
    %9320 = vmatprep.subr.mxu0 %v4171
    %9321 = vmatpush1.msra.mxu0 %v4170
    %9322 = vmatprep.subr.mxu0 %v4179
    %9323 = vmatpush1.msra.mxu0 %v4178
    %9324 = vmatprep.subr.mxu0 %v4187
    %9325 = vmatpush1.msra.mxu0 %v4186
    %9326 = vmatprep.mubr.f32.mxu0 %v8422
    %9327 = vmatmul.mubr.f32.gmra.mrb[0].mxu0 %v8415
    %v9328 = vpop.f32.mrb[0].mxu0
    %v9329 = vadd.f32 0.0, %v9328
    %v9330 = vpop.f32.mrb[0].mxu0
    %v9331 = vadd.f32 0.0, %v9330
    %9332 = vdwg.mxu0
    %v9341 = vcombine.low %v9116, %v9118
    %v9342 = vcombine.low %v9187, %v9189
    %v9343 = vcombine.low %v9258, %v9260
    %v9344 = vcombine.low %v9329, %v9331
    %v9346 = vunpack.c.l.s4 1966171168
    %v9347 = vunpack.c.0.s8 %v9346
    %v9348 = vlaneseq
    %v9349 = vshrl.u32 %v9348, 7
    %v9350 = vsub.s32 %v9347, %v9349
    %v9351 = vrot.slane %v9341, %v9350
    %v9353 = vunpack.c.l.s4 1966171168
    %v9354 = vunpack.c.0.s8 %v9353
    %v9355 = vlaneseq
    %v9356 = vshrl.u32 %v9355, 7
    %v9357 = vsub.s32 %v9354, %v9356
    %v9358 = vrot.slane %v9342, %v9357
    %v9360 = vunpack.c.l.s4 1966171168
    %v9361 = vunpack.c.0.s8 %v9360
    %v9362 = vlaneseq
    %v9363 = vshrl.u32 %v9362, 7
    %v9364 = vsub.s32 %v9361, %v9363
    %v9365 = vrot.slane %v9343, %v9364
    %v9367 = vunpack.c.l.s4 1966171168
    %v9368 = vunpack.c.0.s8 %v9367
    %v9369 = vlaneseq
    %v9370 = vshrl.u32 %v9369, 7
    %v9371 = vsub.s32 %v9368, %v9370
    %v9372 = vrot.slane %v9344, %v9371
    %v9373 = vcombine.low %v9351, %v9358
    %v9374 = vcombine.high %v9351, %v9358
    %v9375 = vcombine.low %v9365, %v9372
    %v9376 = vcombine.high %v9365, %v9372
    %v9378 = vunpack.c.l.s4 1966171168
    %v9379 = vunpack.c.0.s8 %v9378
    %v9380 = vlaneseq
    %v9381 = vshrl.u32 %v9380, 7
    %v9382 = vsub.s32 %v9379, %v9381
    %v9383 = vrot.slane %v9373, %v9382
    %v9385 = vunpack.c.l.s4 1966171168
    %v9386 = vunpack.c.0.s8 %v9385
    %v9387 = vlaneseq
    %v9388 = vshrl.u32 %v9387, 7
    %v9389 = vsub.s32 %v9386, %v9388
    %v9390 = vrot.slane %v9374, %v9389
    %v9392 = vunpack.c.l.s4 1966171168
    %v9393 = vunpack.c.0.s8 %v9392
    %v9394 = vlaneseq
    %v9395 = vshrl.u32 %v9394, 7
    %v9396 = vsub.s32 %v9393, %v9395
    %v9397 = vrot.slane %v9375, %v9396
    %v9399 = vunpack.c.l.s4 1966171168
    %v9400 = vunpack.c.0.s8 %v9399
    %v9401 = vlaneseq
    %v9402 = vshrl.u32 %v9401, 7
    %v9403 = vsub.s32 %v9400, %v9402
    %v9404 = vrot.slane %v9376, %v9403
    %v9405 = vcombine.low %v9383, %v9397
    %v9406 = vcombine.low %v9390, %v9404
    %v9409 = vadd.f32 %v9044, %v9405
    %v9410 = vadd.f32 %v9048, %v9406
    %v9411 = vxor.u32 %v9409, 2147483648
    %v9412 = vxor.u32 %v9410, 2147483648
    %v9413 = vmul.f32 %v9411, 1.442695
    %v9414 = vpow.pop %v9413
    %v9415 = vmul.f32 %v9412, 1.442695
    %v9416 = vpow.pop %v9415
    %v9417 = vadd.f32 %v9414, 1.0
    %v9418 = vadd.f32 %v9416, 1.0
    %v9419 = vrcp.pop %v9417
    %v9420 = vmul.f32 1.0, %v9419
    %v9421 = vrcp.pop %v9418
    %v9422 = vmul.f32 1.0, %v9421
    %v9425 = vrot.slane %v9409, 2
    %v9426 = vrot.slane %v9410, 2
    %v9429 = vxor.u32 %v9425, 2147483648
    %v9430 = vxor.u32 %v9426, 2147483648
    %v9431 = vmul.f32 %v9429, 1.442695
    %v9432 = vpow.pop %v9431
    %v9433 = vmul.f32 %v9430, 1.442695
    %v9434 = vpow.pop %v9433
    %v9435 = vadd.f32 %v9432, 1.0
    %v9436 = vadd.f32 %v9434, 1.0
    %v9437 = vrcp.pop %v9435
    %v9438 = vmul.f32 1.0, %v9437
    %v9439 = vrcp.pop %v9436
    %v9440 = vmul.f32 1.0, %v9439
    %v9441 = vrot.slane %v9409, 4
    %v9442 = vrot.slane %v9410, 4
    %v9445 = vtanh.pop %v9441
    %v9446 = vtanh.pop %v9442
    %v9447 = vrot.slane %v9409, 6
    %v9448 = vrot.slane %v9410, 6
    %v9451 = vxor.u32 %v9447, 2147483648
    %v9452 = vxor.u32 %v9448, 2147483648
    %v9453 = vmul.f32 %v9451, 1.442695
    %v9454 = vpow.pop %v9453
    %v9455 = vmul.f32 %v9452, 1.442695
    %v9456 = vpow.pop %v9455
    %v9457 = vadd.f32 %v9454, 1.0
    %v9458 = vadd.f32 %v9456, 1.0
    %v9459 = vrcp.pop %v9457
    %v9460 = vmul.f32 1.0, %v9459
    %v9461 = vrcp.pop %v9458
    %v9462 = vmul.f32 1.0, %v9461
    %v9463 = vmul.f32 %v9438, %v8392
    %v9464 = vmul.f32 %v9440, %v8393
    %v9465 = vmul.f32 %v9420, %v9445
    %v9466 = vmul.f32 %v9422, %v9446
    %v9467 = vadd.f32 %v9463, %v9465
    %v9468 = vadd.f32 %v9464, %v9466
    %v9469 = vtanh.pop %v9467
    %v9470 = vtanh.pop %v9468
    %v9471 = vmul.f32 %v9460, %v9469
    %v9472 = vmul.f32 %v9462, %v9470
    %v9475 = vcombine.low %v9471, %v9472
    %v9477 = vunpack.c.l.s4 1966171168
    %v9478 = vunpack.c.0.s8 %v9477
    %v9479 = vlaneseq
    %v9480 = vshrl.u32 %v9479, 7
    %v9481 = vsub.s32 %v9478, %v9480
    %v9482 = vrot.slane %v9475, %v9481
    %v9483 = vcombine.high %v9482, %v9482
    %v9485 = vunpack.c.l.s4 1966171168
    %v9486 = vunpack.c.0.s8 %v9485
    %v9487 = vlaneseq
    %v9488 = vshrl.u32 %v9487, 7
    %v9489 = vsub.s32 %v9486, %v9488
    %v9490 = vrot.slane %v9482, %v9489
    %v9492 = vunpack.c.l.s4 1966171168
    %v9493 = vunpack.c.0.s8 %v9492
    %v9494 = vlaneseq
    %v9495 = vshrl.u32 %v9494, 7
    %v9496 = vsub.s32 %v9493, %v9495
    %v9497 = vrot.slane %v9483, %v9496
    %9500 = vmatprep.subr.mxu0 %v4189
    %9501 = vmatpush1.msra.mxu0 %v4188
    %9502 = vmatprep.subr.mxu0 %v4197
    %9503 = vmatpush1.msra.mxu0 %v4196
    %9504 = vmatprep.subr.mxu0 %v4205
    %9505 = vmatpush1.msra.mxu0 %v4204
    %9506 = vmatprep.subr.mxu0 %v4213
    %9507 = vmatpush1.msra.mxu0 %v4212
    %9508 = vmatprep.subr.mxu0 %v4221
    %9509 = vmatpush1.msra.mxu0 %v4220
    %9510 = vmatprep.subr.mxu0 %v4229
    %9511 = vmatpush1.msra.mxu0 %v4228
    %9512 = vmatprep.subr.mxu0 %v4237
    %9513 = vmatpush1.msra.mxu0 %v4236
    %9514 = vmatprep.subr.mxu0 %v4245
    %9515 = vmatpush1.msra.mxu0 %v4244
    %9516 = vmatprep.subr.mxu0 %v4253
    %9517 = vmatpush1.msra.mxu0 %v4252
    %9518 = vmatprep.subr.mxu0 %v4261
    %9519 = vmatpush1.msra.mxu0 %v4260
    %9520 = vmatprep.subr.mxu0 %v4269
    %9521 = vmatpush1.msra.mxu0 %v4268
    %9522 = vmatprep.subr.mxu0 %v4277
    %9523 = vmatpush1.msra.mxu0 %v4276
    %9524 = vmatprep.subr.mxu0 %v4285
    %9525 = vmatpush1.msra.mxu0 %v4284
    %9526 = vmatprep.subr.mxu0 %v4293
    %9527 = vmatpush1.msra.mxu0 %v4292
    %9528 = vmatprep.subr.mxu0 %v4301
    %9529 = vmatpush1.msra.mxu0 %v4300
    %9530 = vmatprep.subr.mxu0 %v4309
    %9531 = vmatpush1.msra.mxu0 %v4308
    %9532 = vmatprep.subr.mxu0 %v4317
    %9533 = vmatpush1.msra.mxu0 %v4316
    %9534 = vmatprep.subr.mxu0 %v4325
    %9535 = vmatpush1.msra.mxu0 %v4324
    %9536 = vmatprep.subr.mxu0 %v4333
    %9537 = vmatpush1.msra.mxu0 %v4332
    %9538 = vmatprep.subr.mxu0 %v4341
    %9539 = vmatpush1.msra.mxu0 %v4340
    %9540 = vmatprep.subr.mxu0 %v4349
    %9541 = vmatpush1.msra.mxu0 %v4348
    %9542 = vmatprep.subr.mxu0 %v4357
    %9543 = vmatpush1.msra.mxu0 %v4356
    %9544 = vmatprep.subr.mxu0 %v4365
    %9545 = vmatpush1.msra.mxu0 %v4364
    %9546 = vmatprep.subr.mxu0 %v4373
    %9547 = vmatpush1.msra.mxu0 %v4372
    %9548 = vmatprep.subr.mxu0 %v4381
    %9549 = vmatpush1.msra.mxu0 %v4380
    %9550 = vmatprep.subr.mxu0 %v4389
    %9551 = vmatpush1.msra.mxu0 %v4388
    %9552 = vmatprep.subr.mxu0 %v4397
    %9553 = vmatpush1.msra.mxu0 %v4396
    %9554 = vmatprep.subr.mxu0 %v4405
    %9555 = vmatpush1.msra.mxu0 %v4404
    %9556 = vmatprep.subr.mxu0 %v4413
    %9557 = vmatpush1.msra.mxu0 %v4412
    %9558 = vmatprep.subr.mxu0 %v4421
    %9559 = vmatpush1.msra.mxu0 %v4420
    %9560 = vmatprep.subr.mxu0 %v4429
    %9561 = vmatpush1.msra.mxu0 %v4428
    %9562 = vmatprep.subr.mxu0 %v4437
    %9563 = vmatpush1.msra.mxu0 %v4436
    %9564 = vmatprep.mubr.f32.mxu0 %v9497
    %9565 = vmatmul.mubr.f32.gmra.mrb[0].mxu0 %v9490
    %v9566 = vpop.f32.mrb[0].mxu0
    %v9567 = vadd.f32 %v4705, %v9566
    %v9568 = vpop.f32.mrb[0].mxu0
    %v9569 = vadd.f32 %v4709, %v9568
    %9570 = vdwg.mxu0
    %9571 = vmatprep.subr.mxu0 %v4445
    %9572 = vmatpush1.msra.mxu0 %v4444
    %9573 = vmatprep.subr.mxu0 %v4453
    %9574 = vmatpush1.msra.mxu0 %v4452
    %9575 = vmatprep.subr.mxu0 %v4461
    %9576 = vmatpush1.msra.mxu0 %v4460
    %9577 = vmatprep.subr.mxu0 %v4469
    %9578 = vmatpush1.msra.mxu0 %v4468
    %9579 = vmatprep.subr.mxu0 %v4477
    %9580 = vmatpush1.msra.mxu0 %v4476
    %9581 = vmatprep.subr.mxu0 %v4485
    %9582 = vmatpush1.msra.mxu0 %v4484
    %9583 = vmatprep.subr.mxu0 %v4493
    %9584 = vmatpush1.msra.mxu0 %v4492
    %9585 = vmatprep.subr.mxu0 %v4501
    %9586 = vmatpush1.msra.mxu0 %v4500
    %9587 = vmatprep.subr.mxu0 %v4509
    %9588 = vmatpush1.msra.mxu0 %v4508
    %9589 = vmatprep.subr.mxu0 %v4517
    %9590 = vmatpush1.msra.mxu0 %v4516
    %9591 = vmatprep.subr.mxu0 %v4525
    %9592 = vmatpush1.msra.mxu0 %v4524
    %9593 = vmatprep.subr.mxu0 %v4533
    %9594 = vmatpush1.msra.mxu0 %v4532
    %9595 = vmatprep.subr.mxu0 %v4541
    %9596 = vmatpush1.msra.mxu0 %v4540
    %9597 = vmatprep.subr.mxu0 %v4549
    %9598 = vmatpush1.msra.mxu0 %v4548
    %9599 = vmatprep.subr.mxu0 %v4557
    %9600 = vmatpush1.msra.mxu0 %v4556
    %9601 = vmatprep.subr.mxu0 %v4565
    %9602 = vmatpush1.msra.mxu0 %v4564
    %9603 = vmatprep.subr.mxu0 %v4573
    %9604 = vmatpush1.msra.mxu0 %v4572
    %9605 = vmatprep.subr.mxu0 %v4581
    %9606 = vmatpush1.msra.mxu0 %v4580
    %9607 = vmatprep.subr.mxu0 %v4589
    %9608 = vmatpush1.msra.mxu0 %v4588
    %9609 = vmatprep.subr.mxu0 %v4597
    %9610 = vmatpush1.msra.mxu0 %v4596
    %9611 = vmatprep.subr.mxu0 %v4605
    %9612 = vmatpush1.msra.mxu0 %v4604
    %9613 = vmatprep.subr.mxu0 %v4613
    %9614 = vmatpush1.msra.mxu0 %v4612
    %9615 = vmatprep.subr.mxu0 %v4621
    %9616 = vmatpush1.msra.mxu0 %v4620
    %9617 = vmatprep.subr.mxu0 %v4629
    %9618 = vmatpush1.msra.mxu0 %v4628
    %9619 = vmatprep.subr.mxu0 %v4637
    %9620 = vmatpush1.msra.mxu0 %v4636
    %9621 = vmatprep.subr.mxu0 %v4645
    %9622 = vmatpush1.msra.mxu0 %v4644
    %9623 = vmatprep.subr.mxu0 %v4653
    %9624 = vmatpush1.msra.mxu0 %v4652
    %9625 = vmatprep.subr.mxu0 %v4661
    %9626 = vmatpush1.msra.mxu0 %v4660
    %9627 = vmatprep.subr.mxu0 %v4669
    %9628 = vmatpush1.msra.mxu0 %v4668
    %9629 = vmatprep.subr.mxu0 %v4677
    %9630 = vmatpush1.msra.mxu0 %v4676
    %9631 = vmatprep.subr.mxu0 %v4685
    %9632 = vmatpush1.msra.mxu0 %v4684
    %9633 = vmatprep.subr.mxu0 %v4693
    %9634 = vmatpush1.msra.mxu0 %v4692
    %9635 = vmatprep.mubr.f32.mxu0 %v9040
    %9636 = vmatmul.mubr.f32.gmra.mrb[0].mxu0 %v9039
    %v9637 = vpop.f32.mrb[0].mxu0
    %v9638 = vadd.f32 %v9567, %v9637
    %v9639 = vpop.f32.mrb[0].mxu0
    %v9640 = vadd.f32 %v9569, %v9639
    %9641 = vdwg.mxu0
    %9642 = vmatprep.subr.mxu0 %v4191
    %9643 = vmatpush1.msra.mxu0 %v4190
    %9644 = vmatprep.subr.mxu0 %v4199
    %9645 = vmatpush1.msra.mxu0 %v4198
    %9646 = vmatprep.subr.mxu0 %v4207
    %9647 = vmatpush1.msra.mxu0 %v4206
    %9648 = vmatprep.subr.mxu0 %v4215
    %9649 = vmatpush1.msra.mxu0 %v4214
    %9650 = vmatprep.subr.mxu0 %v4223
    %9651 = vmatpush1.msra.mxu0 %v4222
    %9652 = vmatprep.subr.mxu0 %v4231
    %9653 = vmatpush1.msra.mxu0 %v4230
    %9654 = vmatprep.subr.mxu0 %v4239
    %9655 = vmatpush1.msra.mxu0 %v4238
    %9656 = vmatprep.subr.mxu0 %v4247
    %9657 = vmatpush1.msra.mxu0 %v4246
    %9658 = vmatprep.subr.mxu0 %v4255
    %9659 = vmatpush1.msra.mxu0 %v4254
    %9660 = vmatprep.subr.mxu0 %v4263
    %9661 = vmatpush1.msra.mxu0 %v4262
    %9662 = vmatprep.subr.mxu0 %v4271
    %9663 = vmatpush1.msra.mxu0 %v4270
    %9664 = vmatprep.subr.mxu0 %v4279
    %9665 = vmatpush1.msra.mxu0 %v4278
    %9666 = vmatprep.subr.mxu0 %v4287
    %9667 = vmatpush1.msra.mxu0 %v4286
    %9668 = vmatprep.subr.mxu0 %v4295
    %9669 = vmatpush1.msra.mxu0 %v4294
    %9670 = vmatprep.subr.mxu0 %v4303
    %9671 = vmatpush1.msra.mxu0 %v4302
    %9672 = vmatprep.subr.mxu0 %v4311
    %9673 = vmatpush1.msra.mxu0 %v4310
    %9674 = vmatprep.subr.mxu0 %v4319
    %9675 = vmatpush1.msra.mxu0 %v4318
    %9676 = vmatprep.subr.mxu0 %v4327
    %9677 = vmatpush1.msra.mxu0 %v4326
    %9678 = vmatprep.subr.mxu0 %v4335
    %9679 = vmatpush1.msra.mxu0 %v4334
    %9680 = vmatprep.subr.mxu0 %v4343
    %9681 = vmatpush1.msra.mxu0 %v4342
    %9682 = vmatprep.subr.mxu0 %v4351
    %9683 = vmatpush1.msra.mxu0 %v4350
    %9684 = vmatprep.subr.mxu0 %v4359
    %9685 = vmatpush1.msra.mxu0 %v4358
    %9686 = vmatprep.subr.mxu0 %v4367
    %9687 = vmatpush1.msra.mxu0 %v4366
    %9688 = vmatprep.subr.mxu0 %v4375
    %9689 = vmatpush1.msra.mxu0 %v4374
    %9690 = vmatprep.subr.mxu0 %v4383
    %9691 = vmatpush1.msra.mxu0 %v4382
    %9692 = vmatprep.subr.mxu0 %v4391
    %9693 = vmatpush1.msra.mxu0 %v4390
    %9694 = vmatprep.subr.mxu0 %v4399
    %9695 = vmatpush1.msra.mxu0 %v4398
    %9696 = vmatprep.subr.mxu0 %v4407
    %9697 = vmatpush1.msra.mxu0 %v4406
    %9698 = vmatprep.subr.mxu0 %v4415
    %9699 = vmatpush1.msra.mxu0 %v4414
    %9700 = vmatprep.subr.mxu0 %v4423
    %9701 = vmatpush1.msra.mxu0 %v4422
    %9702 = vmatprep.subr.mxu0 %v4431
    %9703 = vmatpush1.msra.mxu0 %v4430
    %9704 = vmatprep.subr.mxu0 %v4439
    %9705 = vmatpush1.msra.mxu0 %v4438
    %9706 = vmatprep.mubr.f32.mxu0 %v9497
    %9707 = vmatmul.mubr.f32.gmra.mrb[0].mxu0 %v9490
    %v9708 = vpop.f32.mrb[0].mxu0
    %v9709 = vadd.f32 %v4713, %v9708
    %v9710 = vpop.f32.mrb[0].mxu0
    %v9711 = vadd.f32 %v4717, %v9710
    %9712 = vdwg.mxu0
    %9713 = vmatprep.subr.mxu0 %v4447
    %9714 = vmatpush1.msra.mxu0 %v4446
    %9715 = vmatprep.subr.mxu0 %v4455
    %9716 = vmatpush1.msra.mxu0 %v4454
    %9717 = vmatprep.subr.mxu0 %v4463
    %9718 = vmatpush1.msra.mxu0 %v4462
    %9719 = vmatprep.subr.mxu0 %v4471
    %9720 = vmatpush1.msra.mxu0 %v4470
    %9721 = vmatprep.subr.mxu0 %v4479
    %9722 = vmatpush1.msra.mxu0 %v4478
    %9723 = vmatprep.subr.mxu0 %v4487
    %9724 = vmatpush1.msra.mxu0 %v4486
    %9725 = vmatprep.subr.mxu0 %v4495
    %9726 = vmatpush1.msra.mxu0 %v4494
    %9727 = vmatprep.subr.mxu0 %v4503
    %9728 = vmatpush1.msra.mxu0 %v4502
    %9729 = vmatprep.subr.mxu0 %v4511
    %9730 = vmatpush1.msra.mxu0 %v4510
    %9731 = vmatprep.subr.mxu0 %v4519
    %9732 = vmatpush1.msra.mxu0 %v4518
    %9733 = vmatprep.subr.mxu0 %v4527
    %9734 = vmatpush1.msra.mxu0 %v4526
    %9735 = vmatprep.subr.mxu0 %v4535
    %9736 = vmatpush1.msra.mxu0 %v4534
    %9737 = vmatprep.subr.mxu0 %v4543
    %9738 = vmatpush1.msra.mxu0 %v4542
    %9739 = vmatprep.subr.mxu0 %v4551
    %9740 = vmatpush1.msra.mxu0 %v4550
    %9741 = vmatprep.subr.mxu0 %v4559
    %9742 = vmatpush1.msra.mxu0 %v4558
    %9743 = vmatprep.subr.mxu0 %v4567
    %9744 = vmatpush1.msra.mxu0 %v4566
    %9745 = vmatprep.subr.mxu0 %v4575
    %9746 = vmatpush1.msra.mxu0 %v4574
    %9747 = vmatprep.subr.mxu0 %v4583
    %9748 = vmatpush1.msra.mxu0 %v4582
    %9749 = vmatprep.subr.mxu0 %v4591
    %9750 = vmatpush1.msra.mxu0 %v4590
    %9751 = vmatprep.subr.mxu0 %v4599
    %9752 = vmatpush1.msra.mxu0 %v4598
    %9753 = vmatprep.subr.mxu0 %v4607
    %9754 = vmatpush1.msra.mxu0 %v4606
    %9755 = vmatprep.subr.mxu0 %v4615
    %9756 = vmatpush1.msra.mxu0 %v4614
    %9757 = vmatprep.subr.mxu0 %v4623
    %9758 = vmatpush1.msra.mxu0 %v4622
    %9759 = vmatprep.subr.mxu0 %v4631
    %9760 = vmatpush1.msra.mxu0 %v4630
    %9761 = vmatprep.subr.mxu0 %v4639
    %9762 = vmatpush1.msra.mxu0 %v4638
    %9763 = vmatprep.subr.mxu0 %v4647
    %9764 = vmatpush1.msra.mxu0 %v4646
    %9765 = vmatprep.subr.mxu0 %v4655
    %9766 = vmatpush1.msra.mxu0 %v4654
    %9767 = vmatprep.subr.mxu0 %v4663
    %9768 = vmatpush1.msra.mxu0 %v4662
    %9769 = vmatprep.subr.mxu0 %v4671
    %9770 = vmatpush1.msra.mxu0 %v4670
    %9771 = vmatprep.subr.mxu0 %v4679
    %9772 = vmatpush1.msra.mxu0 %v4678
    %9773 = vmatprep.subr.mxu0 %v4687
    %9774 = vmatpush1.msra.mxu0 %v4686
    %9775 = vmatprep.subr.mxu0 %v4695
    %9776 = vmatpush1.msra.mxu0 %v4694
    %9777 = vmatprep.mubr.f32.mxu0 %v9040
    %9778 = vmatmul.mubr.f32.gmra.mrb[0].mxu0 %v9039
    %v9779 = vpop.f32.mrb[0].mxu0
    %v9780 = vadd.f32 %v9709, %v9779
    %v9781 = vpop.f32.mrb[0].mxu0
    %v9782 = vadd.f32 %v9711, %v9781
    %9783 = vdwg.mxu0
    %9784 = vmatprep.subr.mxu0 %v4193
    %9785 = vmatpush1.msra.mxu0 %v4192
    %9786 = vmatprep.subr.mxu0 %v4201
    %9787 = vmatpush1.msra.mxu0 %v4200
    %9788 = vmatprep.subr.mxu0 %v4209
    %9789 = vmatpush1.msra.mxu0 %v4208
    %9790 = vmatprep.subr.mxu0 %v4217
    %9791 = vmatpush1.msra.mxu0 %v4216
    %9792 = vmatprep.subr.mxu0 %v4225
    %9793 = vmatpush1.msra.mxu0 %v4224
    %9794 = vmatprep.subr.mxu0 %v4233
    %9795 = vmatpush1.msra.mxu0 %v4232
    %9796 = vmatprep.subr.mxu0 %v4241
    %9797 = vmatpush1.msra.mxu0 %v4240
    %9798 = vmatprep.subr.mxu0 %v4249
    %9799 = vmatpush1.msra.mxu0 %v4248
    %9800 = vmatprep.subr.mxu0 %v4257
    %9801 = vmatpush1.msra.mxu0 %v4256
    %9802 = vmatprep.subr.mxu0 %v4265
    %9803 = vmatpush1.msra.mxu0 %v4264
    %9804 = vmatprep.subr.mxu0 %v4273
    %9805 = vmatpush1.msra.mxu0 %v4272
    %9806 = vmatprep.subr.mxu0 %v4281
    %9807 = vmatpush1.msra.mxu0 %v4280
    %9808 = vmatprep.subr.mxu0 %v4289
    %9809 = vmatpush1.msra.mxu0 %v4288
    %9810 = vmatprep.subr.mxu0 %v4297
    %9811 = vmatpush1.msra.mxu0 %v4296
    %9812 = vmatprep.subr.mxu0 %v4305
    %9813 = vmatpush1.msra.mxu0 %v4304
    %9814 = vmatprep.subr.mxu0 %v4313
    %9815 = vmatpush1.msra.mxu0 %v4312
    %9816 = vmatprep.subr.mxu0 %v4321
    %9817 = vmatpush1.msra.mxu0 %v4320
    %9818 = vmatprep.subr.mxu0 %v4329
    %9819 = vmatpush1.msra.mxu0 %v4328
    %9820 = vmatprep.subr.mxu0 %v4337
    %9821 = vmatpush1.msra.mxu0 %v4336
    %9822 = vmatprep.subr.mxu0 %v4345
    %9823 = vmatpush1.msra.mxu0 %v4344
    %9824 = vmatprep.subr.mxu0 %v4353
    %9825 = vmatpush1.msra.mxu0 %v4352
    %9826 = vmatprep.subr.mxu0 %v4361
    %9827 = vmatpush1.msra.mxu0 %v4360
    %9828 = vmatprep.subr.mxu0 %v4369
    %9829 = vmatpush1.msra.mxu0 %v4368
    %9830 = vmatprep.subr.mxu0 %v4377
    %9831 = vmatpush1.msra.mxu0 %v4376
    %9832 = vmatprep.subr.mxu0 %v4385
    %9833 = vmatpush1.msra.mxu0 %v4384
    %9834 = vmatprep.subr.mxu0 %v4393
    %9835 = vmatpush1.msra.mxu0 %v4392
    %9836 = vmatprep.subr.mxu0 %v4401
    %9837 = vmatpush1.msra.mxu0 %v4400
    %9838 = vmatprep.subr.mxu0 %v4409
    %9839 = vmatpush1.msra.mxu0 %v4408
    %9840 = vmatprep.subr.mxu0 %v4417
    %9841 = vmatpush1.msra.mxu0 %v4416
    %9842 = vmatprep.subr.mxu0 %v4425
    %9843 = vmatpush1.msra.mxu0 %v4424
    %9844 = vmatprep.subr.mxu0 %v4433
    %9845 = vmatpush1.msra.mxu0 %v4432
    %9846 = vmatprep.subr.mxu0 %v4441
    %9847 = vmatpush1.msra.mxu0 %v4440
    %9848 = vmatprep.mubr.f32.mxu0 %v9497
    %9849 = vmatmul.mubr.f32.gmra.mrb[0].mxu0 %v9490
    %v9850 = vpop.f32.mrb[0].mxu0
    %v9851 = vadd.f32 %v4721, %v9850
    %v9852 = vpop.f32.mrb[0].mxu0
    %v9853 = vadd.f32 %v4725, %v9852
    %9854 = vdwg.mxu0
    %9855 = vmatprep.subr.mxu0 %v4449
    %9856 = vmatpush1.msra.mxu0 %v4448
    %9857 = vmatprep.subr.mxu0 %v4457
    %9858 = vmatpush1.msra.mxu0 %v4456
    %9859 = vmatprep.subr.mxu0 %v4465
    %9860 = vmatpush1.msra.mxu0 %v4464
    %9861 = vmatprep.subr.mxu0 %v4473
    %9862 = vmatpush1.msra.mxu0 %v4472
    %9863 = vmatprep.subr.mxu0 %v4481
    %9864 = vmatpush1.msra.mxu0 %v4480
    %9865 = vmatprep.subr.mxu0 %v4489
    %9866 = vmatpush1.msra.mxu0 %v4488
    %9867 = vmatprep.subr.mxu0 %v4497
    %9868 = vmatpush1.msra.mxu0 %v4496
    %9869 = vmatprep.subr.mxu0 %v4505
    %9870 = vmatpush1.msra.mxu0 %v4504
    %9871 = vmatprep.subr.mxu0 %v4513
    %9872 = vmatpush1.msra.mxu0 %v4512
    %9873 = vmatprep.subr.mxu0 %v4521
    %9874 = vmatpush1.msra.mxu0 %v4520
    %9875 = vmatprep.subr.mxu0 %v4529
    %9876 = vmatpush1.msra.mxu0 %v4528
    %9877 = vmatprep.subr.mxu0 %v4537
    %9878 = vmatpush1.msra.mxu0 %v4536
    %9879 = vmatprep.subr.mxu0 %v4545
    %9880 = vmatpush1.msra.mxu0 %v4544
    %9881 = vmatprep.subr.mxu0 %v4553
    %9882 = vmatpush1.msra.mxu0 %v4552
    %9883 = vmatprep.subr.mxu0 %v4561
    %9884 = vmatpush1.msra.mxu0 %v4560
    %9885 = vmatprep.subr.mxu0 %v4569
    %9886 = vmatpush1.msra.mxu0 %v4568
    %9887 = vmatprep.subr.mxu0 %v4577
    %9888 = vmatpush1.msra.mxu0 %v4576
    %9889 = vmatprep.subr.mxu0 %v4585
    %9890 = vmatpush1.msra.mxu0 %v4584
    %9891 = vmatprep.subr.mxu0 %v4593
    %9892 = vmatpush1.msra.mxu0 %v4592
    %9893 = vmatprep.subr.mxu0 %v4601
    %9894 = vmatpush1.msra.mxu0 %v4600
    %9895 = vmatprep.subr.mxu0 %v4609
    %9896 = vmatpush1.msra.mxu0 %v4608
    %9897 = vmatprep.subr.mxu0 %v4617
    %9898 = vmatpush1.msra.mxu0 %v4616
    %9899 = vmatprep.subr.mxu0 %v4625
    %9900 = vmatpush1.msra.mxu0 %v4624
    %9901 = vmatprep.subr.mxu0 %v4633
    %9902 = vmatpush1.msra.mxu0 %v4632
    %9903 = vmatprep.subr.mxu0 %v4641
    %9904 = vmatpush1.msra.mxu0 %v4640
    %9905 = vmatprep.subr.mxu0 %v4649
    %9906 = vmatpush1.msra.mxu0 %v4648
    %9907 = vmatprep.subr.mxu0 %v4657
    %9908 = vmatpush1.msra.mxu0 %v4656
    %9909 = vmatprep.subr.mxu0 %v4665
    %9910 = vmatpush1.msra.mxu0 %v4664
    %9911 = vmatprep.subr.mxu0 %v4673
    %9912 = vmatpush1.msra.mxu0 %v4672
    %9913 = vmatprep.subr.mxu0 %v4681
    %9914 = vmatpush1.msra.mxu0 %v4680
    %9915 = vmatprep.subr.mxu0 %v4689
    %9916 = vmatpush1.msra.mxu0 %v4688
    %9917 = vmatprep.subr.mxu0 %v4697
    %9918 = vmatpush1.msra.mxu0 %v4696
    %9919 = vmatprep.mubr.f32.mxu0 %v9040
    %9920 = vmatmul.mubr.f32.gmra.mrb[0].mxu0 %v9039
    %v9921 = vpop.f32.mrb[0].mxu0
    %v9922 = vadd.f32 %v9851, %v9921
    %v9923 = vpop.f32.mrb[0].mxu0
    %v9924 = vadd.f32 %v9853, %v9923
    %9925 = vdwg.mxu0
    %9926 = vmatprep.subr.mxu0 %v4195
    %9927 = vmatpush1.msra.mxu0 %v4194
    %9928 = vmatprep.subr.mxu0 %v4203
    %9929 = vmatpush1.msra.mxu0 %v4202
    %9930 = vmatprep.subr.mxu0 %v4211
    %9931 = vmatpush1.msra.mxu0 %v4210
    %9932 = vmatprep.subr.mxu0 %v4219
    %9933 = vmatpush1.msra.mxu0 %v4218
    %9934 = vmatprep.subr.mxu0 %v4227
    %9935 = vmatpush1.msra.mxu0 %v4226
    %9936 = vmatprep.subr.mxu0 %v4235
    %9937 = vmatpush1.msra.mxu0 %v4234
    %9938 = vmatprep.subr.mxu0 %v4243
    %9939 = vmatpush1.msra.mxu0 %v4242
    %9940 = vmatprep.subr.mxu0 %v4251
    %9941 = vmatpush1.msra.mxu0 %v4250
    %9942 = vmatprep.subr.mxu0 %v4259
    %9943 = vmatpush1.msra.mxu0 %v4258
    %9944 = vmatprep.subr.mxu0 %v4267
    %9945 = vmatpush1.msra.mxu0 %v4266
    %9946 = vmatprep.subr.mxu0 %v4275
    %9947 = vmatpush1.msra.mxu0 %v4274
    %9948 = vmatprep.subr.mxu0 %v4283
    %9949 = vmatpush1.msra.mxu0 %v4282
    %9950 = vmatprep.subr.mxu0 %v4291
    %9951 = vmatpush1.msra.mxu0 %v4290
    %9952 = vmatprep.subr.mxu0 %v4299
    %9953 = vmatpush1.msra.mxu0 %v4298
    %9954 = vmatprep.subr.mxu0 %v4307
    %9955 = vmatpush1.msra.mxu0 %v4306
    %9956 = vmatprep.subr.mxu0 %v4315
    %9957 = vmatpush1.msra.mxu0 %v4314
    %9958 = vmatprep.subr.mxu0 %v4323
    %9959 = vmatpush1.msra.mxu0 %v4322
    %9960 = vmatprep.subr.mxu0 %v4331
    %9961 = vmatpush1.msra.mxu0 %v4330
    %9962 = vmatprep.subr.mxu0 %v4339
    %9963 = vmatpush1.msra.mxu0 %v4338
    %9964 = vmatprep.subr.mxu0 %v4347
    %9965 = vmatpush1.msra.mxu0 %v4346
    %9966 = vmatprep.subr.mxu0 %v4355
    %9967 = vmatpush1.msra.mxu0 %v4354
    %9968 = vmatprep.subr.mxu0 %v4363
    %9969 = vmatpush1.msra.mxu0 %v4362
    %9970 = vmatprep.subr.mxu0 %v4371
    %9971 = vmatpush1.msra.mxu0 %v4370
    %9972 = vmatprep.subr.mxu0 %v4379
    %9973 = vmatpush1.msra.mxu0 %v4378
    %9974 = vmatprep.subr.mxu0 %v4387
    %9975 = vmatpush1.msra.mxu0 %v4386
    %9976 = vmatprep.subr.mxu0 %v4395
    %9977 = vmatpush1.msra.mxu0 %v4394
    %9978 = vmatprep.subr.mxu0 %v4403
    %9979 = vmatpush1.msra.mxu0 %v4402
    %9980 = vmatprep.subr.mxu0 %v4411
    %9981 = vmatpush1.msra.mxu0 %v4410
    %9982 = vmatprep.subr.mxu0 %v4419
    %9983 = vmatpush1.msra.mxu0 %v4418
    %9984 = vmatprep.subr.mxu0 %v4427
    %9985 = vmatpush1.msra.mxu0 %v4426
    %9986 = vmatprep.subr.mxu0 %v4435
    %9987 = vmatpush1.msra.mxu0 %v4434
    %9988 = vmatprep.subr.mxu0 %v4443
    %9989 = vmatpush1.msra.mxu0 %v4442
    %9990 = vmatprep.mubr.f32.mxu0 %v9497
    %9991 = vmatmul.mubr.f32.gmra.mrb[0].mxu0 %v9490
    %v9992 = vpop.f32.mrb[0].mxu0
    %v9993 = vadd.f32 %v4729, %v9992
    %v9994 = vpop.f32.mrb[0].mxu0
    %v9995 = vadd.f32 %v4733, %v9994
    %9996 = vdwg.mxu0
    %9997 = vmatprep.subr.mxu0 %v4451
    %9998 = vmatpush1.msra.mxu0 %v4450
    %9999 = vmatprep.subr.mxu0 %v4459
    %10000 = vmatpush1.msra.mxu0 %v4458
    %10001 = vmatprep.subr.mxu0 %v4467
    %10002 = vmatpush1.msra.mxu0 %v4466
    %10003 = vmatprep.subr.mxu0 %v4475
    %10004 = vmatpush1.msra.mxu0 %v4474
    %10005 = vmatprep.subr.mxu0 %v4483
    %10006 = vmatpush1.msra.mxu0 %v4482
    %10007 = vmatprep.subr.mxu0 %v4491
    %10008 = vmatpush1.msra.mxu0 %v4490
    %10009 = vmatprep.subr.mxu0 %v4499
    %10010 = vmatpush1.msra.mxu0 %v4498
    %10011 = vmatprep.subr.mxu0 %v4507
    %10012 = vmatpush1.msra.mxu0 %v4506
    %10013 = vmatprep.subr.mxu0 %v4515
    %10014 = vmatpush1.msra.mxu0 %v4514
    %10015 = vmatprep.subr.mxu0 %v4523
    %10016 = vmatpush1.msra.mxu0 %v4522
    %10017 = vmatprep.subr.mxu0 %v4531
    %10018 = vmatpush1.msra.mxu0 %v4530
    %10019 = vmatprep.subr.mxu0 %v4539
    %10020 = vmatpush1.msra.mxu0 %v4538
    %10021 = vmatprep.subr.mxu0 %v4547
    %10022 = vmatpush1.msra.mxu0 %v4546
    %10023 = vmatprep.subr.mxu0 %v4555
    %10024 = vmatpush1.msra.mxu0 %v4554
    %10025 = vmatprep.subr.mxu0 %v4563
    %10026 = vmatpush1.msra.mxu0 %v4562
    %10027 = vmatprep.subr.mxu0 %v4571
    %10028 = vmatpush1.msra.mxu0 %v4570
    %10029 = vmatprep.subr.mxu0 %v4579
    %10030 = vmatpush1.msra.mxu0 %v4578
    %10031 = vmatprep.subr.mxu0 %v4587
    %10032 = vmatpush1.msra.mxu0 %v4586
    %10033 = vmatprep.subr.mxu0 %v4595
    %10034 = vmatpush1.msra.mxu0 %v4594
    %10035 = vmatprep.subr.mxu0 %v4603
    %10036 = vmatpush1.msra.mxu0 %v4602
    %10037 = vmatprep.subr.mxu0 %v4611
    %10038 = vmatpush1.msra.mxu0 %v4610
    %10039 = vmatprep.subr.mxu0 %v4619
    %10040 = vmatpush1.msra.mxu0 %v4618
    %10041 = vmatprep.subr.mxu0 %v4627
    %10042 = vmatpush1.msra.mxu0 %v4626
    %10043 = vmatprep.subr.mxu0 %v4635
    %10044 = vmatpush1.msra.mxu0 %v4634
    %10045 = vmatprep.subr.mxu0 %v4643
    %10046 = vmatpush1.msra.mxu0 %v4642
    %10047 = vmatprep.subr.mxu0 %v4651
    %10048 = vmatpush1.msra.mxu0 %v4650
    %10049 = vmatprep.subr.mxu0 %v4659
    %10050 = vmatpush1.msra.mxu0 %v4658
    %10051 = vmatprep.subr.mxu0 %v4667
    %10052 = vmatpush1.msra.mxu0 %v4666
    %10053 = vmatprep.subr.mxu0 %v4675
    %10054 = vmatpush1.msra.mxu0 %v4674
    %10055 = vmatprep.subr.mxu0 %v4683
    %10056 = vmatpush1.msra.mxu0 %v4682
    %10057 = vmatprep.subr.mxu0 %v4691
    %10058 = vmatpush1.msra.mxu0 %v4690
    %10059 = vmatprep.subr.mxu0 %v4699
    %10060 = vmatpush1.msra.mxu0 %v4698
    %10061 = vmatprep.mubr.f32.mxu0 %v9040
    %10062 = vmatmul.mubr.f32.gmra.mrb[0].mxu0 %v9039
    %v10063 = vpop.f32.mrb[0].mxu0
    %v10064 = vadd.f32 %v9993, %v10063
    %v10065 = vpop.f32.mrb[0].mxu0
    %v10066 = vadd.f32 %v9995, %v10065
    %10067 = vdwg.mxu0
    %v10068 = vxor.u32 %v9638, 2147483648
    %v10069 = vxor.u32 %v9640, 2147483648
    %v10070 = vmul.f32 %v10068, 1.442695
    %v10071 = vpow.pop %v10070
    %v10072 = vmul.f32 %v10069, 1.442695
    %v10073 = vpow.pop %v10072
    %v10074 = vadd.f32 %v10071, 1.0
    %v10075 = vadd.f32 %v10073, 1.0
    %v10076 = vrcp.pop %v10074
    %v10077 = vmul.f32 1.0, %v10076
    %v10078 = vrcp.pop %v10075
    %v10079 = vmul.f32 1.0, %v10078
    %v10080 = vxor.u32 %v9780, 2147483648
    %v10081 = vxor.u32 %v9782, 2147483648
    %v10082 = vmul.f32 %v10080, 1.442695
    %v10083 = vpow.pop %v10082
    %v10084 = vmul.f32 %v10081, 1.442695
    %v10085 = vpow.pop %v10084
    %v10086 = vadd.f32 %v10083, 1.0
    %v10087 = vadd.f32 %v10085, 1.0
    %v10088 = vrcp.pop %v10086
    %v10089 = vmul.f32 1.0, %v10088
    %v10090 = vrcp.pop %v10087
    %v10091 = vmul.f32 1.0, %v10090
    %v10092 = vtanh.pop %v9922
    %v10093 = vtanh.pop %v9924
    %v10094 = vxor.u32 %v10064, 2147483648
    %v10095 = vxor.u32 %v10066, 2147483648
    %v10096 = vmul.f32 %v10094, 1.442695
    %v10097 = vpow.pop %v10096
    %v10098 = vmul.f32 %v10095, 1.442695
    %v10099 = vpow.pop %v10098
    %v10100 = vadd.f32 %v10097, 1.0
    %v10101 = vadd.f32 %v10099, 1.0
    %v10102 = vrcp.pop %v10100
    %v10103 = vmul.f32 1.0, %v10102
    %v10104 = vrcp.pop %v10101
    %v10105 = vmul.f32 1.0, %v10104
    %v10106 = vmul.f32 %v10089, %v9035
    %v10107 = vmul.f32 %v10091, %v9036
    %v10108 = vmul.f32 %v10077, %v10092
    %v10109 = vmul.f32 %v10079, %v10093
    %v10110 = vadd.f32 %v10106, %v10108
    %v10111 = vadd.f32 %v10107, %v10109
    %v10112 = vtanh.pop %v10110
    %v10113 = vtanh.pop %v10111
    %v10114 = vmul.f32 %v10103, %v10112
    %v10115 = vmul.f32 %v10105, %v10113
    %v10116 = vld [vmem:[%s12] sm:$0xff]
    %v10117 = vld [vmem:[%s12 + $0x8] sm:$0xff]
    %v10118 = vld [vmem:[%s12 + $0x10] sm:$0xff]
    %v10119 = vld [vmem:[%s12 + $0x18] sm:$0xff]
    %v10120 = vld [vmem:[%s12 + $0x20] sm:$0xff]
    %v10121 = vld [vmem:[%s12 + $0x28] sm:$0xff]
    %v10122 = vld [vmem:[%s12 + $0x30] sm:$0xff]
    %v10123 = vld [vmem:[%s12 + $0x38] sm:$0xff]
    %v10124 = vld [vmem:[%s12 + $0x40] sm:$0xff]
    %v10125 = vld [vmem:[%s12 + $0x48] sm:$0xff]
    %v10126 = vld [vmem:[%s12 + $0x50] sm:$0xff]
    %v10127 = vld [vmem:[%s12 + $0x58] sm:$0xff]
    %v10128 = vld [vmem:[%s12 + $0x60] sm:$0xff]
    %v10129 = vld [vmem:[%s12 + $0x68] sm:$0xff]
    %v10130 = vld [vmem:[%s12 + $0x70] sm:$0xff]
    %v10131 = vld [vmem:[%s12 + $0x78] sm:$0xff]
    %v10132 = vld [vmem:[%s12 + $0x80] sm:$0xff]
    %v10133 = vld [vmem:[%s12 + $0x88] sm:$0xff]
    %v10134 = vld [vmem:[%s12 + $0x90] sm:$0xff]
    %v10135 = vld [vmem:[%s12 + $0x98] sm:$0xff]
    %v10136 = vld [vmem:[%s12 + $0xa0] sm:$0xff]
    %v10137 = vld [vmem:[%s12 + $0xa8] sm:$0xff]
    %v10138 = vld [vmem:[%s12 + $0xb0] sm:$0xff]
    %v10139 = vld [vmem:[%s12 + $0xb8] sm:$0xff]
    %v10140 = vld [vmem:[%s12 + $0xc0] sm:$0xff]
    %v10141 = vld [vmem:[%s12 + $0xc8] sm:$0xff]
    %v10142 = vld [vmem:[%s12 + $0xd0] sm:$0xff]
    %v10143 = vld [vmem:[%s12 + $0xd8] sm:$0xff]
    %v10144 = vld [vmem:[%s12 + $0xe0] sm:$0xff]
    %v10145 = vld [vmem:[%s12 + $0xe8] sm:$0xff]
    %v10146 = vld [vmem:[%s12 + $0xf0] sm:$0xff]
    %v10147 = vld [vmem:[%s12 + $0xf8] sm:$0xff]
    %v10148 = vld [vmem:[%s13] sm:$0x1]
    %v10150 = vlaneseq
    %v10151 = vshrl.u32 %v10150, 7
    %v10152 = vsub.s32 0, %v10151
    %v10153 = vrot.slane %v10148, %v10152
    %10155 = vmatprep.subr.mxu0 0.0
    %10156 = vmatpush1.msra.mxu0 %v10116
    %10157 = vmatprep.subr.mxu0 0.0
    %10158 = vmatpush1.msra.mxu0 %v10117
    %10159 = vmatprep.subr.mxu0 0.0
    %10160 = vmatpush1.msra.mxu0 %v10118
    %10161 = vmatprep.subr.mxu0 0.0
    %10162 = vmatpush1.msra.mxu0 %v10119
    %10163 = vmatprep.subr.mxu0 0.0
    %10164 = vmatpush1.msra.mxu0 %v10120
    %10165 = vmatprep.subr.mxu0 0.0
    %10166 = vmatpush1.msra.mxu0 %v10121
    %10167 = vmatprep.subr.mxu0 0.0
    %10168 = vmatpush1.msra.mxu0 %v10122
    %10169 = vmatprep.subr.mxu0 0.0
    %10170 = vmatpush1.msra.mxu0 %v10123
    %10171 = vmatprep.subr.mxu0 0.0
    %10172 = vmatpush1.msra.mxu0 %v10124
    %10173 = vmatprep.subr.mxu0 0.0
    %10174 = vmatpush1.msra.mxu0 %v10125
    %10175 = vmatprep.subr.mxu0 0.0
    %10176 = vmatpush1.msra.mxu0 %v10126
    %10177 = vmatprep.subr.mxu0 0.0
    %10178 = vmatpush1.msra.mxu0 %v10127
    %10179 = vmatprep.subr.mxu0 0.0
    %10180 = vmatpush1.msra.mxu0 %v10128
    %10181 = vmatprep.subr.mxu0 0.0
    %10182 = vmatpush1.msra.mxu0 %v10129
    %10183 = vmatprep.subr.mxu0 0.0
    %10184 = vmatpush1.msra.mxu0 %v10130
    %10185 = vmatprep.subr.mxu0 0.0
    %10186 = vmatpush1.msra.mxu0 %v10131
    %10187 = vmatprep.subr.mxu0 0.0
    %10188 = vmatpush1.msra.mxu0 %v10132
    %10189 = vmatprep.subr.mxu0 0.0
    %10190 = vmatpush1.msra.mxu0 %v10133
    %10191 = vmatprep.subr.mxu0 0.0
    %10192 = vmatpush1.msra.mxu0 %v10134
    %10193 = vmatprep.subr.mxu0 0.0
    %10194 = vmatpush1.msra.mxu0 %v10135
    %10195 = vmatprep.subr.mxu0 0.0
    %10196 = vmatpush1.msra.mxu0 %v10136
    %10197 = vmatprep.subr.mxu0 0.0
    %10198 = vmatpush1.msra.mxu0 %v10137
    %10199 = vmatprep.subr.mxu0 0.0
    %10200 = vmatpush1.msra.mxu0 %v10138
    %10201 = vmatprep.subr.mxu0 0.0
    %10202 = vmatpush1.msra.mxu0 %v10139
    %10203 = vmatprep.subr.mxu0 0.0
    %10204 = vmatpush1.msra.mxu0 %v10140
    %10205 = vmatprep.subr.mxu0 0.0
    %10206 = vmatpush1.msra.mxu0 %v10141
    %10207 = vmatprep.subr.mxu0 0.0
    %10208 = vmatpush1.msra.mxu0 %v10142
    %10209 = vmatprep.subr.mxu0 0.0
    %10210 = vmatpush1.msra.mxu0 %v10143
    %10211 = vmatprep.subr.mxu0 0.0
    %10212 = vmatpush1.msra.mxu0 %v10144
    %10213 = vmatprep.subr.mxu0 0.0
    %10214 = vmatpush1.msra.mxu0 %v10145
    %10215 = vmatprep.subr.mxu0 0.0
    %10216 = vmatpush1.msra.mxu0 %v10146
    %10217 = vmatprep.subr.mxu0 0.0
    %10218 = vmatpush1.msra.mxu0 %v10147
    %10219 = vmatprep.mubr.f32.mxu0 %v10115
    %10220 = vmatmul.mubr.f32.gmra.mrb[0].mxu0 %v10114
    %v10221 = vpop.f32.mrb[0].mxu0
    %v10222 = vadd.f32 %v10153, %v10221
    %v10223 = vpop.f32.mrb[0].mxu0
    %10224 = vdwg.mxu0
    %10225 = vst [vmem:[#allocation5] sm:$0x3] %v10222
    // Predicated region
    $region58: #{model_forward.1} parent=1 // pred_check
      _
    $region59: #{model_forward.1} parent=1 // pred_check_branch
      %10227 = sbr.rel (0) target = $region61
    $region60: #{model_forward.1} parent=1 // pred_region
      %s10229 = ssub.s32 32, 32
      %10230 = vsyncadd [#allocation6], %s10229
      %s10232 = sshll.u32 [#allocation5], 4
      %s10233 = int_to_ptr.vmem [resolvable:$true] %s10232
      %10235 = dma.vmem_to_hbm [thread:$0]  %s10233, 32, %s14, [#allocation6]
    $region61: #{model_forward.1} parent=1 // pred_fallthru
      _
    // Predicated region
    $region62: #{model_forward.1} parent=1 // pred_check
      _
    $region63: #{model_forward.1} parent=1 // pred_check_branch
      %10237 = sbr.rel (0) target = $region65
    $region64: #{model_forward.1} parent=1 // pred_region
      %10238 = dma.done [#allocation6], 32
    $region65: #{model_forward.1} parent=1 // pred_fallthru
      _
    %10239 = vsyncpa [#allocation6], 1

</llo_original>
